<compile_context>
chip_gen: v5e
topology: v5e:2x2
jax: 0.10.0
libtpu: 0.0.40
codegen_flags: <defaults>
</compile_context>

<pallas_src>
import jax
import jax.numpy as jnp
from jax.experimental import pallas as pl
from jax.experimental.pallas import tpu as pltpu

EPS = 1e-5          # nn.BatchNorm default eps
NEG_SLOPE = 0.2     # LeakyReLU(0.2)
LANE = 128

# Sub-pixel taps for ConvTranspose2d(kernel=4, stride=2, padding=1):
# output row 2*m + ph pulls (padded-input-start, kernel-row) pairs:
_TAPS = (((1, 1), (0, 3)),      # ph == 0 -> (ih=m,   kh=1), (ih=m-1, kh=3)
         ((2, 0), (1, 2)))      # ph == 1 -> (ih=m+1, kh=0), (ih=m,   kh=2)


def _pick_tm(m, target=1024):
    """Largest tile from a multiple-of-8 ladder that exactly divides m."""
    for t in sorted({target, 2048, 1024, 512, 256, 128, 64, 32, 16, 8},
                    reverse=True):
        if t <= m and m % t == 0:
            return t
    return m


# ----------------------------------------------------------------------------
# Pallas kernels
# ----------------------------------------------------------------------------
def _linear_bn_lrelu_kernel(x_ref, w_ref, b_ref, g_ref, bb_ref, o_ref):
    # (B, K) @ (K, tn) on the MXU (bf16 in, f32 acc).  The full batch is in
    # the tile, so BatchNorm1d batch statistics are exact per feature column.
    y = jnp.dot(x_ref[...], w_ref[...], preferred_element_type=jnp.float32)
    y = y + b_ref[...]
    mean = jnp.mean(y, axis=0, keepdims=True)
    var = jnp.mean(jnp.square(y - mean), axis=0, keepdims=True)
    y = (y - mean) * jax.lax.rsqrt(var + EPS) * g_ref[...] + bb_ref[...]
    o_ref[...] = jnp.where(y >= 0, y, NEG_SLOPE * y).astype(o_ref.dtype)


def _mm_bias_stats_kernel(x_ref, w_ref, b_ref, y_ref, s_ref, ss_ref):
    # Per (phase, M-tile) matmul + bias; y stored bf16, BN partials stored as
    # separate f32 (sum, centered sum-of-squares) so the global reduction is
    # numerically safe and never forces the whole M axis resident in VMEM.
    y = jnp.dot(x_ref[0], w_ref[0], preferred_element_type=jnp.float32)
    y = y + b_ref[...]
    y_ref[0] = y.astype(y_ref.dtype)
    s = jnp.sum(y, axis=0, keepdims=True)                 # (1, Cout)
    mu = s * (1.0 / y.shape[0])
    d = y - mu
    ss = jnp.sum(d * d, axis=0, keepdims=True)            # centered ssq
    s_ref[...] = s.reshape(1, 1, 1, -1)
    ss_ref[...] = ss.reshape(1, 1, 1, -1)


def _affine_lrelu_kernel(y_ref, sc_ref, sh_ref, o_ref):
    # BN finalize (scale/shift precomputed from reduced stats) + LeakyReLU.
    y = y_ref[0].astype(jnp.float32) * sc_ref[...] + sh_ref[...]
    o_ref[0] = jnp.where(y >= 0, y, NEG_SLOPE * y).astype(o_ref.dtype)


def _mm_bias_tanh_kernel(x_ref, w_ref, b_ref, o_ref):
    y = jnp.dot(x_ref[...], w_ref[...], preferred_element_type=jnp.float32)
    o_ref[...] = jnp.tanh(y + b_ref[...]).astype(o_ref.dtype)


# ----------------------------------------------------------------------------
# pallas_call wrappers (tiled grids, all axes parallel)
# ----------------------------------------------------------------------------
def linear_bn_lrelu(x_bf16, w_bf16, b, g, beta, tn=4096):
    B, K = x_bf16.shape
    N = w_bf16.shape[1]
    tn = min(tn, N)
    assert N % tn == 0
    # NOTE: BN1d statistics require the whole batch in one tile (true here);
    # a two-phase BN path would be needed before tiling the batch axis.
    return pl.pallas_call(
        _linear_bn_lrelu_kernel,
        out_shape=jax.ShapeDtypeStruct((B, N), jnp.bfloat16),
        grid_spec=pltpu.PrefetchScalarGridSpec(
            num_scalar_prefetch=0, grid=(N // tn,),
            in_specs=[pl.BlockSpec((B, K), lambda j: (0, 0)),
                      pl.BlockSpec((K, tn), lambda j: (0, j)),
                      pl.BlockSpec((1, tn), lambda j: (0, j)),
                      pl.BlockSpec((1, tn), lambda j: (0, j)),
                      pl.BlockSpec((1, tn), lambda j: (0, j))],
            out_specs=pl.BlockSpec((B, tn), lambda j: (0, j))),
        compiler_params=pltpu.CompilerParams(
            dimension_semantics=("parallel",)),
    )(x_bf16, w_bf16, b, g, beta)


def conv_mm_bias_stats(cols, wm, bias):
    P, M, K = cols.shape
    Cout = wm.shape[-1]
    tm = _pick_tm(M)
    mt = M // tm
    return pl.pallas_call(
        _mm_bias_stats_kernel,
        out_shape=(jax.ShapeDtypeStruct((P, M, Cout), jnp.bfloat16),
                   jax.ShapeDtypeStruct((P, mt, 1, Cout), jnp.float32),
                   jax.ShapeDtypeStruct((P, mt, 1, Cout), jnp.float32)),
        grid_spec=pltpu.PrefetchScalarGridSpec(
            num_scalar_prefetch=0, grid=(P, mt),
            in_specs=[pl.BlockSpec((1, tm, K), lambda p, m: (p, m, 0)),
                      pl.BlockSpec((1, K, Cout), lambda p, m: (p, 0, 0)),
                      pl.BlockSpec((1, Cout), lambda p, m: (0, 0))],
            out_specs=(pl.BlockSpec((1, tm, Cout), lambda p, m: (p, m, 0)),
                       pl.BlockSpec((1, 1, 1, Cout), lambda p, m: (p, m, 0, 0)),
                       pl.BlockSpec((1, 1, 1, Cout), lambda p, m: (p, m, 0, 0)))),
        compiler_params=pltpu.CompilerParams(
            dimension_semantics=("parallel", "parallel")),
    )(cols, wm, bias)


def affine_lrelu(y, scale, shift, out_dtype=jnp.bfloat16):
    P, M, C = y.shape
    tm = _pick_tm(M)
    return pl.pallas_call(
        _affine_lrelu_kernel,
        out_shape=jax.ShapeDtypeStruct((P, M, C), out_dtype),
        grid_spec=pltpu.PrefetchScalarGridSpec(
            num_scalar_prefetch=0, grid=(P, M // tm),
            in_specs=[pl.BlockSpec((1, tm, C), lambda p, m: (p, m, 0)),
                      pl.BlockSpec((1, C), lambda p, m: (0, 0)),
                      pl.BlockSpec((1, C), lambda p, m: (0, 0))],
            out_specs=pl.BlockSpec((1, tm, C), lambda p, m: (p, m, 0))),
        compiler_params=pltpu.CompilerParams(
            dimension_semantics=("parallel", "parallel")),
    )(y, scale, shift)


def mm_bias_tanh(cols2d, wm, bias):
    M, K = cols2d.shape
    Cout = wm.shape[-1]
    tm = _pick_tm(M)
    return pl.pallas_call(
        _mm_bias_tanh_kernel,
        out_shape=jax.ShapeDtypeStruct((M, Cout), jnp.bfloat16),
        grid_spec=pltpu.PrefetchScalarGridSpec(
            num_scalar_prefetch=0, grid=(M // tm,),
            in_specs=[pl.BlockSpec((tm, K), lambda m: (m, 0)),
                      pl.BlockSpec((K, Cout), lambda m: (0, 0)),
                      pl.BlockSpec((1, Cout), lambda m: (0, 0))],
            out_specs=pl.BlockSpec((tm, Cout), lambda m: (m, 0))),
        compiler_params=pltpu.CompilerParams(
            dimension_semantics=("parallel",)),
    )(cols2d, wm, bias)


# ----------------------------------------------------------------------------
# Layout glue: sub-pixel-phase decomposition of ConvTranspose2d(4, 2, 1)
# ----------------------------------------------------------------------------
def _phase_cols_list(x_nhwc):
    """(N, H, W, C) -> list of 4 phase im2col arrays (N*H*W, 4*C) bf16."""
    N, H, W, C = x_nhwc.shape
    xp = jnp.pad(x_nhwc, ((0, 0), (1, 1), (1, 1), (0, 0)))
    out = []
    for ph in range(2):
        for pw in range(2):
            taps = [xp[:, sh:sh + H, sw:sw + W, :]
                    for (sh, _) in _TAPS[ph] for (sw, _) in _TAPS[pw]]
            cols = jnp.stack(taps, axis=3)                    # (N, H, W, 4, C)
            out.append(cols.reshape(N * H * W, 4 * C).astype(jnp.bfloat16))
    return out


def ct_phase_cols(x_nhwc):
    return jnp.stack(_phase_cols_list(x_nhwc), axis=0)        # (4, M, 4C)


def ct_phase_cols_concat(x_nhwc):
    return jnp.concatenate(_phase_cols_list(x_nhwc), axis=1)  # (M, 16C)


def ct_phase_weights(w_pt):
    """PyTorch ConvTranspose2d weight (Cin, Cout, 4, 4) -> (4, 4*Cin, Cout)."""
    mats = []
    for ph in range(2):
        for pw in range(2):
            rows = [w_pt[:, :, kh, kw]
                    for (_, kh) in _TAPS[ph] for (_, kw) in _TAPS[pw]]
            mats.append(jnp.concatenate(rows, axis=0))        # (4*Cin, Cout)
    return jnp.stack(mats, axis=0)


def ct3_blockdiag_weight(w_pt, lane_pad=LANE):
    """Pack the 4 phase weights block-diagonally: (16*Cin, lane_pad)."""
    mats = ct_phase_weights(w_pt)                             # (4, 4*Cin, 3)
    P, K, Cout = mats.shape
    wbd = jnp.zeros((P * K, lane_pad), mats.dtype)
    for p in range(P):
        wbd = wbd.at[p * K:(p + 1) * K, p * Cout:(p + 1) * Cout].set(mats[p])
    return wbd


def ct3_blockdiag_bias(b, lane_pad=LANE):
    c = b.shape[0]
    bbd = jnp.zeros((lane_pad,), b.dtype)
    for p in range(4):
        bbd = bbd.at[p * c:(p + 1) * c].set(b)
    return bbd.reshape(1, -1)


def interleave_phases(yp, N, H, W, C):
    """(4, N*H*W, C) phase outputs -> (N, 2H, 2W, C) via transpose/reshape."""
    t = yp.reshape(2, 2, N, H, W, C).transpose(2, 3, 0, 4, 1, 5)
    return t.reshape(N, 2 * H, 2 * W, C)


def bn_scale_shift(sums, css, tile_rows, count, gamma, beta):
    """Combine per-tile (sum, centered ssq) -> BN scale/shift (train mode)."""
    s = jnp.sum(sums, axis=(0, 1, 2))                         # (C,)
    mean = s / count
    tile_mean = sums[:, :, 0, :] / tile_rows                  # (P, mt, C)
    between = jnp.sum(jnp.square(tile_mean - mean) * tile_rows, axis=(0, 1))
    var = (jnp.sum(css, axis=(0, 1, 2)) + between) / count    # biased var
    scale = gamma * jax.lax.rsqrt(var + EPS)
    shift = beta - mean * scale
    return scale.reshape(1, -1), shift.reshape(1, -1)


def convt_bn_lrelu(x_nhwc, wm, bias, gamma, beta, true_cout):
    N, H, W, _ = x_nhwc.shape
    cols = ct_phase_cols(x_nhwc)                              # (4, NHW, 4*Cin)
    y, sums, css = conv_mm_bias_stats(cols, wm, bias)
    tile_rows = y.shape[1] // sums.shape[1]
    scale, shift = bn_scale_shift(sums, css, float(tile_rows),
                                  4.0 * N * H * W, gamma, beta)
    yn = affine_lrelu(y, scale, shift, jnp.bfloat16)          # (4, NHW, Cpad)
    return interleave_phases(yn[..., :true_cout], N, H, W, true_cout)


def convt_tanh_blockdiag(x_nhwc, wbd, bbd, true_cout=3):
    N, H, W, _ = x_nhwc.shape
    cols = ct_phase_cols_concat(x_nhwc)                       # (NHW, 16*Cin)
    y = mm_bias_tanh(cols, wbd, bbd)                          # (NHW, 128) bf16
    y = y[:, :4 * true_cout].astype(jnp.float32)
    y = y.reshape(N, H, W, 2, 2, true_cout).transpose(0, 1, 3, 2, 4, 5)
    return y.reshape(N, 2 * H, 2 * W, true_cout)


# ----------------------------------------------------------------------------
# One-time parameter preprocessing (hoisted out of the forward)
# ----------------------------------------------------------------------------
def prepare_params(p, lane_pad=LANE):
    def pad_c(w, c):  # zero-pad the last (Cout) axis to lane width
        return jnp.pad(w, [(0, 0)] * (w.ndim - 1) + [(0, c - w.shape[-1])])

    return {
        "lin_w": p["lin_w"].astype(jnp.bfloat16),
        "lin_b": p["lin_b"].reshape(1, -1),
        "bn1_g": p["bn1_g"].reshape(1, -1),
        "bn1_b": p["bn1_b"].reshape(1, -1),
        # layer 2: 256 -> 128 (already lane-dense)
        "ct1_wm": ct_phase_weights(p["ct1_w"]).astype(jnp.bfloat16),
        "ct1_b": p["ct1_b"].reshape(1, -1),
        "bn2_g": p["bn2_g"], "bn2_b": p["bn2_b"],
        # layer 3: 128 -> 64, Cout zero-padded to 128 so all stores are
        # lane-dense (gamma/beta padded with zeros -> dead cols stay 0)
        "ct2_wm": pad_c(ct_phase_weights(p["ct2_w"]), lane_pad).astype(jnp.bfloat16),
        "ct2_b": pad_c(p["ct2_b"], lane_pad).reshape(1, -1),
        "bn3_g": pad_c(p["bn3_g"], lane_pad),
        "bn3_b": pad_c(p["bn3_b"], lane_pad),
        # layer 4: block-diagonal packing -> one lane-dense (M, 128) slab
        "ct3_wbd": ct3_blockdiag_weight(p["ct3_w"], lane_pad).astype(jnp.bfloat16),
        "ct3_bbd": ct3_blockdiag_bias(p["ct3_b"], lane_pad),
    }


# ----------------------------------------------------------------------------
# Generator forward (Pallas path)
# ----------------------------------------------------------------------------
@jax.jit
def generator_forward(x, pp):
    N = x.shape[0]
    # project: Linear(noise, 4096) + BatchNorm1d(4096) + LeakyReLU(0.2)
    h = linear_bn_lrelu(x.astype(jnp.bfloat16), pp["lin_w"], pp["lin_b"],
                        pp["bn1_g"], pp["bn1_b"])                 # (N, 4096)
    # .view(-1, 256, 4, 4) (NCHW) -> NHWC
    h = h.reshape(N, 256, 4, 4).transpose(0, 2, 3, 1)             # (N, 4, 4, 256)
    # ConvTranspose2d(256->128) + BN2d + LReLU   (4x4 -> 8x8)
    h = convt_bn_lrelu(h, pp["ct1_wm"], pp["ct1_b"],
                       pp["bn2_g"], pp["bn2_b"], true_cout=128)
    # ConvTranspose2d(128->64) + BN2d + LReLU    (8x8 -> 16x16)
    h = convt_bn_lrelu(h, pp["ct2_wm"], pp["ct2_b"],
                       pp["bn3_g"], pp["bn3_b"], true_cout=64)
    # ConvTranspose2d(64->3) + Tanh              (16x16 -> 32x32)
    h = convt_tanh_blockdiag(h, pp["ct3_wbd"], pp["ct3_bbd"], true_cout=3)
    return h.transpose(0, 3, 1, 2).astype(jnp.float32)            # (N, 3, 32, 32)


# ----------------------------------------------------------------------------
# Independent pure-JAX reference (XLA dilated conv, NOT the phase lowering)
# ----------------------------------------------------------------------------
def _bfc(x):
    return x.astype(jnp.bfloat16).astype(jnp.float32)   # match bf16 MXU inputs


def _ref_lrelu(y):
    return jnp.where(y >= 0, y, NEG_SLOPE * y)


def _ref_bn(y, g, b, axes):
    mean = y.mean(axes, keepdims=True)
    var = jnp.square(y - mean).mean(axes, keepdims=True)
    shape = [1, -1] + [1] * (y.ndim - 2)
    return (y - mean) * jax.lax.rsqrt(var + EPS) * g.reshape(shape) + b.reshape(shape)


def _ref_convt(x_nchw, w_pt, b):
    # ConvTranspose2d(k=4, s=2, p=1): flip kernel, dilate input by 2, pad k-1-p=2
    w = jnp.flip(_bfc(w_pt), axis=(2, 3))
    w = jnp.transpose(w, (1, 0, 2, 3))                   # (Cout, Cin, kh, kw)
    out = jax.lax.conv_general_dilated(
        _bfc(x_nchw), w, window_strides=(1, 1), padding=((2, 2), (2, 2)),
        lhs_dilation=(2, 2), dimension_numbers=("NCHW", "OIHW", "NCHW"))
    return out + b[None, :, None, None]


@jax.jit
def generator_forward_ref(x, p):
    N = x.shape[0]
    y = _bfc(x) @ _bfc(p["lin_w"]) + p["lin_b"][None, :]
    y = _ref_lrelu(_ref_bn(y, p["bn1_g"], p["bn1_b"], axes=(0,)))
    h = y.reshape(N, 256, 4, 4)
    h = _ref_lrelu(_ref_bn(_ref_convt(h, p["ct1_w"], p["ct1_b"]),
                           p["bn2_g"], p["bn2_b"], axes=(0, 2, 3)))
    h = _ref_lrelu(_ref_bn(_ref_convt(h, p["ct2_w"], p["ct2_b"]),
                           p["bn3_g"], p["bn3_b"], axes=(0, 2, 3)))
    return jnp.tanh(_ref_convt(h, p["ct3_w"], p["ct3_b"]))


# ----------------------------------------------------------------------------
# Deterministic parameter init (shapes from Generator.__init__ / weights_init)
# ----------------------------------------------------------------------------
def init_params(key, noise_size):
    ks = jax.random.split(key, 8)

    def nrm(k, shape, std, mean=0.0):
        return (mean + std * jax.random.normal(k, shape)).astype(jnp.float32)

    return {
        "lin_w": nrm(ks[0], (noise_size, 4096), 1.0 / float(noise_size) ** 0.5),
        "lin_b": jnp.zeros((4096,), jnp.float32),
        "bn1_g": nrm(ks[1], (4096,), 0.02, 1.0),
        "bn1_b": jnp.zeros((4096,), jnp.float32),
        "ct1_w": nrm(ks[2], (256, 128, 4, 4), 0.02),
        "ct1_b": jnp.zeros((128,), jnp.float32),
        "bn2_g": nrm(ks[3], (128,), 0.02, 1.0),
        "bn2_b": jnp.zeros((128,), jnp.float32),
        "ct2_w": nrm(ks[4], (128, 64, 4, 4), 0.02),
        "ct2_b": jnp.zeros((64,), jnp.float32),
        "bn3_g": nrm(ks[5], (64,), 0.02, 1.0),
        "bn3_b": jnp.zeros((64,), jnp.float32),
        "ct3_w": nrm(ks[6], (64, 3, 4, 4), 0.02),
        "ct3_b": jnp.zeros((3,), jnp.float32),
    }


if __name__ == "__main__":
    key = jax.random.PRNGKey(0)
    kx, kp = jax.random.split(key)
    batch, noise_size = 2, 32

    x = jax.random.normal(kx, (batch, noise_size), dtype=jnp.float32)
    params = init_params(kp, noise_size)
    pp = prepare_params(params)

    out = jax.block_until_ready(generator_forward(x, pp))
    assert out.shape == (batch, 3, 32, 32), out.shape
    assert bool(jnp.all(jnp.isfinite(out)))

    ref = jax.block_until_ready(generator_forward_ref(x, params))
    err = float(jnp.max(jnp.abs(out - ref)))
    assert bool(jnp.allclose(out, ref, atol=2e-2, rtol=2e-2)), err

    print("KERNEL_OK")
</pallas_src>

<mosaic_0001>
module attributes {stable_mosaic.version = 11 : i64} {
  func.func @_linear_bn_lrelu_kernel(%arg0: i32, %arg1: memref<2x32xbf16, #tpu.memory_space<vmem>>, %arg2: memref<32x4096xbf16, #tpu.memory_space<vmem>>, %arg3: memref<1x4096xf32, #tpu.memory_space<vmem>>, %arg4: memref<1x4096xf32, #tpu.memory_space<vmem>>, %arg5: memref<1x4096xf32, #tpu.memory_space<vmem>>, %arg6: memref<2x4096xbf16, #tpu.memory_space<vmem>>) attributes {dimension_semantics = [#tpu.dimension_semantics<parallel>], iteration_bounds = array<i64: 1>, scalar_prefetch = 0 : i64, scratch_operands = 0 : i64, tpu.core_type = #tpu.core_type<tc>, window_params = [{pipeline_mode = #tpu.pipeline_mode<synchronous>, transform_indices = @transform_0, window_bounds = array<i64: 2, 32>}, {transform_indices = @transform_1, window_bounds = array<i64: 32, 4096>}, {transform_indices = @transform_2, window_bounds = array<i64: 1, 4096>}, {transform_indices = @transform_3, window_bounds = array<i64: 1, 4096>}, {transform_indices = @transform_4, window_bounds = array<i64: 1, 4096>}, {transform_indices = @transform_5, window_bounds = array<i64: 2, 4096>}]} {
    %c0 = arith.constant 0 : index
    %c0_0 = arith.constant 0 : index
    %0 = vector.load %arg1[%c0, %c0_0] : memref<2x32xbf16, #tpu.memory_space<vmem>>, vector<2x32xbf16>
    %c0_1 = arith.constant 0 : index
    %c0_2 = arith.constant 0 : index
    %1 = vector.load %arg2[%c0_1, %c0_2] : memref<32x4096xbf16, #tpu.memory_space<vmem>>, vector<32x4096xbf16>
    %cst = arith.constant dense<0.000000e+00> : vector<2x4096xf32>
    %2 = tpu.matmul %0, %1, %cst {dimension_numbers = #tpu.dot_dimension_numbers<[1], [0], [0], [1], [0, 0, 1, 1], [], []>} : vector<2x32xbf16>, vector<32x4096xbf16>, vector<2x4096xf32> -> vector<2x4096xf32>
    %c0_3 = arith.constant 0 : index
    %c0_4 = arith.constant 0 : index
    %3 = vector.load %arg3[%c0_3, %c0_4] : memref<1x4096xf32, #tpu.memory_space<vmem>>, vector<1x4096xf32>
    %4 = vector.broadcast %3 : vector<1x4096xf32> to vector<2x4096xf32>
    %5 = arith.addf %2, %4 : vector<2x4096xf32>
    %cst_5 = arith.constant dense<0.000000e+00> : vector<4096xf32>
    %6 = vector.multi_reduction <add>, %5, %cst_5 [0] : vector<2x4096xf32> to vector<4096xf32>
    %7 = vector.shape_cast %6 : vector<4096xf32> to vector<1x4096xf32>
    %cst_6 = arith.constant 2.000000e+00 : f32
    %8 = vector.broadcast %cst_6 : f32 to vector<1x4096xf32>
    %9 = arith.divf %7, %8 : vector<1x4096xf32>
    %10 = vector.broadcast %9 : vector<1x4096xf32> to vector<2x4096xf32>
    %11 = arith.subf %5, %10 : vector<2x4096xf32>
    %12 = arith.mulf %11, %11 : vector<2x4096xf32>
    %cst_7 = arith.constant dense<0.000000e+00> : vector<4096xf32>
    %13 = vector.multi_reduction <add>, %12, %cst_7 [0] : vector<2x4096xf32> to vector<4096xf32>
    %14 = vector.shape_cast %13 : vector<4096xf32> to vector<1x4096xf32>
    %cst_8 = arith.constant 2.000000e+00 : f32
    %15 = vector.broadcast %cst_8 : f32 to vector<1x4096xf32>
    %16 = arith.divf %14, %15 : vector<1x4096xf32>
    %17 = vector.broadcast %9 : vector<1x4096xf32> to vector<2x4096xf32>
    %18 = arith.subf %5, %17 : vector<2x4096xf32>
    %cst_9 = arith.constant 9.99999974E-6 : f32
    %19 = vector.broadcast %cst_9 : f32 to vector<1x4096xf32>
    %20 = arith.addf %16, %19 : vector<1x4096xf32>
    %21 = math.rsqrt %20 : vector<1x4096xf32>
    %22 = vector.broadcast %21 : vector<1x4096xf32> to vector<2x4096xf32>
    %23 = arith.mulf %18, %22 : vector<2x4096xf32>
    %c0_10 = arith.constant 0 : index
    %c0_11 = arith.constant 0 : index
    %24 = vector.load %arg4[%c0_10, %c0_11] : memref<1x4096xf32, #tpu.memory_space<vmem>>, vector<1x4096xf32>
    %25 = vector.broadcast %24 : vector<1x4096xf32> to vector<2x4096xf32>
    %26 = arith.mulf %23, %25 : vector<2x4096xf32>
    %c0_12 = arith.constant 0 : index
    %c0_13 = arith.constant 0 : index
    %27 = vector.load %arg5[%c0_12, %c0_13] : memref<1x4096xf32, #tpu.memory_space<vmem>>, vector<1x4096xf32>
    %28 = vector.broadcast %27 : vector<1x4096xf32> to vector<2x4096xf32>
    %29 = arith.addf %26, %28 : vector<2x4096xf32>
    %cst_14 = arith.constant 0.000000e+00 : f32
    %30 = vector.broadcast %cst_14 : f32 to vector<2x4096xf32>
    %31 = arith.cmpf oge, %29, %30 : vector<2x4096xf32>
    %cst_15 = arith.constant 2.000000e-01 : f32
    %32 = vector.broadcast %cst_15 : f32 to vector<2x4096xf32>
    %33 = arith.mulf %32, %29 : vector<2x4096xf32>
    %34 = arith.select %31, %29, %33 : vector<2x4096xi1>, vector<2x4096xf32>
    %35 = arith.truncf %34 : vector<2x4096xf32> to vector<2x4096xbf16>
    %c0_16 = arith.constant 0 : index
    %c0_17 = arith.constant 0 : index
    %36 = vector.load %arg6[%c0_16, %c0_17] : memref<2x4096xbf16, #tpu.memory_space<vmem>>, vector<2x4096xbf16>
    tpu.vector_store %arg6[%c0_16, %c0_17], %35 {strides = array<i32>} : memref<2x4096xbf16, #tpu.memory_space<vmem>>, vector<2x4096xbf16>,
    return
  }
  func.func @transform_0(%arg0: i32) -> (i32, i32) {
    %c0_i32 = arith.constant 0 : i32
    %c0_i32_0 = arith.constant 0 : i32
    %c0_i32_1 = arith.constant 0 : i32
    return %c0_i32, %c0_i32_0 : i32, i32
  }
  func.func @transform_1(%arg0: i32) -> (i32, i32) {
    %c0_i32 = arith.constant 0 : i32
    %c0_i32_0 = arith.constant 0 : i32
    return %c0_i32, %arg0 : i32, i32
  }
  func.func @transform_2(%arg0: i32) -> (i32, i32) {
    %c0_i32 = arith.constant 0 : i32
    %c0_i32_0 = arith.constant 0 : i32
    return %c0_i32, %arg0 : i32, i32
  }
  func.func @transform_3(%arg0: i32) -> (i32, i32) {
    %c0_i32 = arith.constant 0 : i32
    %c0_i32_0 = arith.constant 0 : i32
    return %c0_i32, %arg0 : i32, i32
  }
  func.func @transform_4(%arg0: i32) -> (i32, i32) {
    %c0_i32 = arith.constant 0 : i32
    %c0_i32_0 = arith.constant 0 : i32
    return %c0_i32, %arg0 : i32, i32
  }
  func.func @transform_5(%arg0: i32) -> (i32, i32) {
    %c0_i32 = arith.constant 0 : i32
    %c0_i32_0 = arith.constant 0 : i32
    return %c0_i32, %arg0 : i32, i32
  }
}

module attributes {stable_mosaic.version = 11 : i64} {
  func.func @_mm_bias_stats_kernel(%arg0: i32, %arg1: i32, %arg2: memref<1x32x1024xbf16, #tpu.memory_space<vmem>>, %arg3: memref<1x1024x128xbf16, #tpu.memory_space<vmem>>, %arg4: memref<1x128xf32, #tpu.memory_space<vmem>>, %arg5: memref<1x32x128xbf16, #tpu.memory_space<vmem>>, %arg6: memref<1x1x1x128xf32, #tpu.memory_space<vmem>>, %arg7: memref<1x1x1x128xf32, #tpu.memory_space<vmem>>) attributes {dimension_semantics = [#tpu.dimension_semantics<parallel>, #tpu.dimension_semantics<parallel>], iteration_bounds = array<i64: 4, 1>, scalar_prefetch = 0 : i64, scratch_operands = 0 : i64, tpu.core_type = #tpu.core_type<tc>, window_params = [{transform_indices = @transform_0, window_bounds = array<i64: 1, 32, 1024>}, {transform_indices = @transform_1, window_bounds = array<i64: 1, 1024, 128>}, {pipeline_mode = #tpu.pipeline_mode<synchronous>, transform_indices = @transform_2, window_bounds = array<i64: 1, 128>}, {transform_indices = @transform_3, window_bounds = array<i64: 1, 32, 128>}, {transform_indices = @transform_4, window_bounds = array<i64: 1, 1, 1, 128>}, {transform_indices = @transform_5, window_bounds = array<i64: 1, 1, 1, 128>}]} {
    %c0 = arith.constant 0 : index
    %c0_0 = arith.constant 0 : index
    %c0_1 = arith.constant 0 : index
    %0 = vector.load %arg2[%c0, %c0_0, %c0_1] : memref<1x32x1024xbf16, #tpu.memory_space<vmem>>, vector<1x32x1024xbf16>
    %1 = vector.shape_cast %0 : vector<1x32x1024xbf16> to vector<32x1024xbf16>
    %c0_2 = arith.constant 0 : index
    %c0_3 = arith.constant 0 : index
    %c0_4 = arith.constant 0 : index
    %2 = vector.load %arg3[%c0_2, %c0_3, %c0_4] : memref<1x1024x128xbf16, #tpu.memory_space<vmem>>, vector<1x1024x128xbf16>
    %3 = vector.shape_cast %2 : vector<1x1024x128xbf16> to vector<1024x128xbf16>
    %cst = arith.constant dense<0.000000e+00> : vector<32x128xf32>
    %4 = tpu.matmul %1, %3, %cst {dimension_numbers = #tpu.dot_dimension_numbers<[1], [0], [0], [1], [0, 0, 1, 1], [], []>} : vector<32x1024xbf16>, vector<1024x128xbf16>, vector<32x128xf32> -> vector<32x128xf32>
    %c0_5 = arith.constant 0 : index
    %c0_6 = arith.constant 0 : index
    %5 = vector.load %arg4[%c0_5, %c0_6] : memref<1x128xf32, #tpu.memory_space<vmem>>, vector<1x128xf32>
    %6 = vector.broadcast %5 : vector<1x128xf32> to vector<32x128xf32>
    %7 = arith.addf %4, %6 : vector<32x128xf32>
    %8 = arith.truncf %7 : vector<32x128xf32> to vector<32x128xbf16>
    %c0_7 = arith.constant 0 : index
    %c0_8 = arith.constant 0 : index
    %c0_9 = arith.constant 0 : index
    %9 = vector.load %arg5[%c0_7, %c0_8, %c0_9] : memref<1x32x128xbf16, #tpu.memory_space<vmem>>, vector<1x32x128xbf16>
    %10 = vector.shape_cast %9 : vector<1x32x128xbf16> to vector<32x128xbf16>
    %11 = vector.shape_cast %8 : vector<32x128xbf16> to vector<1x32x128xbf16>
    tpu.vector_store %arg5[%c0_7, %c0_8, %c0_9], %11 {strides = array<i32>} : memref<1x32x128xbf16, #tpu.memory_space<vmem>>, vector<1x32x128xbf16>,
    %cst_10 = arith.constant dense<0.000000e+00> : vector<128xf32>
    %12 = vector.multi_reduction <add>, %7, %cst_10 [0] : vector<32x128xf32> to vector<128xf32>
    %13 = vector.shape_cast %12 : vector<128xf32> to vector<1x128xf32>
    %cst_11 = arith.constant 3.125000e-02 : f32
    %14 = vector.broadcast %cst_11 : f32 to vector<1x128xf32>
    %15 = arith.mulf %13, %14 : vector<1x128xf32>
    %16 = vector.broadcast %15 : vector<1x128xf32> to vector<32x128xf32>
    %17 = arith.subf %7, %16 : vector<32x128xf32>
    %18 = arith.mulf %17, %17 : vector<32x128xf32>
    %cst_12 = arith.constant dense<0.000000e+00> : vector<128xf32>
    %19 = vector.multi_reduction <add>, %18, %cst_12 [0] : vector<32x128xf32> to vector<128xf32>
    %20 = vector.shape_cast %19 : vector<128xf32> to vector<1x128xf32>
    %21 = vector.shape_cast %13 : vector<1x128xf32> to vector<1x1x1x128xf32>
    %c0_13 = arith.constant 0 : index
    %c0_14 = arith.constant 0 : index
    %c0_15 = arith.constant 0 : index
    %c0_16 = arith.constant 0 : index
    %22 = vector.load %arg6[%c0_13, %c0_14, %c0_15, %c0_16] : memref<1x1x1x128xf32, #tpu.memory_space<vmem>>, vector<1x1x1x128xf32>
    tpu.vector_store %arg6[%c0_13, %c0_14, %c0_15, %c0_16], %21 {strides = array<i32>} : memref<1x1x1x128xf32, #tpu.memory_space<vmem>>, vector<1x1x1x128xf32>,
    %23 = vector.shape_cast %20 : vector<1x128xf32> to vector<1x1x1x128xf32>
    %c0_17 = arith.constant 0 : index
    %c0_18 = arith.constant 0 : index
    %c0_19 = arith.constant 0 : index
    %c0_20 = arith.constant 0 : index
    %24 = vector.load %arg7[%c0_17, %c0_18, %c0_19, %c0_20] : memref<1x1x1x128xf32, #tpu.memory_space<vmem>>, vector<1x1x1x128xf32>
    tpu.vector_store %arg7[%c0_17, %c0_18, %c0_19, %c0_20], %23 {strides = array<i32>} : memref<1x1x1x128xf32, #tpu.memory_space<vmem>>, vector<1x1x1x128xf32>,
    return
  }
  func.func @transform_0(%arg0: i32, %arg1: i32) -> (i32, i32, i32) {
    %c0_i32 = arith.constant 0 : i32
    %c0_i32_0 = arith.constant 0 : i32
    return %arg0, %arg1, %c0_i32 : i32, i32, i32
  }
  func.func @transform_1(%arg0: i32, %arg1: i32) -> (i32, i32, i32) {
    %c0_i32 = arith.constant 0 : i32
    %c0_i32_0 = arith.constant 0 : i32
    %c0_i32_1 = arith.constant 0 : i32
    return %arg0, %c0_i32, %c0_i32_0 : i32, i32, i32
  }
  func.func @transform_2(%arg0: i32, %arg1: i32) -> (i32, i32) {
    %c0_i32 = arith.constant 0 : i32
    %c0_i32_0 = arith.constant 0 : i32
    %c0_i32_1 = arith.constant 0 : i32
    return %c0_i32, %c0_i32_0 : i32, i32
  }
  func.func @transform_3(%arg0: i32, %arg1: i32) -> (i32, i32, i32) {
    %c0_i32 = arith.constant 0 : i32
    %c0_i32_0 = arith.constant 0 : i32
    return %arg0, %arg1, %c0_i32 : i32, i32, i32
  }
  func.func @transform_4(%arg0: i32, %arg1: i32) -> (i32, i32, i32, i32) {
    %c0_i32 = arith.constant 0 : i32
    %c0_i32_0 = arith.constant 0 : i32
    %c0_i32_1 = arith.constant 0 : i32
    return %arg0, %arg1, %c0_i32, %c0_i32_0 : i32, i32, i32, i32
  }
  func.func @transform_5(%arg0: i32, %arg1: i32) -> (i32, i32, i32, i32) {
    %c0_i32 = arith.constant 0 : i32
    %c0_i32_0 = arith.constant 0 : i32
    %c0_i32_1 = arith.constant 0 : i32
    return %arg0, %arg1, %c0_i32, %c0_i32_0 : i32, i32, i32, i32
  }
}

module attributes {stable_mosaic.version = 11 : i64} {
  func.func @_affine_lrelu_kernel(%arg0: i32, %arg1: i32, %arg2: memref<1x32x128xbf16, #tpu.memory_space<vmem>>, %arg3: memref<1x128xf32, #tpu.memory_space<vmem>>, %arg4: memref<1x128xf32, #tpu.memory_space<vmem>>, %arg5: memref<1x32x128xbf16, #tpu.memory_space<vmem>>) attributes {dimension_semantics = [#tpu.dimension_semantics<parallel>, #tpu.dimension_semantics<parallel>], iteration_bounds = array<i64: 4, 1>, scalar_prefetch = 0 : i64, scratch_operands = 0 : i64, tpu.core_type = #tpu.core_type<tc>, window_params = [{transform_indices = @transform_0, window_bounds = array<i64: 1, 32, 128>}, {pipeline_mode = #tpu.pipeline_mode<synchronous>, transform_indices = @transform_1, window_bounds = array<i64: 1, 128>}, {pipeline_mode = #tpu.pipeline_mode<synchronous>, transform_indices = @transform_2, window_bounds = array<i64: 1, 128>}, {transform_indices = @transform_3, window_bounds = array<i64: 1, 32, 128>}]} {
    %c0 = arith.constant 0 : index
    %c0_0 = arith.constant 0 : index
    %c0_1 = arith.constant 0 : index
    %0 = vector.load %arg2[%c0, %c0_0, %c0_1] : memref<1x32x128xbf16, #tpu.memory_space<vmem>>, vector<1x32x128xbf16>
    %1 = vector.shape_cast %0 : vector<1x32x128xbf16> to vector<32x128xbf16>
    %2 = arith.extf %1 : vector<32x128xbf16> to vector<32x128xf32>
    %c0_2 = arith.constant 0 : index
    %c0_3 = arith.constant 0 : index
    %3 = vector.load %arg3[%c0_2, %c0_3] : memref<1x128xf32, #tpu.memory_space<vmem>>, vector<1x128xf32>
    %4 = vector.broadcast %3 : vector<1x128xf32> to vector<32x128xf32>
    %5 = arith.mulf %2, %4 : vector<32x128xf32>
    %c0_4 = arith.constant 0 : index
    %c0_5 = arith.constant 0 : index
    %6 = vector.load %arg4[%c0_4, %c0_5] : memref<1x128xf32, #tpu.memory_space<vmem>>, vector<1x128xf32>
    %7 = vector.broadcast %6 : vector<1x128xf32> to vector<32x128xf32>
    %8 = arith.addf %5, %7 : vector<32x128xf32>
    %cst = arith.constant 0.000000e+00 : f32
    %9 = vector.broadcast %cst : f32 to vector<32x128xf32>
    %10 = arith.cmpf oge, %8, %9 : vector<32x128xf32>
    %cst_6 = arith.constant 2.000000e-01 : f32
    %11 = vector.broadcast %cst_6 : f32 to vector<32x128xf32>
    %12 = arith.mulf %11, %8 : vector<32x128xf32>
    %13 = arith.select %10, %8, %12 : vector<32x128xi1>, vector<32x128xf32>
    %14 = arith.truncf %13 : vector<32x128xf32> to vector<32x128xbf16>
    %c0_7 = arith.constant 0 : index
    %c0_8 = arith.constant 0 : index
    %c0_9 = arith.constant 0 : index
    %15 = vector.load %arg5[%c0_7, %c0_8, %c0_9] : memref<1x32x128xbf16, #tpu.memory_space<vmem>>, vector<1x32x128xbf16>
    %16 = vector.shape_cast %15 : vector<1x32x128xbf16> to vector<32x128xbf16>
    %17 = vector.shape_cast %14 : vector<32x128xbf16> to vector<1x32x128xbf16>
    tpu.vector_store %arg5[%c0_7, %c0_8, %c0_9], %17 {strides = array<i32>} : memref<1x32x128xbf16, #tpu.memory_space<vmem>>, vector<1x32x128xbf16>,
    return
  }
  func.func @transform_0(%arg0: i32, %arg1: i32) -> (i32, i32, i32) {
    %c0_i32 = arith.constant 0 : i32
    %c0_i32_0 = arith.constant 0 : i32
    return %arg0, %arg1, %c0_i32 : i32, i32, i32
  }
  func.func @transform_1(%arg0: i32, %arg1: i32) -> (i32, i32) {
    %c0_i32 = arith.constant 0 : i32
    %c0_i32_0 = arith.constant 0 : i32
    %c0_i32_1 = arith.constant 0 : i32
    return %c0_i32, %c0_i32_0 : i32, i32
  }
  func.func @transform_2(%arg0: i32, %arg1: i32) -> (i32, i32) {
    %c0_i32 = arith.constant 0 : i32
    %c0_i32_0 = arith.constant 0 : i32
    %c0_i32_1 = arith.constant 0 : i32
    return %c0_i32, %c0_i32_0 : i32, i32
  }
  func.func @transform_3(%arg0: i32, %arg1: i32) -> (i32, i32, i32) {
    %c0_i32 = arith.constant 0 : i32
    %c0_i32_0 = arith.constant 0 : i32
    return %arg0, %arg1, %c0_i32 : i32, i32, i32
  }
}

module attributes {stable_mosaic.version = 11 : i64} {
  func.func @_mm_bias_stats_kernel(%arg0: i32, %arg1: i32, %arg2: memref<1x128x512xbf16, #tpu.memory_space<vmem>>, %arg3: memref<1x512x128xbf16, #tpu.memory_space<vmem>>, %arg4: memref<1x128xf32, #tpu.memory_space<vmem>>, %arg5: memref<1x128x128xbf16, #tpu.memory_space<vmem>>, %arg6: memref<1x1x1x128xf32, #tpu.memory_space<vmem>>, %arg7: memref<1x1x1x128xf32, #tpu.memory_space<vmem>>) attributes {dimension_semantics = [#tpu.dimension_semantics<parallel>, #tpu.dimension_semantics<parallel>], iteration_bounds = array<i64: 4, 1>, scalar_prefetch = 0 : i64, scratch_operands = 0 : i64, tpu.core_type = #tpu.core_type<tc>, window_params = [{transform_indices = @transform_0, window_bounds = array<i64: 1, 128, 512>}, {transform_indices = @transform_1, window_bounds = array<i64: 1, 512, 128>}, {pipeline_mode = #tpu.pipeline_mode<synchronous>, transform_indices = @transform_2, window_bounds = array<i64: 1, 128>}, {transform_indices = @transform_3, window_bounds = array<i64: 1, 128, 128>}, {transform_indices = @transform_4, window_bounds = array<i64: 1, 1, 1, 128>}, {transform_indices = @transform_5, window_bounds = array<i64: 1, 1, 1, 128>}]} {
    %c0 = arith.constant 0 : index
    %c0_0 = arith.constant 0 : index
    %c0_1 = arith.constant 0 : index
    %0 = vector.load %arg2[%c0, %c0_0, %c0_1] : memref<1x128x512xbf16, #tpu.memory_space<vmem>>, vector<1x128x512xbf16>
    %1 = vector.shape_cast %0 : vector<1x128x512xbf16> to vector<128x512xbf16>
    %c0_2 = arith.constant 0 : index
    %c0_3 = arith.constant 0 : index
    %c0_4 = arith.constant 0 : index
    %2 = vector.load %arg3[%c0_2, %c0_3, %c0_4] : memref<1x512x128xbf16, #tpu.memory_space<vmem>>, vector<1x512x128xbf16>
    %3 = vector.shape_cast %2 : vector<1x512x128xbf16> to vector<512x128xbf16>
    %cst = arith.constant dense<0.000000e+00> : vector<128x128xf32>
    %4 = tpu.matmul %1, %3, %cst {dimension_numbers = #tpu.dot_dimension_numbers<[1], [0], [0], [1], [0, 0, 1, 1], [], []>} : vector<128x512xbf16>, vector<512x128xbf16>, vector<128x128xf32> -> vector<128x128xf32>
    %c0_5 = arith.constant 0 : index
    %c0_6 = arith.constant 0 : index
    %5 = vector.load %arg4[%c0_5, %c0_6] : memref<1x128xf32, #tpu.memory_space<vmem>>, vector<1x128xf32>
    %6 = vector.broadcast %5 : vector<1x128xf32> to vector<128x128xf32>
    %7 = arith.addf %4, %6 : vector<128x128xf32>
    %8 = arith.truncf %7 : vector<128x128xf32> to vector<128x128xbf16>
    %c0_7 = arith.constant 0 : index
    %c0_8 = arith.constant 0 : index
    %c0_9 = arith.constant 0 : index
    %9 = vector.load %arg5[%c0_7, %c0_8, %c0_9] : memref<1x128x128xbf16, #tpu.memory_space<vmem>>, vector<1x128x128xbf16>
    %10 = vector.shape_cast %9 : vector<1x128x128xbf16> to vector<128x128xbf16>
    %11 = vector.shape_cast %8 : vector<128x128xbf16> to vector<1x128x128xbf16>
    tpu.vector_store %arg5[%c0_7, %c0_8, %c0_9], %11 {strides = array<i32>} : memref<1x128x128xbf16, #tpu.memory_space<vmem>>, vector<1x128x128xbf16>,
    %cst_10 = arith.constant dense<0.000000e+00> : vector<128xf32>
    %12 = vector.multi_reduction <add>, %7, %cst_10 [0] : vector<128x128xf32> to vector<128xf32>
    %13 = vector.shape_cast %12 : vector<128xf32> to vector<1x128xf32>
    %cst_11 = arith.constant 7.812500e-03 : f32
    %14 = vector.broadcast %cst_11 : f32 to vector<1x128xf32>
    %15 = arith.mulf %13, %14 : vector<1x128xf32>
    %16 = vector.broadcast %15 : vector<1x128xf32> to vector<128x128xf32>
    %17 = arith.subf %7, %16 : vector<128x128xf32>
    %18 = arith.mulf %17, %17 : vector<128x128xf32>
    %cst_12 = arith.constant dense<0.000000e+00> : vector<128xf32>
    %19 = vector.multi_reduction <add>, %18, %cst_12 [0] : vector<128x128xf32> to vector<128xf32>
    %20 = vector.shape_cast %19 : vector<128xf32> to vector<1x128xf32>
    %21 = vector.shape_cast %13 : vector<1x128xf32> to vector<1x1x1x128xf32>
    %c0_13 = arith.constant 0 : index
    %c0_14 = arith.constant 0 : index
    %c0_15 = arith.constant 0 : index
    %c0_16 = arith.constant 0 : index
    %22 = vector.load %arg6[%c0_13, %c0_14, %c0_15, %c0_16] : memref<1x1x1x128xf32, #tpu.memory_space<vmem>>, vector<1x1x1x128xf32>
    tpu.vector_store %arg6[%c0_13, %c0_14, %c0_15, %c0_16], %21 {strides = array<i32>} : memref<1x1x1x128xf32, #tpu.memory_space<vmem>>, vector<1x1x1x128xf32>,
    %23 = vector.shape_cast %20 : vector<1x128xf32> to vector<1x1x1x128xf32>
    %c0_17 = arith.constant 0 : index
    %c0_18 = arith.constant 0 : index
    %c0_19 = arith.constant 0 : index
    %c0_20 = arith.constant 0 : index
    %24 = vector.load %arg7[%c0_17, %c0_18, %c0_19, %c0_20] : memref<1x1x1x128xf32, #tpu.memory_space<vmem>>, vector<1x1x1x128xf32>
    tpu.vector_store %arg7[%c0_17, %c0_18, %c0_19, %c0_20], %23 {strides = array<i32>} : memref<1x1x1x128xf32, #tpu.memory_space<vmem>>, vector<1x1x1x128xf32>,
    return
  }
  func.func @transform_0(%arg0: i32, %arg1: i32) -> (i32, i32, i32) {
    %c0_i32 = arith.constant 0 : i32
    %c0_i32_0 = arith.constant 0 : i32
    return %arg0, %arg1, %c0_i32 : i32, i32, i32
  }
  func.func @transform_1(%arg0: i32, %arg1: i32) -> (i32, i32, i32) {
    %c0_i32 = arith.constant 0 : i32
    %c0_i32_0 = arith.constant 0 : i32
    %c0_i32_1 = arith.constant 0 : i32
    return %arg0, %c0_i32, %c0_i32_0 : i32, i32, i32
  }
  func.func @transform_2(%arg0: i32, %arg1: i32) -> (i32, i32) {
    %c0_i32 = arith.constant 0 : i32
    %c0_i32_0 = arith.constant 0 : i32
    %c0_i32_1 = arith.constant 0 : i32
    return %c0_i32, %c0_i32_0 : i32, i32
  }
  func.func @transform_3(%arg0: i32, %arg1: i32) -> (i32, i32, i32) {
    %c0_i32 = arith.constant 0 : i32
    %c0_i32_0 = arith.constant 0 : i32
    return %arg0, %arg1, %c0_i32 : i32, i32, i32
  }
  func.func @transform_4(%arg0: i32, %arg1: i32) -> (i32, i32, i32, i32) {
    %c0_i32 = arith.constant 0 : i32
    %c0_i32_0 = arith.constant 0 : i32
    %c0_i32_1 = arith.constant 0 : i32
    return %arg0, %arg1, %c0_i32, %c0_i32_0 : i32, i32, i32, i32
  }
  func.func @transform_5(%arg0: i32, %arg1: i32) -> (i32, i32, i32, i32) {
    %c0_i32 = arith.constant 0 : i32
    %c0_i32_0 = arith.constant 0 : i32
    %c0_i32_1 = arith.constant 0 : i32
    return %arg0, %arg1, %c0_i32, %c0_i32_0 : i32, i32, i32, i32
  }
}

module attributes {stable_mosaic.version = 11 : i64} {
  func.func @_affine_lrelu_kernel(%arg0: i32, %arg1: i32, %arg2: memref<1x128x128xbf16, #tpu.memory_space<vmem>>, %arg3: memref<1x128xf32, #tpu.memory_space<vmem>>, %arg4: memref<1x128xf32, #tpu.memory_space<vmem>>, %arg5: memref<1x128x128xbf16, #tpu.memory_space<vmem>>) attributes {dimension_semantics = [#tpu.dimension_semantics<parallel>, #tpu.dimension_semantics<parallel>], iteration_bounds = array<i64: 4, 1>, scalar_prefetch = 0 : i64, scratch_operands = 0 : i64, tpu.core_type = #tpu.core_type<tc>, window_params = [{transform_indices = @transform_0, window_bounds = array<i64: 1, 128, 128>}, {pipeline_mode = #tpu.pipeline_mode<synchronous>, transform_indices = @transform_1, window_bounds = array<i64: 1, 128>}, {pipeline_mode = #tpu.pipeline_mode<synchronous>, transform_indices = @transform_2, window_bounds = array<i64: 1, 128>}, {transform_indices = @transform_3, window_bounds = array<i64: 1, 128, 128>}]} {
    %c0 = arith.constant 0 : index
    %c0_0 = arith.constant 0 : index
    %c0_1 = arith.constant 0 : index
    %0 = vector.load %arg2[%c0, %c0_0, %c0_1] : memref<1x128x128xbf16, #tpu.memory_space<vmem>>, vector<1x128x128xbf16>
    %1 = vector.shape_cast %0 : vector<1x128x128xbf16> to vector<128x128xbf16>
    %2 = arith.extf %1 : vector<128x128xbf16> to vector<128x128xf32>
    %c0_2 = arith.constant 0 : index
    %c0_3 = arith.constant 0 : index
    %3 = vector.load %arg3[%c0_2, %c0_3] : memref<1x128xf32, #tpu.memory_space<vmem>>, vector<1x128xf32>
    %4 = vector.broadcast %3 : vector<1x128xf32> to vector<128x128xf32>
    %5 = arith.mulf %2, %4 : vector<128x128xf32>
    %c0_4 = arith.constant 0 : index
    %c0_5 = arith.constant 0 : index
    %6 = vector.load %arg4[%c0_4, %c0_5] : memref<1x128xf32, #tpu.memory_space<vmem>>, vector<1x128xf32>
    %7 = vector.broadcast %6 : vector<1x128xf32> to vector<128x128xf32>
    %8 = arith.addf %5, %7 : vector<128x128xf32>
    %cst = arith.constant 0.000000e+00 : f32
    %9 = vector.broadcast %cst : f32 to vector<128x128xf32>
    %10 = arith.cmpf oge, %8, %9 : vector<128x128xf32>
    %cst_6 = arith.constant 2.000000e-01 : f32
    %11 = vector.broadcast %cst_6 : f32 to vector<128x128xf32>
    %12 = arith.mulf %11, %8 : vector<128x128xf32>
    %13 = arith.select %10, %8, %12 : vector<128x128xi1>, vector<128x128xf32>
    %14 = arith.truncf %13 : vector<128x128xf32> to vector<128x128xbf16>
    %c0_7 = arith.constant 0 : index
    %c0_8 = arith.constant 0 : index
    %c0_9 = arith.constant 0 : index
    %15 = vector.load %arg5[%c0_7, %c0_8, %c0_9] : memref<1x128x128xbf16, #tpu.memory_space<vmem>>, vector<1x128x128xbf16>
    %16 = vector.shape_cast %15 : vector<1x128x128xbf16> to vector<128x128xbf16>
    %17 = vector.shape_cast %14 : vector<128x128xbf16> to vector<1x128x128xbf16>
    tpu.vector_store %arg5[%c0_7, %c0_8, %c0_9], %17 {strides = array<i32>} : memref<1x128x128xbf16, #tpu.memory_space<vmem>>, vector<1x128x128xbf16>,
    return
  }
  func.func @transform_0(%arg0: i32, %arg1: i32) -> (i32, i32, i32) {
    %c0_i32 = arith.constant 0 : i32
    %c0_i32_0 = arith.constant 0 : i32
    return %arg0, %arg1, %c0_i32 : i32, i32, i32
  }
  func.func @transform_1(%arg0: i32, %arg1: i32) -> (i32, i32) {
    %c0_i32 = arith.constant 0 : i32
    %c0_i32_0 = arith.constant 0 : i32
    %c0_i32_1 = arith.constant 0 : i32
    return %c0_i32, %c0_i32_0 : i32, i32
  }
  func.func @transform_2(%arg0: i32, %arg1: i32) -> (i32, i32) {
    %c0_i32 = arith.constant 0 : i32
    %c0_i32_0 = arith.constant 0 : i32
    %c0_i32_1 = arith.constant 0 : i32
    return %c0_i32, %c0_i32_0 : i32, i32
  }
  func.func @transform_3(%arg0: i32, %arg1: i32) -> (i32, i32, i32) {
    %c0_i32 = arith.constant 0 : i32
    %c0_i32_0 = arith.constant 0 : i32
    return %arg0, %arg1, %c0_i32 : i32, i32, i32
  }
}

module attributes {stable_mosaic.version = 11 : i64} {
  func.func @_mm_bias_tanh_kernel(%arg0: i32, %arg1: memref<512x1024xbf16, #tpu.memory_space<vmem>>, %arg2: memref<1024x128xbf16, #tpu.memory_space<vmem>>, %arg3: memref<1x128xf32, #tpu.memory_space<vmem>>, %arg4: memref<512x128xbf16, #tpu.memory_space<vmem>>) attributes {dimension_semantics = [#tpu.dimension_semantics<parallel>], iteration_bounds = array<i64: 1>, scalar_prefetch = 0 : i64, scratch_operands = 0 : i64, tpu.core_type = #tpu.core_type<tc>, window_params = [{transform_indices = @transform_0, window_bounds = array<i64: 512, 1024>}, {pipeline_mode = #tpu.pipeline_mode<synchronous>, transform_indices = @transform_1, window_bounds = array<i64: 1024, 128>}, {pipeline_mode = #tpu.pipeline_mode<synchronous>, transform_indices = @transform_2, window_bounds = array<i64: 1, 128>}, {transform_indices = @transform_3, window_bounds = array<i64: 512, 128>}]} {
    %c0 = arith.constant 0 : index
    %c0_0 = arith.constant 0 : index
    %0 = vector.load %arg1[%c0, %c0_0] : memref<512x1024xbf16, #tpu.memory_space<vmem>>, vector<512x1024xbf16>
    %c0_1 = arith.constant 0 : index
    %c0_2 = arith.constant 0 : index
    %1 = vector.load %arg2[%c0_1, %c0_2] : memref<1024x128xbf16, #tpu.memory_space<vmem>>, vector<1024x128xbf16>
    %cst = arith.constant dense<0.000000e+00> : vector<512x128xf32>
    %2 = tpu.matmul %0, %1, %cst {dimension_numbers = #tpu.dot_dimension_numbers<[1], [0], [0], [1], [0, 0, 1, 1], [], []>} : vector<512x1024xbf16>, vector<1024x128xbf16>, vector<512x128xf32> -> vector<512x128xf32>
    %c0_3 = arith.constant 0 : index
    %c0_4 = arith.constant 0 : index
    %3 = vector.load %arg3[%c0_3, %c0_4] : memref<1x128xf32, #tpu.memory_space<vmem>>, vector<1x128xf32>
    %4 = vector.broadcast %3 : vector<1x128xf32> to vector<512x128xf32>
    %5 = arith.addf %2, %4 : vector<512x128xf32>
    %6 = math.tanh %5 : vector<512x128xf32>
    %7 = arith.truncf %6 : vector<512x128xf32> to vector<512x128xbf16>
    %c0_5 = arith.constant 0 : index
    %c0_6 = arith.constant 0 : index
    %8 = vector.load %arg4[%c0_5, %c0_6] : memref<512x128xbf16, #tpu.memory_space<vmem>>, vector<512x128xbf16>
    tpu.vector_store %arg4[%c0_5, %c0_6], %7 {strides = array<i32>} : memref<512x128xbf16, #tpu.memory_space<vmem>>, vector<512x128xbf16>,
    return
  }
  func.func @transform_0(%arg0: i32) -> (i32, i32) {
    %c0_i32 = arith.constant 0 : i32
    %c0_i32_0 = arith.constant 0 : i32
    return %arg0, %c0_i32 : i32, i32
  }
  func.func @transform_1(%arg0: i32) -> (i32, i32) {
    %c0_i32 = arith.constant 0 : i32
    %c0_i32_0 = arith.constant 0 : i32
    %c0_i32_1 = arith.constant 0 : i32
    return %c0_i32, %c0_i32_0 : i32, i32
  }
  func.func @transform_2(%arg0: i32) -> (i32, i32) {
    %c0_i32 = arith.constant 0 : i32
    %c0_i32_0 = arith.constant 0 : i32
    %c0_i32_1 = arith.constant 0 : i32
    return %c0_i32, %c0_i32_0 : i32, i32
  }
  func.func @transform_3(%arg0: i32) -> (i32, i32) {
    %c0_i32 = arith.constant 0 : i32
    %c0_i32_0 = arith.constant 0 : i32
    return %arg0, %c0_i32 : i32, i32
  }
}

</mosaic_0001>

<llo_original>
// kernel: generator_forward.6
$region0: #{generator_forward.6}
  #allocation0 [shape = 'u32[]', space=smem, size = 0x4, offset = 0x4, fixed_abs, tag = 'smem constant byte address 0x4 - core index']
  #allocation1 [shape = 'u32[72,128]{1,0:T(1,128)}', space=vmem, size = 0x9000, scoped, tag = 'internal scratch']
  %s0 = inlined_call_operand.vmem [shape: bf16[2,32], index: 0, kind: input, shape index: {}]
  %s1 = inlined_call_operand.hbm [shape: bf16[32,4096], index: 1, kind: input, shape index: {}]
  %s2 = inlined_call_operand.hbm [shape: f32[1,4096], index: 2, kind: input, shape index: {}]
  %s3 = inlined_call_operand.hbm [shape: f32[1,4096], index: 3, kind: input, shape index: {}]
  %s4 = inlined_call_operand.hbm [shape: f32[1,4096], index: 4, kind: input, shape index: {}]
  %s5 = inlined_call_operand.vmem [shape: bf16[2,4096], index: 5, kind: output, shape index: {}]
  %s6 = sld [smem:[#allocation0]]
  $region46: #{generator_forward.6} parent=0
    _
  %s8 = ssub.s32 1, %s6
  %s9 = scalar_select 0, %s8, %s6
  $region1: #{generator_forward.6} parent=0
    #allocation2 [shape = 'u8[262144]{0}', space=vmem, size = 0x40000, scoped, tag = 'input window, operand 1, single buffered']
    #allocation3 [shape = 's32[1]{0}', space=sflag, size = 0x4, scoped, tag = 'scoped memory for generator_forward.6']
    #allocation4 [shape = 'u8[16384]{0}', space=vmem, size = 0x4000, scoped, tag = 'input window, operand 2, single buffered']
    #allocation5 [shape = 's32[1]{0}', space=sflag, size = 0x4, scoped, tag = 'scoped memory for generator_forward.6']
    #allocation6 [shape = 'u8[16384]{0}', space=vmem, size = 0x4000, scoped, tag = 'input window, operand 3, single buffered']
    #allocation7 [shape = 'u8[16384]{0}', space=vmem, size = 0x4000, scoped, tag = 'input window, operand 4, single buffered']
    #allocation8 [shape = 's32[1]{0}', space=sflag, size = 0x4, scoped, tag = 'scoped memory for generator_forward.6']
    %10 = vsyncpa [#allocation3], 0
    %11 = vsyncpa [#allocation5], 0
    %12 = vsyncpa [#allocation8], 0
    // Predicated region
    $region2: #{generator_forward.6} parent=1 // pred_check
      _
    $region3: #{generator_forward.6} parent=1 // pred_check_branch
      %14 = sbr.rel (0) target = $region5
    $region4: #{generator_forward.6} parent=1 // pred_region
      _
    $region5: #{generator_forward.6} parent=1 // pred_fallthru
      _
    // Predicated region
    $region6: #{generator_forward.6} parent=1 // pred_check
      _
    $region7: #{generator_forward.6} parent=1 // pred_check_branch
      %16 = sbr.rel (0) target = $region9
    $region8: #{generator_forward.6} parent=1 // pred_region
      %18 = vsyncadd [#allocation3], 0
      %s19 = sshll.u32 %s1, 4
      %s20 = int_to_ptr.hbm [resolvable:$true] %s19
      %s21 = sshll.u32 [#allocation2], 4
      %s22 = int_to_ptr.vmem [resolvable:$true] %s21
      %27 = dma.hbm_to_vmem [thread:$0]  %s20, 8192, %s22, [#allocation3], 2048, 2048, 128
    $region9: #{generator_forward.6} parent=1 // pred_fallthru
      _
    // Predicated region
    $region10: #{generator_forward.6} parent=1 // pred_check
      _
    $region11: #{generator_forward.6} parent=1 // pred_check_branch
      %29 = sbr.rel (0) target = $region13
    $region12: #{generator_forward.6} parent=1 // pred_region
      %31 = vsyncadd [#allocation5], 0
      %s33 = sshll.u32 %s2, 4
      %s34 = int_to_ptr.hbm [resolvable:$true] %s33
      %s35 = sshll.u32 [#allocation4], 4
      %s36 = int_to_ptr.vmem [resolvable:$true] %s35
      %38 = dma.hbm_to_vmem [thread:$0]  %s34, 512, %s36, [#allocation5]
    $region13: #{generator_forward.6} parent=1 // pred_fallthru
      _
    // Predicated region
    $region14: #{generator_forward.6} parent=1 // pred_check
      _
    $region15: #{generator_forward.6} parent=1 // pred_check_branch
      %40 = sbr.rel (0) target = $region17
    $region16: #{generator_forward.6} parent=1 // pred_region
      %42 = vsyncadd [#allocation5], 0
      %s44 = sshll.u32 %s3, 4
      %s45 = int_to_ptr.hbm [resolvable:$true] %s44
      %s46 = sshll.u32 [#allocation6], 4
      %s47 = int_to_ptr.vmem [resolvable:$true] %s46
      %49 = dma.hbm_to_vmem [thread:$0]  %s45, 512, %s47, [#allocation5]
    $region17: #{generator_forward.6} parent=1 // pred_fallthru
      _
    // Predicated region
    $region18: #{generator_forward.6} parent=1 // pred_check
      _
    $region19: #{generator_forward.6} parent=1 // pred_check_branch
      %51 = sbr.rel (0) target = $region21
    $region20: #{generator_forward.6} parent=1 // pred_region
      %53 = vsyncadd [#allocation8], 0
      %s55 = sshll.u32 %s4, 4
      %s56 = int_to_ptr.hbm [resolvable:$true] %s55
      %s57 = sshll.u32 [#allocation7], 4
      %s58 = int_to_ptr.vmem [resolvable:$true] %s57
      %60 = dma.hbm_to_vmem [thread:$0]  %s56, 512, %s58, [#allocation8]
    $region21: #{generator_forward.6} parent=1 // pred_fallthru
      _
    // Predicated region
    $region22: #{generator_forward.6} parent=1 // pred_check
      _
    $region23: #{generator_forward.6} parent=1 // pred_check_branch
      %62 = sbr.rel (0) target = $region25
    $region24: #{generator_forward.6} parent=1 // pred_region
      %64 = dma.done [#allocation3], 8192
    $region25: #{generator_forward.6} parent=1 // pred_fallthru
      _
    // Predicated region
    $region26: #{generator_forward.6} parent=1 // pred_check
      _
    $region27: #{generator_forward.6} parent=1 // pred_check_branch
      %66 = sbr.rel (0) target = $region29
    $region28: #{generator_forward.6} parent=1 // pred_region
      %68 = dma.done [#allocation5], 512
    $region29: #{generator_forward.6} parent=1 // pred_fallthru
      _
    // Predicated region
    $region30: #{generator_forward.6} parent=1 // pred_check
      _
    $region31: #{generator_forward.6} parent=1 // pred_check_branch
      %70 = sbr.rel (0) target = $region33
    $region32: #{generator_forward.6} parent=1 // pred_region
      %72 = dma.done [#allocation5], 512
    $region33: #{generator_forward.6} parent=1 // pred_fallthru
      _
    // Predicated region
    $region34: #{generator_forward.6} parent=1 // pred_check
      _
    $region35: #{generator_forward.6} parent=1 // pred_check_branch
      %74 = sbr.rel (0) target = $region37
    $region36: #{generator_forward.6} parent=1 // pred_region
      %76 = dma.done [#allocation8], 512
    $region37: #{generator_forward.6} parent=1 // pred_fallthru
      _
    %v78 = vld [vmem:[%s0] sm:$0x1]
    %v79 = vld [vmem:[#allocation2] sm:$0xff]
    %v80 = vld [vmem:[#allocation2 + $0x8] sm:$0xff]
    %v81 = vld [vmem:[#allocation2 + $0x10] sm:$0xff]
    %v82 = vld [vmem:[#allocation2 + $0x18] sm:$0xff]
    %v83 = vld [vmem:[#allocation2 + $0x20] sm:$0xff]
    %v84 = vld [vmem:[#allocation2 + $0x28] sm:$0xff]
    %v85 = vld [vmem:[#allocation2 + $0x30] sm:$0xff]
    %v86 = vld [vmem:[#allocation2 + $0x38] sm:$0xff]
    %v87 = vld [vmem:[#allocation2 + $0x40] sm:$0xff]
    %v88 = vld [vmem:[#allocation2 + $0x48] sm:$0xff]
    %v89 = vld [vmem:[#allocation2 + $0x50] sm:$0xff]
    %v90 = vld [vmem:[#allocation2 + $0x58] sm:$0xff]
    %v91 = vld [vmem:[#allocation2 + $0x60] sm:$0xff]
    %v92 = vld [vmem:[#allocation2 + $0x68] sm:$0xff]
    %v93 = vld [vmem:[#allocation2 + $0x70] sm:$0xff]
    %v94 = vld [vmem:[#allocation2 + $0x78] sm:$0xff]
    %v95 = vld [vmem:[#allocation2 + $0x80] sm:$0xff]
    %v96 = vld [vmem:[#allocation2 + $0x88] sm:$0xff]
    %v97 = vld [vmem:[#allocation2 + $0x90] sm:$0xff]
    %v98 = vld [vmem:[#allocation2 + $0x98] sm:$0xff]
    %v99 = vld [vmem:[#allocation2 + $0xa0] sm:$0xff]
    %v100 = vld [vmem:[#allocation2 + $0xa8] sm:$0xff]
    %v101 = vld [vmem:[#allocation2 + $0xb0] sm:$0xff]
    %v102 = vld [vmem:[#allocation2 + $0xb8] sm:$0xff]
    %v103 = vld [vmem:[#allocation2 + $0xc0] sm:$0xff]
    %v104 = vld [vmem:[#allocation2 + $0xc8] sm:$0xff]
    %v105 = vld [vmem:[#allocation2 + $0xd0] sm:$0xff]
    %v106 = vld [vmem:[#allocation2 + $0xd8] sm:$0xff]
    %v107 = vld [vmem:[#allocation2 + $0xe0] sm:$0xff]
    %v108 = vld [vmem:[#allocation2 + $0xe8] sm:$0xff]
    %v109 = vld [vmem:[#allocation2 + $0xf0] sm:$0xff]
    %v110 = vld [vmem:[#allocation2 + $0xf8] sm:$0xff]
    %v111 = vld [vmem:[#allocation2 + $0x100] sm:$0xff]
    %v112 = vld [vmem:[#allocation2 + $0x108] sm:$0xff]
    %v113 = vld [vmem:[#allocation2 + $0x110] sm:$0xff]
    %v114 = vld [vmem:[#allocation2 + $0x118] sm:$0xff]
    %v115 = vld [vmem:[#allocation2 + $0x120] sm:$0xff]
    %v116 = vld [vmem:[#allocation2 + $0x128] sm:$0xff]
    %v117 = vld [vmem:[#allocation2 + $0x130] sm:$0xff]
    %v118 = vld [vmem:[#allocation2 + $0x138] sm:$0xff]
    %v119 = vld [vmem:[#allocation2 + $0x140] sm:$0xff]
    %v120 = vld [vmem:[#allocation2 + $0x148] sm:$0xff]
    %v121 = vld [vmem:[#allocation2 + $0x150] sm:$0xff]
    %v122 = vld [vmem:[#allocation2 + $0x158] sm:$0xff]
    %v123 = vld [vmem:[#allocation2 + $0x160] sm:$0xff]
    %v124 = vld [vmem:[#allocation2 + $0x168] sm:$0xff]
    %v125 = vld [vmem:[#allocation2 + $0x170] sm:$0xff]
    %v126 = vld [vmem:[#allocation2 + $0x178] sm:$0xff]
    %v127 = vld [vmem:[#allocation2 + $0x180] sm:$0xff]
    %v128 = vld [vmem:[#allocation2 + $0x188] sm:$0xff]
    %v129 = vld [vmem:[#allocation2 + $0x190] sm:$0xff]
    %v130 = vld [vmem:[#allocation2 + $0x198] sm:$0xff]
    %v131 = vld [vmem:[#allocation2 + $0x1a0] sm:$0xff]
    %v132 = vld [vmem:[#allocation2 + $0x1a8] sm:$0xff]
    %v133 = vld [vmem:[#allocation2 + $0x1b0] sm:$0xff]
    %v134 = vld [vmem:[#allocation2 + $0x1b8] sm:$0xff]
    %v135 = vld [vmem:[#allocation2 + $0x1c0] sm:$0xff]
    %v136 = vld [vmem:[#allocation2 + $0x1c8] sm:$0xff]
    %v137 = vld [vmem:[#allocation2 + $0x1d0] sm:$0xff]
    %v138 = vld [vmem:[#allocation2 + $0x1d8] sm:$0xff]
    %v139 = vld [vmem:[#allocation2 + $0x1e0] sm:$0xff]
    %v140 = vld [vmem:[#allocation2 + $0x1e8] sm:$0xff]
    %v141 = vld [vmem:[#allocation2 + $0x1f0] sm:$0xff]
    %v142 = vld [vmem:[#allocation2 + $0x1f8] sm:$0xff]
    %v143 = vld [vmem:[#allocation4] sm:$0xff]
    %v144 = vld [vmem:[#allocation4 + $0x8] sm:$0xff]
    %v145 = vld [vmem:[#allocation4 + $0x10] sm:$0xff]
    %v146 = vld [vmem:[#allocation4 + $0x18] sm:$0xff]
    %v151 = vperm.slane %v143, 0
    %v152 = vperm.slane %v143, 1
    %v153 = vperm.slane %v143, 2
    %v154 = vperm.slane %v143, 3
    %v155 = vperm.slane %v143, 4
    %v156 = vperm.slane %v143, 5
    %v157 = vperm.slane %v143, 6
    %v158 = vperm.slane %v143, 7
    %v159 = vperm.slane %v144, 0
    %v160 = vperm.slane %v144, 1
    %v161 = vperm.slane %v144, 2
    %v162 = vperm.slane %v144, 3
    %v163 = vperm.slane %v144, 4
    %v164 = vperm.slane %v144, 5
    %v165 = vperm.slane %v144, 6
    %v166 = vperm.slane %v144, 7
    %v167 = vperm.slane %v145, 0
    %v168 = vperm.slane %v145, 1
    %v169 = vperm.slane %v145, 2
    %v170 = vperm.slane %v145, 3
    %v171 = vperm.slane %v145, 4
    %v172 = vperm.slane %v145, 5
    %v173 = vperm.slane %v145, 6
    %v174 = vperm.slane %v145, 7
    %v175 = vperm.slane %v146, 0
    %v176 = vperm.slane %v146, 1
    %v177 = vperm.slane %v146, 2
    %v178 = vperm.slane %v146, 3
    %v179 = vperm.slane %v146, 4
    %v180 = vperm.slane %v146, 5
    %v181 = vperm.slane %v146, 6
    %v182 = vperm.slane %v146, 7
    %v279 = vunpack.c.l.b16 %v79
    %v280 = vunpack.c.h.b16 %v79
    %v281 = vunpack.c.l.b16 %v80
    %v282 = vunpack.c.h.b16 %v80
    %v283 = vunpack.c.l.b16 %v81
    %v284 = vunpack.c.h.b16 %v81
    %v285 = vunpack.c.l.b16 %v82
    %v286 = vunpack.c.h.b16 %v82
    %v287 = vunpack.c.l.b16 %v83
    %v288 = vunpack.c.h.b16 %v83
    %v289 = vunpack.c.l.b16 %v84
    %v290 = vunpack.c.h.b16 %v84
    %v291 = vunpack.c.l.b16 %v85
    %v292 = vunpack.c.h.b16 %v85
    %v293 = vunpack.c.l.b16 %v86
    %v294 = vunpack.c.h.b16 %v86
    %v295 = vunpack.c.l.b16 %v87
    %v296 = vunpack.c.h.b16 %v87
    %v297 = vunpack.c.l.b16 %v88
    %v298 = vunpack.c.h.b16 %v88
    %v299 = vunpack.c.l.b16 %v89
    %v300 = vunpack.c.h.b16 %v89
    %v301 = vunpack.c.l.b16 %v90
    %v302 = vunpack.c.h.b16 %v90
    %v303 = vunpack.c.l.b16 %v91
    %v304 = vunpack.c.h.b16 %v91
    %v305 = vunpack.c.l.b16 %v92
    %v306 = vunpack.c.h.b16 %v92
    %v307 = vunpack.c.l.b16 %v93
    %v308 = vunpack.c.h.b16 %v93
    %v309 = vunpack.c.l.b16 %v94
    %v310 = vunpack.c.h.b16 %v94
    %v311 = vunpack.c.l.b16 %v95
    %v312 = vunpack.c.h.b16 %v95
    %v313 = vunpack.c.l.b16 %v96
    %v314 = vunpack.c.h.b16 %v96
    %v315 = vunpack.c.l.b16 %v97
    %v316 = vunpack.c.h.b16 %v97
    %v317 = vunpack.c.l.b16 %v98
    %v318 = vunpack.c.h.b16 %v98
    %v319 = vunpack.c.l.b16 %v99
    %v320 = vunpack.c.h.b16 %v99
    %v321 = vunpack.c.l.b16 %v100
    %v322 = vunpack.c.h.b16 %v100
    %v323 = vunpack.c.l.b16 %v101
    %v324 = vunpack.c.h.b16 %v101
    %v325 = vunpack.c.l.b16 %v102
    %v326 = vunpack.c.h.b16 %v102
    %v327 = vunpack.c.l.b16 %v103
    %v328 = vunpack.c.h.b16 %v103
    %v329 = vunpack.c.l.b16 %v104
    %v330 = vunpack.c.h.b16 %v104
    %v331 = vunpack.c.l.b16 %v105
    %v332 = vunpack.c.h.b16 %v105
    %v333 = vunpack.c.l.b16 %v106
    %v334 = vunpack.c.h.b16 %v106
    %v335 = vunpack.c.l.b16 %v107
    %v336 = vunpack.c.h.b16 %v107
    %v337 = vunpack.c.l.b16 %v108
    %v338 = vunpack.c.h.b16 %v108
    %v339 = vunpack.c.l.b16 %v109
    %v340 = vunpack.c.h.b16 %v109
    %v341 = vunpack.c.l.b16 %v110
    %v342 = vunpack.c.h.b16 %v110
    %v343 = vunpack.c.l.b16 %v111
    %v344 = vunpack.c.h.b16 %v111
    %v345 = vunpack.c.l.b16 %v112
    %v346 = vunpack.c.h.b16 %v112
    %v347 = vunpack.c.l.b16 %v113
    %v348 = vunpack.c.h.b16 %v113
    %v349 = vunpack.c.l.b16 %v114
    %v350 = vunpack.c.h.b16 %v114
    %v351 = vunpack.c.l.b16 %v115
    %v352 = vunpack.c.h.b16 %v115
    %v353 = vunpack.c.l.b16 %v116
    %v354 = vunpack.c.h.b16 %v116
    %v355 = vunpack.c.l.b16 %v117
    %v356 = vunpack.c.h.b16 %v117
    %v357 = vunpack.c.l.b16 %v118
    %v358 = vunpack.c.h.b16 %v118
    %v359 = vunpack.c.l.b16 %v119
    %v360 = vunpack.c.h.b16 %v119
    %v361 = vunpack.c.l.b16 %v120
    %v362 = vunpack.c.h.b16 %v120
    %v363 = vunpack.c.l.b16 %v121
    %v364 = vunpack.c.h.b16 %v121
    %v365 = vunpack.c.l.b16 %v122
    %v366 = vunpack.c.h.b16 %v122
    %v367 = vunpack.c.l.b16 %v123
    %v368 = vunpack.c.h.b16 %v123
    %v369 = vunpack.c.l.b16 %v124
    %v370 = vunpack.c.h.b16 %v124
    %v371 = vunpack.c.l.b16 %v125
    %v372 = vunpack.c.h.b16 %v125
    %v373 = vunpack.c.l.b16 %v126
    %v374 = vunpack.c.h.b16 %v126
    %v375 = vunpack.c.l.b16 %v127
    %v376 = vunpack.c.h.b16 %v127
    %v377 = vunpack.c.l.b16 %v128
    %v378 = vunpack.c.h.b16 %v128
    %v379 = vunpack.c.l.b16 %v129
    %v380 = vunpack.c.h.b16 %v129
    %v381 = vunpack.c.l.b16 %v130
    %v382 = vunpack.c.h.b16 %v130
    %v383 = vunpack.c.l.b16 %v131
    %v384 = vunpack.c.h.b16 %v131
    %v385 = vunpack.c.l.b16 %v132
    %v386 = vunpack.c.h.b16 %v132
    %v387 = vunpack.c.l.b16 %v133
    %v388 = vunpack.c.h.b16 %v133
    %v389 = vunpack.c.l.b16 %v134
    %v390 = vunpack.c.h.b16 %v134
    %v391 = vunpack.c.l.b16 %v135
    %v392 = vunpack.c.h.b16 %v135
    %v393 = vunpack.c.l.b16 %v136
    %v394 = vunpack.c.h.b16 %v136
    %v395 = vunpack.c.l.b16 %v137
    %v396 = vunpack.c.h.b16 %v137
    %v397 = vunpack.c.l.b16 %v138
    %v398 = vunpack.c.h.b16 %v138
    %v399 = vunpack.c.l.b16 %v139
    %v400 = vunpack.c.h.b16 %v139
    %v401 = vunpack.c.l.b16 %v140
    %v402 = vunpack.c.h.b16 %v140
    %v403 = vunpack.c.l.b16 %v141
    %v404 = vunpack.c.h.b16 %v141
    %v405 = vunpack.c.l.b16 %v142
    %v406 = vunpack.c.h.b16 %v142
    %v407 = vpack.c.b16 %v311, %v279
    %v408 = vpack.c.b16 %v312, %v280
    %v409 = vpack.c.b16 %v313, %v281
    %v410 = vpack.c.b16 %v314, %v282
    %v411 = vpack.c.b16 %v315, %v283
    %v412 = vpack.c.b16 %v316, %v284
    %v413 = vpack.c.b16 %v317, %v285
    %v414 = vpack.c.b16 %v318, %v286
    %v415 = vpack.c.b16 %v319, %v287
    %v416 = vpack.c.b16 %v320, %v288
    %v417 = vpack.c.b16 %v321, %v289
    %v418 = vpack.c.b16 %v322, %v290
    %v419 = vpack.c.b16 %v323, %v291
    %v420 = vpack.c.b16 %v324, %v292
    %v421 = vpack.c.b16 %v325, %v293
    %v422 = vpack.c.b16 %v326, %v294
    %v423 = vpack.c.b16 %v327, %v295
    %v424 = vpack.c.b16 %v328, %v296
    %v425 = vpack.c.b16 %v329, %v297
    %v426 = vpack.c.b16 %v330, %v298
    %v427 = vpack.c.b16 %v331, %v299
    %v428 = vpack.c.b16 %v332, %v300
    %v429 = vpack.c.b16 %v333, %v301
    %v430 = vpack.c.b16 %v334, %v302
    %v431 = vpack.c.b16 %v335, %v303
    %v432 = vpack.c.b16 %v336, %v304
    %v433 = vpack.c.b16 %v337, %v305
    %v434 = vpack.c.b16 %v338, %v306
    %v435 = vpack.c.b16 %v339, %v307
    %v436 = vpack.c.b16 %v340, %v308
    %v437 = vpack.c.b16 %v341, %v309
    %v438 = vpack.c.b16 %v342, %v310
    %v439 = vpack.c.b16 %v375, %v343
    %v440 = vpack.c.b16 %v376, %v344
    %v441 = vpack.c.b16 %v377, %v345
    %v442 = vpack.c.b16 %v378, %v346
    %v443 = vpack.c.b16 %v379, %v347
    %v444 = vpack.c.b16 %v380, %v348
    %v445 = vpack.c.b16 %v381, %v349
    %v446 = vpack.c.b16 %v382, %v350
    %v447 = vpack.c.b16 %v383, %v351
    %v448 = vpack.c.b16 %v384, %v352
    %v449 = vpack.c.b16 %v385, %v353
    %v450 = vpack.c.b16 %v386, %v354
    %v451 = vpack.c.b16 %v387, %v355
    %v452 = vpack.c.b16 %v388, %v356
    %v453 = vpack.c.b16 %v389, %v357
    %v454 = vpack.c.b16 %v390, %v358
    %v455 = vpack.c.b16 %v391, %v359
    %v456 = vpack.c.b16 %v392, %v360
    %v457 = vpack.c.b16 %v393, %v361
    %v458 = vpack.c.b16 %v394, %v362
    %v459 = vpack.c.b16 %v395, %v363
    %v460 = vpack.c.b16 %v396, %v364
    %v461 = vpack.c.b16 %v397, %v365
    %v462 = vpack.c.b16 %v398, %v366
    %v463 = vpack.c.b16 %v399, %v367
    %v464 = vpack.c.b16 %v400, %v368
    %v465 = vpack.c.b16 %v401, %v369
    %v466 = vpack.c.b16 %v402, %v370
    %v467 = vpack.c.b16 %v403, %v371
    %v468 = vpack.c.b16 %v404, %v372
    %v469 = vpack.c.b16 %v405, %v373
    %v470 = vpack.c.b16 %v406, %v374
    %vm535 = vcmask 261120
    %v537 = vsel %vm535, %v78, 0
    %539 = vmatpush.bf16.msra.mxu0 0
    %540 = vmatpush.bf16.msra.mxu0 0
    %541 = vmatpush.bf16.msra.mxu0 0
    %542 = vmatpush.bf16.msra.mxu0 0
    %543 = vmatpush.bf16.msra.mxu0 0
    %544 = vmatpush.bf16.msra.mxu0 0
    %545 = vmatpush.bf16.msra.mxu0 %v439
    %546 = vmatpush.bf16.msra.mxu0 %v407
    %547 = vmatmul.bf16.gmra.mxu0 %v537
    %v548 = vpop.f32.mrf.mxu0
    %v549 = vadd.f32 %v151, %v548
    %v550 = vpop.f32.mrf.mxu0
    %551 = vdwg.mxu0
    %552 = vmatpush.bf16.msra.mxu0 0
    %553 = vmatpush.bf16.msra.mxu0 0
    %554 = vmatpush.bf16.msra.mxu0 0
    %555 = vmatpush.bf16.msra.mxu0 0
    %556 = vmatpush.bf16.msra.mxu0 0
    %557 = vmatpush.bf16.msra.mxu0 0
    %558 = vmatpush.bf16.msra.mxu0 %v440
    %559 = vmatpush.bf16.msra.mxu0 %v408
    %560 = vmatmul.bf16.gmra.mxu0 %v537
    %v561 = vpop.f32.mrf.mxu0
    %v562 = vadd.f32 %v152, %v561
    %v563 = vpop.f32.mrf.mxu0
    %564 = vdwg.mxu0
    %565 = vmatpush.bf16.msra.mxu0 0
    %566 = vmatpush.bf16.msra.mxu0 0
    %567 = vmatpush.bf16.msra.mxu0 0
    %568 = vmatpush.bf16.msra.mxu0 0
    %569 = vmatpush.bf16.msra.mxu0 0
    %570 = vmatpush.bf16.msra.mxu0 0
    %571 = vmatpush.bf16.msra.mxu0 %v441
    %572 = vmatpush.bf16.msra.mxu0 %v409
    %573 = vmatmul.bf16.gmra.mxu0 %v537
    %v574 = vpop.f32.mrf.mxu0
    %v575 = vadd.f32 %v153, %v574
    %v576 = vpop.f32.mrf.mxu0
    %577 = vdwg.mxu0
    %578 = vmatpush.bf16.msra.mxu0 0
    %579 = vmatpush.bf16.msra.mxu0 0
    %580 = vmatpush.bf16.msra.mxu0 0
    %581 = vmatpush.bf16.msra.mxu0 0
    %582 = vmatpush.bf16.msra.mxu0 0
    %583 = vmatpush.bf16.msra.mxu0 0
    %584 = vmatpush.bf16.msra.mxu0 %v442
    %585 = vmatpush.bf16.msra.mxu0 %v410
    %586 = vmatmul.bf16.gmra.mxu0 %v537
    %v587 = vpop.f32.mrf.mxu0
    %v588 = vadd.f32 %v154, %v587
    %v589 = vpop.f32.mrf.mxu0
    %590 = vdwg.mxu0
    %591 = vmatpush.bf16.msra.mxu0 0
    %592 = vmatpush.bf16.msra.mxu0 0
    %593 = vmatpush.bf16.msra.mxu0 0
    %594 = vmatpush.bf16.msra.mxu0 0
    %595 = vmatpush.bf16.msra.mxu0 0
    %596 = vmatpush.bf16.msra.mxu0 0
    %597 = vmatpush.bf16.msra.mxu0 %v443
    %598 = vmatpush.bf16.msra.mxu0 %v411
    %599 = vmatmul.bf16.gmra.mxu0 %v537
    %v600 = vpop.f32.mrf.mxu0
    %v601 = vadd.f32 %v155, %v600
    %v602 = vpop.f32.mrf.mxu0
    %603 = vdwg.mxu0
    %604 = vmatpush.bf16.msra.mxu0 0
    %605 = vmatpush.bf16.msra.mxu0 0
    %606 = vmatpush.bf16.msra.mxu0 0
    %607 = vmatpush.bf16.msra.mxu0 0
    %608 = vmatpush.bf16.msra.mxu0 0
    %609 = vmatpush.bf16.msra.mxu0 0
    %610 = vmatpush.bf16.msra.mxu0 %v444
    %611 = vmatpush.bf16.msra.mxu0 %v412
    %612 = vmatmul.bf16.gmra.mxu0 %v537
    %v613 = vpop.f32.mrf.mxu0
    %v614 = vadd.f32 %v156, %v613
    %v615 = vpop.f32.mrf.mxu0
    %616 = vdwg.mxu0
    %617 = vmatpush.bf16.msra.mxu0 0
    %618 = vmatpush.bf16.msra.mxu0 0
    %619 = vmatpush.bf16.msra.mxu0 0
    %620 = vmatpush.bf16.msra.mxu0 0
    %621 = vmatpush.bf16.msra.mxu0 0
    %622 = vmatpush.bf16.msra.mxu0 0
    %623 = vmatpush.bf16.msra.mxu0 %v445
    %624 = vmatpush.bf16.msra.mxu0 %v413
    %625 = vmatmul.bf16.gmra.mxu0 %v537
    %v626 = vpop.f32.mrf.mxu0
    %v627 = vadd.f32 %v157, %v626
    %v628 = vpop.f32.mrf.mxu0
    %629 = vdwg.mxu0
    %630 = vmatpush.bf16.msra.mxu0 0
    %631 = vmatpush.bf16.msra.mxu0 0
    %632 = vmatpush.bf16.msra.mxu0 0
    %633 = vmatpush.bf16.msra.mxu0 0
    %634 = vmatpush.bf16.msra.mxu0 0
    %635 = vmatpush.bf16.msra.mxu0 0
    %636 = vmatpush.bf16.msra.mxu0 %v446
    %637 = vmatpush.bf16.msra.mxu0 %v414
    %638 = vmatmul.bf16.gmra.mxu0 %v537
    %v639 = vpop.f32.mrf.mxu0
    %v640 = vadd.f32 %v158, %v639
    %v641 = vpop.f32.mrf.mxu0
    %642 = vdwg.mxu0
    %643 = vmatpush.bf16.msra.mxu0 0
    %644 = vmatpush.bf16.msra.mxu0 0
    %645 = vmatpush.bf16.msra.mxu0 0
    %646 = vmatpush.bf16.msra.mxu0 0
    %647 = vmatpush.bf16.msra.mxu0 0
    %648 = vmatpush.bf16.msra.mxu0 0
    %649 = vmatpush.bf16.msra.mxu0 %v447
    %650 = vmatpush.bf16.msra.mxu0 %v415
    %651 = vmatmul.bf16.gmra.mxu0 %v537
    %v652 = vpop.f32.mrf.mxu0
    %v653 = vadd.f32 %v159, %v652
    %v654 = vpop.f32.mrf.mxu0
    %655 = vdwg.mxu0
    %656 = vmatpush.bf16.msra.mxu0 0
    %657 = vmatpush.bf16.msra.mxu0 0
    %658 = vmatpush.bf16.msra.mxu0 0
    %659 = vmatpush.bf16.msra.mxu0 0
    %660 = vmatpush.bf16.msra.mxu0 0
    %661 = vmatpush.bf16.msra.mxu0 0
    %662 = vmatpush.bf16.msra.mxu0 %v448
    %663 = vmatpush.bf16.msra.mxu0 %v416
    %664 = vmatmul.bf16.gmra.mxu0 %v537
    %v665 = vpop.f32.mrf.mxu0
    %v666 = vadd.f32 %v160, %v665
    %v667 = vpop.f32.mrf.mxu0
    %668 = vdwg.mxu0
    %669 = vmatpush.bf16.msra.mxu0 0
    %670 = vmatpush.bf16.msra.mxu0 0
    %671 = vmatpush.bf16.msra.mxu0 0
    %672 = vmatpush.bf16.msra.mxu0 0
    %673 = vmatpush.bf16.msra.mxu0 0
    %674 = vmatpush.bf16.msra.mxu0 0
    %675 = vmatpush.bf16.msra.mxu0 %v449
    %676 = vmatpush.bf16.msra.mxu0 %v417
    %677 = vmatmul.bf16.gmra.mxu0 %v537
    %v678 = vpop.f32.mrf.mxu0
    %v679 = vadd.f32 %v161, %v678
    %v680 = vpop.f32.mrf.mxu0
    %681 = vdwg.mxu0
    %682 = vmatpush.bf16.msra.mxu0 0
    %683 = vmatpush.bf16.msra.mxu0 0
    %684 = vmatpush.bf16.msra.mxu0 0
    %685 = vmatpush.bf16.msra.mxu0 0
    %686 = vmatpush.bf16.msra.mxu0 0
    %687 = vmatpush.bf16.msra.mxu0 0
    %688 = vmatpush.bf16.msra.mxu0 %v450
    %689 = vmatpush.bf16.msra.mxu0 %v418
    %690 = vmatmul.bf16.gmra.mxu0 %v537
    %v691 = vpop.f32.mrf.mxu0
    %v692 = vadd.f32 %v162, %v691
    %v693 = vpop.f32.mrf.mxu0
    %694 = vdwg.mxu0
    %695 = vmatpush.bf16.msra.mxu0 0
    %696 = vmatpush.bf16.msra.mxu0 0
    %697 = vmatpush.bf16.msra.mxu0 0
    %698 = vmatpush.bf16.msra.mxu0 0
    %699 = vmatpush.bf16.msra.mxu0 0
    %700 = vmatpush.bf16.msra.mxu0 0
    %701 = vmatpush.bf16.msra.mxu0 %v451
    %702 = vmatpush.bf16.msra.mxu0 %v419
    %703 = vmatmul.bf16.gmra.mxu0 %v537
    %v704 = vpop.f32.mrf.mxu0
    %v705 = vadd.f32 %v163, %v704
    %v706 = vpop.f32.mrf.mxu0
    %707 = vdwg.mxu0
    %708 = vmatpush.bf16.msra.mxu0 0
    %709 = vmatpush.bf16.msra.mxu0 0
    %710 = vmatpush.bf16.msra.mxu0 0
    %711 = vmatpush.bf16.msra.mxu0 0
    %712 = vmatpush.bf16.msra.mxu0 0
    %713 = vmatpush.bf16.msra.mxu0 0
    %714 = vmatpush.bf16.msra.mxu0 %v452
    %715 = vmatpush.bf16.msra.mxu0 %v420
    %716 = vmatmul.bf16.gmra.mxu0 %v537
    %v717 = vpop.f32.mrf.mxu0
    %v718 = vadd.f32 %v164, %v717
    %v719 = vpop.f32.mrf.mxu0
    %720 = vdwg.mxu0
    %721 = vmatpush.bf16.msra.mxu0 0
    %722 = vmatpush.bf16.msra.mxu0 0
    %723 = vmatpush.bf16.msra.mxu0 0
    %724 = vmatpush.bf16.msra.mxu0 0
    %725 = vmatpush.bf16.msra.mxu0 0
    %726 = vmatpush.bf16.msra.mxu0 0
    %727 = vmatpush.bf16.msra.mxu0 %v453
    %728 = vmatpush.bf16.msra.mxu0 %v421
    %729 = vmatmul.bf16.gmra.mxu0 %v537
    %v730 = vpop.f32.mrf.mxu0
    %v731 = vadd.f32 %v165, %v730
    %v732 = vpop.f32.mrf.mxu0
    %733 = vdwg.mxu0
    %734 = vmatpush.bf16.msra.mxu0 0
    %735 = vmatpush.bf16.msra.mxu0 0
    %736 = vmatpush.bf16.msra.mxu0 0
    %737 = vmatpush.bf16.msra.mxu0 0
    %738 = vmatpush.bf16.msra.mxu0 0
    %739 = vmatpush.bf16.msra.mxu0 0
    %740 = vmatpush.bf16.msra.mxu0 %v454
    %741 = vmatpush.bf16.msra.mxu0 %v422
    %742 = vmatmul.bf16.gmra.mxu0 %v537
    %v743 = vpop.f32.mrf.mxu0
    %v744 = vadd.f32 %v166, %v743
    %v745 = vpop.f32.mrf.mxu0
    %746 = vdwg.mxu0
    %747 = vmatpush.bf16.msra.mxu0 0
    %748 = vmatpush.bf16.msra.mxu0 0
    %749 = vmatpush.bf16.msra.mxu0 0
    %750 = vmatpush.bf16.msra.mxu0 0
    %751 = vmatpush.bf16.msra.mxu0 0
    %752 = vmatpush.bf16.msra.mxu0 0
    %753 = vmatpush.bf16.msra.mxu0 %v455
    %754 = vmatpush.bf16.msra.mxu0 %v423
    %755 = vmatmul.bf16.gmra.mxu0 %v537
    %v756 = vpop.f32.mrf.mxu0
    %v757 = vadd.f32 %v167, %v756
    %v758 = vpop.f32.mrf.mxu0
    %759 = vdwg.mxu0
    %760 = vmatpush.bf16.msra.mxu0 0
    %761 = vmatpush.bf16.msra.mxu0 0
    %762 = vmatpush.bf16.msra.mxu0 0
    %763 = vmatpush.bf16.msra.mxu0 0
    %764 = vmatpush.bf16.msra.mxu0 0
    %765 = vmatpush.bf16.msra.mxu0 0
    %766 = vmatpush.bf16.msra.mxu0 %v456
    %767 = vmatpush.bf16.msra.mxu0 %v424
    %768 = vmatmul.bf16.gmra.mxu0 %v537
    %v769 = vpop.f32.mrf.mxu0
    %v770 = vadd.f32 %v168, %v769
    %v771 = vpop.f32.mrf.mxu0
    %772 = vdwg.mxu0
    %773 = vmatpush.bf16.msra.mxu0 0
    %774 = vmatpush.bf16.msra.mxu0 0
    %775 = vmatpush.bf16.msra.mxu0 0
    %776 = vmatpush.bf16.msra.mxu0 0
    %777 = vmatpush.bf16.msra.mxu0 0
    %778 = vmatpush.bf16.msra.mxu0 0
    %779 = vmatpush.bf16.msra.mxu0 %v457
    %780 = vmatpush.bf16.msra.mxu0 %v425
    %781 = vmatmul.bf16.gmra.mxu0 %v537
    %v782 = vpop.f32.mrf.mxu0
    %v783 = vadd.f32 %v169, %v782
    %v784 = vpop.f32.mrf.mxu0
    %785 = vdwg.mxu0
    %786 = vmatpush.bf16.msra.mxu0 0
    %787 = vmatpush.bf16.msra.mxu0 0
    %788 = vmatpush.bf16.msra.mxu0 0
    %789 = vmatpush.bf16.msra.mxu0 0
    %790 = vmatpush.bf16.msra.mxu0 0
    %791 = vmatpush.bf16.msra.mxu0 0
    %792 = vmatpush.bf16.msra.mxu0 %v458
    %793 = vmatpush.bf16.msra.mxu0 %v426
    %794 = vmatmul.bf16.gmra.mxu0 %v537
    %v795 = vpop.f32.mrf.mxu0
    %v796 = vadd.f32 %v170, %v795
    %v797 = vpop.f32.mrf.mxu0
    %798 = vdwg.mxu0
    %799 = vmatpush.bf16.msra.mxu0 0
    %800 = vmatpush.bf16.msra.mxu0 0
    %801 = vmatpush.bf16.msra.mxu0 0
    %802 = vmatpush.bf16.msra.mxu0 0
    %803 = vmatpush.bf16.msra.mxu0 0
    %804 = vmatpush.bf16.msra.mxu0 0
    %805 = vmatpush.bf16.msra.mxu0 %v459
    %806 = vmatpush.bf16.msra.mxu0 %v427
    %807 = vmatmul.bf16.gmra.mxu0 %v537
    %v808 = vpop.f32.mrf.mxu0
    %v809 = vadd.f32 %v171, %v808
    %v810 = vpop.f32.mrf.mxu0
    %811 = vdwg.mxu0
    %812 = vmatpush.bf16.msra.mxu0 0
    %813 = vmatpush.bf16.msra.mxu0 0
    %814 = vmatpush.bf16.msra.mxu0 0
    %815 = vmatpush.bf16.msra.mxu0 0
    %816 = vmatpush.bf16.msra.mxu0 0
    %817 = vmatpush.bf16.msra.mxu0 0
    %818 = vmatpush.bf16.msra.mxu0 %v460
    %819 = vmatpush.bf16.msra.mxu0 %v428
    %820 = vmatmul.bf16.gmra.mxu0 %v537
    %v821 = vpop.f32.mrf.mxu0
    %v822 = vadd.f32 %v172, %v821
    %v823 = vpop.f32.mrf.mxu0
    %824 = vdwg.mxu0
    %825 = vmatpush.bf16.msra.mxu0 0
    %826 = vmatpush.bf16.msra.mxu0 0
    %827 = vmatpush.bf16.msra.mxu0 0
    %828 = vmatpush.bf16.msra.mxu0 0
    %829 = vmatpush.bf16.msra.mxu0 0
    %830 = vmatpush.bf16.msra.mxu0 0
    %831 = vmatpush.bf16.msra.mxu0 %v461
    %832 = vmatpush.bf16.msra.mxu0 %v429
    %833 = vmatmul.bf16.gmra.mxu0 %v537
    %v834 = vpop.f32.mrf.mxu0
    %v835 = vadd.f32 %v173, %v834
    %v836 = vpop.f32.mrf.mxu0
    %837 = vdwg.mxu0
    %838 = vmatpush.bf16.msra.mxu0 0
    %839 = vmatpush.bf16.msra.mxu0 0
    %840 = vmatpush.bf16.msra.mxu0 0
    %841 = vmatpush.bf16.msra.mxu0 0
    %842 = vmatpush.bf16.msra.mxu0 0
    %843 = vmatpush.bf16.msra.mxu0 0
    %844 = vmatpush.bf16.msra.mxu0 %v462
    %845 = vmatpush.bf16.msra.mxu0 %v430
    %846 = vmatmul.bf16.gmra.mxu0 %v537
    %v847 = vpop.f32.mrf.mxu0
    %v848 = vadd.f32 %v174, %v847
    %v849 = vpop.f32.mrf.mxu0
    %850 = vdwg.mxu0
    %851 = vmatpush.bf16.msra.mxu0 0
    %852 = vmatpush.bf16.msra.mxu0 0
    %853 = vmatpush.bf16.msra.mxu0 0
    %854 = vmatpush.bf16.msra.mxu0 0
    %855 = vmatpush.bf16.msra.mxu0 0
    %856 = vmatpush.bf16.msra.mxu0 0
    %857 = vmatpush.bf16.msra.mxu0 %v463
    %858 = vmatpush.bf16.msra.mxu0 %v431
    %859 = vmatmul.bf16.gmra.mxu0 %v537
    %v860 = vpop.f32.mrf.mxu0
    %v861 = vadd.f32 %v175, %v860
    %v862 = vpop.f32.mrf.mxu0
    %863 = vdwg.mxu0
    %864 = vmatpush.bf16.msra.mxu0 0
    %865 = vmatpush.bf16.msra.mxu0 0
    %866 = vmatpush.bf16.msra.mxu0 0
    %867 = vmatpush.bf16.msra.mxu0 0
    %868 = vmatpush.bf16.msra.mxu0 0
    %869 = vmatpush.bf16.msra.mxu0 0
    %870 = vmatpush.bf16.msra.mxu0 %v464
    %871 = vmatpush.bf16.msra.mxu0 %v432
    %872 = vmatmul.bf16.gmra.mxu0 %v537
    %v873 = vpop.f32.mrf.mxu0
    %v874 = vadd.f32 %v176, %v873
    %v875 = vpop.f32.mrf.mxu0
    %876 = vdwg.mxu0
    %877 = vmatpush.bf16.msra.mxu0 0
    %878 = vmatpush.bf16.msra.mxu0 0
    %879 = vmatpush.bf16.msra.mxu0 0
    %880 = vmatpush.bf16.msra.mxu0 0
    %881 = vmatpush.bf16.msra.mxu0 0
    %882 = vmatpush.bf16.msra.mxu0 0
    %883 = vmatpush.bf16.msra.mxu0 %v465
    %884 = vmatpush.bf16.msra.mxu0 %v433
    %885 = vmatmul.bf16.gmra.mxu0 %v537
    %v886 = vpop.f32.mrf.mxu0
    %v887 = vadd.f32 %v177, %v886
    %v888 = vpop.f32.mrf.mxu0
    %889 = vdwg.mxu0
    %890 = vmatpush.bf16.msra.mxu0 0
    %891 = vmatpush.bf16.msra.mxu0 0
    %892 = vmatpush.bf16.msra.mxu0 0
    %893 = vmatpush.bf16.msra.mxu0 0
    %894 = vmatpush.bf16.msra.mxu0 0
    %895 = vmatpush.bf16.msra.mxu0 0
    %896 = vmatpush.bf16.msra.mxu0 %v466
    %897 = vmatpush.bf16.msra.mxu0 %v434
    %898 = vmatmul.bf16.gmra.mxu0 %v537
    %v899 = vpop.f32.mrf.mxu0
    %v900 = vadd.f32 %v178, %v899
    %v901 = vpop.f32.mrf.mxu0
    %902 = vdwg.mxu0
    %903 = vmatpush.bf16.msra.mxu0 0
    %904 = vmatpush.bf16.msra.mxu0 0
    %905 = vmatpush.bf16.msra.mxu0 0
    %906 = vmatpush.bf16.msra.mxu0 0
    %907 = vmatpush.bf16.msra.mxu0 0
    %908 = vmatpush.bf16.msra.mxu0 0
    %909 = vmatpush.bf16.msra.mxu0 %v467
    %910 = vmatpush.bf16.msra.mxu0 %v435
    %911 = vmatmul.bf16.gmra.mxu0 %v537
    %v912 = vpop.f32.mrf.mxu0
    %v913 = vadd.f32 %v179, %v912
    %v914 = vpop.f32.mrf.mxu0
    %915 = vdwg.mxu0
    %916 = vmatpush.bf16.msra.mxu0 0
    %917 = vmatpush.bf16.msra.mxu0 0
    %918 = vmatpush.bf16.msra.mxu0 0
    %919 = vmatpush.bf16.msra.mxu0 0
    %920 = vmatpush.bf16.msra.mxu0 0
    %921 = vmatpush.bf16.msra.mxu0 0
    %922 = vmatpush.bf16.msra.mxu0 %v468
    %923 = vmatpush.bf16.msra.mxu0 %v436
    %924 = vmatmul.bf16.gmra.mxu0 %v537
    %v925 = vpop.f32.mrf.mxu0
    %v926 = vadd.f32 %v180, %v925
    %v927 = vpop.f32.mrf.mxu0
    %928 = vdwg.mxu0
    %929 = vmatpush.bf16.msra.mxu0 0
    %930 = vmatpush.bf16.msra.mxu0 0
    %931 = vmatpush.bf16.msra.mxu0 0
    %932 = vmatpush.bf16.msra.mxu0 0
    %933 = vmatpush.bf16.msra.mxu0 0
    %934 = vmatpush.bf16.msra.mxu0 0
    %935 = vmatpush.bf16.msra.mxu0 %v469
    %936 = vmatpush.bf16.msra.mxu0 %v437
    %937 = vmatmul.bf16.gmra.mxu0 %v537
    %v938 = vpop.f32.mrf.mxu0
    %v939 = vadd.f32 %v181, %v938
    %v940 = vpop.f32.mrf.mxu0
    %941 = vdwg.mxu0
    %942 = vmatpush.bf16.msra.mxu0 0
    %943 = vmatpush.bf16.msra.mxu0 0
    %944 = vmatpush.bf16.msra.mxu0 0
    %945 = vmatpush.bf16.msra.mxu0 0
    %946 = vmatpush.bf16.msra.mxu0 0
    %947 = vmatpush.bf16.msra.mxu0 0
    %948 = vmatpush.bf16.msra.mxu0 %v470
    %949 = vmatpush.bf16.msra.mxu0 %v438
    %950 = vmatmul.bf16.gmra.mxu0 %v537
    %v951 = vpop.f32.mrf.mxu0
    %v952 = vadd.f32 %v182, %v951
    %v953 = vpop.f32.mrf.mxu0
    %954 = vdwg.mxu0
    %vm955 = vcmask 1041408
    %v956 = vsel %vm955, %v549, 0.0
    %v957 = vrot.slane %v956, 4
    %v958 = vadd.f32 %v956, %v957
    %v959 = vrot.slane %v958, 2
    %v960 = vadd.f32 %v958, %v959
    %v961 = vrot.slane %v960, 1
    %v962 = vadd.f32 %v960, %v961
    %v963 = vsel %vm955, %v562, 0.0
    %v964 = vrot.slane %v963, 4
    %v965 = vadd.f32 %v963, %v964
    %v966 = vrot.slane %v965, 2
    %v967 = vadd.f32 %v965, %v966
    %v968 = vrot.slane %v967, 1
    %v969 = vadd.f32 %v967, %v968
    %v970 = vsel %vm955, %v575, 0.0
    %v971 = vrot.slane %v970, 4
    %v972 = vadd.f32 %v970, %v971
    %v973 = vrot.slane %v972, 2
    %v974 = vadd.f32 %v972, %v973
    %v975 = vrot.slane %v974, 1
    %v976 = vadd.f32 %v974, %v975
    %v977 = vsel %vm955, %v588, 0.0
    %v978 = vrot.slane %v977, 4
    %v979 = vadd.f32 %v977, %v978
    %v980 = vrot.slane %v979, 2
    %v981 = vadd.f32 %v979, %v980
    %v982 = vrot.slane %v981, 1
    %v983 = vadd.f32 %v981, %v982
    %v984 = vsel %vm955, %v601, 0.0
    %v985 = vrot.slane %v984, 4
    %v986 = vadd.f32 %v984, %v985
    %v987 = vrot.slane %v986, 2
    %v988 = vadd.f32 %v986, %v987
    %v989 = vrot.slane %v988, 1
    %v990 = vadd.f32 %v988, %v989
    %v991 = vsel %vm955, %v614, 0.0
    %v992 = vrot.slane %v991, 4
    %v993 = vadd.f32 %v991, %v992
    %v994 = vrot.slane %v993, 2
    %v995 = vadd.f32 %v993, %v994
    %v996 = vrot.slane %v995, 1
    %v997 = vadd.f32 %v995, %v996
    %v998 = vsel %vm955, %v627, 0.0
    %v999 = vrot.slane %v998, 4
    %v1000 = vadd.f32 %v998, %v999
    %v1001 = vrot.slane %v1000, 2
    %v1002 = vadd.f32 %v1000, %v1001
    %v1003 = vrot.slane %v1002, 1
    %v1004 = vadd.f32 %v1002, %v1003
    %v1005 = vsel %vm955, %v640, 0.0
    %v1006 = vrot.slane %v1005, 4
    %v1007 = vadd.f32 %v1005, %v1006
    %v1008 = vrot.slane %v1007, 2
    %v1009 = vadd.f32 %v1007, %v1008
    %v1010 = vrot.slane %v1009, 1
    %v1011 = vadd.f32 %v1009, %v1010
    %v1012 = vsel %vm955, %v653, 0.0
    %v1013 = vrot.slane %v1012, 4
    %v1014 = vadd.f32 %v1012, %v1013
    %v1015 = vrot.slane %v1014, 2
    %v1016 = vadd.f32 %v1014, %v1015
    %v1017 = vrot.slane %v1016, 1
    %v1018 = vadd.f32 %v1016, %v1017
    %v1019 = vsel %vm955, %v666, 0.0
    %v1020 = vrot.slane %v1019, 4
    %v1021 = vadd.f32 %v1019, %v1020
    %v1022 = vrot.slane %v1021, 2
    %v1023 = vadd.f32 %v1021, %v1022
    %v1024 = vrot.slane %v1023, 1
    %v1025 = vadd.f32 %v1023, %v1024
    %v1026 = vsel %vm955, %v679, 0.0
    %v1027 = vrot.slane %v1026, 4
    %v1028 = vadd.f32 %v1026, %v1027
    %v1029 = vrot.slane %v1028, 2
    %v1030 = vadd.f32 %v1028, %v1029
    %v1031 = vrot.slane %v1030, 1
    %v1032 = vadd.f32 %v1030, %v1031
    %v1033 = vsel %vm955, %v692, 0.0
    %v1034 = vrot.slane %v1033, 4
    %v1035 = vadd.f32 %v1033, %v1034
    %v1036 = vrot.slane %v1035, 2
    %v1037 = vadd.f32 %v1035, %v1036
    %v1038 = vrot.slane %v1037, 1
    %v1039 = vadd.f32 %v1037, %v1038
    %v1040 = vsel %vm955, %v705, 0.0
    %v1041 = vrot.slane %v1040, 4
    %v1042 = vadd.f32 %v1040, %v1041
    %v1043 = vrot.slane %v1042, 2
    %v1044 = vadd.f32 %v1042, %v1043
    %v1045 = vrot.slane %v1044, 1
    %v1046 = vadd.f32 %v1044, %v1045
    %v1047 = vsel %vm955, %v718, 0.0
    %v1048 = vrot.slane %v1047, 4
    %v1049 = vadd.f32 %v1047, %v1048
    %v1050 = vrot.slane %v1049, 2
    %v1051 = vadd.f32 %v1049, %v1050
    %v1052 = vrot.slane %v1051, 1
    %v1053 = vadd.f32 %v1051, %v1052
    %v1054 = vsel %vm955, %v731, 0.0
    %v1055 = vrot.slane %v1054, 4
    %v1056 = vadd.f32 %v1054, %v1055
    %v1057 = vrot.slane %v1056, 2
    %v1058 = vadd.f32 %v1056, %v1057
    %v1059 = vrot.slane %v1058, 1
    %v1060 = vadd.f32 %v1058, %v1059
    %v1061 = vsel %vm955, %v744, 0.0
    %v1062 = vrot.slane %v1061, 4
    %v1063 = vadd.f32 %v1061, %v1062
    %v1064 = vrot.slane %v1063, 2
    %v1065 = vadd.f32 %v1063, %v1064
    %v1066 = vrot.slane %v1065, 1
    %v1067 = vadd.f32 %v1065, %v1066
    %v1068 = vsel %vm955, %v757, 0.0
    %v1069 = vrot.slane %v1068, 4
    %v1070 = vadd.f32 %v1068, %v1069
    %v1071 = vrot.slane %v1070, 2
    %v1072 = vadd.f32 %v1070, %v1071
    %v1073 = vrot.slane %v1072, 1
    %v1074 = vadd.f32 %v1072, %v1073
    %v1075 = vsel %vm955, %v770, 0.0
    %v1076 = vrot.slane %v1075, 4
    %v1077 = vadd.f32 %v1075, %v1076
    %v1078 = vrot.slane %v1077, 2
    %v1079 = vadd.f32 %v1077, %v1078
    %v1080 = vrot.slane %v1079, 1
    %v1081 = vadd.f32 %v1079, %v1080
    %v1082 = vsel %vm955, %v783, 0.0
    %v1083 = vrot.slane %v1082, 4
    %v1084 = vadd.f32 %v1082, %v1083
    %v1085 = vrot.slane %v1084, 2
    %v1086 = vadd.f32 %v1084, %v1085
    %v1087 = vrot.slane %v1086, 1
    %v1088 = vadd.f32 %v1086, %v1087
    %v1089 = vsel %vm955, %v796, 0.0
    %v1090 = vrot.slane %v1089, 4
    %v1091 = vadd.f32 %v1089, %v1090
    %v1092 = vrot.slane %v1091, 2
    %v1093 = vadd.f32 %v1091, %v1092
    %v1094 = vrot.slane %v1093, 1
    %v1095 = vadd.f32 %v1093, %v1094
    %v1096 = vsel %vm955, %v809, 0.0
    %v1097 = vrot.slane %v1096, 4
    %v1098 = vadd.f32 %v1096, %v1097
    %v1099 = vrot.slane %v1098, 2
    %v1100 = vadd.f32 %v1098, %v1099
    %v1101 = vrot.slane %v1100, 1
    %v1102 = vadd.f32 %v1100, %v1101
    %v1103 = vsel %vm955, %v822, 0.0
    %v1104 = vrot.slane %v1103, 4
    %v1105 = vadd.f32 %v1103, %v1104
    %v1106 = vrot.slane %v1105, 2
    %v1107 = vadd.f32 %v1105, %v1106
    %v1108 = vrot.slane %v1107, 1
    %v1109 = vadd.f32 %v1107, %v1108
    %v1110 = vsel %vm955, %v835, 0.0
    %v1111 = vrot.slane %v1110, 4
    %v1112 = vadd.f32 %v1110, %v1111
    %v1113 = vrot.slane %v1112, 2
    %v1114 = vadd.f32 %v1112, %v1113
    %v1115 = vrot.slane %v1114, 1
    %v1116 = vadd.f32 %v1114, %v1115
    %v1117 = vsel %vm955, %v848, 0.0
    %v1118 = vrot.slane %v1117, 4
    %v1119 = vadd.f32 %v1117, %v1118
    %v1120 = vrot.slane %v1119, 2
    %v1121 = vadd.f32 %v1119, %v1120
    %v1122 = vrot.slane %v1121, 1
    %v1123 = vadd.f32 %v1121, %v1122
    %v1124 = vsel %vm955, %v861, 0.0
    %v1125 = vrot.slane %v1124, 4
    %v1126 = vadd.f32 %v1124, %v1125
    %v1127 = vrot.slane %v1126, 2
    %v1128 = vadd.f32 %v1126, %v1127
    %v1129 = vrot.slane %v1128, 1
    %v1130 = vadd.f32 %v1128, %v1129
    %v1131 = vsel %vm955, %v874, 0.0
    %v1132 = vrot.slane %v1131, 4
    %v1133 = vadd.f32 %v1131, %v1132
    %v1134 = vrot.slane %v1133, 2
    %v1135 = vadd.f32 %v1133, %v1134
    %v1136 = vrot.slane %v1135, 1
    %v1137 = vadd.f32 %v1135, %v1136
    %v1138 = vsel %vm955, %v887, 0.0
    %v1139 = vrot.slane %v1138, 4
    %v1140 = vadd.f32 %v1138, %v1139
    %v1141 = vrot.slane %v1140, 2
    %v1142 = vadd.f32 %v1140, %v1141
    %v1143 = vrot.slane %v1142, 1
    %v1144 = vadd.f32 %v1142, %v1143
    %v1145 = vsel %vm955, %v900, 0.0
    %v1146 = vrot.slane %v1145, 4
    %v1147 = vadd.f32 %v1145, %v1146
    %v1148 = vrot.slane %v1147, 2
    %v1149 = vadd.f32 %v1147, %v1148
    %v1150 = vrot.slane %v1149, 1
    %v1151 = vadd.f32 %v1149, %v1150
    %v1152 = vsel %vm955, %v913, 0.0
    %v1153 = vrot.slane %v1152, 4
    %v1154 = vadd.f32 %v1152, %v1153
    %v1155 = vrot.slane %v1154, 2
    %v1156 = vadd.f32 %v1154, %v1155
    %v1157 = vrot.slane %v1156, 1
    %v1158 = vadd.f32 %v1156, %v1157
    %v1159 = vsel %vm955, %v926, 0.0
    %v1160 = vrot.slane %v1159, 4
    %v1161 = vadd.f32 %v1159, %v1160
    %v1162 = vrot.slane %v1161, 2
    %v1163 = vadd.f32 %v1161, %v1162
    %v1164 = vrot.slane %v1163, 1
    %v1165 = vadd.f32 %v1163, %v1164
    %v1166 = vsel %vm955, %v939, 0.0
    %v1167 = vrot.slane %v1166, 4
    %v1168 = vadd.f32 %v1166, %v1167
    %v1169 = vrot.slane %v1168, 2
    %v1170 = vadd.f32 %v1168, %v1169
    %v1171 = vrot.slane %v1170, 1
    %v1172 = vadd.f32 %v1170, %v1171
    %v1173 = vsel %vm955, %v952, 0.0
    %v1174 = vrot.slane %v1173, 4
    %v1175 = vadd.f32 %v1173, %v1174
    %v1176 = vrot.slane %v1175, 2
    %v1177 = vadd.f32 %v1175, %v1176
    %v1178 = vrot.slane %v1177, 1
    %v1179 = vadd.f32 %v1177, %v1178
    %v1180 = vrcp.pop 2.0
    %v1181 = vmul.f32 2.0, %v1180
    %v1182 = vsub.f32 1.0, %v1181
    %v1183 = vmul.f32 %v1180, %v1182
    %v1184 = vadd.f32 %v1180, %v1183
    %vm1185 = vweird.f32 %v1180
    %v1186 = vsel %vm1185, %v1180, %v1184
    %v1187 = vmul.f32 %v962, %v1186
    %v1188 = vmul.f32 %v969, %v1186
    %v1189 = vmul.f32 %v976, %v1186
    %v1190 = vmul.f32 %v983, %v1186
    %v1191 = vmul.f32 %v990, %v1186
    %v1192 = vmul.f32 %v997, %v1186
    %v1193 = vmul.f32 %v1004, %v1186
    %v1194 = vmul.f32 %v1011, %v1186
    %v1195 = vmul.f32 %v1018, %v1186
    %v1196 = vmul.f32 %v1025, %v1186
    %v1197 = vmul.f32 %v1032, %v1186
    %v1198 = vmul.f32 %v1039, %v1186
    %v1199 = vmul.f32 %v1046, %v1186
    %v1200 = vmul.f32 %v1053, %v1186
    %v1201 = vmul.f32 %v1060, %v1186
    %v1202 = vmul.f32 %v1067, %v1186
    %v1203 = vmul.f32 %v1074, %v1186
    %v1204 = vmul.f32 %v1081, %v1186
    %v1205 = vmul.f32 %v1088, %v1186
    %v1206 = vmul.f32 %v1095, %v1186
    %v1207 = vmul.f32 %v1102, %v1186
    %v1208 = vmul.f32 %v1109, %v1186
    %v1209 = vmul.f32 %v1116, %v1186
    %v1210 = vmul.f32 %v1123, %v1186
    %v1211 = vmul.f32 %v1130, %v1186
    %v1212 = vmul.f32 %v1137, %v1186
    %v1213 = vmul.f32 %v1144, %v1186
    %v1214 = vmul.f32 %v1151, %v1186
    %v1215 = vmul.f32 %v1158, %v1186
    %v1216 = vmul.f32 %v1165, %v1186
    %v1217 = vmul.f32 %v1172, %v1186
    %v1218 = vmul.f32 %v1179, %v1186
    %v1219 = vsub.f32 %v549, %v1187
    %v1220 = vsub.f32 %v562, %v1188
    %v1221 = vsub.f32 %v575, %v1189
    %v1222 = vsub.f32 %v588, %v1190
    %v1223 = vsub.f32 %v601, %v1191
    %v1224 = vsub.f32 %v614, %v1192
    %v1225 = vsub.f32 %v627, %v1193
    %v1226 = vsub.f32 %v640, %v1194
    %v1227 = vsub.f32 %v653, %v1195
    %v1228 = vsub.f32 %v666, %v1196
    %v1229 = vsub.f32 %v679, %v1197
    %v1230 = vsub.f32 %v692, %v1198
    %v1231 = vsub.f32 %v705, %v1199
    %v1232 = vsub.f32 %v718, %v1200
    %v1233 = vsub.f32 %v731, %v1201
    %v1234 = vsub.f32 %v744, %v1202
    %v1235 = vsub.f32 %v757, %v1203
    %v1236 = vsub.f32 %v770, %v1204
    %v1237 = vsub.f32 %v783, %v1205
    %v1238 = vsub.f32 %v796, %v1206
    %v1239 = vsub.f32 %v809, %v1207
    %v1240 = vsub.f32 %v822, %v1208
    %v1241 = vsub.f32 %v835, %v1209
    %v1242 = vsub.f32 %v848, %v1210
    %v1243 = vsub.f32 %v861, %v1211
    %v1244 = vsub.f32 %v874, %v1212
    %v1245 = vsub.f32 %v887, %v1213
    %v1246 = vsub.f32 %v900, %v1214
    %v1247 = vsub.f32 %v913, %v1215
    %v1248 = vsub.f32 %v926, %v1216
    %v1249 = vsub.f32 %v939, %v1217
    %v1250 = vsub.f32 %v952, %v1218
    %v1251 = vmul.f32 %v1219, %v1219
    %v1252 = vmul.f32 %v1220, %v1220
    %v1253 = vmul.f32 %v1221, %v1221
    %v1254 = vmul.f32 %v1222, %v1222
    %v1255 = vmul.f32 %v1223, %v1223
    %v1256 = vmul.f32 %v1224, %v1224
    %v1257 = vmul.f32 %v1225, %v1225
    %v1258 = vmul.f32 %v1226, %v1226
    %v1259 = vmul.f32 %v1227, %v1227
    %v1260 = vmul.f32 %v1228, %v1228
    %v1261 = vmul.f32 %v1229, %v1229
    %v1262 = vmul.f32 %v1230, %v1230
    %v1263 = vmul.f32 %v1231, %v1231
    %v1264 = vmul.f32 %v1232, %v1232
    %v1265 = vmul.f32 %v1233, %v1233
    %v1266 = vmul.f32 %v1234, %v1234
    %v1267 = vmul.f32 %v1235, %v1235
    %v1268 = vmul.f32 %v1236, %v1236
    %v1269 = vmul.f32 %v1237, %v1237
    %v1270 = vmul.f32 %v1238, %v1238
    %v1271 = vmul.f32 %v1239, %v1239
    %v1272 = vmul.f32 %v1240, %v1240
    %v1273 = vmul.f32 %v1241, %v1241
    %v1274 = vmul.f32 %v1242, %v1242
    %v1275 = vmul.f32 %v1243, %v1243
    %v1276 = vmul.f32 %v1244, %v1244
    %v1277 = vmul.f32 %v1245, %v1245
    %v1278 = vmul.f32 %v1246, %v1246
    %v1279 = vmul.f32 %v1247, %v1247
    %v1280 = vmul.f32 %v1248, %v1248
    %v1281 = vmul.f32 %v1249, %v1249
    %v1282 = vmul.f32 %v1250, %v1250
    %v1283 = vsel %vm955, %v1251, 0.0
    %v1284 = vrot.slane %v1283, 4
    %v1285 = vadd.f32 %v1283, %v1284
    %v1286 = vrot.slane %v1285, 2
    %v1287 = vadd.f32 %v1285, %v1286
    %v1288 = vrot.slane %v1287, 1
    %v1289 = vadd.f32 %v1287, %v1288
    %v1290 = vsel %vm955, %v1252, 0.0
    %v1291 = vrot.slane %v1290, 4
    %v1292 = vadd.f32 %v1290, %v1291
    %v1293 = vrot.slane %v1292, 2
    %v1294 = vadd.f32 %v1292, %v1293
    %v1295 = vrot.slane %v1294, 1
    %v1296 = vadd.f32 %v1294, %v1295
    %v1297 = vsel %vm955, %v1253, 0.0
    %v1298 = vrot.slane %v1297, 4
    %v1299 = vadd.f32 %v1297, %v1298
    %v1300 = vrot.slane %v1299, 2
    %v1301 = vadd.f32 %v1299, %v1300
    %v1302 = vrot.slane %v1301, 1
    %v1303 = vadd.f32 %v1301, %v1302
    %v1304 = vsel %vm955, %v1254, 0.0
    %v1305 = vrot.slane %v1304, 4
    %v1306 = vadd.f32 %v1304, %v1305
    %v1307 = vrot.slane %v1306, 2
    %v1308 = vadd.f32 %v1306, %v1307
    %v1309 = vrot.slane %v1308, 1
    %v1310 = vadd.f32 %v1308, %v1309
    %v1311 = vsel %vm955, %v1255, 0.0
    %v1312 = vrot.slane %v1311, 4
    %v1313 = vadd.f32 %v1311, %v1312
    %v1314 = vrot.slane %v1313, 2
    %v1315 = vadd.f32 %v1313, %v1314
    %v1316 = vrot.slane %v1315, 1
    %v1317 = vadd.f32 %v1315, %v1316
    %v1318 = vsel %vm955, %v1256, 0.0
    %v1319 = vrot.slane %v1318, 4
    %v1320 = vadd.f32 %v1318, %v1319
    %v1321 = vrot.slane %v1320, 2
    %v1322 = vadd.f32 %v1320, %v1321
    %v1323 = vrot.slane %v1322, 1
    %v1324 = vadd.f32 %v1322, %v1323
    %v1325 = vsel %vm955, %v1257, 0.0
    %v1326 = vrot.slane %v1325, 4
    %v1327 = vadd.f32 %v1325, %v1326
    %v1328 = vrot.slane %v1327, 2
    %v1329 = vadd.f32 %v1327, %v1328
    %v1330 = vrot.slane %v1329, 1
    %v1331 = vadd.f32 %v1329, %v1330
    %v1332 = vsel %vm955, %v1258, 0.0
    %v1333 = vrot.slane %v1332, 4
    %v1334 = vadd.f32 %v1332, %v1333
    %v1335 = vrot.slane %v1334, 2
    %v1336 = vadd.f32 %v1334, %v1335
    %v1337 = vrot.slane %v1336, 1
    %v1338 = vadd.f32 %v1336, %v1337
    %v1339 = vsel %vm955, %v1259, 0.0
    %v1340 = vrot.slane %v1339, 4
    %v1341 = vadd.f32 %v1339, %v1340
    %v1342 = vrot.slane %v1341, 2
    %v1343 = vadd.f32 %v1341, %v1342
    %v1344 = vrot.slane %v1343, 1
    %v1345 = vadd.f32 %v1343, %v1344
    %v1346 = vsel %vm955, %v1260, 0.0
    %v1347 = vrot.slane %v1346, 4
    %v1348 = vadd.f32 %v1346, %v1347
    %v1349 = vrot.slane %v1348, 2
    %v1350 = vadd.f32 %v1348, %v1349
    %v1351 = vrot.slane %v1350, 1
    %v1352 = vadd.f32 %v1350, %v1351
    %v1353 = vsel %vm955, %v1261, 0.0
    %v1354 = vrot.slane %v1353, 4
    %v1355 = vadd.f32 %v1353, %v1354
    %v1356 = vrot.slane %v1355, 2
    %v1357 = vadd.f32 %v1355, %v1356
    %v1358 = vrot.slane %v1357, 1
    %v1359 = vadd.f32 %v1357, %v1358
    %v1360 = vsel %vm955, %v1262, 0.0
    %v1361 = vrot.slane %v1360, 4
    %v1362 = vadd.f32 %v1360, %v1361
    %v1363 = vrot.slane %v1362, 2
    %v1364 = vadd.f32 %v1362, %v1363
    %v1365 = vrot.slane %v1364, 1
    %v1366 = vadd.f32 %v1364, %v1365
    %v1367 = vsel %vm955, %v1263, 0.0
    %v1368 = vrot.slane %v1367, 4
    %v1369 = vadd.f32 %v1367, %v1368
    %v1370 = vrot.slane %v1369, 2
    %v1371 = vadd.f32 %v1369, %v1370
    %v1372 = vrot.slane %v1371, 1
    %v1373 = vadd.f32 %v1371, %v1372
    %v1374 = vsel %vm955, %v1264, 0.0
    %v1375 = vrot.slane %v1374, 4
    %v1376 = vadd.f32 %v1374, %v1375
    %v1377 = vrot.slane %v1376, 2
    %v1378 = vadd.f32 %v1376, %v1377
    %v1379 = vrot.slane %v1378, 1
    %v1380 = vadd.f32 %v1378, %v1379
    %v1381 = vsel %vm955, %v1265, 0.0
    %v1382 = vrot.slane %v1381, 4
    %v1383 = vadd.f32 %v1381, %v1382
    %v1384 = vrot.slane %v1383, 2
    %v1385 = vadd.f32 %v1383, %v1384
    %v1386 = vrot.slane %v1385, 1
    %v1387 = vadd.f32 %v1385, %v1386
    %v1388 = vsel %vm955, %v1266, 0.0
    %v1389 = vrot.slane %v1388, 4
    %v1390 = vadd.f32 %v1388, %v1389
    %v1391 = vrot.slane %v1390, 2
    %v1392 = vadd.f32 %v1390, %v1391
    %v1393 = vrot.slane %v1392, 1
    %v1394 = vadd.f32 %v1392, %v1393
    %v1395 = vsel %vm955, %v1267, 0.0
    %v1396 = vrot.slane %v1395, 4
    %v1397 = vadd.f32 %v1395, %v1396
    %v1398 = vrot.slane %v1397, 2
    %v1399 = vadd.f32 %v1397, %v1398
    %v1400 = vrot.slane %v1399, 1
    %v1401 = vadd.f32 %v1399, %v1400
    %v1402 = vsel %vm955, %v1268, 0.0
    %v1403 = vrot.slane %v1402, 4
    %v1404 = vadd.f32 %v1402, %v1403
    %v1405 = vrot.slane %v1404, 2
    %v1406 = vadd.f32 %v1404, %v1405
    %v1407 = vrot.slane %v1406, 1
    %v1408 = vadd.f32 %v1406, %v1407
    %v1409 = vsel %vm955, %v1269, 0.0
    %v1410 = vrot.slane %v1409, 4
    %v1411 = vadd.f32 %v1409, %v1410
    %v1412 = vrot.slane %v1411, 2
    %v1413 = vadd.f32 %v1411, %v1412
    %v1414 = vrot.slane %v1413, 1
    %v1415 = vadd.f32 %v1413, %v1414
    %v1416 = vsel %vm955, %v1270, 0.0
    %v1417 = vrot.slane %v1416, 4
    %v1418 = vadd.f32 %v1416, %v1417
    %v1419 = vrot.slane %v1418, 2
    %v1420 = vadd.f32 %v1418, %v1419
    %v1421 = vrot.slane %v1420, 1
    %v1422 = vadd.f32 %v1420, %v1421
    %v1423 = vsel %vm955, %v1271, 0.0
    %v1424 = vrot.slane %v1423, 4
    %v1425 = vadd.f32 %v1423, %v1424
    %v1426 = vrot.slane %v1425, 2
    %v1427 = vadd.f32 %v1425, %v1426
    %v1428 = vrot.slane %v1427, 1
    %v1429 = vadd.f32 %v1427, %v1428
    %v1430 = vsel %vm955, %v1272, 0.0
    %v1431 = vrot.slane %v1430, 4
    %v1432 = vadd.f32 %v1430, %v1431
    %v1433 = vrot.slane %v1432, 2
    %v1434 = vadd.f32 %v1432, %v1433
    %v1435 = vrot.slane %v1434, 1
    %v1436 = vadd.f32 %v1434, %v1435
    %v1437 = vsel %vm955, %v1273, 0.0
    %v1438 = vrot.slane %v1437, 4
    %v1439 = vadd.f32 %v1437, %v1438
    %v1440 = vrot.slane %v1439, 2
    %v1441 = vadd.f32 %v1439, %v1440
    %v1442 = vrot.slane %v1441, 1
    %v1443 = vadd.f32 %v1441, %v1442
    %v1444 = vsel %vm955, %v1274, 0.0
    %v1445 = vrot.slane %v1444, 4
    %v1446 = vadd.f32 %v1444, %v1445
    %v1447 = vrot.slane %v1446, 2
    %v1448 = vadd.f32 %v1446, %v1447
    %v1449 = vrot.slane %v1448, 1
    %v1450 = vadd.f32 %v1448, %v1449
    %v1451 = vsel %vm955, %v1275, 0.0
    %v1452 = vrot.slane %v1451, 4
    %v1453 = vadd.f32 %v1451, %v1452
    %v1454 = vrot.slane %v1453, 2
    %v1455 = vadd.f32 %v1453, %v1454
    %v1456 = vrot.slane %v1455, 1
    %v1457 = vadd.f32 %v1455, %v1456
    %v1458 = vsel %vm955, %v1276, 0.0
    %v1459 = vrot.slane %v1458, 4
    %v1460 = vadd.f32 %v1458, %v1459
    %v1461 = vrot.slane %v1460, 2
    %v1462 = vadd.f32 %v1460, %v1461
    %v1463 = vrot.slane %v1462, 1
    %v1464 = vadd.f32 %v1462, %v1463
    %v1465 = vsel %vm955, %v1277, 0.0
    %v1466 = vrot.slane %v1465, 4
    %v1467 = vadd.f32 %v1465, %v1466
    %v1468 = vrot.slane %v1467, 2
    %v1469 = vadd.f32 %v1467, %v1468
    %v1470 = vrot.slane %v1469, 1
    %v1471 = vadd.f32 %v1469, %v1470
    %v1472 = vsel %vm955, %v1278, 0.0
    %v1473 = vrot.slane %v1472, 4
    %v1474 = vadd.f32 %v1472, %v1473
    %v1475 = vrot.slane %v1474, 2
    %v1476 = vadd.f32 %v1474, %v1475
    %v1477 = vrot.slane %v1476, 1
    %v1478 = vadd.f32 %v1476, %v1477
    %v1479 = vsel %vm955, %v1279, 0.0
    %v1480 = vrot.slane %v1479, 4
    %v1481 = vadd.f32 %v1479, %v1480
    %v1482 = vrot.slane %v1481, 2
    %v1483 = vadd.f32 %v1481, %v1482
    %v1484 = vrot.slane %v1483, 1
    %v1485 = vadd.f32 %v1483, %v1484
    %v1486 = vsel %vm955, %v1280, 0.0
    %v1487 = vrot.slane %v1486, 4
    %v1488 = vadd.f32 %v1486, %v1487
    %v1489 = vrot.slane %v1488, 2
    %v1490 = vadd.f32 %v1488, %v1489
    %v1491 = vrot.slane %v1490, 1
    %v1492 = vadd.f32 %v1490, %v1491
    %v1493 = vsel %vm955, %v1281, 0.0
    %v1494 = vrot.slane %v1493, 4
    %v1495 = vadd.f32 %v1493, %v1494
    %v1496 = vrot.slane %v1495, 2
    %v1497 = vadd.f32 %v1495, %v1496
    %v1498 = vrot.slane %v1497, 1
    %v1499 = vadd.f32 %v1497, %v1498
    %v1500 = vsel %vm955, %v1282, 0.0
    %v1501 = vrot.slane %v1500, 4
    %v1502 = vadd.f32 %v1500, %v1501
    %v1503 = vrot.slane %v1502, 2
    %v1504 = vadd.f32 %v1502, %v1503
    %v1505 = vrot.slane %v1504, 1
    %v1506 = vadd.f32 %v1504, %v1505
    %v1507 = vmul.f32 %v1289, %v1186
    %v1508 = vmul.f32 %v1296, %v1186
    %v1509 = vmul.f32 %v1303, %v1186
    %v1510 = vmul.f32 %v1310, %v1186
    %v1511 = vmul.f32 %v1317, %v1186
    %v1512 = vmul.f32 %v1324, %v1186
    %v1513 = vmul.f32 %v1331, %v1186
    %v1514 = vmul.f32 %v1338, %v1186
    %v1515 = vmul.f32 %v1345, %v1186
    %v1516 = vmul.f32 %v1352, %v1186
    %v1517 = vmul.f32 %v1359, %v1186
    %v1518 = vmul.f32 %v1366, %v1186
    %v1519 = vmul.f32 %v1373, %v1186
    %v1520 = vmul.f32 %v1380, %v1186
    %v1521 = vmul.f32 %v1387, %v1186
    %v1522 = vmul.f32 %v1394, %v1186
    %v1523 = vmul.f32 %v1401, %v1186
    %v1524 = vmul.f32 %v1408, %v1186
    %v1525 = vmul.f32 %v1415, %v1186
    %v1526 = vmul.f32 %v1422, %v1186
    %v1527 = vmul.f32 %v1429, %v1186
    %v1528 = vmul.f32 %v1436, %v1186
    %v1529 = vmul.f32 %v1443, %v1186
    %v1530 = vmul.f32 %v1450, %v1186
    %v1531 = vmul.f32 %v1457, %v1186
    %v1532 = vmul.f32 %v1464, %v1186
    %v1533 = vmul.f32 %v1471, %v1186
    %v1534 = vmul.f32 %v1478, %v1186
    %v1535 = vmul.f32 %v1485, %v1186
    %v1536 = vmul.f32 %v1492, %v1186
    %v1537 = vmul.f32 %v1499, %v1186
    %v1538 = vmul.f32 %v1506, %v1186
    %v1539 = vadd.f32 %v1507, 1e-05
    %v1540 = vadd.f32 %v1508, 1e-05
    %v1541 = vadd.f32 %v1509, 1e-05
    %v1542 = vadd.f32 %v1510, 1e-05
    %v1543 = vadd.f32 %v1511, 1e-05
    %v1544 = vadd.f32 %v1512, 1e-05
    %v1545 = vadd.f32 %v1513, 1e-05
    %v1546 = vadd.f32 %v1514, 1e-05
    %v1547 = vadd.f32 %v1515, 1e-05
    %v1548 = vadd.f32 %v1516, 1e-05
    %v1549 = vadd.f32 %v1517, 1e-05
    %v1550 = vadd.f32 %v1518, 1e-05
    %v1551 = vadd.f32 %v1519, 1e-05
    %v1552 = vadd.f32 %v1520, 1e-05
    %v1553 = vadd.f32 %v1521, 1e-05
    %v1554 = vadd.f32 %v1522, 1e-05
    %v1555 = vadd.f32 %v1523, 1e-05
    %v1556 = vadd.f32 %v1524, 1e-05
    %v1557 = vadd.f32 %v1525, 1e-05
    %v1558 = vadd.f32 %v1526, 1e-05
    %v1559 = vadd.f32 %v1527, 1e-05
    %v1560 = vadd.f32 %v1528, 1e-05
    %v1561 = vadd.f32 %v1529, 1e-05
    %v1562 = vadd.f32 %v1530, 1e-05
    %v1563 = vadd.f32 %v1531, 1e-05
    %v1564 = vadd.f32 %v1532, 1e-05
    %v1565 = vadd.f32 %v1533, 1e-05
    %v1566 = vadd.f32 %v1534, 1e-05
    %v1567 = vadd.f32 %v1535, 1e-05
    %v1568 = vadd.f32 %v1536, 1e-05
    %v1569 = vadd.f32 %v1537, 1e-05
    %v1570 = vadd.f32 %v1538, 1e-05
    %v1571 = vrsqrt.pop %v1539
    %v1572 = vmul.f32 %v1571, %v1539
    %v1573 = vmul.f32 %v1572, %v1571
    %v1574 = vmul.f32 0.5, %v1573
    %v1575 = vsub.f32 1.5, %v1574
    %v1576 = vmul.f32 %v1571, %v1575
    %vm1577 = vweird.f32 %v1539
    %vm1578 = vweird.f32 %v1571
    %vm1579 = vmor %vm1577, %vm1578
    %v1580 = vsel %vm1579, %v1571, %v1576
    %v1581 = vrsqrt.pop %v1540
    %v1582 = vmul.f32 %v1581, %v1540
    %v1583 = vmul.f32 %v1582, %v1581
    %v1584 = vmul.f32 0.5, %v1583
    %v1585 = vsub.f32 1.5, %v1584
    %v1586 = vmul.f32 %v1581, %v1585
    %vm1587 = vweird.f32 %v1540
    %vm1588 = vweird.f32 %v1581
    %vm1589 = vmor %vm1587, %vm1588
    %v1590 = vsel %vm1589, %v1581, %v1586
    %v1591 = vrsqrt.pop %v1541
    %v1592 = vmul.f32 %v1591, %v1541
    %v1593 = vmul.f32 %v1592, %v1591
    %v1594 = vmul.f32 0.5, %v1593
    %v1595 = vsub.f32 1.5, %v1594
    %v1596 = vmul.f32 %v1591, %v1595
    %vm1597 = vweird.f32 %v1541
    %vm1598 = vweird.f32 %v1591
    %vm1599 = vmor %vm1597, %vm1598
    %v1600 = vsel %vm1599, %v1591, %v1596
    %v1601 = vrsqrt.pop %v1542
    %v1602 = vmul.f32 %v1601, %v1542
    %v1603 = vmul.f32 %v1602, %v1601
    %v1604 = vmul.f32 0.5, %v1603
    %v1605 = vsub.f32 1.5, %v1604
    %v1606 = vmul.f32 %v1601, %v1605
    %vm1607 = vweird.f32 %v1542
    %vm1608 = vweird.f32 %v1601
    %vm1609 = vmor %vm1607, %vm1608
    %v1610 = vsel %vm1609, %v1601, %v1606
    %v1611 = vrsqrt.pop %v1543
    %v1612 = vmul.f32 %v1611, %v1543
    %v1613 = vmul.f32 %v1612, %v1611
    %v1614 = vmul.f32 0.5, %v1613
    %v1615 = vsub.f32 1.5, %v1614
    %v1616 = vmul.f32 %v1611, %v1615
    %vm1617 = vweird.f32 %v1543
    %vm1618 = vweird.f32 %v1611
    %vm1619 = vmor %vm1617, %vm1618
    %v1620 = vsel %vm1619, %v1611, %v1616
    %v1621 = vrsqrt.pop %v1544
    %v1622 = vmul.f32 %v1621, %v1544
    %v1623 = vmul.f32 %v1622, %v1621
    %v1624 = vmul.f32 0.5, %v1623
    %v1625 = vsub.f32 1.5, %v1624
    %v1626 = vmul.f32 %v1621, %v1625
    %vm1627 = vweird.f32 %v1544
    %vm1628 = vweird.f32 %v1621
    %vm1629 = vmor %vm1627, %vm1628
    %v1630 = vsel %vm1629, %v1621, %v1626
    %v1631 = vrsqrt.pop %v1545
    %v1632 = vmul.f32 %v1631, %v1545
    %v1633 = vmul.f32 %v1632, %v1631
    %v1634 = vmul.f32 0.5, %v1633
    %v1635 = vsub.f32 1.5, %v1634
    %v1636 = vmul.f32 %v1631, %v1635
    %vm1637 = vweird.f32 %v1545
    %vm1638 = vweird.f32 %v1631
    %vm1639 = vmor %vm1637, %vm1638
    %v1640 = vsel %vm1639, %v1631, %v1636
    %v1641 = vrsqrt.pop %v1546
    %v1642 = vmul.f32 %v1641, %v1546
    %v1643 = vmul.f32 %v1642, %v1641
    %v1644 = vmul.f32 0.5, %v1643
    %v1645 = vsub.f32 1.5, %v1644
    %v1646 = vmul.f32 %v1641, %v1645
    %vm1647 = vweird.f32 %v1546
    %vm1648 = vweird.f32 %v1641
    %vm1649 = vmor %vm1647, %vm1648
    %v1650 = vsel %vm1649, %v1641, %v1646
    %v1651 = vrsqrt.pop %v1547
    %v1652 = vmul.f32 %v1651, %v1547
    %v1653 = vmul.f32 %v1652, %v1651
    %v1654 = vmul.f32 0.5, %v1653
    %v1655 = vsub.f32 1.5, %v1654
    %v1656 = vmul.f32 %v1651, %v1655
    %vm1657 = vweird.f32 %v1547
    %vm1658 = vweird.f32 %v1651
    %vm1659 = vmor %vm1657, %vm1658
    %v1660 = vsel %vm1659, %v1651, %v1656
    %v1661 = vrsqrt.pop %v1548
    %v1662 = vmul.f32 %v1661, %v1548
    %v1663 = vmul.f32 %v1662, %v1661
    %v1664 = vmul.f32 0.5, %v1663
    %v1665 = vsub.f32 1.5, %v1664
    %v1666 = vmul.f32 %v1661, %v1665
    %vm1667 = vweird.f32 %v1548
    %vm1668 = vweird.f32 %v1661
    %vm1669 = vmor %vm1667, %vm1668
    %v1670 = vsel %vm1669, %v1661, %v1666
    %v1671 = vrsqrt.pop %v1549
    %v1672 = vmul.f32 %v1671, %v1549
    %v1673 = vmul.f32 %v1672, %v1671
    %v1674 = vmul.f32 0.5, %v1673
    %v1675 = vsub.f32 1.5, %v1674
    %v1676 = vmul.f32 %v1671, %v1675
    %vm1677 = vweird.f32 %v1549
    %vm1678 = vweird.f32 %v1671
    %vm1679 = vmor %vm1677, %vm1678
    %v1680 = vsel %vm1679, %v1671, %v1676
    %v1681 = vrsqrt.pop %v1550
    %v1682 = vmul.f32 %v1681, %v1550
    %v1683 = vmul.f32 %v1682, %v1681
    %v1684 = vmul.f32 0.5, %v1683
    %v1685 = vsub.f32 1.5, %v1684
    %v1686 = vmul.f32 %v1681, %v1685
    %vm1687 = vweird.f32 %v1550
    %vm1688 = vweird.f32 %v1681
    %vm1689 = vmor %vm1687, %vm1688
    %v1690 = vsel %vm1689, %v1681, %v1686
    %v1691 = vrsqrt.pop %v1551
    %v1692 = vmul.f32 %v1691, %v1551
    %v1693 = vmul.f32 %v1692, %v1691
    %v1694 = vmul.f32 0.5, %v1693
    %v1695 = vsub.f32 1.5, %v1694
    %v1696 = vmul.f32 %v1691, %v1695
    %vm1697 = vweird.f32 %v1551
    %vm1698 = vweird.f32 %v1691
    %vm1699 = vmor %vm1697, %vm1698
    %v1700 = vsel %vm1699, %v1691, %v1696
    %v1701 = vrsqrt.pop %v1552
    %v1702 = vmul.f32 %v1701, %v1552
    %v1703 = vmul.f32 %v1702, %v1701
    %v1704 = vmul.f32 0.5, %v1703
    %v1705 = vsub.f32 1.5, %v1704
    %v1706 = vmul.f32 %v1701, %v1705
    %vm1707 = vweird.f32 %v1552
    %vm1708 = vweird.f32 %v1701
    %vm1709 = vmor %vm1707, %vm1708
    %v1710 = vsel %vm1709, %v1701, %v1706
    %v1711 = vrsqrt.pop %v1553
    %v1712 = vmul.f32 %v1711, %v1553
    %v1713 = vmul.f32 %v1712, %v1711
    %v1714 = vmul.f32 0.5, %v1713
    %v1715 = vsub.f32 1.5, %v1714
    %v1716 = vmul.f32 %v1711, %v1715
    %vm1717 = vweird.f32 %v1553
    %vm1718 = vweird.f32 %v1711
    %vm1719 = vmor %vm1717, %vm1718
    %v1720 = vsel %vm1719, %v1711, %v1716
    %v1721 = vrsqrt.pop %v1554
    %v1722 = vmul.f32 %v1721, %v1554
    %v1723 = vmul.f32 %v1722, %v1721
    %v1724 = vmul.f32 0.5, %v1723
    %v1725 = vsub.f32 1.5, %v1724
    %v1726 = vmul.f32 %v1721, %v1725
    %vm1727 = vweird.f32 %v1554
    %vm1728 = vweird.f32 %v1721
    %vm1729 = vmor %vm1727, %vm1728
    %v1730 = vsel %vm1729, %v1721, %v1726
    %v1731 = vrsqrt.pop %v1555
    %v1732 = vmul.f32 %v1731, %v1555
    %v1733 = vmul.f32 %v1732, %v1731
    %v1734 = vmul.f32 0.5, %v1733
    %v1735 = vsub.f32 1.5, %v1734
    %v1736 = vmul.f32 %v1731, %v1735
    %vm1737 = vweird.f32 %v1555
    %vm1738 = vweird.f32 %v1731
    %vm1739 = vmor %vm1737, %vm1738
    %v1740 = vsel %vm1739, %v1731, %v1736
    %v1741 = vrsqrt.pop %v1556
    %v1742 = vmul.f32 %v1741, %v1556
    %v1743 = vmul.f32 %v1742, %v1741
    %v1744 = vmul.f32 0.5, %v1743
    %v1745 = vsub.f32 1.5, %v1744
    %v1746 = vmul.f32 %v1741, %v1745
    %vm1747 = vweird.f32 %v1556
    %vm1748 = vweird.f32 %v1741
    %vm1749 = vmor %vm1747, %vm1748
    %v1750 = vsel %vm1749, %v1741, %v1746
    %v1751 = vrsqrt.pop %v1557
    %v1752 = vmul.f32 %v1751, %v1557
    %v1753 = vmul.f32 %v1752, %v1751
    %v1754 = vmul.f32 0.5, %v1753
    %v1755 = vsub.f32 1.5, %v1754
    %v1756 = vmul.f32 %v1751, %v1755
    %vm1757 = vweird.f32 %v1557
    %vm1758 = vweird.f32 %v1751
    %vm1759 = vmor %vm1757, %vm1758
    %v1760 = vsel %vm1759, %v1751, %v1756
    %v1761 = vrsqrt.pop %v1558
    %v1762 = vmul.f32 %v1761, %v1558
    %v1763 = vmul.f32 %v1762, %v1761
    %v1764 = vmul.f32 0.5, %v1763
    %v1765 = vsub.f32 1.5, %v1764
    %v1766 = vmul.f32 %v1761, %v1765
    %vm1767 = vweird.f32 %v1558
    %vm1768 = vweird.f32 %v1761
    %vm1769 = vmor %vm1767, %vm1768
    %v1770 = vsel %vm1769, %v1761, %v1766
    %v1771 = vrsqrt.pop %v1559
    %v1772 = vmul.f32 %v1771, %v1559
    %v1773 = vmul.f32 %v1772, %v1771
    %v1774 = vmul.f32 0.5, %v1773
    %v1775 = vsub.f32 1.5, %v1774
    %v1776 = vmul.f32 %v1771, %v1775
    %vm1777 = vweird.f32 %v1559
    %vm1778 = vweird.f32 %v1771
    %vm1779 = vmor %vm1777, %vm1778
    %v1780 = vsel %vm1779, %v1771, %v1776
    %v1781 = vrsqrt.pop %v1560
    %v1782 = vmul.f32 %v1781, %v1560
    %v1783 = vmul.f32 %v1782, %v1781
    %v1784 = vmul.f32 0.5, %v1783
    %v1785 = vsub.f32 1.5, %v1784
    %v1786 = vmul.f32 %v1781, %v1785
    %vm1787 = vweird.f32 %v1560
    %vm1788 = vweird.f32 %v1781
    %vm1789 = vmor %vm1787, %vm1788
    %v1790 = vsel %vm1789, %v1781, %v1786
    %v1791 = vrsqrt.pop %v1561
    %v1792 = vmul.f32 %v1791, %v1561
    %v1793 = vmul.f32 %v1792, %v1791
    %v1794 = vmul.f32 0.5, %v1793
    %v1795 = vsub.f32 1.5, %v1794
    %v1796 = vmul.f32 %v1791, %v1795
    %vm1797 = vweird.f32 %v1561
    %vm1798 = vweird.f32 %v1791
    %vm1799 = vmor %vm1797, %vm1798
    %v1800 = vsel %vm1799, %v1791, %v1796
    %v1801 = vrsqrt.pop %v1562
    %v1802 = vmul.f32 %v1801, %v1562
    %v1803 = vmul.f32 %v1802, %v1801
    %v1804 = vmul.f32 0.5, %v1803
    %v1805 = vsub.f32 1.5, %v1804
    %v1806 = vmul.f32 %v1801, %v1805
    %vm1807 = vweird.f32 %v1562
    %vm1808 = vweird.f32 %v1801
    %vm1809 = vmor %vm1807, %vm1808
    %v1810 = vsel %vm1809, %v1801, %v1806
    %v1811 = vrsqrt.pop %v1563
    %v1812 = vmul.f32 %v1811, %v1563
    %v1813 = vmul.f32 %v1812, %v1811
    %v1814 = vmul.f32 0.5, %v1813
    %v1815 = vsub.f32 1.5, %v1814
    %v1816 = vmul.f32 %v1811, %v1815
    %vm1817 = vweird.f32 %v1563
    %vm1818 = vweird.f32 %v1811
    %vm1819 = vmor %vm1817, %vm1818
    %v1820 = vsel %vm1819, %v1811, %v1816
    %v1821 = vrsqrt.pop %v1564
    %v1822 = vmul.f32 %v1821, %v1564
    %v1823 = vmul.f32 %v1822, %v1821
    %v1824 = vmul.f32 0.5, %v1823
    %v1825 = vsub.f32 1.5, %v1824
    %v1826 = vmul.f32 %v1821, %v1825
    %vm1827 = vweird.f32 %v1564
    %vm1828 = vweird.f32 %v1821
    %vm1829 = vmor %vm1827, %vm1828
    %v1830 = vsel %vm1829, %v1821, %v1826
    %v1831 = vrsqrt.pop %v1565
    %v1832 = vmul.f32 %v1831, %v1565
    %v1833 = vmul.f32 %v1832, %v1831
    %v1834 = vmul.f32 0.5, %v1833
    %v1835 = vsub.f32 1.5, %v1834
    %v1836 = vmul.f32 %v1831, %v1835
    %vm1837 = vweird.f32 %v1565
    %vm1838 = vweird.f32 %v1831
    %vm1839 = vmor %vm1837, %vm1838
    %v1840 = vsel %vm1839, %v1831, %v1836
    %v1841 = vrsqrt.pop %v1566
    %v1842 = vmul.f32 %v1841, %v1566
    %v1843 = vmul.f32 %v1842, %v1841
    %v1844 = vmul.f32 0.5, %v1843
    %v1845 = vsub.f32 1.5, %v1844
    %v1846 = vmul.f32 %v1841, %v1845
    %vm1847 = vweird.f32 %v1566
    %vm1848 = vweird.f32 %v1841
    %vm1849 = vmor %vm1847, %vm1848
    %v1850 = vsel %vm1849, %v1841, %v1846
    %v1851 = vrsqrt.pop %v1567
    %v1852 = vmul.f32 %v1851, %v1567
    %v1853 = vmul.f32 %v1852, %v1851
    %v1854 = vmul.f32 0.5, %v1853
    %v1855 = vsub.f32 1.5, %v1854
    %v1856 = vmul.f32 %v1851, %v1855
    %vm1857 = vweird.f32 %v1567
    %vm1858 = vweird.f32 %v1851
    %vm1859 = vmor %vm1857, %vm1858
    %v1860 = vsel %vm1859, %v1851, %v1856
    %v1861 = vrsqrt.pop %v1568
    %v1862 = vmul.f32 %v1861, %v1568
    %v1863 = vmul.f32 %v1862, %v1861
    %v1864 = vmul.f32 0.5, %v1863
    %v1865 = vsub.f32 1.5, %v1864
    %v1866 = vmul.f32 %v1861, %v1865
    %vm1867 = vweird.f32 %v1568
    %vm1868 = vweird.f32 %v1861
    %vm1869 = vmor %vm1867, %vm1868
    %v1870 = vsel %vm1869, %v1861, %v1866
    %v1871 = vrsqrt.pop %v1569
    %v1872 = vmul.f32 %v1871, %v1569
    %v1873 = vmul.f32 %v1872, %v1871
    %v1874 = vmul.f32 0.5, %v1873
    %v1875 = vsub.f32 1.5, %v1874
    %v1876 = vmul.f32 %v1871, %v1875
    %vm1877 = vweird.f32 %v1569
    %vm1878 = vweird.f32 %v1871
    %vm1879 = vmor %vm1877, %vm1878
    %v1880 = vsel %vm1879, %v1871, %v1876
    %v1881 = vrsqrt.pop %v1570
    %v1882 = vmul.f32 %v1881, %v1570
    %v1883 = vmul.f32 %v1882, %v1881
    %v1884 = vmul.f32 0.5, %v1883
    %v1885 = vsub.f32 1.5, %v1884
    %v1886 = vmul.f32 %v1881, %v1885
    %vm1887 = vweird.f32 %v1570
    %vm1888 = vweird.f32 %v1881
    %vm1889 = vmor %vm1887, %vm1888
    %v1890 = vsel %vm1889, %v1881, %v1886
    %v1891 = vmul.f32 %v1219, %v1580
    %v1892 = vmul.f32 %v1220, %v1590
    %v1893 = vmul.f32 %v1221, %v1600
    %v1894 = vmul.f32 %v1222, %v1610
    %v1895 = vmul.f32 %v1223, %v1620
    %v1896 = vmul.f32 %v1224, %v1630
    %v1897 = vmul.f32 %v1225, %v1640
    %v1898 = vmul.f32 %v1226, %v1650
    %v1899 = vmul.f32 %v1227, %v1660
    %v1900 = vmul.f32 %v1228, %v1670
    %v1901 = vmul.f32 %v1229, %v1680
    %v1902 = vmul.f32 %v1230, %v1690
    %v1903 = vmul.f32 %v1231, %v1700
    %v1904 = vmul.f32 %v1232, %v1710
    %v1905 = vmul.f32 %v1233, %v1720
    %v1906 = vmul.f32 %v1234, %v1730
    %v1907 = vmul.f32 %v1235, %v1740
    %v1908 = vmul.f32 %v1236, %v1750
    %v1909 = vmul.f32 %v1237, %v1760
    %v1910 = vmul.f32 %v1238, %v1770
    %v1911 = vmul.f32 %v1239, %v1780
    %v1912 = vmul.f32 %v1240, %v1790
    %v1913 = vmul.f32 %v1241, %v1800
    %v1914 = vmul.f32 %v1242, %v1810
    %v1915 = vmul.f32 %v1243, %v1820
    %v1916 = vmul.f32 %v1244, %v1830
    %v1917 = vmul.f32 %v1245, %v1840
    %v1918 = vmul.f32 %v1246, %v1850
    %v1919 = vmul.f32 %v1247, %v1860
    %v1920 = vmul.f32 %v1248, %v1870
    %v1921 = vmul.f32 %v1249, %v1880
    %v1922 = vmul.f32 %v1250, %v1890
    %v1923 = vld [vmem:[#allocation6] sm:$0xff]
    %v1924 = vld [vmem:[#allocation6 + $0x8] sm:$0xff]
    %v1925 = vld [vmem:[#allocation6 + $0x10] sm:$0xff]
    %v1926 = vld [vmem:[#allocation6 + $0x18] sm:$0xff]
    %v1931 = vperm.slane %v1923, 0
    %v1932 = vperm.slane %v1923, 1
    %v1933 = vperm.slane %v1923, 2
    %v1934 = vperm.slane %v1923, 3
    %v1935 = vperm.slane %v1923, 4
    %v1936 = vperm.slane %v1923, 5
    %v1937 = vperm.slane %v1923, 6
    %v1938 = vperm.slane %v1923, 7
    %v1939 = vperm.slane %v1924, 0
    %v1940 = vperm.slane %v1924, 1
    %v1941 = vperm.slane %v1924, 2
    %v1942 = vperm.slane %v1924, 3
    %v1943 = vperm.slane %v1924, 4
    %v1944 = vperm.slane %v1924, 5
    %v1945 = vperm.slane %v1924, 6
    %v1946 = vperm.slane %v1924, 7
    %v1947 = vperm.slane %v1925, 0
    %v1948 = vperm.slane %v1925, 1
    %v1949 = vperm.slane %v1925, 2
    %v1950 = vperm.slane %v1925, 3
    %v1951 = vperm.slane %v1925, 4
    %v1952 = vperm.slane %v1925, 5
    %v1953 = vperm.slane %v1925, 6
    %v1954 = vperm.slane %v1925, 7
    %v1955 = vperm.slane %v1926, 0
    %v1956 = vperm.slane %v1926, 1
    %v1957 = vperm.slane %v1926, 2
    %v1958 = vperm.slane %v1926, 3
    %v1959 = vperm.slane %v1926, 4
    %v1960 = vperm.slane %v1926, 5
    %v1961 = vperm.slane %v1926, 6
    %v1962 = vperm.slane %v1926, 7
    %v1995 = vmul.f32 %v1891, %v1931
    %v1996 = vmul.f32 %v1892, %v1932
    %v1997 = vmul.f32 %v1893, %v1933
    %v1998 = vmul.f32 %v1894, %v1934
    %v1999 = vmul.f32 %v1895, %v1935
    %v2000 = vmul.f32 %v1896, %v1936
    %v2001 = vmul.f32 %v1897, %v1937
    %v2002 = vmul.f32 %v1898, %v1938
    %v2003 = vmul.f32 %v1899, %v1939
    %v2004 = vmul.f32 %v1900, %v1940
    %v2005 = vmul.f32 %v1901, %v1941
    %v2006 = vmul.f32 %v1902, %v1942
    %v2007 = vmul.f32 %v1903, %v1943
    %v2008 = vmul.f32 %v1904, %v1944
    %v2009 = vmul.f32 %v1905, %v1945
    %v2010 = vmul.f32 %v1906, %v1946
    %v2011 = vmul.f32 %v1907, %v1947
    %v2012 = vmul.f32 %v1908, %v1948
    %v2013 = vmul.f32 %v1909, %v1949
    %v2014 = vmul.f32 %v1910, %v1950
    %v2015 = vmul.f32 %v1911, %v1951
    %v2016 = vmul.f32 %v1912, %v1952
    %v2017 = vmul.f32 %v1913, %v1953
    %v2018 = vmul.f32 %v1914, %v1954
    %v2019 = vmul.f32 %v1915, %v1955
    %v2020 = vmul.f32 %v1916, %v1956
    %v2021 = vmul.f32 %v1917, %v1957
    %v2022 = vmul.f32 %v1918, %v1958
    %v2023 = vmul.f32 %v1919, %v1959
    %v2024 = vmul.f32 %v1920, %v1960
    %v2025 = vmul.f32 %v1921, %v1961
    %v2026 = vmul.f32 %v1922, %v1962
    %v2027 = vld [vmem:[#allocation7] sm:$0xff]
    %v2028 = vld [vmem:[#allocation7 + $0x8] sm:$0xff]
    %v2029 = vld [vmem:[#allocation7 + $0x10] sm:$0xff]
    %v2030 = vld [vmem:[#allocation7 + $0x18] sm:$0xff]
    %v2035 = vperm.slane %v2027, 0
    %v2036 = vperm.slane %v2027, 1
    %v2037 = vperm.slane %v2027, 2
    %v2038 = vperm.slane %v2027, 3
    %v2039 = vperm.slane %v2027, 4
    %v2040 = vperm.slane %v2027, 5
    %v2041 = vperm.slane %v2027, 6
    %v2042 = vperm.slane %v2027, 7
    %v2043 = vperm.slane %v2028, 0
    %v2044 = vperm.slane %v2028, 1
    %v2045 = vperm.slane %v2028, 2
    %v2046 = vperm.slane %v2028, 3
    %v2047 = vperm.slane %v2028, 4
    %v2048 = vperm.slane %v2028, 5
    %v2049 = vperm.slane %v2028, 6
    %v2050 = vperm.slane %v2028, 7
    %v2051 = vperm.slane %v2029, 0
    %v2052 = vperm.slane %v2029, 1
    %v2053 = vperm.slane %v2029, 2
    %v2054 = vperm.slane %v2029, 3
    %v2055 = vperm.slane %v2029, 4
    %v2056 = vperm.slane %v2029, 5
    %v2057 = vperm.slane %v2029, 6
    %v2058 = vperm.slane %v2029, 7
    %v2059 = vperm.slane %v2030, 0
    %v2060 = vperm.slane %v2030, 1
    %v2061 = vperm.slane %v2030, 2
    %v2062 = vperm.slane %v2030, 3
    %v2063 = vperm.slane %v2030, 4
    %v2064 = vperm.slane %v2030, 5
    %v2065 = vperm.slane %v2030, 6
    %v2066 = vperm.slane %v2030, 7
    %v2099 = vadd.f32 %v1995, %v2035
    %v2100 = vadd.f32 %v1996, %v2036
    %v2101 = vadd.f32 %v1997, %v2037
    %v2102 = vadd.f32 %v1998, %v2038
    %v2103 = vadd.f32 %v1999, %v2039
    %v2104 = vadd.f32 %v2000, %v2040
    %v2105 = vadd.f32 %v2001, %v2041
    %v2106 = vadd.f32 %v2002, %v2042
    %v2107 = vadd.f32 %v2003, %v2043
    %v2108 = vadd.f32 %v2004, %v2044
    %v2109 = vadd.f32 %v2005, %v2045
    %v2110 = vadd.f32 %v2006, %v2046
    %v2111 = vadd.f32 %v2007, %v2047
    %v2112 = vadd.f32 %v2008, %v2048
    %v2113 = vadd.f32 %v2009, %v2049
    %v2114 = vadd.f32 %v2010, %v2050
    %v2115 = vadd.f32 %v2011, %v2051
    %v2116 = vadd.f32 %v2012, %v2052
    %v2117 = vadd.f32 %v2013, %v2053
    %v2118 = vadd.f32 %v2014, %v2054
    %v2119 = vadd.f32 %v2015, %v2055
    %v2120 = vadd.f32 %v2016, %v2056
    %v2121 = vadd.f32 %v2017, %v2057
    %v2122 = vadd.f32 %v2018, %v2058
    %v2123 = vadd.f32 %v2019, %v2059
    %v2124 = vadd.f32 %v2020, %v2060
    %v2125 = vadd.f32 %v2021, %v2061
    %v2126 = vadd.f32 %v2022, %v2062
    %v2127 = vadd.f32 %v2023, %v2063
    %v2128 = vadd.f32 %v2024, %v2064
    %v2129 = vadd.f32 %v2025, %v2065
    %v2130 = vadd.f32 %v2026, %v2066
    %vm2131 = vcmp.ge.f32.partialorder %v2099, 0.0
    %vm2132 = vcmp.ge.f32.partialorder %v2100, 0.0
    %vm2133 = vcmp.ge.f32.partialorder %v2101, 0.0
    %vm2134 = vcmp.ge.f32.partialorder %v2102, 0.0
    %vm2135 = vcmp.ge.f32.partialorder %v2103, 0.0
    %vm2136 = vcmp.ge.f32.partialorder %v2104, 0.0
    %vm2137 = vcmp.ge.f32.partialorder %v2105, 0.0
    %vm2138 = vcmp.ge.f32.partialorder %v2106, 0.0
    %vm2139 = vcmp.ge.f32.partialorder %v2107, 0.0
    %vm2140 = vcmp.ge.f32.partialorder %v2108, 0.0
    %vm2141 = vcmp.ge.f32.partialorder %v2109, 0.0
    %vm2142 = vcmp.ge.f32.partialorder %v2110, 0.0
    %vm2143 = vcmp.ge.f32.partialorder %v2111, 0.0
    %vm2144 = vcmp.ge.f32.partialorder %v2112, 0.0
    %vm2145 = vcmp.ge.f32.partialorder %v2113, 0.0
    %vm2146 = vcmp.ge.f32.partialorder %v2114, 0.0
    %vm2147 = vcmp.ge.f32.partialorder %v2115, 0.0
    %vm2148 = vcmp.ge.f32.partialorder %v2116, 0.0
    %vm2149 = vcmp.ge.f32.partialorder %v2117, 0.0
    %vm2150 = vcmp.ge.f32.partialorder %v2118, 0.0
    %vm2151 = vcmp.ge.f32.partialorder %v2119, 0.0
    %vm2152 = vcmp.ge.f32.partialorder %v2120, 0.0
    %vm2153 = vcmp.ge.f32.partialorder %v2121, 0.0
    %vm2154 = vcmp.ge.f32.partialorder %v2122, 0.0
    %vm2155 = vcmp.ge.f32.partialorder %v2123, 0.0
    %vm2156 = vcmp.ge.f32.partialorder %v2124, 0.0
    %vm2157 = vcmp.ge.f32.partialorder %v2125, 0.0
    %vm2158 = vcmp.ge.f32.partialorder %v2126, 0.0
    %vm2159 = vcmp.ge.f32.partialorder %v2127, 0.0
    %vm2160 = vcmp.ge.f32.partialorder %v2128, 0.0
    %vm2161 = vcmp.ge.f32.partialorder %v2129, 0.0
    %vm2162 = vcmp.ge.f32.partialorder %v2130, 0.0
    %v2163 = vmul.f32 %v2099, 0.2
    %v2164 = vmul.f32 %v2100, 0.2
    %v2165 = vmul.f32 %v2101, 0.2
    %v2166 = vmul.f32 %v2102, 0.2
    %v2167 = vmul.f32 %v2103, 0.2
    %v2168 = vmul.f32 %v2104, 0.2
    %v2169 = vmul.f32 %v2105, 0.2
    %v2170 = vmul.f32 %v2106, 0.2
    %v2171 = vmul.f32 %v2107, 0.2
    %v2172 = vmul.f32 %v2108, 0.2
    %v2173 = vmul.f32 %v2109, 0.2
    %v2174 = vmul.f32 %v2110, 0.2
    %v2175 = vmul.f32 %v2111, 0.2
    %v2176 = vmul.f32 %v2112, 0.2
    %v2177 = vmul.f32 %v2113, 0.2
    %v2178 = vmul.f32 %v2114, 0.2
    %v2179 = vmul.f32 %v2115, 0.2
    %v2180 = vmul.f32 %v2116, 0.2
    %v2181 = vmul.f32 %v2117, 0.2
    %v2182 = vmul.f32 %v2118, 0.2
    %v2183 = vmul.f32 %v2119, 0.2
    %v2184 = vmul.f32 %v2120, 0.2
    %v2185 = vmul.f32 %v2121, 0.2
    %v2186 = vmul.f32 %v2122, 0.2
    %v2187 = vmul.f32 %v2123, 0.2
    %v2188 = vmul.f32 %v2124, 0.2
    %v2189 = vmul.f32 %v2125, 0.2
    %v2190 = vmul.f32 %v2126, 0.2
    %v2191 = vmul.f32 %v2127, 0.2
    %v2192 = vmul.f32 %v2128, 0.2
    %v2193 = vmul.f32 %v2129, 0.2
    %v2194 = vmul.f32 %v2130, 0.2
    %v2195 = vsel %vm2131, %v2099, %v2163
    %v2196 = vsel %vm2132, %v2100, %v2164
    %v2197 = vsel %vm2133, %v2101, %v2165
    %v2198 = vsel %vm2134, %v2102, %v2166
    %v2199 = vsel %vm2135, %v2103, %v2167
    %v2200 = vsel %vm2136, %v2104, %v2168
    %v2201 = vsel %vm2137, %v2105, %v2169
    %v2202 = vsel %vm2138, %v2106, %v2170
    %v2203 = vsel %vm2139, %v2107, %v2171
    %v2204 = vsel %vm2140, %v2108, %v2172
    %v2205 = vsel %vm2141, %v2109, %v2173
    %v2206 = vsel %vm2142, %v2110, %v2174
    %v2207 = vsel %vm2143, %v2111, %v2175
    %v2208 = vsel %vm2144, %v2112, %v2176
    %v2209 = vsel %vm2145, %v2113, %v2177
    %v2210 = vsel %vm2146, %v2114, %v2178
    %v2211 = vsel %vm2147, %v2115, %v2179
    %v2212 = vsel %vm2148, %v2116, %v2180
    %v2213 = vsel %vm2149, %v2117, %v2181
    %v2214 = vsel %vm2150, %v2118, %v2182
    %v2215 = vsel %vm2151, %v2119, %v2183
    %v2216 = vsel %vm2152, %v2120, %v2184
    %v2217 = vsel %vm2153, %v2121, %v2185
    %v2218 = vsel %vm2154, %v2122, %v2186
    %v2219 = vsel %vm2155, %v2123, %v2187
    %v2220 = vsel %vm2156, %v2124, %v2188
    %v2221 = vsel %vm2157, %v2125, %v2189
    %v2222 = vsel %vm2158, %v2126, %v2190
    %v2223 = vsel %vm2159, %v2127, %v2191
    %v2224 = vsel %vm2160, %v2128, %v2192
    %v2225 = vsel %vm2161, %v2129, %v2193
    %v2226 = vsel %vm2162, %v2130, %v2194
    %v2227 = vpack.c.bf16 %v2196, %v2195
    %v2228 = vpack.c.bf16 %v2198, %v2197
    %v2229 = vpack.c.bf16 %v2200, %v2199
    %v2230 = vpack.c.bf16 %v2202, %v2201
    %v2231 = vpack.c.bf16 %v2204, %v2203
    %v2232 = vpack.c.bf16 %v2206, %v2205
    %v2233 = vpack.c.bf16 %v2208, %v2207
    %v2234 = vpack.c.bf16 %v2210, %v2209
    %v2235 = vpack.c.bf16 %v2212, %v2211
    %v2236 = vpack.c.bf16 %v2214, %v2213
    %v2237 = vpack.c.bf16 %v2216, %v2215
    %v2238 = vpack.c.bf16 %v2218, %v2217
    %v2239 = vpack.c.bf16 %v2220, %v2219
    %v2240 = vpack.c.bf16 %v2222, %v2221
    %v2241 = vpack.c.bf16 %v2224, %v2223
    %v2242 = vpack.c.bf16 %v2226, %v2225
    %v2259 = vrot.slane %v2227, 3
    %v2260 = vrot.slane %v2228, 6
    %v2261 = vrot.slane %v2228, 1
    %v2262 = vrot.slane %v2229, 4
    %v2263 = vrot.slane %v2229, 7
    %v2264 = vrot.slane %v2230, 2
    %v2265 = vrot.slane %v2230, 5
    %v2266 = vrot.slane %v2231, 3
    %v2267 = vrot.slane %v2232, 6
    %v2268 = vrot.slane %v2232, 1
    %v2269 = vrot.slane %v2233, 4
    %v2270 = vrot.slane %v2233, 7
    %v2271 = vrot.slane %v2234, 2
    %v2272 = vrot.slane %v2234, 5
    %v2273 = vrot.slane %v2235, 3
    %v2274 = vrot.slane %v2236, 6
    %v2275 = vrot.slane %v2236, 1
    %v2276 = vrot.slane %v2237, 4
    %v2277 = vrot.slane %v2237, 7
    %v2278 = vrot.slane %v2238, 2
    %v2279 = vrot.slane %v2238, 5
    %v2280 = vrot.slane %v2239, 3
    %v2281 = vrot.slane %v2240, 6
    %v2282 = vrot.slane %v2240, 1
    %v2283 = vrot.slane %v2241, 4
    %v2284 = vrot.slane %v2241, 7
    %v2285 = vrot.slane %v2242, 2
    %v2286 = vrot.slane %v2242, 5
    %vm2287 = vcmask 1040384
    %v2290 = vsel %vm2287, %v2227, %v2259
    %vm2291 = vcmask 1042434
    %v2294 = vsel %vm2291, %v2260, %v2261
    %v2295 = vsel %vm955, %v2290, %v2294
    %vm2296 = vcmask 1044484
    %v2299 = vsel %vm2296, %v2262, %v2263
    %vm2300 = vcmask 1046534
    %v2303 = vsel %vm2300, %v2264, %v2265
    %vm2304 = vcmask 1045508
    %v2305 = vsel %vm2304, %v2299, %v2303
    %vm2306 = vcmask 1043456
    %v2307 = vsel %vm2306, %v2295, %v2305
    %v2310 = vsel %vm2287, %v2231, %v2266
    %v2313 = vsel %vm2291, %v2267, %v2268
    %v2314 = vsel %vm955, %v2310, %v2313
    %v2317 = vsel %vm2296, %v2269, %v2270
    %v2320 = vsel %vm2300, %v2271, %v2272
    %v2321 = vsel %vm2304, %v2317, %v2320
    %v2322 = vsel %vm2306, %v2314, %v2321
    %v2325 = vsel %vm2287, %v2235, %v2273
    %v2328 = vsel %vm2291, %v2274, %v2275
    %v2329 = vsel %vm955, %v2325, %v2328
    %v2332 = vsel %vm2296, %v2276, %v2277
    %v2335 = vsel %vm2300, %v2278, %v2279
    %v2336 = vsel %vm2304, %v2332, %v2335
    %v2337 = vsel %vm2306, %v2329, %v2336
    %v2340 = vsel %vm2287, %v2239, %v2280
    %v2343 = vsel %vm2291, %v2281, %v2282
    %v2344 = vsel %vm955, %v2340, %v2343
    %v2347 = vsel %vm2296, %v2283, %v2284
    %v2350 = vsel %vm2300, %v2285, %v2286
    %v2351 = vsel %vm2304, %v2347, %v2350
    %v2352 = vsel %vm2306, %v2344, %v2351
    %2357 = vst [vmem:[%s5] sm:$0xff] %v2307
    %2358 = vst [vmem:[%s5 + $0x8] sm:$0xff] %v2322
    %2359 = vst [vmem:[%s5 + $0x10] sm:$0xff] %v2337
    %2360 = vst [vmem:[%s5 + $0x18] sm:$0xff] %v2352
    // Predicated region
    $region38: #{generator_forward.6} parent=1 // pred_check
      _
    $region39: #{generator_forward.6} parent=1 // pred_check_branch
      %2362 = sbr.rel (0) target = $region41
    $region40: #{generator_forward.6} parent=1 // pred_region
      _
    $region41: #{generator_forward.6} parent=1 // pred_fallthru
      _
    // Predicated region
    $region42: #{generator_forward.6} parent=1 // pred_check
      _
    $region43: #{generator_forward.6} parent=1 // pred_check_branch
      %2364 = sbr.rel (0) target = $region45
    $region44: #{generator_forward.6} parent=1 // pred_region
      _
    $region45: #{generator_forward.6} parent=1 // pred_fallthru
      _
    %2365 = vsyncpa [#allocation3], 1
    %2366 = vsyncpa [#allocation5], 1
    %2367 = vsyncpa [#allocation8], 1

// kernel: generator_forward.7
$region0: #{generator_forward.7}
  #allocation0 [shape = 'u32[]', space=smem, size = 0x4, offset = 0x4, fixed_abs, tag = 'smem constant byte address 0x4 - core index']
  #allocation1 [shape = 'u32[72,128]{1,0:T(1,128)}', space=vmem, size = 0x9000, scoped, tag = 'internal scratch']
  %s0 = inlined_call_operand.vmem [shape: bf16[4,32,1024], index: 0, kind: input, shape index: {}]
  %s1 = inlined_call_operand.vmem [shape: bf16[4,1024,128], index: 1, kind: input, shape index: {}]
  %s2 = inlined_call_operand.vmem [shape: f32[1,128], index: 2, kind: input, shape index: {}]
  %s3 = inlined_call_operand.vmem [shape: bf16[4,32,128], index: 3, kind: output, shape index: {0}]
  %s4 = inlined_call_operand.vmem [shape: f32[4,1,1,128], index: 4, kind: output, shape index: {1}]
  %s5 = inlined_call_operand.vmem [shape: f32[4,1,1,128], index: 5, kind: output, shape index: {2}]
  %6 = xla_tuple %s3, %s4, %s5
  %s7 = sld [smem:[#allocation0]]
  $region61: #{generator_forward.7} parent=0
    _
  %s9 = ssub.s32 1, %s7
  %s10 = scalar_select 0, %s9, %s7
  loop: start=0, step=1, limit=6
  $region2: #{generator_forward.7} parent=0 // loop_pre_header
    _
  $region3: #{generator_forward.7} parent=0 // loop_header
    %s12 = sphi 0, %s16
    %p13 = scmp.ge.s32.totalorder %s12, 6
    %s19 = sphi 0, %s31
    %s20 = sphi 0, %s27
    %s21 = sphi 0, %s19
    %s22 = sphi 0, %s20
    %s23 = sphi 0, %s21
    %s24 = sphi 0, %s22
    %s36 = sphi 0, %s38
    %s39 = sphi 0, %s36
    %s40 = sphi 0, %s39
    %s56 = sphi 0, %s40
    %s62 = sphi 0, %s64
    %s65 = sphi 0, %s62
    %s66 = sphi 0, %s65
    %s82 = sphi 0, %s66
    %s86 = sphi 0, %s86
    %s88 = sphi 0, %s86
    %s89 = sphi 0, %s88
    %s103 = sphi 0, %s89
    %s111 = sphi 0, %s113
    %s114 = sphi 0, %s111
    %s115 = sphi 0, %s114
    %s131 = sphi 0, %s115
    %s139 = sphi 0, %s141
    %s142 = sphi 0, %s139
    %s143 = sphi 0, %s142
    %s159 = sphi 0, %s143
    %s167 = sphi 0, %s169
    %s170 = sphi 0, %s167
    %s171 = sphi 0, %s170
    %s187 = sphi 0, %s171
  $region4: #{generator_forward.7} parent=0 // loop_header_branch
    %15 = sbr.rel (%p13) target = $region8
  $region5: #{generator_forward.7} parent=0 // loop_body
    %s17 = ssub.s32 %s12, 1
    %s18 = ssub.s32 %s12, 2
    %s25 = sadd.s32 1, %s20
    %p26 = scmp.ge.s32.totalorder %s25, 1
    %s27 = scalar_select %p26, 0, %s25
    %s28 = sadd.s32 1, %s19
    %s29 = scalar_select %p26, %s28, %s19
    %p30 = scmp.ge.s32.totalorder %s29, 4
    %s31 = scalar_select %p30, 0, %s29
    %s32 = ssub.s32 %s19, %s31
    %s33 = ssub.s32 %s20, %s27
    %s34 = sor.u32 %s32, %s33
    %p35 = scmp.eq.s32.totalorder %s34, 0
    %s37 = sadd.s32 %s36, 1
    %s38 = scalar_select %p35, %s36, %s37
    %p41 = pneg %p35
    %p42 = scmp.eq.s32.totalorder %s12, 3
    %p43 = por %p41, %p42
    %p44 = scmp.ne.s32.totalorder %s36, %s39
    %p45 = scmp.eq.s32.totalorder %s12, 0
    %p46 = por %p44, %p45
    %p47 = scmp.ne.s32.totalorder %s36, %s39
    %p48 = scmp.eq.s32.totalorder %s17, 3
    %p49 = por %p47, %p48
    %p50 = scmp.ne.s32.totalorder %s39, %s40
    %p51 = scmp.eq.s32.totalorder %s17, 0
    %p52 = por %p50, %p51
    %p53 = scmp.ne.s32.totalorder %s39, %s40
    %p54 = scmp.eq.s32.totalorder %s18, 3
    %p55 = por %p53, %p54
    %p57 = scmp.ne.s32.totalorder %s40, %s56
    %p58 = scmp.eq.s32.totalorder %s18, 0
    %p59 = por %p57, %p58
    %s60 = ssub.s32 %s19, %s31
    %p61 = scmp.eq.s32.totalorder %s60, 0
    %s63 = sadd.s32 %s62, 1
    %s64 = scalar_select %p61, %s62, %s63
    %p67 = pneg %p61
    %p68 = scmp.eq.s32.totalorder %s12, 3
    %p69 = por %p67, %p68
    %p70 = scmp.ne.s32.totalorder %s62, %s65
    %p71 = scmp.eq.s32.totalorder %s12, 0
    %p72 = por %p70, %p71
    %p73 = scmp.ne.s32.totalorder %s62, %s65
    %p74 = scmp.eq.s32.totalorder %s17, 3
    %p75 = por %p73, %p74
    %p76 = scmp.ne.s32.totalorder %s65, %s66
    %p77 = scmp.eq.s32.totalorder %s17, 0
    %p78 = por %p76, %p77
    %p79 = scmp.ne.s32.totalorder %s65, %s66
    %p80 = scmp.eq.s32.totalorder %s18, 3
    %p81 = por %p79, %p80
    %p83 = scmp.ne.s32.totalorder %s66, %s82
    %p84 = scmp.eq.s32.totalorder %s18, 0
    %p85 = por %p83, %p84
    %s87 = sadd.s32 %s86, 1
    %p90 = scmp.eq.s32.totalorder %s12, 3
    %p91 = scmp.ne.s32.totalorder %s86, %s88
    %p92 = scmp.eq.s32.totalorder %s12, 0
    %p93 = por %p91, %p92
    %p94 = scmp.ne.s32.totalorder %s86, %s88
    %p95 = scmp.eq.s32.totalorder %s17, 3
    %p96 = por %p94, %p95
    %p97 = scmp.ne.s32.totalorder %s88, %s89
    %p98 = scmp.eq.s32.totalorder %s17, 0
    %p99 = por %p97, %p98
    %p100 = scmp.ne.s32.totalorder %s88, %s89
    %p101 = scmp.eq.s32.totalorder %s18, 3
    %p102 = por %p100, %p101
    %p104 = scmp.ne.s32.totalorder %s89, %s103
    %p105 = scmp.eq.s32.totalorder %s18, 0
    %p106 = por %p104, %p105
    %s107 = ssub.s32 %s19, %s31
    %s108 = ssub.s32 %s20, %s27
    %s109 = sor.u32 %s107, %s108
    %p110 = scmp.eq.s32.totalorder %s109, 0
    %s112 = sadd.s32 %s111, 1
    %s113 = scalar_select %p110, %s111, %s112
    %p116 = pneg %p110
    %p117 = scmp.eq.s32.totalorder %s12, 3
    %p118 = por %p116, %p117
    %p119 = scmp.ne.s32.totalorder %s111, %s114
    %p120 = scmp.eq.s32.totalorder %s12, 0
    %p121 = por %p119, %p120
    %p122 = scmp.ne.s32.totalorder %s111, %s114
    %p123 = scmp.eq.s32.totalorder %s17, 3
    %p124 = por %p122, %p123
    %p125 = scmp.ne.s32.totalorder %s114, %s115
    %p126 = scmp.eq.s32.totalorder %s17, 0
    %p127 = por %p125, %p126
    %p128 = scmp.ne.s32.totalorder %s114, %s115
    %p129 = scmp.eq.s32.totalorder %s18, 3
    %p130 = por %p128, %p129
    %p132 = scmp.ne.s32.totalorder %s115, %s131
    %p133 = scmp.eq.s32.totalorder %s18, 0
    %p134 = por %p132, %p133
    %s135 = ssub.s32 %s19, %s31
    %s136 = ssub.s32 %s20, %s27
    %s137 = sor.u32 %s135, %s136
    %p138 = scmp.eq.s32.totalorder %s137, 0
    %s140 = sadd.s32 %s139, 1
    %s141 = scalar_select %p138, %s139, %s140
    %p144 = pneg %p138
    %p145 = scmp.eq.s32.totalorder %s12, 3
    %p146 = por %p144, %p145
    %p147 = scmp.ne.s32.totalorder %s139, %s142
    %p148 = scmp.eq.s32.totalorder %s12, 0
    %p149 = por %p147, %p148
    %p150 = scmp.ne.s32.totalorder %s139, %s142
    %p151 = scmp.eq.s32.totalorder %s17, 3
    %p152 = por %p150, %p151
    %p153 = scmp.ne.s32.totalorder %s142, %s143
    %p154 = scmp.eq.s32.totalorder %s17, 0
    %p155 = por %p153, %p154
    %p156 = scmp.ne.s32.totalorder %s142, %s143
    %p157 = scmp.eq.s32.totalorder %s18, 3
    %p158 = por %p156, %p157
    %p160 = scmp.ne.s32.totalorder %s143, %s159
    %p161 = scmp.eq.s32.totalorder %s18, 0
    %p162 = por %p160, %p161
    %s163 = ssub.s32 %s19, %s31
    %s164 = ssub.s32 %s20, %s27
    %s165 = sor.u32 %s163, %s164
    %p166 = scmp.eq.s32.totalorder %s165, 0
    %s168 = sadd.s32 %s167, 1
    %s169 = scalar_select %p166, %s167, %s168
    %p172 = pneg %p166
    %p173 = scmp.eq.s32.totalorder %s12, 3
    %p174 = por %p172, %p173
    %p175 = scmp.ne.s32.totalorder %s167, %s170
    %p176 = scmp.eq.s32.totalorder %s12, 0
    %p177 = por %p175, %p176
    %p178 = scmp.ne.s32.totalorder %s167, %s170
    %p179 = scmp.eq.s32.totalorder %s17, 3
    %p180 = por %p178, %p179
    %p181 = scmp.ne.s32.totalorder %s170, %s171
    %p182 = scmp.eq.s32.totalorder %s17, 0
    %p183 = por %p181, %p182
    %p184 = scmp.ne.s32.totalorder %s170, %s171
    %p185 = scmp.eq.s32.totalorder %s18, 3
    %p186 = por %p184, %p185
    %p188 = scmp.ne.s32.totalorder %s171, %s187
    %p189 = scmp.eq.s32.totalorder %s18, 0
    %p190 = por %p188, %p189
    %p191 = scmp.le.s32.totalorder 1, %s12
    %p192 = scmp.lt.s32.totalorder %s12, 5
    %p193 = pnand %p191, %p192
    %p194 = pneg %p193
    // Predicated region
    $region9: #{generator_forward.7} parent=5 // pred_check
      _
    $region10: #{generator_forward.7} parent=5 // pred_check_branch
      %196 = sbr.rel (%p193) target = $region12
    $region11: #{generator_forward.7} parent=5 // pred_region
      %s197 = ssub.s32 %s12, 1
      // Predicated region
      $region13: #{generator_forward.7} parent=11 // pred_check
        %p198 = pneg %p99
      $region14: #{generator_forward.7} parent=11 // pred_check_branch
        %200 = sbr.rel (%p198) target = $region16
      $region15: #{generator_forward.7} parent=11 // pred_region
        _
      $region16: #{generator_forward.7} parent=11 // pred_fallthru
        _
    $region12: #{generator_forward.7} parent=5 // pred_fallthru
      _
    %p201 = scmp.lt.s32.totalorder %s12, 4
    // Predicated region
    $region17: #{generator_forward.7} parent=5 // pred_check
      %p202 = pneg %p201
    $region18: #{generator_forward.7} parent=5 // pred_check_branch
      %204 = sbr.rel (%p202) target = $region20
    $region19: #{generator_forward.7} parent=5 // pred_region
      // Predicated region
      $region21: #{generator_forward.7} parent=19 // pred_check
        %p205 = pneg %p46
      $region22: #{generator_forward.7} parent=19 // pred_check_branch
        %207 = sbr.rel (%p205) target = $region24
      $region23: #{generator_forward.7} parent=19 // pred_region
        %s208 = smul.u32 4, %s20
        %p209 = scmp.lt.s32.totalorder %s19, 3
        %s210 = scalar_select %p209, %s19, 3
        %p211 = scmp.lt.s32.totalorder %s208, 3
        %s212 = scalar_select %p211, %s208, 3
        %s213 = smul.addr %s212, 8
        %s214 = smul.addr %s210, 32
        %s215 = sadd.s32 %s213, %s214
        %s216 = smul.addr %s215, 4
        %s217 = scalar_lea.vmem %s0, %s216
        %s218 = smul.u32 4, %s20
      $region24: #{generator_forward.7} parent=19 // pred_fallthru
        _
      // Predicated region
      $region25: #{generator_forward.7} parent=19 // pred_check
        %p219 = pneg %p72
      $region26: #{generator_forward.7} parent=19 // pred_check_branch
        %221 = sbr.rel (%p219) target = $region28
      $region27: #{generator_forward.7} parent=19 // pred_region
        %p222 = scmp.lt.s32.totalorder %s19, 3
        %s223 = scalar_select %p222, %s19, 3
        %s224 = smul.addr %s223, 128
        %s225 = smul.addr %s224, 4
        %s226 = scalar_lea.vmem %s1, %s225
      $region28: #{generator_forward.7} parent=19 // pred_fallthru
        _
    $region20: #{generator_forward.7} parent=5 // pred_fallthru
      _
    %p227 = scmp.le.s32.totalorder 1, %s12
    %p228 = scmp.lt.s32.totalorder %s12, 5
    %p229 = pnand %p227, %p228
    %p230 = pneg %p229
    // Predicated region
    $region29: #{generator_forward.7} parent=5 // pred_check
      _
    $region30: #{generator_forward.7} parent=5 // pred_check_branch
      %232 = sbr.rel (%p229) target = $region32
    $region31: #{generator_forward.7} parent=5 // pred_region
      %s233 = ssub.s32 %s12, 1
      %s234 = smul.u32 4, %s22
      %p235 = scmp.lt.s32.totalorder %s21, 3
      %s236 = scalar_select %p235, %s21, 3
      %p237 = scmp.lt.s32.totalorder %s234, 3
      %s238 = scalar_select %p237, %s234, 3
      %s239 = smul.addr %s238, 8
      %s240 = smul.addr %s236, 32
      %s241 = sadd.s32 %s239, %s240
      %s242 = smul.addr %s241, 4
      %s243 = scalar_lea.vmem %s0, %s242
      %p244 = pneg %p52
      %p245 = pneg %p49
      %p246 = scmp.lt.s32.totalorder %s21, 3
      %s247 = scalar_select %p246, %s21, 3
      %s248 = smul.addr %s247, 128
      %s249 = smul.addr %s248, 4
      %s250 = scalar_lea.vmem %s1, %s249
      %p251 = pneg %p78
      %p252 = pneg %p75
      %p253 = pneg %p99
      %p254 = pneg %p96
      %p255 = pneg %p127
      %p256 = pneg %p124
      %s257 = smul.u32 4, %s22
      %p258 = scmp.lt.s32.totalorder %s21, 3
      %s259 = scalar_select %p258, %s21, 3
      %p260 = scmp.lt.s32.totalorder %s257, 3
      %s261 = scalar_select %p260, %s257, 3
      %s262 = smul.addr %s259, 4
      %s263 = sadd.s32 %s261, %s262
      %s264 = smul.addr %s263, 4
      %s265 = scalar_lea.vmem %s3, %s264
      %p266 = pneg %p155
      %p267 = pneg %p152
      %p268 = scmp.lt.s32.totalorder %s21, 3
      %s269 = scalar_select %p268, %s21, 3
      %p270 = scmp.lt.s32.totalorder %s22, 0
      %s271 = scalar_select %p270, %s22, 0
      %s272 = sadd.s32 %s271, %s269
      %s273 = scalar_lea.vmem %s4, %s272
      %p274 = pneg %p183
      %p275 = pneg %p180
      %p276 = scmp.lt.s32.totalorder %s21, 3
      %s277 = scalar_select %p276, %s21, 3
      %p278 = scmp.lt.s32.totalorder %s22, 0
      %s279 = scalar_select %p278, %s22, 0
      %s280 = sadd.s32 %s279, %s277
      %s281 = scalar_lea.vmem %s5, %s280
      %s282 = smul.u32 4, %s22
      %p283 = scmp.lt.s32.totalorder %s21, 3
      %s284 = scalar_select %p283, %s21, 3
      %p285 = scmp.lt.s32.totalorder %s282, 3
      %s286 = scalar_select %p285, %s282, 3
      %s287 = smul.addr %s286, 8
      %s288 = smul.addr %s284, 32
      %s289 = sadd.s32 %s287, %s288
      %s290 = smul.addr %s289, 4
      %s291 = scalar_lea.vmem %s0, %s290
      %s292 = smul.u32 4, %s22
      %p293 = scmp.lt.s32.totalorder %s21, 3
      %s294 = scalar_select %p293, %s21, 3
      %s295 = smul.addr %s294, 128
      %s296 = smul.addr %s295, 4
      %s297 = scalar_lea.vmem %s1, %s296
      %s298 = smul.u32 4, %s22
      %p299 = scmp.lt.s32.totalorder %s21, 3
      %s300 = scalar_select %p299, %s21, 3
      %p301 = scmp.lt.s32.totalorder %s298, 3
      %s302 = scalar_select %p301, %s298, 3
      %s303 = smul.addr %s300, 4
      %s304 = sadd.s32 %s302, %s303
      %s305 = smul.addr %s304, 4
      %s306 = scalar_lea.vmem %s3, %s305
      %s307 = smul.u32 4, %s22
      %p308 = scmp.lt.s32.totalorder %s21, 3
      %s309 = scalar_select %p308, %s21, 3
      %p310 = scmp.lt.s32.totalorder %s22, 0
      %s311 = scalar_select %p310, %s22, 0
      %s312 = sadd.s32 %s311, %s309
      %s313 = scalar_lea.vmem %s4, %s312
      %p314 = scmp.lt.s32.totalorder %s21, 3
      %s315 = scalar_select %p314, %s21, 3
      %p316 = scmp.lt.s32.totalorder %s22, 0
      %s317 = scalar_select %p316, %s22, 0
      %s318 = sadd.s32 %s317, %s315
      %s319 = scalar_lea.vmem %s5, %s318
      %v320 = vld [vmem:[%s291] sm:$0xff]
      %v321 = vld [vmem:[%s291 + $0x8] sm:$0xff]
      %v322 = vld [vmem:[%s291 + $0x10] sm:$0xff]
      %v323 = vld [vmem:[%s291 + $0x18] sm:$0xff]
      %v324 = vld [vmem:[%s291 + $0x20] sm:$0xff]
      %v325 = vld [vmem:[%s291 + $0x28] sm:$0xff]
      %v326 = vld [vmem:[%s291 + $0x30] sm:$0xff]
      %v327 = vld [vmem:[%s291 + $0x38] sm:$0xff]
      %v328 = vld [vmem:[%s291 + $0x40] sm:$0xff]
      %v329 = vld [vmem:[%s291 + $0x48] sm:$0xff]
      %v330 = vld [vmem:[%s291 + $0x50] sm:$0xff]
      %v331 = vld [vmem:[%s291 + $0x58] sm:$0xff]
      %v332 = vld [vmem:[%s291 + $0x60] sm:$0xff]
      %v333 = vld [vmem:[%s291 + $0x68] sm:$0xff]
      %v334 = vld [vmem:[%s291 + $0x70] sm:$0xff]
      %v335 = vld [vmem:[%s291 + $0x78] sm:$0xff]
      %v336 = vld [vmem:[%s297] sm:$0xf]
      %v337 = vld [vmem:[%s297 + $0x4] sm:$0xf]
      %v338 = vld [vmem:[%s297 + $0x8] sm:$0xf]
      %v339 = vld [vmem:[%s297 + $0xc] sm:$0xf]
      %v340 = vld [vmem:[%s297 + $0x10] sm:$0xf]
      %v341 = vld [vmem:[%s297 + $0x14] sm:$0xf]
      %v342 = vld [vmem:[%s297 + $0x18] sm:$0xf]
      %v343 = vld [vmem:[%s297 + $0x1c] sm:$0xf]
      %v344 = vld [vmem:[%s297 + $0x20] sm:$0xf]
      %v345 = vld [vmem:[%s297 + $0x24] sm:$0xf]
      %v346 = vld [vmem:[%s297 + $0x28] sm:$0xf]
      %v347 = vld [vmem:[%s297 + $0x2c] sm:$0xf]
      %v348 = vld [vmem:[%s297 + $0x30] sm:$0xf]
      %v349 = vld [vmem:[%s297 + $0x34] sm:$0xf]
      %v350 = vld [vmem:[%s297 + $0x38] sm:$0xf]
      %v351 = vld [vmem:[%s297 + $0x3c] sm:$0xf]
      %v352 = vld [vmem:[%s297 + $0x40] sm:$0xf]
      %v353 = vld [vmem:[%s297 + $0x44] sm:$0xf]
      %v354 = vld [vmem:[%s297 + $0x48] sm:$0xf]
      %v355 = vld [vmem:[%s297 + $0x4c] sm:$0xf]
      %v356 = vld [vmem:[%s297 + $0x50] sm:$0xf]
      %v357 = vld [vmem:[%s297 + $0x54] sm:$0xf]
      %v358 = vld [vmem:[%s297 + $0x58] sm:$0xf]
      %v359 = vld [vmem:[%s297 + $0x5c] sm:$0xf]
      %v360 = vld [vmem:[%s297 + $0x60] sm:$0xf]
      %v361 = vld [vmem:[%s297 + $0x64] sm:$0xf]
      %v362 = vld [vmem:[%s297 + $0x68] sm:$0xf]
      %v363 = vld [vmem:[%s297 + $0x6c] sm:$0xf]
      %v364 = vld [vmem:[%s297 + $0x70] sm:$0xf]
      %v365 = vld [vmem:[%s297 + $0x74] sm:$0xf]
      %v366 = vld [vmem:[%s297 + $0x78] sm:$0xf]
      %v367 = vld [vmem:[%s297 + $0x7c] sm:$0xf]
      %v368 = vld [vmem:[%s297 + $0x80] sm:$0xf]
      %v369 = vld [vmem:[%s297 + $0x84] sm:$0xf]
      %v370 = vld [vmem:[%s297 + $0x88] sm:$0xf]
      %v371 = vld [vmem:[%s297 + $0x8c] sm:$0xf]
      %v372 = vld [vmem:[%s297 + $0x90] sm:$0xf]
      %v373 = vld [vmem:[%s297 + $0x94] sm:$0xf]
      %v374 = vld [vmem:[%s297 + $0x98] sm:$0xf]
      %v375 = vld [vmem:[%s297 + $0x9c] sm:$0xf]
      %v376 = vld [vmem:[%s297 + $0xa0] sm:$0xf]
      %v377 = vld [vmem:[%s297 + $0xa4] sm:$0xf]
      %v378 = vld [vmem:[%s297 + $0xa8] sm:$0xf]
      %v379 = vld [vmem:[%s297 + $0xac] sm:$0xf]
      %v380 = vld [vmem:[%s297 + $0xb0] sm:$0xf]
      %v381 = vld [vmem:[%s297 + $0xb4] sm:$0xf]
      %v382 = vld [vmem:[%s297 + $0xb8] sm:$0xf]
      %v383 = vld [vmem:[%s297 + $0xbc] sm:$0xf]
      %v384 = vld [vmem:[%s297 + $0xc0] sm:$0xf]
      %v385 = vld [vmem:[%s297 + $0xc4] sm:$0xf]
      %v386 = vld [vmem:[%s297 + $0xc8] sm:$0xf]
      %v387 = vld [vmem:[%s297 + $0xcc] sm:$0xf]
      %v388 = vld [vmem:[%s297 + $0xd0] sm:$0xf]
      %v389 = vld [vmem:[%s297 + $0xd4] sm:$0xf]
      %v390 = vld [vmem:[%s297 + $0xd8] sm:$0xf]
      %v391 = vld [vmem:[%s297 + $0xdc] sm:$0xf]
      %v392 = vld [vmem:[%s297 + $0xe0] sm:$0xf]
      %v393 = vld [vmem:[%s297 + $0xe4] sm:$0xf]
      %v394 = vld [vmem:[%s297 + $0xe8] sm:$0xf]
      %v395 = vld [vmem:[%s297 + $0xec] sm:$0xf]
      %v396 = vld [vmem:[%s297 + $0xf0] sm:$0xf]
      %v397 = vld [vmem:[%s297 + $0xf4] sm:$0xf]
      %v398 = vld [vmem:[%s297 + $0xf8] sm:$0xf]
      %v399 = vld [vmem:[%s297 + $0xfc] sm:$0xf]
      %v400 = vld [vmem:[%s297 + $0x100] sm:$0xf]
      %v401 = vld [vmem:[%s297 + $0x104] sm:$0xf]
      %v402 = vld [vmem:[%s297 + $0x108] sm:$0xf]
      %v403 = vld [vmem:[%s297 + $0x10c] sm:$0xf]
      %v404 = vld [vmem:[%s297 + $0x110] sm:$0xf]
      %v405 = vld [vmem:[%s297 + $0x114] sm:$0xf]
      %v406 = vld [vmem:[%s297 + $0x118] sm:$0xf]
      %v407 = vld [vmem:[%s297 + $0x11c] sm:$0xf]
      %v408 = vld [vmem:[%s297 + $0x120] sm:$0xf]
      %v409 = vld [vmem:[%s297 + $0x124] sm:$0xf]
      %v410 = vld [vmem:[%s297 + $0x128] sm:$0xf]
      %v411 = vld [vmem:[%s297 + $0x12c] sm:$0xf]
      %v412 = vld [vmem:[%s297 + $0x130] sm:$0xf]
      %v413 = vld [vmem:[%s297 + $0x134] sm:$0xf]
      %v414 = vld [vmem:[%s297 + $0x138] sm:$0xf]
      %v415 = vld [vmem:[%s297 + $0x13c] sm:$0xf]
      %v416 = vld [vmem:[%s297 + $0x140] sm:$0xf]
      %v417 = vld [vmem:[%s297 + $0x144] sm:$0xf]
      %v418 = vld [vmem:[%s297 + $0x148] sm:$0xf]
      %v419 = vld [vmem:[%s297 + $0x14c] sm:$0xf]
      %v420 = vld [vmem:[%s297 + $0x150] sm:$0xf]
      %v421 = vld [vmem:[%s297 + $0x154] sm:$0xf]
      %v422 = vld [vmem:[%s297 + $0x158] sm:$0xf]
      %v423 = vld [vmem:[%s297 + $0x15c] sm:$0xf]
      %v424 = vld [vmem:[%s297 + $0x160] sm:$0xf]
      %v425 = vld [vmem:[%s297 + $0x164] sm:$0xf]
      %v426 = vld [vmem:[%s297 + $0x168] sm:$0xf]
      %v427 = vld [vmem:[%s297 + $0x16c] sm:$0xf]
      %v428 = vld [vmem:[%s297 + $0x170] sm:$0xf]
      %v429 = vld [vmem:[%s297 + $0x174] sm:$0xf]
      %v430 = vld [vmem:[%s297 + $0x178] sm:$0xf]
      %v431 = vld [vmem:[%s297 + $0x17c] sm:$0xf]
      %v432 = vld [vmem:[%s297 + $0x180] sm:$0xf]
      %v433 = vld [vmem:[%s297 + $0x184] sm:$0xf]
      %v434 = vld [vmem:[%s297 + $0x188] sm:$0xf]
      %v435 = vld [vmem:[%s297 + $0x18c] sm:$0xf]
      %v436 = vld [vmem:[%s297 + $0x190] sm:$0xf]
      %v437 = vld [vmem:[%s297 + $0x194] sm:$0xf]
      %v438 = vld [vmem:[%s297 + $0x198] sm:$0xf]
      %v439 = vld [vmem:[%s297 + $0x19c] sm:$0xf]
      %v440 = vld [vmem:[%s297 + $0x1a0] sm:$0xf]
      %v441 = vld [vmem:[%s297 + $0x1a4] sm:$0xf]
      %v442 = vld [vmem:[%s297 + $0x1a8] sm:$0xf]
      %v443 = vld [vmem:[%s297 + $0x1ac] sm:$0xf]
      %v444 = vld [vmem:[%s297 + $0x1b0] sm:$0xf]
      %v445 = vld [vmem:[%s297 + $0x1b4] sm:$0xf]
      %v446 = vld [vmem:[%s297 + $0x1b8] sm:$0xf]
      %v447 = vld [vmem:[%s297 + $0x1bc] sm:$0xf]
      %v448 = vld [vmem:[%s297 + $0x1c0] sm:$0xf]
      %v449 = vld [vmem:[%s297 + $0x1c4] sm:$0xf]
      %v450 = vld [vmem:[%s297 + $0x1c8] sm:$0xf]
      %v451 = vld [vmem:[%s297 + $0x1cc] sm:$0xf]
      %v452 = vld [vmem:[%s297 + $0x1d0] sm:$0xf]
      %v453 = vld [vmem:[%s297 + $0x1d4] sm:$0xf]
      %v454 = vld [vmem:[%s297 + $0x1d8] sm:$0xf]
      %v455 = vld [vmem:[%s297 + $0x1dc] sm:$0xf]
      %v456 = vld [vmem:[%s297 + $0x1e0] sm:$0xf]
      %v457 = vld [vmem:[%s297 + $0x1e4] sm:$0xf]
      %v458 = vld [vmem:[%s297 + $0x1e8] sm:$0xf]
      %v459 = vld [vmem:[%s297 + $0x1ec] sm:$0xf]
      %v460 = vld [vmem:[%s297 + $0x1f0] sm:$0xf]
      %v461 = vld [vmem:[%s297 + $0x1f4] sm:$0xf]
      %v462 = vld [vmem:[%s297 + $0x1f8] sm:$0xf]
      %v463 = vld [vmem:[%s297 + $0x1fc] sm:$0xf]
      %v464 = vld [vmem:[%s2] sm:$0x1]
      %v466 = vperm.slane %v464, 0
      %v484 = vunpack.c.l.b16 %v320
      %v485 = vunpack.c.h.b16 %v320
      %v486 = vunpack.c.l.b16 %v321
      %v487 = vunpack.c.h.b16 %v321
      %v488 = vunpack.c.l.b16 %v322
      %v489 = vunpack.c.h.b16 %v322
      %v490 = vunpack.c.l.b16 %v323
      %v491 = vunpack.c.h.b16 %v323
      %v492 = vunpack.c.l.b16 %v324
      %v493 = vunpack.c.h.b16 %v324
      %v494 = vunpack.c.l.b16 %v325
      %v495 = vunpack.c.h.b16 %v325
      %v496 = vunpack.c.l.b16 %v326
      %v497 = vunpack.c.h.b16 %v326
      %v498 = vunpack.c.l.b16 %v327
      %v499 = vunpack.c.h.b16 %v327
      %v500 = vunpack.c.l.b16 %v328
      %v501 = vunpack.c.h.b16 %v328
      %v502 = vunpack.c.l.b16 %v329
      %v503 = vunpack.c.h.b16 %v329
      %v504 = vunpack.c.l.b16 %v330
      %v505 = vunpack.c.h.b16 %v330
      %v506 = vunpack.c.l.b16 %v331
      %v507 = vunpack.c.h.b16 %v331
      %v508 = vunpack.c.l.b16 %v332
      %v509 = vunpack.c.h.b16 %v332
      %v510 = vunpack.c.l.b16 %v333
      %v511 = vunpack.c.h.b16 %v333
      %v512 = vunpack.c.l.b16 %v334
      %v513 = vunpack.c.h.b16 %v334
      %v514 = vunpack.c.l.b16 %v335
      %v515 = vunpack.c.h.b16 %v335
      %v516 = vpack.c.b16 %v492, %v484
      %v517 = vpack.c.b16 %v493, %v485
      %v518 = vpack.c.b16 %v494, %v486
      %v519 = vpack.c.b16 %v495, %v487
      %v520 = vpack.c.b16 %v496, %v488
      %v521 = vpack.c.b16 %v497, %v489
      %v522 = vpack.c.b16 %v498, %v490
      %v523 = vpack.c.b16 %v499, %v491
      %v524 = vpack.c.b16 %v508, %v500
      %v525 = vpack.c.b16 %v509, %v501
      %v526 = vpack.c.b16 %v510, %v502
      %v527 = vpack.c.b16 %v511, %v503
      %v528 = vpack.c.b16 %v512, %v504
      %v529 = vpack.c.b16 %v513, %v505
      %v530 = vpack.c.b16 %v514, %v506
      %v531 = vpack.c.b16 %v515, %v507
      %v676 = vunpack.c.l.b16 %v336
      %v677 = vunpack.c.l.b16 %v337
      %v678 = vunpack.c.l.b16 %v338
      %v679 = vunpack.c.l.b16 %v339
      %v680 = vunpack.c.l.b16 %v340
      %v681 = vunpack.c.l.b16 %v341
      %v682 = vunpack.c.l.b16 %v342
      %v683 = vunpack.c.l.b16 %v343
      %v684 = vunpack.c.l.b16 %v344
      %v685 = vunpack.c.l.b16 %v345
      %v686 = vunpack.c.l.b16 %v346
      %v687 = vunpack.c.l.b16 %v347
      %v688 = vunpack.c.l.b16 %v348
      %v689 = vunpack.c.l.b16 %v349
      %v690 = vunpack.c.l.b16 %v350
      %v691 = vunpack.c.l.b16 %v351
      %v692 = vunpack.c.l.b16 %v352
      %v693 = vunpack.c.l.b16 %v353
      %v694 = vunpack.c.l.b16 %v354
      %v695 = vunpack.c.l.b16 %v355
      %v696 = vunpack.c.l.b16 %v356
      %v697 = vunpack.c.l.b16 %v357
      %v698 = vunpack.c.l.b16 %v358
      %v699 = vunpack.c.l.b16 %v359
      %v700 = vunpack.c.l.b16 %v360
      %v701 = vunpack.c.l.b16 %v361
      %v702 = vunpack.c.l.b16 %v362
      %v703 = vunpack.c.l.b16 %v363
      %v704 = vunpack.c.l.b16 %v364
      %v705 = vunpack.c.l.b16 %v365
      %v706 = vunpack.c.l.b16 %v366
      %v707 = vunpack.c.l.b16 %v367
      %v708 = vunpack.c.l.b16 %v368
      %v709 = vunpack.c.l.b16 %v369
      %v710 = vunpack.c.l.b16 %v370
      %v711 = vunpack.c.l.b16 %v371
      %v712 = vunpack.c.l.b16 %v372
      %v713 = vunpack.c.l.b16 %v373
      %v714 = vunpack.c.l.b16 %v374
      %v715 = vunpack.c.l.b16 %v375
      %v716 = vunpack.c.l.b16 %v376
      %v717 = vunpack.c.l.b16 %v377
      %v718 = vunpack.c.l.b16 %v378
      %v719 = vunpack.c.l.b16 %v379
      %v720 = vunpack.c.l.b16 %v380
      %v721 = vunpack.c.l.b16 %v381
      %v722 = vunpack.c.l.b16 %v382
      %v723 = vunpack.c.l.b16 %v383
      %v724 = vunpack.c.l.b16 %v384
      %v725 = vunpack.c.l.b16 %v385
      %v726 = vunpack.c.l.b16 %v386
      %v727 = vunpack.c.l.b16 %v387
      %v728 = vunpack.c.l.b16 %v388
      %v729 = vunpack.c.l.b16 %v389
      %v730 = vunpack.c.l.b16 %v390
      %v731 = vunpack.c.l.b16 %v391
      %v732 = vunpack.c.l.b16 %v392
      %v733 = vunpack.c.l.b16 %v393
      %v734 = vunpack.c.l.b16 %v394
      %v735 = vunpack.c.l.b16 %v395
      %v736 = vunpack.c.l.b16 %v396
      %v737 = vunpack.c.l.b16 %v397
      %v738 = vunpack.c.l.b16 %v398
      %v739 = vunpack.c.l.b16 %v399
      %v740 = vunpack.c.l.b16 %v400
      %v741 = vunpack.c.l.b16 %v401
      %v742 = vunpack.c.l.b16 %v402
      %v743 = vunpack.c.l.b16 %v403
      %v744 = vunpack.c.l.b16 %v404
      %v745 = vunpack.c.l.b16 %v405
      %v746 = vunpack.c.l.b16 %v406
      %v747 = vunpack.c.l.b16 %v407
      %v748 = vunpack.c.l.b16 %v408
      %v749 = vunpack.c.l.b16 %v409
      %v750 = vunpack.c.l.b16 %v410
      %v751 = vunpack.c.l.b16 %v411
      %v752 = vunpack.c.l.b16 %v412
      %v753 = vunpack.c.l.b16 %v413
      %v754 = vunpack.c.l.b16 %v414
      %v755 = vunpack.c.l.b16 %v415
      %v756 = vunpack.c.l.b16 %v416
      %v757 = vunpack.c.l.b16 %v417
      %v758 = vunpack.c.l.b16 %v418
      %v759 = vunpack.c.l.b16 %v419
      %v760 = vunpack.c.l.b16 %v420
      %v761 = vunpack.c.l.b16 %v421
      %v762 = vunpack.c.l.b16 %v422
      %v763 = vunpack.c.l.b16 %v423
      %v764 = vunpack.c.l.b16 %v424
      %v765 = vunpack.c.l.b16 %v425
      %v766 = vunpack.c.l.b16 %v426
      %v767 = vunpack.c.l.b16 %v427
      %v768 = vunpack.c.l.b16 %v428
      %v769 = vunpack.c.l.b16 %v429
      %v770 = vunpack.c.l.b16 %v430
      %v771 = vunpack.c.l.b16 %v431
      %v772 = vunpack.c.l.b16 %v432
      %v773 = vunpack.c.l.b16 %v433
      %v774 = vunpack.c.l.b16 %v434
      %v775 = vunpack.c.l.b16 %v435
      %v776 = vunpack.c.l.b16 %v436
      %v777 = vunpack.c.l.b16 %v437
      %v778 = vunpack.c.l.b16 %v438
      %v779 = vunpack.c.l.b16 %v439
      %v780 = vunpack.c.l.b16 %v440
      %v781 = vunpack.c.l.b16 %v441
      %v782 = vunpack.c.l.b16 %v442
      %v783 = vunpack.c.l.b16 %v443
      %v784 = vunpack.c.l.b16 %v444
      %v785 = vunpack.c.l.b16 %v445
      %v786 = vunpack.c.l.b16 %v446
      %v787 = vunpack.c.l.b16 %v447
      %v788 = vunpack.c.l.b16 %v448
      %v789 = vunpack.c.l.b16 %v449
      %v790 = vunpack.c.l.b16 %v450
      %v791 = vunpack.c.l.b16 %v451
      %v792 = vunpack.c.l.b16 %v452
      %v793 = vunpack.c.l.b16 %v453
      %v794 = vunpack.c.l.b16 %v454
      %v795 = vunpack.c.l.b16 %v455
      %v796 = vunpack.c.l.b16 %v456
      %v797 = vunpack.c.l.b16 %v457
      %v798 = vunpack.c.l.b16 %v458
      %v799 = vunpack.c.l.b16 %v459
      %v800 = vunpack.c.l.b16 %v460
      %v801 = vunpack.c.l.b16 %v461
      %v802 = vunpack.c.l.b16 %v462
      %v803 = vunpack.c.l.b16 %v463
      %v804 = vpack.c.b16 %v677, %v676
      %v805 = vpack.c.b16 %v679, %v678
      %v806 = vpack.c.b16 %v681, %v680
      %v807 = vpack.c.b16 %v683, %v682
      %v808 = vpack.c.b16 %v685, %v684
      %v809 = vpack.c.b16 %v687, %v686
      %v810 = vpack.c.b16 %v689, %v688
      %v811 = vpack.c.b16 %v691, %v690
      %v812 = vpack.c.b16 %v693, %v692
      %v813 = vpack.c.b16 %v695, %v694
      %v814 = vpack.c.b16 %v697, %v696
      %v815 = vpack.c.b16 %v699, %v698
      %v816 = vpack.c.b16 %v701, %v700
      %v817 = vpack.c.b16 %v703, %v702
      %v818 = vpack.c.b16 %v705, %v704
      %v819 = vpack.c.b16 %v707, %v706
      %v820 = vpack.c.b16 %v709, %v708
      %v821 = vpack.c.b16 %v711, %v710
      %v822 = vpack.c.b16 %v713, %v712
      %v823 = vpack.c.b16 %v715, %v714
      %v824 = vpack.c.b16 %v717, %v716
      %v825 = vpack.c.b16 %v719, %v718
      %v826 = vpack.c.b16 %v721, %v720
      %v827 = vpack.c.b16 %v723, %v722
      %v828 = vpack.c.b16 %v725, %v724
      %v829 = vpack.c.b16 %v727, %v726
      %v830 = vpack.c.b16 %v729, %v728
      %v831 = vpack.c.b16 %v731, %v730
      %v832 = vpack.c.b16 %v733, %v732
      %v833 = vpack.c.b16 %v735, %v734
      %v834 = vpack.c.b16 %v737, %v736
      %v835 = vpack.c.b16 %v739, %v738
      %v836 = vpack.c.b16 %v741, %v740
      %v837 = vpack.c.b16 %v743, %v742
      %v838 = vpack.c.b16 %v745, %v744
      %v839 = vpack.c.b16 %v747, %v746
      %v840 = vpack.c.b16 %v749, %v748
      %v841 = vpack.c.b16 %v751, %v750
      %v842 = vpack.c.b16 %v753, %v752
      %v843 = vpack.c.b16 %v755, %v754
      %v844 = vpack.c.b16 %v757, %v756
      %v845 = vpack.c.b16 %v759, %v758
      %v846 = vpack.c.b16 %v761, %v760
      %v847 = vpack.c.b16 %v763, %v762
      %v848 = vpack.c.b16 %v765, %v764
      %v849 = vpack.c.b16 %v767, %v766
      %v850 = vpack.c.b16 %v769, %v768
      %v851 = vpack.c.b16 %v771, %v770
      %v852 = vpack.c.b16 %v773, %v772
      %v853 = vpack.c.b16 %v775, %v774
      %v854 = vpack.c.b16 %v777, %v776
      %v855 = vpack.c.b16 %v779, %v778
      %v856 = vpack.c.b16 %v781, %v780
      %v857 = vpack.c.b16 %v783, %v782
      %v858 = vpack.c.b16 %v785, %v784
      %v859 = vpack.c.b16 %v787, %v786
      %v860 = vpack.c.b16 %v789, %v788
      %v861 = vpack.c.b16 %v791, %v790
      %v862 = vpack.c.b16 %v793, %v792
      %v863 = vpack.c.b16 %v795, %v794
      %v864 = vpack.c.b16 %v797, %v796
      %v865 = vpack.c.b16 %v799, %v798
      %v866 = vpack.c.b16 %v801, %v800
      %v867 = vpack.c.b16 %v803, %v802
      %932 = vmatpush.bf16.msra.mxu0 %v811
      %933 = vmatpush.bf16.msra.mxu0 %v810
      %934 = vmatpush.bf16.msra.mxu0 %v809
      %935 = vmatpush.bf16.msra.mxu0 %v808
      %936 = vmatpush.bf16.msra.mxu0 %v807
      %937 = vmatpush.bf16.msra.mxu0 %v806
      %938 = vmatpush.bf16.msra.mxu0 %v805
      %939 = vmatpush.bf16.msra.mxu0 %v804
      %940 = vmatmul.bf16.gmra.mxu0 %v516
      %v941 = vpop.f32.mrf.mxu0
      %v942 = vadd.f32 %v466, %v941
      %v943 = vpop.f32.mrf.mxu0
      %v944 = vadd.f32 %v466, %v943
      %945 = vmatmul.bf16.gmra.mxu0 %v524
      %v946 = vpop.f32.mrf.mxu0
      %v947 = vadd.f32 %v466, %v946
      %v948 = vpop.f32.mrf.mxu0
      %v949 = vadd.f32 %v466, %v948
      %950 = vdwg.mxu0
      %951 = vmatpush.bf16.msra.mxu0 %v819
      %952 = vmatpush.bf16.msra.mxu0 %v818
      %953 = vmatpush.bf16.msra.mxu0 %v817
      %954 = vmatpush.bf16.msra.mxu0 %v816
      %955 = vmatpush.bf16.msra.mxu0 %v815
      %956 = vmatpush.bf16.msra.mxu0 %v814
      %957 = vmatpush.bf16.msra.mxu0 %v813
      %958 = vmatpush.bf16.msra.mxu0 %v812
      %959 = vmatmul.bf16.gmra.mxu0 %v517
      %v960 = vpop.f32.mrf.mxu0
      %v961 = vadd.f32 %v942, %v960
      %v962 = vpop.f32.mrf.mxu0
      %v963 = vadd.f32 %v944, %v962
      %964 = vmatmul.bf16.gmra.mxu0 %v525
      %v965 = vpop.f32.mrf.mxu0
      %v966 = vadd.f32 %v947, %v965
      %v967 = vpop.f32.mrf.mxu0
      %v968 = vadd.f32 %v949, %v967
      %969 = vdwg.mxu0
      %970 = vmatpush.bf16.msra.mxu0 %v827
      %971 = vmatpush.bf16.msra.mxu0 %v826
      %972 = vmatpush.bf16.msra.mxu0 %v825
      %973 = vmatpush.bf16.msra.mxu0 %v824
      %974 = vmatpush.bf16.msra.mxu0 %v823
      %975 = vmatpush.bf16.msra.mxu0 %v822
      %976 = vmatpush.bf16.msra.mxu0 %v821
      %977 = vmatpush.bf16.msra.mxu0 %v820
      %978 = vmatmul.bf16.gmra.mxu0 %v518
      %v979 = vpop.f32.mrf.mxu0
      %v980 = vadd.f32 %v961, %v979
      %v981 = vpop.f32.mrf.mxu0
      %v982 = vadd.f32 %v963, %v981
      %983 = vmatmul.bf16.gmra.mxu0 %v526
      %v984 = vpop.f32.mrf.mxu0
      %v985 = vadd.f32 %v966, %v984
      %v986 = vpop.f32.mrf.mxu0
      %v987 = vadd.f32 %v968, %v986
      %988 = vdwg.mxu0
      %989 = vmatpush.bf16.msra.mxu0 %v835
      %990 = vmatpush.bf16.msra.mxu0 %v834
      %991 = vmatpush.bf16.msra.mxu0 %v833
      %992 = vmatpush.bf16.msra.mxu0 %v832
      %993 = vmatpush.bf16.msra.mxu0 %v831
      %994 = vmatpush.bf16.msra.mxu0 %v830
      %995 = vmatpush.bf16.msra.mxu0 %v829
      %996 = vmatpush.bf16.msra.mxu0 %v828
      %997 = vmatmul.bf16.gmra.mxu0 %v519
      %v998 = vpop.f32.mrf.mxu0
      %v999 = vadd.f32 %v980, %v998
      %v1000 = vpop.f32.mrf.mxu0
      %v1001 = vadd.f32 %v982, %v1000
      %1002 = vmatmul.bf16.gmra.mxu0 %v527
      %v1003 = vpop.f32.mrf.mxu0
      %v1004 = vadd.f32 %v985, %v1003
      %v1005 = vpop.f32.mrf.mxu0
      %v1006 = vadd.f32 %v987, %v1005
      %1007 = vdwg.mxu0
      %1008 = vmatpush.bf16.msra.mxu0 %v843
      %1009 = vmatpush.bf16.msra.mxu0 %v842
      %1010 = vmatpush.bf16.msra.mxu0 %v841
      %1011 = vmatpush.bf16.msra.mxu0 %v840
      %1012 = vmatpush.bf16.msra.mxu0 %v839
      %1013 = vmatpush.bf16.msra.mxu0 %v838
      %1014 = vmatpush.bf16.msra.mxu0 %v837
      %1015 = vmatpush.bf16.msra.mxu0 %v836
      %1016 = vmatmul.bf16.gmra.mxu0 %v520
      %v1017 = vpop.f32.mrf.mxu0
      %v1018 = vadd.f32 %v999, %v1017
      %v1019 = vpop.f32.mrf.mxu0
      %v1020 = vadd.f32 %v1001, %v1019
      %1021 = vmatmul.bf16.gmra.mxu0 %v528
      %v1022 = vpop.f32.mrf.mxu0
      %v1023 = vadd.f32 %v1004, %v1022
      %v1024 = vpop.f32.mrf.mxu0
      %v1025 = vadd.f32 %v1006, %v1024
      %1026 = vdwg.mxu0
      %1027 = vmatpush.bf16.msra.mxu0 %v851
      %1028 = vmatpush.bf16.msra.mxu0 %v850
      %1029 = vmatpush.bf16.msra.mxu0 %v849
      %1030 = vmatpush.bf16.msra.mxu0 %v848
      %1031 = vmatpush.bf16.msra.mxu0 %v847
      %1032 = vmatpush.bf16.msra.mxu0 %v846
      %1033 = vmatpush.bf16.msra.mxu0 %v845
      %1034 = vmatpush.bf16.msra.mxu0 %v844
      %1035 = vmatmul.bf16.gmra.mxu0 %v521
      %v1036 = vpop.f32.mrf.mxu0
      %v1037 = vadd.f32 %v1018, %v1036
      %v1038 = vpop.f32.mrf.mxu0
      %v1039 = vadd.f32 %v1020, %v1038
      %1040 = vmatmul.bf16.gmra.mxu0 %v529
      %v1041 = vpop.f32.mrf.mxu0
      %v1042 = vadd.f32 %v1023, %v1041
      %v1043 = vpop.f32.mrf.mxu0
      %v1044 = vadd.f32 %v1025, %v1043
      %1045 = vdwg.mxu0
      %1046 = vmatpush.bf16.msra.mxu0 %v859
      %1047 = vmatpush.bf16.msra.mxu0 %v858
      %1048 = vmatpush.bf16.msra.mxu0 %v857
      %1049 = vmatpush.bf16.msra.mxu0 %v856
      %1050 = vmatpush.bf16.msra.mxu0 %v855
      %1051 = vmatpush.bf16.msra.mxu0 %v854
      %1052 = vmatpush.bf16.msra.mxu0 %v853
      %1053 = vmatpush.bf16.msra.mxu0 %v852
      %1054 = vmatmul.bf16.gmra.mxu0 %v522
      %v1055 = vpop.f32.mrf.mxu0
      %v1056 = vadd.f32 %v1037, %v1055
      %v1057 = vpop.f32.mrf.mxu0
      %v1058 = vadd.f32 %v1039, %v1057
      %1059 = vmatmul.bf16.gmra.mxu0 %v530
      %v1060 = vpop.f32.mrf.mxu0
      %v1061 = vadd.f32 %v1042, %v1060
      %v1062 = vpop.f32.mrf.mxu0
      %v1063 = vadd.f32 %v1044, %v1062
      %1064 = vdwg.mxu0
      %1065 = vmatpush.bf16.msra.mxu0 %v867
      %1066 = vmatpush.bf16.msra.mxu0 %v866
      %1067 = vmatpush.bf16.msra.mxu0 %v865
      %1068 = vmatpush.bf16.msra.mxu0 %v864
      %1069 = vmatpush.bf16.msra.mxu0 %v863
      %1070 = vmatpush.bf16.msra.mxu0 %v862
      %1071 = vmatpush.bf16.msra.mxu0 %v861
      %1072 = vmatpush.bf16.msra.mxu0 %v860
      %1073 = vmatmul.bf16.gmra.mxu0 %v523
      %v1074 = vpop.f32.mrf.mxu0
      %v1075 = vadd.f32 %v1056, %v1074
      %v1076 = vpop.f32.mrf.mxu0
      %v1077 = vadd.f32 %v1058, %v1076
      %1078 = vmatmul.bf16.gmra.mxu0 %v531
      %v1079 = vpop.f32.mrf.mxu0
      %v1080 = vadd.f32 %v1061, %v1079
      %v1081 = vpop.f32.mrf.mxu0
      %v1082 = vadd.f32 %v1063, %v1081
      %1083 = vdwg.mxu0
      %v1084 = vpack.c.bf16 %v1075, %v1075
      %v1085 = vpack.c.bf16 %v1077, %v1077
      %v1086 = vpack.c.bf16 %v1080, %v1080
      %v1087 = vpack.c.bf16 %v1082, %v1082
      %1088 = vst [vmem:[%s306] sm:$0xf] %v1084
      %1089 = vst [vmem:[%s306 + $0x4] sm:$0xf] %v1085
      %1090 = vst [vmem:[%s306 + $0x8] sm:$0xf] %v1086
      %1091 = vst [vmem:[%s306 + $0xc] sm:$0xf] %v1087
      %v1092 = vadd.f32 %v1075, %v1077
      %v1093 = vadd.f32 %v1092, %v1080
      %v1094 = vadd.f32 %v1093, %v1082
      %v1095 = vrot.slane %v1094, 4
      %v1096 = vadd.f32 %v1094, %v1095
      %v1097 = vrot.slane %v1096, 2
      %v1098 = vadd.f32 %v1096, %v1097
      %v1099 = vrot.slane %v1098, 1
      %v1100 = vadd.f32 %v1098, %v1099
      %v1101 = vmul.f32 %v1100, 0.03125
      %v1102 = vsub.f32 %v1075, %v1101
      %v1103 = vsub.f32 %v1077, %v1101
      %v1104 = vsub.f32 %v1080, %v1101
      %v1105 = vsub.f32 %v1082, %v1101
      %v1106 = vmul.f32 %v1102, %v1102
      %v1107 = vmul.f32 %v1103, %v1103
      %v1108 = vmul.f32 %v1104, %v1104
      %v1109 = vmul.f32 %v1105, %v1105
      %v1110 = vadd.f32 %v1106, %v1107
      %v1111 = vadd.f32 %v1110, %v1108
      %v1112 = vadd.f32 %v1111, %v1109
      %v1113 = vrot.slane %v1112, 4
      %v1114 = vadd.f32 %v1112, %v1113
      %v1115 = vrot.slane %v1114, 2
      %v1116 = vadd.f32 %v1114, %v1115
      %v1117 = vrot.slane %v1116, 1
      %v1118 = vadd.f32 %v1116, %v1117
      %1119 = vst [vmem:[%s313] sm:$0x1] %v1100
      %1120 = vst [vmem:[%s319] sm:$0x1] %v1118
      %s1121 = smul.u32 4, %s22
      %p1122 = scmp.lt.s32.totalorder %s21, 3
      %s1123 = scalar_select %p1122, %s21, 3
      %p1124 = scmp.lt.s32.totalorder %s1121, 3
      %s1125 = scalar_select %p1124, %s1121, 3
      %s1126 = smul.addr %s1123, 4
      %s1127 = sadd.s32 %s1125, %s1126
      %s1128 = smul.addr %s1127, 4
      %s1129 = scalar_lea.vmem %s3, %s1128
      %p1130 = scmp.lt.s32.totalorder %s21, 3
      %s1131 = scalar_select %p1130, %s21, 3
      %p1132 = scmp.lt.s32.totalorder %s22, 0
      %s1133 = scalar_select %p1132, %s22, 0
      %s1134 = sadd.s32 %s1133, %s1131
      %s1135 = scalar_lea.vmem %s4, %s1134
      %p1136 = scmp.lt.s32.totalorder %s21, 3
      %s1137 = scalar_select %p1136, %s21, 3
      %p1138 = scmp.lt.s32.totalorder %s22, 0
      %s1139 = scalar_select %p1138, %s22, 0
      %s1140 = sadd.s32 %s1139, %s1137
      %s1141 = scalar_lea.vmem %s5, %s1140
      // Predicated region
      $region33: #{generator_forward.7} parent=31 // pred_check
        %p1142 = pneg %p124
      $region34: #{generator_forward.7} parent=31 // pred_check_branch
        %1144 = sbr.rel (%p1142) target = $region36
      $region35: #{generator_forward.7} parent=31 // pred_region
        %s1145 = smul.u32 4, %s22
      $region36: #{generator_forward.7} parent=31 // pred_fallthru
        _
      // Predicated region
      $region37: #{generator_forward.7} parent=31 // pred_check
        %p1146 = pneg %p152
      $region38: #{generator_forward.7} parent=31 // pred_check_branch
        %1148 = sbr.rel (%p1146) target = $region40
      $region39: #{generator_forward.7} parent=31 // pred_region
        _
      $region40: #{generator_forward.7} parent=31 // pred_fallthru
        _
      // Predicated region
      $region41: #{generator_forward.7} parent=31 // pred_check
        %p1149 = pneg %p180
      $region42: #{generator_forward.7} parent=31 // pred_check_branch
        %1151 = sbr.rel (%p1149) target = $region44
      $region43: #{generator_forward.7} parent=31 // pred_region
        _
      $region44: #{generator_forward.7} parent=31 // pred_fallthru
        _
    $region32: #{generator_forward.7} parent=5 // pred_fallthru
      _
    %p1152 = scmp.le.s32.totalorder 2, %s12
    // Predicated region
    $region45: #{generator_forward.7} parent=5 // pred_check
      %p1153 = pneg %p1152
    $region46: #{generator_forward.7} parent=5 // pred_check_branch
      %1155 = sbr.rel (%p1153) target = $region48
    $region47: #{generator_forward.7} parent=5 // pred_region
      %s1156 = ssub.s32 %s12, 2
      // Predicated region
      $region49: #{generator_forward.7} parent=47 // pred_check
        %p1157 = pneg %p130
      $region50: #{generator_forward.7} parent=47 // pred_check_branch
        %1159 = sbr.rel (%p1157) target = $region52
      $region51: #{generator_forward.7} parent=47 // pred_region
        %s1160 = smul.u32 4, %s24
        %p1161 = scmp.lt.s32.totalorder %s23, 3
        %s1162 = scalar_select %p1161, %s23, 3
        %p1163 = scmp.lt.s32.totalorder %s1160, 3
        %s1164 = scalar_select %p1163, %s1160, 3
        %s1165 = smul.addr %s1162, 4
        %s1166 = sadd.s32 %s1164, %s1165
        %s1167 = smul.addr %s1166, 4
        %s1168 = scalar_lea.vmem %s3, %s1167
      $region52: #{generator_forward.7} parent=47 // pred_fallthru
        _
      // Predicated region
      $region53: #{generator_forward.7} parent=47 // pred_check
        %p1169 = pneg %p158
      $region54: #{generator_forward.7} parent=47 // pred_check_branch
        %1171 = sbr.rel (%p1169) target = $region56
      $region55: #{generator_forward.7} parent=47 // pred_region
        %p1172 = scmp.lt.s32.totalorder %s23, 3
        %s1173 = scalar_select %p1172, %s23, 3
        %p1174 = scmp.lt.s32.totalorder %s24, 0
        %s1175 = scalar_select %p1174, %s24, 0
        %s1176 = sadd.s32 %s1175, %s1173
        %s1177 = scalar_lea.vmem %s4, %s1176
      $region56: #{generator_forward.7} parent=47 // pred_fallthru
        _
      // Predicated region
      $region57: #{generator_forward.7} parent=47 // pred_check
        %p1178 = pneg %p186
      $region58: #{generator_forward.7} parent=47 // pred_check_branch
        %1180 = sbr.rel (%p1178) target = $region60
      $region59: #{generator_forward.7} parent=47 // pred_region
        %p1181 = scmp.lt.s32.totalorder %s23, 3
        %s1182 = scalar_select %p1181, %s23, 3
        %p1183 = scmp.lt.s32.totalorder %s24, 0
        %s1184 = scalar_select %p1183, %s24, 0
        %s1185 = sadd.s32 %s1184, %s1182
        %s1186 = scalar_lea.vmem %s5, %s1185
      $region60: #{generator_forward.7} parent=47 // pred_fallthru
        _
    $region48: #{generator_forward.7} parent=5 // pred_fallthru
      _
  $region6: #{generator_forward.7} parent=0 // loop_footer
    %s16 = sadd.s32 1, %s12
  $region7: #{generator_forward.7} parent=0 // loop_footer_branch
    %11 = sbr.rel target = $region3
  $region8: #{generator_forward.7} parent=0 // loop_exit
    _

// kernel: generator_forward.8
$region0: #{generator_forward.8}
  #allocation0 [shape = 'u32[]', space=smem, size = 0x4, offset = 0x4, fixed_abs, tag = 'smem constant byte address 0x4 - core index']
  #allocation1 [shape = 'u32[72,128]{1,0:T(1,128)}', space=vmem, size = 0x9000, scoped, tag = 'internal scratch']
  %s0 = inlined_call_operand.vmem [shape: bf16[4,32,128], index: 0, kind: input, shape index: {}]
  %s1 = inlined_call_operand.vmem [shape: f32[1,128], index: 1, kind: input, shape index: {}]
  %s2 = inlined_call_operand.vmem [shape: f32[1,128], index: 2, kind: input, shape index: {}]
  %s3 = inlined_call_operand.vmem [shape: bf16[4,32,128], index: 3, kind: output, shape index: {}]
  %s4 = sld [smem:[#allocation0]]
  $region45: #{generator_forward.8} parent=0
    _
  %s6 = ssub.s32 1, %s4
  %s7 = scalar_select 0, %s6, %s4
  loop: start=0, step=1, limit=6
  $region2: #{generator_forward.8} parent=0 // loop_pre_header
    _
  $region3: #{generator_forward.8} parent=0 // loop_header
    %s9 = sphi 0, %s13
    %p10 = scmp.ge.s32.totalorder %s9, 6
    %s16 = sphi 0, %s28
    %s17 = sphi 0, %s24
    %s18 = sphi 0, %s16
    %s19 = sphi 0, %s17
    %s20 = sphi 0, %s18
    %s21 = sphi 0, %s19
    %s33 = sphi 0, %s35
    %s36 = sphi 0, %s33
    %s37 = sphi 0, %s36
    %s53 = sphi 0, %s37
    %s57 = sphi 0, %s57
    %s59 = sphi 0, %s57
    %s60 = sphi 0, %s59
    %s74 = sphi 0, %s60
    %s78 = sphi 0, %s78
    %s80 = sphi 0, %s78
    %s81 = sphi 0, %s80
    %s95 = sphi 0, %s81
    %s103 = sphi 0, %s105
    %s106 = sphi 0, %s103
    %s107 = sphi 0, %s106
    %s123 = sphi 0, %s107
  $region4: #{generator_forward.8} parent=0 // loop_header_branch
    %12 = sbr.rel (%p10) target = $region8
  $region5: #{generator_forward.8} parent=0 // loop_body
    %s14 = ssub.s32 %s9, 1
    %s15 = ssub.s32 %s9, 2
    %s22 = sadd.s32 1, %s17
    %p23 = scmp.ge.s32.totalorder %s22, 1
    %s24 = scalar_select %p23, 0, %s22
    %s25 = sadd.s32 1, %s16
    %s26 = scalar_select %p23, %s25, %s16
    %p27 = scmp.ge.s32.totalorder %s26, 4
    %s28 = scalar_select %p27, 0, %s26
    %s29 = ssub.s32 %s16, %s28
    %s30 = ssub.s32 %s17, %s24
    %s31 = sor.u32 %s29, %s30
    %p32 = scmp.eq.s32.totalorder %s31, 0
    %s34 = sadd.s32 %s33, 1
    %s35 = scalar_select %p32, %s33, %s34
    %p38 = pneg %p32
    %p39 = scmp.eq.s32.totalorder %s9, 3
    %p40 = por %p38, %p39
    %p41 = scmp.ne.s32.totalorder %s33, %s36
    %p42 = scmp.eq.s32.totalorder %s9, 0
    %p43 = por %p41, %p42
    %p44 = scmp.ne.s32.totalorder %s33, %s36
    %p45 = scmp.eq.s32.totalorder %s14, 3
    %p46 = por %p44, %p45
    %p47 = scmp.ne.s32.totalorder %s36, %s37
    %p48 = scmp.eq.s32.totalorder %s14, 0
    %p49 = por %p47, %p48
    %p50 = scmp.ne.s32.totalorder %s36, %s37
    %p51 = scmp.eq.s32.totalorder %s15, 3
    %p52 = por %p50, %p51
    %p54 = scmp.ne.s32.totalorder %s37, %s53
    %p55 = scmp.eq.s32.totalorder %s15, 0
    %p56 = por %p54, %p55
    %s58 = sadd.s32 %s57, 1
    %p61 = scmp.eq.s32.totalorder %s9, 3
    %p62 = scmp.ne.s32.totalorder %s57, %s59
    %p63 = scmp.eq.s32.totalorder %s9, 0
    %p64 = por %p62, %p63
    %p65 = scmp.ne.s32.totalorder %s57, %s59
    %p66 = scmp.eq.s32.totalorder %s14, 3
    %p67 = por %p65, %p66
    %p68 = scmp.ne.s32.totalorder %s59, %s60
    %p69 = scmp.eq.s32.totalorder %s14, 0
    %p70 = por %p68, %p69
    %p71 = scmp.ne.s32.totalorder %s59, %s60
    %p72 = scmp.eq.s32.totalorder %s15, 3
    %p73 = por %p71, %p72
    %p75 = scmp.ne.s32.totalorder %s60, %s74
    %p76 = scmp.eq.s32.totalorder %s15, 0
    %p77 = por %p75, %p76
    %s79 = sadd.s32 %s78, 1
    %p82 = scmp.eq.s32.totalorder %s9, 3
    %p83 = scmp.ne.s32.totalorder %s78, %s80
    %p84 = scmp.eq.s32.totalorder %s9, 0
    %p85 = por %p83, %p84
    %p86 = scmp.ne.s32.totalorder %s78, %s80
    %p87 = scmp.eq.s32.totalorder %s14, 3
    %p88 = por %p86, %p87
    %p89 = scmp.ne.s32.totalorder %s80, %s81
    %p90 = scmp.eq.s32.totalorder %s14, 0
    %p91 = por %p89, %p90
    %p92 = scmp.ne.s32.totalorder %s80, %s81
    %p93 = scmp.eq.s32.totalorder %s15, 3
    %p94 = por %p92, %p93
    %p96 = scmp.ne.s32.totalorder %s81, %s95
    %p97 = scmp.eq.s32.totalorder %s15, 0
    %p98 = por %p96, %p97
    %s99 = ssub.s32 %s16, %s28
    %s100 = ssub.s32 %s17, %s24
    %s101 = sor.u32 %s99, %s100
    %p102 = scmp.eq.s32.totalorder %s101, 0
    %s104 = sadd.s32 %s103, 1
    %s105 = scalar_select %p102, %s103, %s104
    %p108 = pneg %p102
    %p109 = scmp.eq.s32.totalorder %s9, 3
    %p110 = por %p108, %p109
    %p111 = scmp.ne.s32.totalorder %s103, %s106
    %p112 = scmp.eq.s32.totalorder %s9, 0
    %p113 = por %p111, %p112
    %p114 = scmp.ne.s32.totalorder %s103, %s106
    %p115 = scmp.eq.s32.totalorder %s14, 3
    %p116 = por %p114, %p115
    %p117 = scmp.ne.s32.totalorder %s106, %s107
    %p118 = scmp.eq.s32.totalorder %s14, 0
    %p119 = por %p117, %p118
    %p120 = scmp.ne.s32.totalorder %s106, %s107
    %p121 = scmp.eq.s32.totalorder %s15, 3
    %p122 = por %p120, %p121
    %p124 = scmp.ne.s32.totalorder %s107, %s123
    %p125 = scmp.eq.s32.totalorder %s15, 0
    %p126 = por %p124, %p125
    %p127 = scmp.le.s32.totalorder 1, %s9
    %p128 = scmp.lt.s32.totalorder %s9, 5
    %p129 = pnand %p127, %p128
    %p130 = pneg %p129
    // Predicated region
    $region9: #{generator_forward.8} parent=5 // pred_check
      _
    $region10: #{generator_forward.8} parent=5 // pred_check_branch
      %132 = sbr.rel (%p129) target = $region12
    $region11: #{generator_forward.8} parent=5 // pred_region
      %s133 = ssub.s32 %s9, 1
      // Predicated region
      $region13: #{generator_forward.8} parent=11 // pred_check
        %p134 = pneg %p70
      $region14: #{generator_forward.8} parent=11 // pred_check_branch
        %136 = sbr.rel (%p134) target = $region16
      $region15: #{generator_forward.8} parent=11 // pred_region
        _
      $region16: #{generator_forward.8} parent=11 // pred_fallthru
        _
      // Predicated region
      $region17: #{generator_forward.8} parent=11 // pred_check
        %p137 = pneg %p91
      $region18: #{generator_forward.8} parent=11 // pred_check_branch
        %139 = sbr.rel (%p137) target = $region20
      $region19: #{generator_forward.8} parent=11 // pred_region
        _
      $region20: #{generator_forward.8} parent=11 // pred_fallthru
        _
    $region12: #{generator_forward.8} parent=5 // pred_fallthru
      _
    %p140 = scmp.lt.s32.totalorder %s9, 4
    // Predicated region
    $region21: #{generator_forward.8} parent=5 // pred_check
      %p141 = pneg %p140
    $region22: #{generator_forward.8} parent=5 // pred_check_branch
      %143 = sbr.rel (%p141) target = $region24
    $region23: #{generator_forward.8} parent=5 // pred_region
      // Predicated region
      $region25: #{generator_forward.8} parent=23 // pred_check
        %p144 = pneg %p43
      $region26: #{generator_forward.8} parent=23 // pred_check_branch
        %146 = sbr.rel (%p144) target = $region28
      $region27: #{generator_forward.8} parent=23 // pred_region
        %s147 = smul.u32 4, %s17
        %p148 = scmp.lt.s32.totalorder %s16, 3
        %s149 = scalar_select %p148, %s16, 3
        %p150 = scmp.lt.s32.totalorder %s147, 3
        %s151 = scalar_select %p150, %s147, 3
        %s152 = smul.addr %s149, 4
        %s153 = sadd.s32 %s151, %s152
        %s154 = smul.addr %s153, 4
        %s155 = scalar_lea.vmem %s0, %s154
        %s156 = smul.u32 4, %s17
      $region28: #{generator_forward.8} parent=23 // pred_fallthru
        _
    $region24: #{generator_forward.8} parent=5 // pred_fallthru
      _
    %p157 = scmp.le.s32.totalorder 1, %s9
    %p158 = scmp.lt.s32.totalorder %s9, 5
    %p159 = pnand %p157, %p158
    %p160 = pneg %p159
    // Predicated region
    $region29: #{generator_forward.8} parent=5 // pred_check
      _
    $region30: #{generator_forward.8} parent=5 // pred_check_branch
      %162 = sbr.rel (%p159) target = $region32
    $region31: #{generator_forward.8} parent=5 // pred_region
      %s163 = ssub.s32 %s9, 1
      %s164 = smul.u32 4, %s19
      %p165 = scmp.lt.s32.totalorder %s18, 3
      %s166 = scalar_select %p165, %s18, 3
      %p167 = scmp.lt.s32.totalorder %s164, 3
      %s168 = scalar_select %p167, %s164, 3
      %s169 = smul.addr %s166, 4
      %s170 = sadd.s32 %s168, %s169
      %s171 = smul.addr %s170, 4
      %s172 = scalar_lea.vmem %s0, %s171
      %p173 = pneg %p49
      %p174 = pneg %p46
      %p175 = pneg %p70
      %p176 = pneg %p67
      %p177 = pneg %p91
      %p178 = pneg %p88
      %p179 = pneg %p119
      %p180 = pneg %p116
      %s181 = smul.u32 4, %s19
      %p182 = scmp.lt.s32.totalorder %s18, 3
      %s183 = scalar_select %p182, %s18, 3
      %p184 = scmp.lt.s32.totalorder %s181, 3
      %s185 = scalar_select %p184, %s181, 3
      %s186 = smul.addr %s183, 4
      %s187 = sadd.s32 %s185, %s186
      %s188 = smul.addr %s187, 4
      %s189 = scalar_lea.vmem %s3, %s188
      %s190 = smul.u32 4, %s19
      %p191 = scmp.lt.s32.totalorder %s18, 3
      %s192 = scalar_select %p191, %s18, 3
      %p193 = scmp.lt.s32.totalorder %s190, 3
      %s194 = scalar_select %p193, %s190, 3
      %s195 = smul.addr %s192, 4
      %s196 = sadd.s32 %s194, %s195
      %s197 = smul.addr %s196, 4
      %s198 = scalar_lea.vmem %s0, %s197
      %s199 = smul.u32 4, %s19
      %s200 = smul.u32 4, %s19
      %p201 = scmp.lt.s32.totalorder %s18, 3
      %s202 = scalar_select %p201, %s18, 3
      %p203 = scmp.lt.s32.totalorder %s200, 3
      %s204 = scalar_select %p203, %s200, 3
      %s205 = smul.addr %s202, 4
      %s206 = sadd.s32 %s204, %s205
      %s207 = smul.addr %s206, 4
      %s208 = scalar_lea.vmem %s3, %s207
      %s209 = smul.u32 4, %s19
      %v210 = vld [vmem:[%s198] sm:$0xf]
      %v211 = vld [vmem:[%s198 + $0x4] sm:$0xf]
      %v212 = vld [vmem:[%s198 + $0x8] sm:$0xf]
      %v213 = vld [vmem:[%s198 + $0xc] sm:$0xf]
      %v214 = vunpack.c.l.bf16 %v210
      %v215 = vunpack.c.l.bf16 %v211
      %v216 = vunpack.c.l.bf16 %v212
      %v217 = vunpack.c.l.bf16 %v213
      %v218 = vld [vmem:[%s1] sm:$0x1]
      %v220 = vperm.slane %v218, 0
      %v222 = vmul.f32 %v214, %v220
      %v223 = vmul.f32 %v215, %v220
      %v224 = vmul.f32 %v216, %v220
      %v225 = vmul.f32 %v217, %v220
      %v226 = vld [vmem:[%s2] sm:$0x1]
      %v228 = vperm.slane %v226, 0
      %v230 = vadd.f32 %v222, %v228
      %v231 = vadd.f32 %v223, %v228
      %v232 = vadd.f32 %v224, %v228
      %v233 = vadd.f32 %v225, %v228
      %vm234 = vcmp.ge.f32.partialorder %v230, 0.0
      %vm235 = vcmp.ge.f32.partialorder %v231, 0.0
      %vm236 = vcmp.ge.f32.partialorder %v232, 0.0
      %vm237 = vcmp.ge.f32.partialorder %v233, 0.0
      %v238 = vmul.f32 %v230, 0.2
      %v239 = vmul.f32 %v231, 0.2
      %v240 = vmul.f32 %v232, 0.2
      %v241 = vmul.f32 %v233, 0.2
      %v242 = vsel %vm234, %v230, %v238
      %v243 = vsel %vm235, %v231, %v239
      %v244 = vsel %vm236, %v232, %v240
      %v245 = vsel %vm237, %v233, %v241
      %v246 = vpack.c.bf16 %v242, %v242
      %v247 = vpack.c.bf16 %v243, %v243
      %v248 = vpack.c.bf16 %v244, %v244
      %v249 = vpack.c.bf16 %v245, %v245
      %250 = vst [vmem:[%s208] sm:$0xf] %v246
      %251 = vst [vmem:[%s208 + $0x4] sm:$0xf] %v247
      %252 = vst [vmem:[%s208 + $0x8] sm:$0xf] %v248
      %253 = vst [vmem:[%s208 + $0xc] sm:$0xf] %v249
      %s254 = smul.u32 4, %s19
      %p255 = scmp.lt.s32.totalorder %s18, 3
      %s256 = scalar_select %p255, %s18, 3
      %p257 = scmp.lt.s32.totalorder %s254, 3
      %s258 = scalar_select %p257, %s254, 3
      %s259 = smul.addr %s256, 4
      %s260 = sadd.s32 %s258, %s259
      %s261 = smul.addr %s260, 4
      %s262 = scalar_lea.vmem %s3, %s261
      // Predicated region
      $region33: #{generator_forward.8} parent=31 // pred_check
        %p263 = pneg %p116
      $region34: #{generator_forward.8} parent=31 // pred_check_branch
        %265 = sbr.rel (%p263) target = $region36
      $region35: #{generator_forward.8} parent=31 // pred_region
        %s266 = smul.u32 4, %s19
      $region36: #{generator_forward.8} parent=31 // pred_fallthru
        _
    $region32: #{generator_forward.8} parent=5 // pred_fallthru
      _
    %p267 = scmp.le.s32.totalorder 2, %s9
    // Predicated region
    $region37: #{generator_forward.8} parent=5 // pred_check
      %p268 = pneg %p267
    $region38: #{generator_forward.8} parent=5 // pred_check_branch
      %270 = sbr.rel (%p268) target = $region40
    $region39: #{generator_forward.8} parent=5 // pred_region
      %s271 = ssub.s32 %s9, 2
      // Predicated region
      $region41: #{generator_forward.8} parent=39 // pred_check
        %p272 = pneg %p122
      $region42: #{generator_forward.8} parent=39 // pred_check_branch
        %274 = sbr.rel (%p272) target = $region44
      $region43: #{generator_forward.8} parent=39 // pred_region
        %s275 = smul.u32 4, %s21
        %p276 = scmp.lt.s32.totalorder %s20, 3
        %s277 = scalar_select %p276, %s20, 3
        %p278 = scmp.lt.s32.totalorder %s275, 3
        %s279 = scalar_select %p278, %s275, 3
        %s280 = smul.addr %s277, 4
        %s281 = sadd.s32 %s279, %s280
        %s282 = smul.addr %s281, 4
        %s283 = scalar_lea.vmem %s3, %s282
      $region44: #{generator_forward.8} parent=39 // pred_fallthru
        _
    $region40: #{generator_forward.8} parent=5 // pred_fallthru
      _
  $region6: #{generator_forward.8} parent=0 // loop_footer
    %s13 = sadd.s32 1, %s9
  $region7: #{generator_forward.8} parent=0 // loop_footer_branch
    %8 = sbr.rel target = $region3
  $region8: #{generator_forward.8} parent=0 // loop_exit
    _

// kernel: generator_forward.9
$region0: #{generator_forward.9}
  #allocation0 [shape = 'u32[]', space=smem, size = 0x4, offset = 0x4, fixed_abs, tag = 'smem constant byte address 0x4 - core index']
  #allocation1 [shape = 'u32[72,128]{1,0:T(1,128)}', space=vmem, size = 0x9000, scoped, tag = 'internal scratch']
  %s0 = inlined_call_operand.vmem [shape: bf16[4,128,512], index: 0, kind: input, shape index: {}]
  %s1 = inlined_call_operand.vmem [shape: bf16[4,512,128], index: 1, kind: input, shape index: {}]
  %s2 = inlined_call_operand.vmem [shape: f32[1,128], index: 2, kind: input, shape index: {}]
  %s3 = inlined_call_operand.vmem [shape: bf16[4,128,128], index: 3, kind: output, shape index: {0}]
  %s4 = inlined_call_operand.vmem [shape: f32[4,1,1,128], index: 4, kind: output, shape index: {1}]
  %s5 = inlined_call_operand.vmem [shape: f32[4,1,1,128], index: 5, kind: output, shape index: {2}]
  %6 = xla_tuple %s3, %s4, %s5
  %s7 = sld [smem:[#allocation0]]
  $region61: #{generator_forward.9} parent=0
    _
  %s9 = ssub.s32 1, %s7
  %s10 = scalar_select 0, %s9, %s7
  loop: start=0, step=1, limit=6
  $region2: #{generator_forward.9} parent=0 // loop_pre_header
    _
  $region3: #{generator_forward.9} parent=0 // loop_header
    %s12 = sphi 0, %s16
    %p13 = scmp.ge.s32.totalorder %s12, 6
    %s19 = sphi 0, %s31
    %s20 = sphi 0, %s27
    %s21 = sphi 0, %s19
    %s22 = sphi 0, %s20
    %s23 = sphi 0, %s21
    %s24 = sphi 0, %s22
    %s36 = sphi 0, %s38
    %s39 = sphi 0, %s36
    %s40 = sphi 0, %s39
    %s56 = sphi 0, %s40
    %s62 = sphi 0, %s64
    %s65 = sphi 0, %s62
    %s66 = sphi 0, %s65
    %s82 = sphi 0, %s66
    %s86 = sphi 0, %s86
    %s88 = sphi 0, %s86
    %s89 = sphi 0, %s88
    %s103 = sphi 0, %s89
    %s111 = sphi 0, %s113
    %s114 = sphi 0, %s111
    %s115 = sphi 0, %s114
    %s131 = sphi 0, %s115
    %s139 = sphi 0, %s141
    %s142 = sphi 0, %s139
    %s143 = sphi 0, %s142
    %s159 = sphi 0, %s143
    %s167 = sphi 0, %s169
    %s170 = sphi 0, %s167
    %s171 = sphi 0, %s170
    %s187 = sphi 0, %s171
  $region4: #{generator_forward.9} parent=0 // loop_header_branch
    %15 = sbr.rel (%p13) target = $region8
  $region5: #{generator_forward.9} parent=0 // loop_body
    %s17 = ssub.s32 %s12, 1
    %s18 = ssub.s32 %s12, 2
    %s25 = sadd.s32 1, %s20
    %p26 = scmp.ge.s32.totalorder %s25, 1
    %s27 = scalar_select %p26, 0, %s25
    %s28 = sadd.s32 1, %s19
    %s29 = scalar_select %p26, %s28, %s19
    %p30 = scmp.ge.s32.totalorder %s29, 4
    %s31 = scalar_select %p30, 0, %s29
    %s32 = ssub.s32 %s19, %s31
    %s33 = ssub.s32 %s20, %s27
    %s34 = sor.u32 %s32, %s33
    %p35 = scmp.eq.s32.totalorder %s34, 0
    %s37 = sadd.s32 %s36, 1
    %s38 = scalar_select %p35, %s36, %s37
    %p41 = pneg %p35
    %p42 = scmp.eq.s32.totalorder %s12, 3
    %p43 = por %p41, %p42
    %p44 = scmp.ne.s32.totalorder %s36, %s39
    %p45 = scmp.eq.s32.totalorder %s12, 0
    %p46 = por %p44, %p45
    %p47 = scmp.ne.s32.totalorder %s36, %s39
    %p48 = scmp.eq.s32.totalorder %s17, 3
    %p49 = por %p47, %p48
    %p50 = scmp.ne.s32.totalorder %s39, %s40
    %p51 = scmp.eq.s32.totalorder %s17, 0
    %p52 = por %p50, %p51
    %p53 = scmp.ne.s32.totalorder %s39, %s40
    %p54 = scmp.eq.s32.totalorder %s18, 3
    %p55 = por %p53, %p54
    %p57 = scmp.ne.s32.totalorder %s40, %s56
    %p58 = scmp.eq.s32.totalorder %s18, 0
    %p59 = por %p57, %p58
    %s60 = ssub.s32 %s19, %s31
    %p61 = scmp.eq.s32.totalorder %s60, 0
    %s63 = sadd.s32 %s62, 1
    %s64 = scalar_select %p61, %s62, %s63
    %p67 = pneg %p61
    %p68 = scmp.eq.s32.totalorder %s12, 3
    %p69 = por %p67, %p68
    %p70 = scmp.ne.s32.totalorder %s62, %s65
    %p71 = scmp.eq.s32.totalorder %s12, 0
    %p72 = por %p70, %p71
    %p73 = scmp.ne.s32.totalorder %s62, %s65
    %p74 = scmp.eq.s32.totalorder %s17, 3
    %p75 = por %p73, %p74
    %p76 = scmp.ne.s32.totalorder %s65, %s66
    %p77 = scmp.eq.s32.totalorder %s17, 0
    %p78 = por %p76, %p77
    %p79 = scmp.ne.s32.totalorder %s65, %s66
    %p80 = scmp.eq.s32.totalorder %s18, 3
    %p81 = por %p79, %p80
    %p83 = scmp.ne.s32.totalorder %s66, %s82
    %p84 = scmp.eq.s32.totalorder %s18, 0
    %p85 = por %p83, %p84
    %s87 = sadd.s32 %s86, 1
    %p90 = scmp.eq.s32.totalorder %s12, 3
    %p91 = scmp.ne.s32.totalorder %s86, %s88
    %p92 = scmp.eq.s32.totalorder %s12, 0
    %p93 = por %p91, %p92
    %p94 = scmp.ne.s32.totalorder %s86, %s88
    %p95 = scmp.eq.s32.totalorder %s17, 3
    %p96 = por %p94, %p95
    %p97 = scmp.ne.s32.totalorder %s88, %s89
    %p98 = scmp.eq.s32.totalorder %s17, 0
    %p99 = por %p97, %p98
    %p100 = scmp.ne.s32.totalorder %s88, %s89
    %p101 = scmp.eq.s32.totalorder %s18, 3
    %p102 = por %p100, %p101
    %p104 = scmp.ne.s32.totalorder %s89, %s103
    %p105 = scmp.eq.s32.totalorder %s18, 0
    %p106 = por %p104, %p105
    %s107 = ssub.s32 %s19, %s31
    %s108 = ssub.s32 %s20, %s27
    %s109 = sor.u32 %s107, %s108
    %p110 = scmp.eq.s32.totalorder %s109, 0
    %s112 = sadd.s32 %s111, 1
    %s113 = scalar_select %p110, %s111, %s112
    %p116 = pneg %p110
    %p117 = scmp.eq.s32.totalorder %s12, 3
    %p118 = por %p116, %p117
    %p119 = scmp.ne.s32.totalorder %s111, %s114
    %p120 = scmp.eq.s32.totalorder %s12, 0
    %p121 = por %p119, %p120
    %p122 = scmp.ne.s32.totalorder %s111, %s114
    %p123 = scmp.eq.s32.totalorder %s17, 3
    %p124 = por %p122, %p123
    %p125 = scmp.ne.s32.totalorder %s114, %s115
    %p126 = scmp.eq.s32.totalorder %s17, 0
    %p127 = por %p125, %p126
    %p128 = scmp.ne.s32.totalorder %s114, %s115
    %p129 = scmp.eq.s32.totalorder %s18, 3
    %p130 = por %p128, %p129
    %p132 = scmp.ne.s32.totalorder %s115, %s131
    %p133 = scmp.eq.s32.totalorder %s18, 0
    %p134 = por %p132, %p133
    %s135 = ssub.s32 %s19, %s31
    %s136 = ssub.s32 %s20, %s27
    %s137 = sor.u32 %s135, %s136
    %p138 = scmp.eq.s32.totalorder %s137, 0
    %s140 = sadd.s32 %s139, 1
    %s141 = scalar_select %p138, %s139, %s140
    %p144 = pneg %p138
    %p145 = scmp.eq.s32.totalorder %s12, 3
    %p146 = por %p144, %p145
    %p147 = scmp.ne.s32.totalorder %s139, %s142
    %p148 = scmp.eq.s32.totalorder %s12, 0
    %p149 = por %p147, %p148
    %p150 = scmp.ne.s32.totalorder %s139, %s142
    %p151 = scmp.eq.s32.totalorder %s17, 3
    %p152 = por %p150, %p151
    %p153 = scmp.ne.s32.totalorder %s142, %s143
    %p154 = scmp.eq.s32.totalorder %s17, 0
    %p155 = por %p153, %p154
    %p156 = scmp.ne.s32.totalorder %s142, %s143
    %p157 = scmp.eq.s32.totalorder %s18, 3
    %p158 = por %p156, %p157
    %p160 = scmp.ne.s32.totalorder %s143, %s159
    %p161 = scmp.eq.s32.totalorder %s18, 0
    %p162 = por %p160, %p161
    %s163 = ssub.s32 %s19, %s31
    %s164 = ssub.s32 %s20, %s27
    %s165 = sor.u32 %s163, %s164
    %p166 = scmp.eq.s32.totalorder %s165, 0
    %s168 = sadd.s32 %s167, 1
    %s169 = scalar_select %p166, %s167, %s168
    %p172 = pneg %p166
    %p173 = scmp.eq.s32.totalorder %s12, 3
    %p174 = por %p172, %p173
    %p175 = scmp.ne.s32.totalorder %s167, %s170
    %p176 = scmp.eq.s32.totalorder %s12, 0
    %p177 = por %p175, %p176
    %p178 = scmp.ne.s32.totalorder %s167, %s170
    %p179 = scmp.eq.s32.totalorder %s17, 3
    %p180 = por %p178, %p179
    %p181 = scmp.ne.s32.totalorder %s170, %s171
    %p182 = scmp.eq.s32.totalorder %s17, 0
    %p183 = por %p181, %p182
    %p184 = scmp.ne.s32.totalorder %s170, %s171
    %p185 = scmp.eq.s32.totalorder %s18, 3
    %p186 = por %p184, %p185
    %p188 = scmp.ne.s32.totalorder %s171, %s187
    %p189 = scmp.eq.s32.totalorder %s18, 0
    %p190 = por %p188, %p189
    %p191 = scmp.le.s32.totalorder 1, %s12
    %p192 = scmp.lt.s32.totalorder %s12, 5
    %p193 = pnand %p191, %p192
    %p194 = pneg %p193
    // Predicated region
    $region9: #{generator_forward.9} parent=5 // pred_check
      _
    $region10: #{generator_forward.9} parent=5 // pred_check_branch
      %196 = sbr.rel (%p193) target = $region12
    $region11: #{generator_forward.9} parent=5 // pred_region
      %s197 = ssub.s32 %s12, 1
      // Predicated region
      $region13: #{generator_forward.9} parent=11 // pred_check
        %p198 = pneg %p99
      $region14: #{generator_forward.9} parent=11 // pred_check_branch
        %200 = sbr.rel (%p198) target = $region16
      $region15: #{generator_forward.9} parent=11 // pred_region
        _
      $region16: #{generator_forward.9} parent=11 // pred_fallthru
        _
    $region12: #{generator_forward.9} parent=5 // pred_fallthru
      _
    %p201 = scmp.lt.s32.totalorder %s12, 4
    // Predicated region
    $region17: #{generator_forward.9} parent=5 // pred_check
      %p202 = pneg %p201
    $region18: #{generator_forward.9} parent=5 // pred_check_branch
      %204 = sbr.rel (%p202) target = $region20
    $region19: #{generator_forward.9} parent=5 // pred_region
      // Predicated region
      $region21: #{generator_forward.9} parent=19 // pred_check
        %p205 = pneg %p46
      $region22: #{generator_forward.9} parent=19 // pred_check_branch
        %207 = sbr.rel (%p205) target = $region24
      $region23: #{generator_forward.9} parent=19 // pred_region
        %s208 = smul.u32 16, %s20
        %p209 = scmp.lt.s32.totalorder %s19, 3
        %s210 = scalar_select %p209, %s19, 3
        %p211 = scmp.lt.s32.totalorder %s208, 15
        %s212 = scalar_select %p211, %s208, 15
        %s213 = smul.addr %s212, 4
        %s214 = smul.addr %s210, 64
        %s215 = sadd.s32 %s213, %s214
        %s216 = smul.addr %s215, 4
        %s217 = scalar_lea.vmem %s0, %s216
        %s218 = smul.u32 16, %s20
      $region24: #{generator_forward.9} parent=19 // pred_fallthru
        _
      // Predicated region
      $region25: #{generator_forward.9} parent=19 // pred_check
        %p219 = pneg %p72
      $region26: #{generator_forward.9} parent=19 // pred_check_branch
        %221 = sbr.rel (%p219) target = $region28
      $region27: #{generator_forward.9} parent=19 // pred_region
        %p222 = scmp.lt.s32.totalorder %s19, 3
        %s223 = scalar_select %p222, %s19, 3
        %s224 = smul.addr %s223, 64
        %s225 = smul.addr %s224, 4
        %s226 = scalar_lea.vmem %s1, %s225
      $region28: #{generator_forward.9} parent=19 // pred_fallthru
        _
    $region20: #{generator_forward.9} parent=5 // pred_fallthru
      _
    %p227 = scmp.le.s32.totalorder 1, %s12
    %p228 = scmp.lt.s32.totalorder %s12, 5
    %p229 = pnand %p227, %p228
    %p230 = pneg %p229
    // Predicated region
    $region29: #{generator_forward.9} parent=5 // pred_check
      _
    $region30: #{generator_forward.9} parent=5 // pred_check_branch
      %232 = sbr.rel (%p229) target = $region32
    $region31: #{generator_forward.9} parent=5 // pred_region
      %s233 = ssub.s32 %s12, 1
      %s234 = smul.u32 16, %s22
      %p235 = scmp.lt.s32.totalorder %s21, 3
      %s236 = scalar_select %p235, %s21, 3
      %p237 = scmp.lt.s32.totalorder %s234, 15
      %s238 = scalar_select %p237, %s234, 15
      %s239 = smul.addr %s238, 4
      %s240 = smul.addr %s236, 64
      %s241 = sadd.s32 %s239, %s240
      %s242 = smul.addr %s241, 4
      %s243 = scalar_lea.vmem %s0, %s242
      %p244 = pneg %p52
      %p245 = pneg %p49
      %p246 = scmp.lt.s32.totalorder %s21, 3
      %s247 = scalar_select %p246, %s21, 3
      %s248 = smul.addr %s247, 64
      %s249 = smul.addr %s248, 4
      %s250 = scalar_lea.vmem %s1, %s249
      %p251 = pneg %p78
      %p252 = pneg %p75
      %p253 = pneg %p99
      %p254 = pneg %p96
      %p255 = pneg %p127
      %p256 = pneg %p124
      %s257 = smul.u32 16, %s22
      %p258 = scmp.lt.s32.totalorder %s21, 3
      %s259 = scalar_select %p258, %s21, 3
      %p260 = scmp.lt.s32.totalorder %s257, 15
      %s261 = scalar_select %p260, %s257, 15
      %s262 = smul.addr %s259, 16
      %s263 = sadd.s32 %s261, %s262
      %s264 = smul.addr %s263, 4
      %s265 = scalar_lea.vmem %s3, %s264
      %p266 = pneg %p155
      %p267 = pneg %p152
      %p268 = scmp.lt.s32.totalorder %s21, 3
      %s269 = scalar_select %p268, %s21, 3
      %p270 = scmp.lt.s32.totalorder %s22, 0
      %s271 = scalar_select %p270, %s22, 0
      %s272 = sadd.s32 %s271, %s269
      %s273 = scalar_lea.vmem %s4, %s272
      %p274 = pneg %p183
      %p275 = pneg %p180
      %p276 = scmp.lt.s32.totalorder %s21, 3
      %s277 = scalar_select %p276, %s21, 3
      %p278 = scmp.lt.s32.totalorder %s22, 0
      %s279 = scalar_select %p278, %s22, 0
      %s280 = sadd.s32 %s279, %s277
      %s281 = scalar_lea.vmem %s5, %s280
      %s282 = smul.u32 16, %s22
      %p283 = scmp.lt.s32.totalorder %s21, 3
      %s284 = scalar_select %p283, %s21, 3
      %p285 = scmp.lt.s32.totalorder %s282, 15
      %s286 = scalar_select %p285, %s282, 15
      %s287 = smul.addr %s286, 4
      %s288 = smul.addr %s284, 64
      %s289 = sadd.s32 %s287, %s288
      %s290 = smul.addr %s289, 4
      %s291 = scalar_lea.vmem %s0, %s290
      %s292 = smul.u32 16, %s22
      %p293 = scmp.lt.s32.totalorder %s21, 3
      %s294 = scalar_select %p293, %s21, 3
      %s295 = smul.addr %s294, 64
      %s296 = smul.addr %s295, 4
      %s297 = scalar_lea.vmem %s1, %s296
      %s298 = smul.u32 16, %s22
      %p299 = scmp.lt.s32.totalorder %s21, 3
      %s300 = scalar_select %p299, %s21, 3
      %p301 = scmp.lt.s32.totalorder %s298, 15
      %s302 = scalar_select %p301, %s298, 15
      %s303 = smul.addr %s300, 16
      %s304 = sadd.s32 %s302, %s303
      %s305 = smul.addr %s304, 4
      %s306 = scalar_lea.vmem %s3, %s305
      %s307 = smul.u32 16, %s22
      %p308 = scmp.lt.s32.totalorder %s21, 3
      %s309 = scalar_select %p308, %s21, 3
      %p310 = scmp.lt.s32.totalorder %s22, 0
      %s311 = scalar_select %p310, %s22, 0
      %s312 = sadd.s32 %s311, %s309
      %s313 = scalar_lea.vmem %s4, %s312
      %p314 = scmp.lt.s32.totalorder %s21, 3
      %s315 = scalar_select %p314, %s21, 3
      %p316 = scmp.lt.s32.totalorder %s22, 0
      %s317 = scalar_select %p316, %s22, 0
      %s318 = sadd.s32 %s317, %s315
      %s319 = scalar_lea.vmem %s5, %s318
      %v320 = vld [vmem:[%s291] sm:$0xff]
      %v321 = vld [vmem:[%s291 + $0x8] sm:$0xff]
      %v322 = vld [vmem:[%s291 + $0x10] sm:$0xff]
      %v323 = vld [vmem:[%s291 + $0x18] sm:$0xff]
      %v324 = vld [vmem:[%s291 + $0x20] sm:$0xff]
      %v325 = vld [vmem:[%s291 + $0x28] sm:$0xff]
      %v326 = vld [vmem:[%s291 + $0x30] sm:$0xff]
      %v327 = vld [vmem:[%s291 + $0x38] sm:$0xff]
      %v328 = vld [vmem:[%s291 + $0x40] sm:$0xff]
      %v329 = vld [vmem:[%s291 + $0x48] sm:$0xff]
      %v330 = vld [vmem:[%s291 + $0x50] sm:$0xff]
      %v331 = vld [vmem:[%s291 + $0x58] sm:$0xff]
      %v332 = vld [vmem:[%s291 + $0x60] sm:$0xff]
      %v333 = vld [vmem:[%s291 + $0x68] sm:$0xff]
      %v334 = vld [vmem:[%s291 + $0x70] sm:$0xff]
      %v335 = vld [vmem:[%s291 + $0x78] sm:$0xff]
      %v336 = vld [vmem:[%s291 + $0x80] sm:$0xff]
      %v337 = vld [vmem:[%s291 + $0x88] sm:$0xff]
      %v338 = vld [vmem:[%s291 + $0x90] sm:$0xff]
      %v339 = vld [vmem:[%s291 + $0x98] sm:$0xff]
      %v340 = vld [vmem:[%s291 + $0xa0] sm:$0xff]
      %v341 = vld [vmem:[%s291 + $0xa8] sm:$0xff]
      %v342 = vld [vmem:[%s291 + $0xb0] sm:$0xff]
      %v343 = vld [vmem:[%s291 + $0xb8] sm:$0xff]
      %v344 = vld [vmem:[%s291 + $0xc0] sm:$0xff]
      %v345 = vld [vmem:[%s291 + $0xc8] sm:$0xff]
      %v346 = vld [vmem:[%s291 + $0xd0] sm:$0xff]
      %v347 = vld [vmem:[%s291 + $0xd8] sm:$0xff]
      %v348 = vld [vmem:[%s291 + $0xe0] sm:$0xff]
      %v349 = vld [vmem:[%s291 + $0xe8] sm:$0xff]
      %v350 = vld [vmem:[%s291 + $0xf0] sm:$0xff]
      %v351 = vld [vmem:[%s291 + $0xf8] sm:$0xff]
      %v352 = vld [vmem:[%s297] sm:$0xf]
      %v353 = vld [vmem:[%s297 + $0x4] sm:$0xf]
      %v354 = vld [vmem:[%s297 + $0x8] sm:$0xf]
      %v355 = vld [vmem:[%s297 + $0xc] sm:$0xf]
      %v356 = vld [vmem:[%s297 + $0x10] sm:$0xf]
      %v357 = vld [vmem:[%s297 + $0x14] sm:$0xf]
      %v358 = vld [vmem:[%s297 + $0x18] sm:$0xf]
      %v359 = vld [vmem:[%s297 + $0x1c] sm:$0xf]
      %v360 = vld [vmem:[%s297 + $0x20] sm:$0xf]
      %v361 = vld [vmem:[%s297 + $0x24] sm:$0xf]
      %v362 = vld [vmem:[%s297 + $0x28] sm:$0xf]
      %v363 = vld [vmem:[%s297 + $0x2c] sm:$0xf]
      %v364 = vld [vmem:[%s297 + $0x30] sm:$0xf]
      %v365 = vld [vmem:[%s297 + $0x34] sm:$0xf]
      %v366 = vld [vmem:[%s297 + $0x38] sm:$0xf]
      %v367 = vld [vmem:[%s297 + $0x3c] sm:$0xf]
      %v368 = vld [vmem:[%s297 + $0x40] sm:$0xf]
      %v369 = vld [vmem:[%s297 + $0x44] sm:$0xf]
      %v370 = vld [vmem:[%s297 + $0x48] sm:$0xf]
      %v371 = vld [vmem:[%s297 + $0x4c] sm:$0xf]
      %v372 = vld [vmem:[%s297 + $0x50] sm:$0xf]
      %v373 = vld [vmem:[%s297 + $0x54] sm:$0xf]
      %v374 = vld [vmem:[%s297 + $0x58] sm:$0xf]
      %v375 = vld [vmem:[%s297 + $0x5c] sm:$0xf]
      %v376 = vld [vmem:[%s297 + $0x60] sm:$0xf]
      %v377 = vld [vmem:[%s297 + $0x64] sm:$0xf]
      %v378 = vld [vmem:[%s297 + $0x68] sm:$0xf]
      %v379 = vld [vmem:[%s297 + $0x6c] sm:$0xf]
      %v380 = vld [vmem:[%s297 + $0x70] sm:$0xf]
      %v381 = vld [vmem:[%s297 + $0x74] sm:$0xf]
      %v382 = vld [vmem:[%s297 + $0x78] sm:$0xf]
      %v383 = vld [vmem:[%s297 + $0x7c] sm:$0xf]
      %v384 = vld [vmem:[%s297 + $0x80] sm:$0xf]
      %v385 = vld [vmem:[%s297 + $0x84] sm:$0xf]
      %v386 = vld [vmem:[%s297 + $0x88] sm:$0xf]
      %v387 = vld [vmem:[%s297 + $0x8c] sm:$0xf]
      %v388 = vld [vmem:[%s297 + $0x90] sm:$0xf]
      %v389 = vld [vmem:[%s297 + $0x94] sm:$0xf]
      %v390 = vld [vmem:[%s297 + $0x98] sm:$0xf]
      %v391 = vld [vmem:[%s297 + $0x9c] sm:$0xf]
      %v392 = vld [vmem:[%s297 + $0xa0] sm:$0xf]
      %v393 = vld [vmem:[%s297 + $0xa4] sm:$0xf]
      %v394 = vld [vmem:[%s297 + $0xa8] sm:$0xf]
      %v395 = vld [vmem:[%s297 + $0xac] sm:$0xf]
      %v396 = vld [vmem:[%s297 + $0xb0] sm:$0xf]
      %v397 = vld [vmem:[%s297 + $0xb4] sm:$0xf]
      %v398 = vld [vmem:[%s297 + $0xb8] sm:$0xf]
      %v399 = vld [vmem:[%s297 + $0xbc] sm:$0xf]
      %v400 = vld [vmem:[%s297 + $0xc0] sm:$0xf]
      %v401 = vld [vmem:[%s297 + $0xc4] sm:$0xf]
      %v402 = vld [vmem:[%s297 + $0xc8] sm:$0xf]
      %v403 = vld [vmem:[%s297 + $0xcc] sm:$0xf]
      %v404 = vld [vmem:[%s297 + $0xd0] sm:$0xf]
      %v405 = vld [vmem:[%s297 + $0xd4] sm:$0xf]
      %v406 = vld [vmem:[%s297 + $0xd8] sm:$0xf]
      %v407 = vld [vmem:[%s297 + $0xdc] sm:$0xf]
      %v408 = vld [vmem:[%s297 + $0xe0] sm:$0xf]
      %v409 = vld [vmem:[%s297 + $0xe4] sm:$0xf]
      %v410 = vld [vmem:[%s297 + $0xe8] sm:$0xf]
      %v411 = vld [vmem:[%s297 + $0xec] sm:$0xf]
      %v412 = vld [vmem:[%s297 + $0xf0] sm:$0xf]
      %v413 = vld [vmem:[%s297 + $0xf4] sm:$0xf]
      %v414 = vld [vmem:[%s297 + $0xf8] sm:$0xf]
      %v415 = vld [vmem:[%s297 + $0xfc] sm:$0xf]
      %v416 = vld [vmem:[%s2] sm:$0x1]
      %v418 = vperm.slane %v416, 0
      %v452 = vunpack.c.l.b16 %v320
      %v453 = vunpack.c.h.b16 %v320
      %v454 = vunpack.c.l.b16 %v321
      %v455 = vunpack.c.h.b16 %v321
      %v456 = vunpack.c.l.b16 %v322
      %v457 = vunpack.c.h.b16 %v322
      %v458 = vunpack.c.l.b16 %v323
      %v459 = vunpack.c.h.b16 %v323
      %v460 = vunpack.c.l.b16 %v324
      %v461 = vunpack.c.h.b16 %v324
      %v462 = vunpack.c.l.b16 %v325
      %v463 = vunpack.c.h.b16 %v325
      %v464 = vunpack.c.l.b16 %v326
      %v465 = vunpack.c.h.b16 %v326
      %v466 = vunpack.c.l.b16 %v327
      %v467 = vunpack.c.h.b16 %v327
      %v468 = vunpack.c.l.b16 %v328
      %v469 = vunpack.c.h.b16 %v328
      %v470 = vunpack.c.l.b16 %v329
      %v471 = vunpack.c.h.b16 %v329
      %v472 = vunpack.c.l.b16 %v330
      %v473 = vunpack.c.h.b16 %v330
      %v474 = vunpack.c.l.b16 %v331
      %v475 = vunpack.c.h.b16 %v331
      %v476 = vunpack.c.l.b16 %v332
      %v477 = vunpack.c.h.b16 %v332
      %v478 = vunpack.c.l.b16 %v333
      %v479 = vunpack.c.h.b16 %v333
      %v480 = vunpack.c.l.b16 %v334
      %v481 = vunpack.c.h.b16 %v334
      %v482 = vunpack.c.l.b16 %v335
      %v483 = vunpack.c.h.b16 %v335
      %v484 = vunpack.c.l.b16 %v336
      %v485 = vunpack.c.h.b16 %v336
      %v486 = vunpack.c.l.b16 %v337
      %v487 = vunpack.c.h.b16 %v337
      %v488 = vunpack.c.l.b16 %v338
      %v489 = vunpack.c.h.b16 %v338
      %v490 = vunpack.c.l.b16 %v339
      %v491 = vunpack.c.h.b16 %v339
      %v492 = vunpack.c.l.b16 %v340
      %v493 = vunpack.c.h.b16 %v340
      %v494 = vunpack.c.l.b16 %v341
      %v495 = vunpack.c.h.b16 %v341
      %v496 = vunpack.c.l.b16 %v342
      %v497 = vunpack.c.h.b16 %v342
      %v498 = vunpack.c.l.b16 %v343
      %v499 = vunpack.c.h.b16 %v343
      %v500 = vunpack.c.l.b16 %v344
      %v501 = vunpack.c.h.b16 %v344
      %v502 = vunpack.c.l.b16 %v345
      %v503 = vunpack.c.h.b16 %v345
      %v504 = vunpack.c.l.b16 %v346
      %v505 = vunpack.c.h.b16 %v346
      %v506 = vunpack.c.l.b16 %v347
      %v507 = vunpack.c.h.b16 %v347
      %v508 = vunpack.c.l.b16 %v348
      %v509 = vunpack.c.h.b16 %v348
      %v510 = vunpack.c.l.b16 %v349
      %v511 = vunpack.c.h.b16 %v349
      %v512 = vunpack.c.l.b16 %v350
      %v513 = vunpack.c.h.b16 %v350
      %v514 = vunpack.c.l.b16 %v351
      %v515 = vunpack.c.h.b16 %v351
      %v516 = vpack.c.b16 %v456, %v452
      %v517 = vpack.c.b16 %v457, %v453
      %v518 = vpack.c.b16 %v458, %v454
      %v519 = vpack.c.b16 %v459, %v455
      %v520 = vpack.c.b16 %v464, %v460
      %v521 = vpack.c.b16 %v465, %v461
      %v522 = vpack.c.b16 %v466, %v462
      %v523 = vpack.c.b16 %v467, %v463
      %v524 = vpack.c.b16 %v472, %v468
      %v525 = vpack.c.b16 %v473, %v469
      %v526 = vpack.c.b16 %v474, %v470
      %v527 = vpack.c.b16 %v475, %v471
      %v528 = vpack.c.b16 %v480, %v476
      %v529 = vpack.c.b16 %v481, %v477
      %v530 = vpack.c.b16 %v482, %v478
      %v531 = vpack.c.b16 %v483, %v479
      %v532 = vpack.c.b16 %v488, %v484
      %v533 = vpack.c.b16 %v489, %v485
      %v534 = vpack.c.b16 %v490, %v486
      %v535 = vpack.c.b16 %v491, %v487
      %v536 = vpack.c.b16 %v496, %v492
      %v537 = vpack.c.b16 %v497, %v493
      %v538 = vpack.c.b16 %v498, %v494
      %v539 = vpack.c.b16 %v499, %v495
      %v540 = vpack.c.b16 %v504, %v500
      %v541 = vpack.c.b16 %v505, %v501
      %v542 = vpack.c.b16 %v506, %v502
      %v543 = vpack.c.b16 %v507, %v503
      %v544 = vpack.c.b16 %v512, %v508
      %v545 = vpack.c.b16 %v513, %v509
      %v546 = vpack.c.b16 %v514, %v510
      %v547 = vpack.c.b16 %v515, %v511
      %v644 = vunpack.c.l.b16 %v352
      %v645 = vunpack.c.l.b16 %v353
      %v646 = vunpack.c.l.b16 %v354
      %v647 = vunpack.c.l.b16 %v355
      %v648 = vunpack.c.l.b16 %v356
      %v649 = vunpack.c.l.b16 %v357
      %v650 = vunpack.c.l.b16 %v358
      %v651 = vunpack.c.l.b16 %v359
      %v652 = vunpack.c.l.b16 %v360
      %v653 = vunpack.c.l.b16 %v361
      %v654 = vunpack.c.l.b16 %v362
      %v655 = vunpack.c.l.b16 %v363
      %v656 = vunpack.c.l.b16 %v364
      %v657 = vunpack.c.l.b16 %v365
      %v658 = vunpack.c.l.b16 %v366
      %v659 = vunpack.c.l.b16 %v367
      %v660 = vunpack.c.l.b16 %v368
      %v661 = vunpack.c.l.b16 %v369
      %v662 = vunpack.c.l.b16 %v370
      %v663 = vunpack.c.l.b16 %v371
      %v664 = vunpack.c.l.b16 %v372
      %v665 = vunpack.c.l.b16 %v373
      %v666 = vunpack.c.l.b16 %v374
      %v667 = vunpack.c.l.b16 %v375
      %v668 = vunpack.c.l.b16 %v376
      %v669 = vunpack.c.l.b16 %v377
      %v670 = vunpack.c.l.b16 %v378
      %v671 = vunpack.c.l.b16 %v379
      %v672 = vunpack.c.l.b16 %v380
      %v673 = vunpack.c.l.b16 %v381
      %v674 = vunpack.c.l.b16 %v382
      %v675 = vunpack.c.l.b16 %v383
      %v676 = vunpack.c.l.b16 %v384
      %v677 = vunpack.c.l.b16 %v385
      %v678 = vunpack.c.l.b16 %v386
      %v679 = vunpack.c.l.b16 %v387
      %v680 = vunpack.c.l.b16 %v388
      %v681 = vunpack.c.l.b16 %v389
      %v682 = vunpack.c.l.b16 %v390
      %v683 = vunpack.c.l.b16 %v391
      %v684 = vunpack.c.l.b16 %v392
      %v685 = vunpack.c.l.b16 %v393
      %v686 = vunpack.c.l.b16 %v394
      %v687 = vunpack.c.l.b16 %v395
      %v688 = vunpack.c.l.b16 %v396
      %v689 = vunpack.c.l.b16 %v397
      %v690 = vunpack.c.l.b16 %v398
      %v691 = vunpack.c.l.b16 %v399
      %v692 = vunpack.c.l.b16 %v400
      %v693 = vunpack.c.l.b16 %v401
      %v694 = vunpack.c.l.b16 %v402
      %v695 = vunpack.c.l.b16 %v403
      %v696 = vunpack.c.l.b16 %v404
      %v697 = vunpack.c.l.b16 %v405
      %v698 = vunpack.c.l.b16 %v406
      %v699 = vunpack.c.l.b16 %v407
      %v700 = vunpack.c.l.b16 %v408
      %v701 = vunpack.c.l.b16 %v409
      %v702 = vunpack.c.l.b16 %v410
      %v703 = vunpack.c.l.b16 %v411
      %v704 = vunpack.c.l.b16 %v412
      %v705 = vunpack.c.l.b16 %v413
      %v706 = vunpack.c.l.b16 %v414
      %v707 = vunpack.c.l.b16 %v415
      %v708 = vpack.c.b16 %v645, %v644
      %v709 = vpack.c.b16 %v647, %v646
      %v710 = vpack.c.b16 %v649, %v648
      %v711 = vpack.c.b16 %v651, %v650
      %v712 = vpack.c.b16 %v653, %v652
      %v713 = vpack.c.b16 %v655, %v654
      %v714 = vpack.c.b16 %v657, %v656
      %v715 = vpack.c.b16 %v659, %v658
      %v716 = vpack.c.b16 %v661, %v660
      %v717 = vpack.c.b16 %v663, %v662
      %v718 = vpack.c.b16 %v665, %v664
      %v719 = vpack.c.b16 %v667, %v666
      %v720 = vpack.c.b16 %v669, %v668
      %v721 = vpack.c.b16 %v671, %v670
      %v722 = vpack.c.b16 %v673, %v672
      %v723 = vpack.c.b16 %v675, %v674
      %v724 = vpack.c.b16 %v677, %v676
      %v725 = vpack.c.b16 %v679, %v678
      %v726 = vpack.c.b16 %v681, %v680
      %v727 = vpack.c.b16 %v683, %v682
      %v728 = vpack.c.b16 %v685, %v684
      %v729 = vpack.c.b16 %v687, %v686
      %v730 = vpack.c.b16 %v689, %v688
      %v731 = vpack.c.b16 %v691, %v690
      %v732 = vpack.c.b16 %v693, %v692
      %v733 = vpack.c.b16 %v695, %v694
      %v734 = vpack.c.b16 %v697, %v696
      %v735 = vpack.c.b16 %v699, %v698
      %v736 = vpack.c.b16 %v701, %v700
      %v737 = vpack.c.b16 %v703, %v702
      %v738 = vpack.c.b16 %v705, %v704
      %v739 = vpack.c.b16 %v707, %v706
      %772 = vmatpush.bf16.msra.mxu0 %v715
      %773 = vmatpush.bf16.msra.mxu0 %v714
      %774 = vmatpush.bf16.msra.mxu0 %v713
      %775 = vmatpush.bf16.msra.mxu0 %v712
      %776 = vmatpush.bf16.msra.mxu0 %v711
      %777 = vmatpush.bf16.msra.mxu0 %v710
      %778 = vmatpush.bf16.msra.mxu0 %v709
      %779 = vmatpush.bf16.msra.mxu0 %v708
      %780 = vmatmul.bf16.gmra.mxu0 %v516
      %v781 = vpop.f32.mrf.mxu0
      %v782 = vadd.f32 %v418, %v781
      %v783 = vpop.f32.mrf.mxu0
      %v784 = vadd.f32 %v418, %v783
      %785 = vmatmul.bf16.gmra.mxu0 %v520
      %v786 = vpop.f32.mrf.mxu0
      %v787 = vadd.f32 %v418, %v786
      %v788 = vpop.f32.mrf.mxu0
      %v789 = vadd.f32 %v418, %v788
      %790 = vmatmul.bf16.gmra.mxu0 %v524
      %v791 = vpop.f32.mrf.mxu0
      %v792 = vadd.f32 %v418, %v791
      %v793 = vpop.f32.mrf.mxu0
      %v794 = vadd.f32 %v418, %v793
      %795 = vmatmul.bf16.gmra.mxu0 %v528
      %v796 = vpop.f32.mrf.mxu0
      %v797 = vadd.f32 %v418, %v796
      %v798 = vpop.f32.mrf.mxu0
      %v799 = vadd.f32 %v418, %v798
      %800 = vmatmul.bf16.gmra.mxu0 %v532
      %v801 = vpop.f32.mrf.mxu0
      %v802 = vadd.f32 %v418, %v801
      %v803 = vpop.f32.mrf.mxu0
      %v804 = vadd.f32 %v418, %v803
      %805 = vmatmul.bf16.gmra.mxu0 %v536
      %v806 = vpop.f32.mrf.mxu0
      %v807 = vadd.f32 %v418, %v806
      %v808 = vpop.f32.mrf.mxu0
      %v809 = vadd.f32 %v418, %v808
      %810 = vmatmul.bf16.gmra.mxu0 %v540
      %v811 = vpop.f32.mrf.mxu0
      %v812 = vadd.f32 %v418, %v811
      %v813 = vpop.f32.mrf.mxu0
      %v814 = vadd.f32 %v418, %v813
      %815 = vmatmul.bf16.gmra.mxu0 %v544
      %v816 = vpop.f32.mrf.mxu0
      %v817 = vadd.f32 %v418, %v816
      %v818 = vpop.f32.mrf.mxu0
      %v819 = vadd.f32 %v418, %v818
      %820 = vdwg.mxu0
      %821 = vmatpush.bf16.msra.mxu0 %v723
      %822 = vmatpush.bf16.msra.mxu0 %v722
      %823 = vmatpush.bf16.msra.mxu0 %v721
      %824 = vmatpush.bf16.msra.mxu0 %v720
      %825 = vmatpush.bf16.msra.mxu0 %v719
      %826 = vmatpush.bf16.msra.mxu0 %v718
      %827 = vmatpush.bf16.msra.mxu0 %v717
      %828 = vmatpush.bf16.msra.mxu0 %v716
      %829 = vmatmul.bf16.gmra.mxu0 %v517
      %v830 = vpop.f32.mrf.mxu0
      %v831 = vadd.f32 %v782, %v830
      %v832 = vpop.f32.mrf.mxu0
      %v833 = vadd.f32 %v784, %v832
      %834 = vmatmul.bf16.gmra.mxu0 %v521
      %v835 = vpop.f32.mrf.mxu0
      %v836 = vadd.f32 %v787, %v835
      %v837 = vpop.f32.mrf.mxu0
      %v838 = vadd.f32 %v789, %v837
      %839 = vmatmul.bf16.gmra.mxu0 %v525
      %v840 = vpop.f32.mrf.mxu0
      %v841 = vadd.f32 %v792, %v840
      %v842 = vpop.f32.mrf.mxu0
      %v843 = vadd.f32 %v794, %v842
      %844 = vmatmul.bf16.gmra.mxu0 %v529
      %v845 = vpop.f32.mrf.mxu0
      %v846 = vadd.f32 %v797, %v845
      %v847 = vpop.f32.mrf.mxu0
      %v848 = vadd.f32 %v799, %v847
      %849 = vmatmul.bf16.gmra.mxu0 %v533
      %v850 = vpop.f32.mrf.mxu0
      %v851 = vadd.f32 %v802, %v850
      %v852 = vpop.f32.mrf.mxu0
      %v853 = vadd.f32 %v804, %v852
      %854 = vmatmul.bf16.gmra.mxu0 %v537
      %v855 = vpop.f32.mrf.mxu0
      %v856 = vadd.f32 %v807, %v855
      %v857 = vpop.f32.mrf.mxu0
      %v858 = vadd.f32 %v809, %v857
      %859 = vmatmul.bf16.gmra.mxu0 %v541
      %v860 = vpop.f32.mrf.mxu0
      %v861 = vadd.f32 %v812, %v860
      %v862 = vpop.f32.mrf.mxu0
      %v863 = vadd.f32 %v814, %v862
      %864 = vmatmul.bf16.gmra.mxu0 %v545
      %v865 = vpop.f32.mrf.mxu0
      %v866 = vadd.f32 %v817, %v865
      %v867 = vpop.f32.mrf.mxu0
      %v868 = vadd.f32 %v819, %v867
      %869 = vdwg.mxu0
      %870 = vmatpush.bf16.msra.mxu0 %v731
      %871 = vmatpush.bf16.msra.mxu0 %v730
      %872 = vmatpush.bf16.msra.mxu0 %v729
      %873 = vmatpush.bf16.msra.mxu0 %v728
      %874 = vmatpush.bf16.msra.mxu0 %v727
      %875 = vmatpush.bf16.msra.mxu0 %v726
      %876 = vmatpush.bf16.msra.mxu0 %v725
      %877 = vmatpush.bf16.msra.mxu0 %v724
      %878 = vmatmul.bf16.gmra.mxu0 %v518
      %v879 = vpop.f32.mrf.mxu0
      %v880 = vadd.f32 %v831, %v879
      %v881 = vpop.f32.mrf.mxu0
      %v882 = vadd.f32 %v833, %v881
      %883 = vmatmul.bf16.gmra.mxu0 %v522
      %v884 = vpop.f32.mrf.mxu0
      %v885 = vadd.f32 %v836, %v884
      %v886 = vpop.f32.mrf.mxu0
      %v887 = vadd.f32 %v838, %v886
      %888 = vmatmul.bf16.gmra.mxu0 %v526
      %v889 = vpop.f32.mrf.mxu0
      %v890 = vadd.f32 %v841, %v889
      %v891 = vpop.f32.mrf.mxu0
      %v892 = vadd.f32 %v843, %v891
      %893 = vmatmul.bf16.gmra.mxu0 %v530
      %v894 = vpop.f32.mrf.mxu0
      %v895 = vadd.f32 %v846, %v894
      %v896 = vpop.f32.mrf.mxu0
      %v897 = vadd.f32 %v848, %v896
      %898 = vmatmul.bf16.gmra.mxu0 %v534
      %v899 = vpop.f32.mrf.mxu0
      %v900 = vadd.f32 %v851, %v899
      %v901 = vpop.f32.mrf.mxu0
      %v902 = vadd.f32 %v853, %v901
      %903 = vmatmul.bf16.gmra.mxu0 %v538
      %v904 = vpop.f32.mrf.mxu0
      %v905 = vadd.f32 %v856, %v904
      %v906 = vpop.f32.mrf.mxu0
      %v907 = vadd.f32 %v858, %v906
      %908 = vmatmul.bf16.gmra.mxu0 %v542
      %v909 = vpop.f32.mrf.mxu0
      %v910 = vadd.f32 %v861, %v909
      %v911 = vpop.f32.mrf.mxu0
      %v912 = vadd.f32 %v863, %v911
      %913 = vmatmul.bf16.gmra.mxu0 %v546
      %v914 = vpop.f32.mrf.mxu0
      %v915 = vadd.f32 %v866, %v914
      %v916 = vpop.f32.mrf.mxu0
      %v917 = vadd.f32 %v868, %v916
      %918 = vdwg.mxu0
      %919 = vmatpush.bf16.msra.mxu0 %v739
      %920 = vmatpush.bf16.msra.mxu0 %v738
      %921 = vmatpush.bf16.msra.mxu0 %v737
      %922 = vmatpush.bf16.msra.mxu0 %v736
      %923 = vmatpush.bf16.msra.mxu0 %v735
      %924 = vmatpush.bf16.msra.mxu0 %v734
      %925 = vmatpush.bf16.msra.mxu0 %v733
      %926 = vmatpush.bf16.msra.mxu0 %v732
      %927 = vmatmul.bf16.gmra.mxu0 %v519
      %v928 = vpop.f32.mrf.mxu0
      %v929 = vadd.f32 %v880, %v928
      %v930 = vpop.f32.mrf.mxu0
      %v931 = vadd.f32 %v882, %v930
      %932 = vmatmul.bf16.gmra.mxu0 %v523
      %v933 = vpop.f32.mrf.mxu0
      %v934 = vadd.f32 %v885, %v933
      %v935 = vpop.f32.mrf.mxu0
      %v936 = vadd.f32 %v887, %v935
      %937 = vmatmul.bf16.gmra.mxu0 %v527
      %v938 = vpop.f32.mrf.mxu0
      %v939 = vadd.f32 %v890, %v938
      %v940 = vpop.f32.mrf.mxu0
      %v941 = vadd.f32 %v892, %v940
      %942 = vmatmul.bf16.gmra.mxu0 %v531
      %v943 = vpop.f32.mrf.mxu0
      %v944 = vadd.f32 %v895, %v943
      %v945 = vpop.f32.mrf.mxu0
      %v946 = vadd.f32 %v897, %v945
      %947 = vmatmul.bf16.gmra.mxu0 %v535
      %v948 = vpop.f32.mrf.mxu0
      %v949 = vadd.f32 %v900, %v948
      %v950 = vpop.f32.mrf.mxu0
      %v951 = vadd.f32 %v902, %v950
      %952 = vmatmul.bf16.gmra.mxu0 %v539
      %v953 = vpop.f32.mrf.mxu0
      %v954 = vadd.f32 %v905, %v953
      %v955 = vpop.f32.mrf.mxu0
      %v956 = vadd.f32 %v907, %v955
      %957 = vmatmul.bf16.gmra.mxu0 %v543
      %v958 = vpop.f32.mrf.mxu0
      %v959 = vadd.f32 %v910, %v958
      %v960 = vpop.f32.mrf.mxu0
      %v961 = vadd.f32 %v912, %v960
      %962 = vmatmul.bf16.gmra.mxu0 %v547
      %v963 = vpop.f32.mrf.mxu0
      %v964 = vadd.f32 %v915, %v963
      %v965 = vpop.f32.mrf.mxu0
      %v966 = vadd.f32 %v917, %v965
      %967 = vdwg.mxu0
      %v968 = vpack.c.bf16 %v929, %v929
      %v969 = vpack.c.bf16 %v931, %v931
      %v970 = vpack.c.bf16 %v934, %v934
      %v971 = vpack.c.bf16 %v936, %v936
      %v972 = vpack.c.bf16 %v939, %v939
      %v973 = vpack.c.bf16 %v941, %v941
      %v974 = vpack.c.bf16 %v944, %v944
      %v975 = vpack.c.bf16 %v946, %v946
      %v976 = vpack.c.bf16 %v949, %v949
      %v977 = vpack.c.bf16 %v951, %v951
      %v978 = vpack.c.bf16 %v954, %v954
      %v979 = vpack.c.bf16 %v956, %v956
      %v980 = vpack.c.bf16 %v959, %v959
      %v981 = vpack.c.bf16 %v961, %v961
      %v982 = vpack.c.bf16 %v964, %v964
      %v983 = vpack.c.bf16 %v966, %v966
      %984 = vst [vmem:[%s306] sm:$0xf] %v968
      %985 = vst [vmem:[%s306 + $0x4] sm:$0xf] %v969
      %986 = vst [vmem:[%s306 + $0x8] sm:$0xf] %v970
      %987 = vst [vmem:[%s306 + $0xc] sm:$0xf] %v971
      %988 = vst [vmem:[%s306 + $0x10] sm:$0xf] %v972
      %989 = vst [vmem:[%s306 + $0x14] sm:$0xf] %v973
      %990 = vst [vmem:[%s306 + $0x18] sm:$0xf] %v974
      %991 = vst [vmem:[%s306 + $0x1c] sm:$0xf] %v975
      %992 = vst [vmem:[%s306 + $0x20] sm:$0xf] %v976
      %993 = vst [vmem:[%s306 + $0x24] sm:$0xf] %v977
      %994 = vst [vmem:[%s306 + $0x28] sm:$0xf] %v978
      %995 = vst [vmem:[%s306 + $0x2c] sm:$0xf] %v979
      %996 = vst [vmem:[%s306 + $0x30] sm:$0xf] %v980
      %997 = vst [vmem:[%s306 + $0x34] sm:$0xf] %v981
      %998 = vst [vmem:[%s306 + $0x38] sm:$0xf] %v982
      %999 = vst [vmem:[%s306 + $0x3c] sm:$0xf] %v983
      %v1000 = vadd.f32 %v929, %v931
      %v1001 = vadd.f32 %v1000, %v934
      %v1002 = vadd.f32 %v1001, %v936
      %v1003 = vadd.f32 %v1002, %v939
      %v1004 = vadd.f32 %v1003, %v941
      %v1005 = vadd.f32 %v1004, %v944
      %v1006 = vadd.f32 %v1005, %v946
      %v1007 = vadd.f32 %v1006, %v949
      %v1008 = vadd.f32 %v1007, %v951
      %v1009 = vadd.f32 %v1008, %v954
      %v1010 = vadd.f32 %v1009, %v956
      %v1011 = vadd.f32 %v1010, %v959
      %v1012 = vadd.f32 %v1011, %v961
      %v1013 = vadd.f32 %v1012, %v964
      %v1014 = vadd.f32 %v1013, %v966
      %v1015 = vrot.slane %v1014, 4
      %v1016 = vadd.f32 %v1014, %v1015
      %v1017 = vrot.slane %v1016, 2
      %v1018 = vadd.f32 %v1016, %v1017
      %v1019 = vrot.slane %v1018, 1
      %v1020 = vadd.f32 %v1018, %v1019
      %v1021 = vmul.f32 %v1020, 0.0078125
      %v1022 = vsub.f32 %v929, %v1021
      %v1023 = vsub.f32 %v931, %v1021
      %v1024 = vsub.f32 %v934, %v1021
      %v1025 = vsub.f32 %v936, %v1021
      %v1026 = vsub.f32 %v939, %v1021
      %v1027 = vsub.f32 %v941, %v1021
      %v1028 = vsub.f32 %v944, %v1021
      %v1029 = vsub.f32 %v946, %v1021
      %v1030 = vsub.f32 %v949, %v1021
      %v1031 = vsub.f32 %v951, %v1021
      %v1032 = vsub.f32 %v954, %v1021
      %v1033 = vsub.f32 %v956, %v1021
      %v1034 = vsub.f32 %v959, %v1021
      %v1035 = vsub.f32 %v961, %v1021
      %v1036 = vsub.f32 %v964, %v1021
      %v1037 = vsub.f32 %v966, %v1021
      %v1038 = vmul.f32 %v1022, %v1022
      %v1039 = vmul.f32 %v1023, %v1023
      %v1040 = vmul.f32 %v1024, %v1024
      %v1041 = vmul.f32 %v1025, %v1025
      %v1042 = vmul.f32 %v1026, %v1026
      %v1043 = vmul.f32 %v1027, %v1027
      %v1044 = vmul.f32 %v1028, %v1028
      %v1045 = vmul.f32 %v1029, %v1029
      %v1046 = vmul.f32 %v1030, %v1030
      %v1047 = vmul.f32 %v1031, %v1031
      %v1048 = vmul.f32 %v1032, %v1032
      %v1049 = vmul.f32 %v1033, %v1033
      %v1050 = vmul.f32 %v1034, %v1034
      %v1051 = vmul.f32 %v1035, %v1035
      %v1052 = vmul.f32 %v1036, %v1036
      %v1053 = vmul.f32 %v1037, %v1037
      %v1054 = vadd.f32 %v1038, %v1039
      %v1055 = vadd.f32 %v1054, %v1040
      %v1056 = vadd.f32 %v1055, %v1041
      %v1057 = vadd.f32 %v1056, %v1042
      %v1058 = vadd.f32 %v1057, %v1043
      %v1059 = vadd.f32 %v1058, %v1044
      %v1060 = vadd.f32 %v1059, %v1045
      %v1061 = vadd.f32 %v1060, %v1046
      %v1062 = vadd.f32 %v1061, %v1047
      %v1063 = vadd.f32 %v1062, %v1048
      %v1064 = vadd.f32 %v1063, %v1049
      %v1065 = vadd.f32 %v1064, %v1050
      %v1066 = vadd.f32 %v1065, %v1051
      %v1067 = vadd.f32 %v1066, %v1052
      %v1068 = vadd.f32 %v1067, %v1053
      %v1069 = vrot.slane %v1068, 4
      %v1070 = vadd.f32 %v1068, %v1069
      %v1071 = vrot.slane %v1070, 2
      %v1072 = vadd.f32 %v1070, %v1071
      %v1073 = vrot.slane %v1072, 1
      %v1074 = vadd.f32 %v1072, %v1073
      %1075 = vst [vmem:[%s313] sm:$0x1] %v1020
      %1076 = vst [vmem:[%s319] sm:$0x1] %v1074
      %s1077 = smul.u32 16, %s22
      %p1078 = scmp.lt.s32.totalorder %s21, 3
      %s1079 = scalar_select %p1078, %s21, 3
      %p1080 = scmp.lt.s32.totalorder %s1077, 15
      %s1081 = scalar_select %p1080, %s1077, 15
      %s1082 = smul.addr %s1079, 16
      %s1083 = sadd.s32 %s1081, %s1082
      %s1084 = smul.addr %s1083, 4
      %s1085 = scalar_lea.vmem %s3, %s1084
      %p1086 = scmp.lt.s32.totalorder %s21, 3
      %s1087 = scalar_select %p1086, %s21, 3
      %p1088 = scmp.lt.s32.totalorder %s22, 0
      %s1089 = scalar_select %p1088, %s22, 0
      %s1090 = sadd.s32 %s1089, %s1087
      %s1091 = scalar_lea.vmem %s4, %s1090
      %p1092 = scmp.lt.s32.totalorder %s21, 3
      %s1093 = scalar_select %p1092, %s21, 3
      %p1094 = scmp.lt.s32.totalorder %s22, 0
      %s1095 = scalar_select %p1094, %s22, 0
      %s1096 = sadd.s32 %s1095, %s1093
      %s1097 = scalar_lea.vmem %s5, %s1096
      // Predicated region
      $region33: #{generator_forward.9} parent=31 // pred_check
        %p1098 = pneg %p124
      $region34: #{generator_forward.9} parent=31 // pred_check_branch
        %1100 = sbr.rel (%p1098) target = $region36
      $region35: #{generator_forward.9} parent=31 // pred_region
        %s1101 = smul.u32 16, %s22
      $region36: #{generator_forward.9} parent=31 // pred_fallthru
        _
      // Predicated region
      $region37: #{generator_forward.9} parent=31 // pred_check
        %p1102 = pneg %p152
      $region38: #{generator_forward.9} parent=31 // pred_check_branch
        %1104 = sbr.rel (%p1102) target = $region40
      $region39: #{generator_forward.9} parent=31 // pred_region
        _
      $region40: #{generator_forward.9} parent=31 // pred_fallthru
        _
      // Predicated region
      $region41: #{generator_forward.9} parent=31 // pred_check
        %p1105 = pneg %p180
      $region42: #{generator_forward.9} parent=31 // pred_check_branch
        %1107 = sbr.rel (%p1105) target = $region44
      $region43: #{generator_forward.9} parent=31 // pred_region
        _
      $region44: #{generator_forward.9} parent=31 // pred_fallthru
        _
    $region32: #{generator_forward.9} parent=5 // pred_fallthru
      _
    %p1108 = scmp.le.s32.totalorder 2, %s12
    // Predicated region
    $region45: #{generator_forward.9} parent=5 // pred_check
      %p1109 = pneg %p1108
    $region46: #{generator_forward.9} parent=5 // pred_check_branch
      %1111 = sbr.rel (%p1109) target = $region48
    $region47: #{generator_forward.9} parent=5 // pred_region
      %s1112 = ssub.s32 %s12, 2
      // Predicated region
      $region49: #{generator_forward.9} parent=47 // pred_check
        %p1113 = pneg %p130
      $region50: #{generator_forward.9} parent=47 // pred_check_branch
        %1115 = sbr.rel (%p1113) target = $region52
      $region51: #{generator_forward.9} parent=47 // pred_region
        %s1116 = smul.u32 16, %s24
        %p1117 = scmp.lt.s32.totalorder %s23, 3
        %s1118 = scalar_select %p1117, %s23, 3
        %p1119 = scmp.lt.s32.totalorder %s1116, 15
        %s1120 = scalar_select %p1119, %s1116, 15
        %s1121 = smul.addr %s1118, 16
        %s1122 = sadd.s32 %s1120, %s1121
        %s1123 = smul.addr %s1122, 4
        %s1124 = scalar_lea.vmem %s3, %s1123
      $region52: #{generator_forward.9} parent=47 // pred_fallthru
        _
      // Predicated region
      $region53: #{generator_forward.9} parent=47 // pred_check
        %p1125 = pneg %p158
      $region54: #{generator_forward.9} parent=47 // pred_check_branch
        %1127 = sbr.rel (%p1125) target = $region56
      $region55: #{generator_forward.9} parent=47 // pred_region
        %p1128 = scmp.lt.s32.totalorder %s23, 3
        %s1129 = scalar_select %p1128, %s23, 3
        %p1130 = scmp.lt.s32.totalorder %s24, 0
        %s1131 = scalar_select %p1130, %s24, 0
        %s1132 = sadd.s32 %s1131, %s1129
        %s1133 = scalar_lea.vmem %s4, %s1132
      $region56: #{generator_forward.9} parent=47 // pred_fallthru
        _
      // Predicated region
      $region57: #{generator_forward.9} parent=47 // pred_check
        %p1134 = pneg %p186
      $region58: #{generator_forward.9} parent=47 // pred_check_branch
        %1136 = sbr.rel (%p1134) target = $region60
      $region59: #{generator_forward.9} parent=47 // pred_region
        %p1137 = scmp.lt.s32.totalorder %s23, 3
        %s1138 = scalar_select %p1137, %s23, 3
        %p1139 = scmp.lt.s32.totalorder %s24, 0
        %s1140 = scalar_select %p1139, %s24, 0
        %s1141 = sadd.s32 %s1140, %s1138
        %s1142 = scalar_lea.vmem %s5, %s1141
      $region60: #{generator_forward.9} parent=47 // pred_fallthru
        _
    $region48: #{generator_forward.9} parent=5 // pred_fallthru
      _
  $region6: #{generator_forward.9} parent=0 // loop_footer
    %s16 = sadd.s32 1, %s12
  $region7: #{generator_forward.9} parent=0 // loop_footer_branch
    %11 = sbr.rel target = $region3
  $region8: #{generator_forward.9} parent=0 // loop_exit
    _

// kernel: generator_forward.10
$region0: #{generator_forward.10}
  #allocation0 [shape = 'u32[]', space=smem, size = 0x4, offset = 0x4, fixed_abs, tag = 'smem constant byte address 0x4 - core index']
  #allocation1 [shape = 'u32[72,128]{1,0:T(1,128)}', space=vmem, size = 0x9000, scoped, tag = 'internal scratch']
  %s0 = inlined_call_operand.vmem [shape: bf16[4,128,128], index: 0, kind: input, shape index: {}]
  %s1 = inlined_call_operand.vmem [shape: f32[1,128], index: 1, kind: input, shape index: {}]
  %s2 = inlined_call_operand.vmem [shape: f32[1,128], index: 2, kind: input, shape index: {}]
  %s3 = inlined_call_operand.vmem [shape: bf16[4,128,128], index: 3, kind: output, shape index: {}]
  %s4 = sld [smem:[#allocation0]]
  $region45: #{generator_forward.10} parent=0
    _
  %s6 = ssub.s32 1, %s4
  %s7 = scalar_select 0, %s6, %s4
  loop: start=0, step=1, limit=6
  $region2: #{generator_forward.10} parent=0 // loop_pre_header
    _
  $region3: #{generator_forward.10} parent=0 // loop_header
    %s9 = sphi 0, %s13
    %p10 = scmp.ge.s32.totalorder %s9, 6
    %s16 = sphi 0, %s28
    %s17 = sphi 0, %s24
    %s18 = sphi 0, %s16
    %s19 = sphi 0, %s17
    %s20 = sphi 0, %s18
    %s21 = sphi 0, %s19
    %s33 = sphi 0, %s35
    %s36 = sphi 0, %s33
    %s37 = sphi 0, %s36
    %s53 = sphi 0, %s37
    %s57 = sphi 0, %s57
    %s59 = sphi 0, %s57
    %s60 = sphi 0, %s59
    %s74 = sphi 0, %s60
    %s78 = sphi 0, %s78
    %s80 = sphi 0, %s78
    %s81 = sphi 0, %s80
    %s95 = sphi 0, %s81
    %s103 = sphi 0, %s105
    %s106 = sphi 0, %s103
    %s107 = sphi 0, %s106
    %s123 = sphi 0, %s107
  $region4: #{generator_forward.10} parent=0 // loop_header_branch
    %12 = sbr.rel (%p10) target = $region8
  $region5: #{generator_forward.10} parent=0 // loop_body
    %s14 = ssub.s32 %s9, 1
    %s15 = ssub.s32 %s9, 2
    %s22 = sadd.s32 1, %s17
    %p23 = scmp.ge.s32.totalorder %s22, 1
    %s24 = scalar_select %p23, 0, %s22
    %s25 = sadd.s32 1, %s16
    %s26 = scalar_select %p23, %s25, %s16
    %p27 = scmp.ge.s32.totalorder %s26, 4
    %s28 = scalar_select %p27, 0, %s26
    %s29 = ssub.s32 %s16, %s28
    %s30 = ssub.s32 %s17, %s24
    %s31 = sor.u32 %s29, %s30
    %p32 = scmp.eq.s32.totalorder %s31, 0
    %s34 = sadd.s32 %s33, 1
    %s35 = scalar_select %p32, %s33, %s34
    %p38 = pneg %p32
    %p39 = scmp.eq.s32.totalorder %s9, 3
    %p40 = por %p38, %p39
    %p41 = scmp.ne.s32.totalorder %s33, %s36
    %p42 = scmp.eq.s32.totalorder %s9, 0
    %p43 = por %p41, %p42
    %p44 = scmp.ne.s32.totalorder %s33, %s36
    %p45 = scmp.eq.s32.totalorder %s14, 3
    %p46 = por %p44, %p45
    %p47 = scmp.ne.s32.totalorder %s36, %s37
    %p48 = scmp.eq.s32.totalorder %s14, 0
    %p49 = por %p47, %p48
    %p50 = scmp.ne.s32.totalorder %s36, %s37
    %p51 = scmp.eq.s32.totalorder %s15, 3
    %p52 = por %p50, %p51
    %p54 = scmp.ne.s32.totalorder %s37, %s53
    %p55 = scmp.eq.s32.totalorder %s15, 0
    %p56 = por %p54, %p55
    %s58 = sadd.s32 %s57, 1
    %p61 = scmp.eq.s32.totalorder %s9, 3
    %p62 = scmp.ne.s32.totalorder %s57, %s59
    %p63 = scmp.eq.s32.totalorder %s9, 0
    %p64 = por %p62, %p63
    %p65 = scmp.ne.s32.totalorder %s57, %s59
    %p66 = scmp.eq.s32.totalorder %s14, 3
    %p67 = por %p65, %p66
    %p68 = scmp.ne.s32.totalorder %s59, %s60
    %p69 = scmp.eq.s32.totalorder %s14, 0
    %p70 = por %p68, %p69
    %p71 = scmp.ne.s32.totalorder %s59, %s60
    %p72 = scmp.eq.s32.totalorder %s15, 3
    %p73 = por %p71, %p72
    %p75 = scmp.ne.s32.totalorder %s60, %s74
    %p76 = scmp.eq.s32.totalorder %s15, 0
    %p77 = por %p75, %p76
    %s79 = sadd.s32 %s78, 1
    %p82 = scmp.eq.s32.totalorder %s9, 3
    %p83 = scmp.ne.s32.totalorder %s78, %s80
    %p84 = scmp.eq.s32.totalorder %s9, 0
    %p85 = por %p83, %p84
    %p86 = scmp.ne.s32.totalorder %s78, %s80
    %p87 = scmp.eq.s32.totalorder %s14, 3
    %p88 = por %p86, %p87
    %p89 = scmp.ne.s32.totalorder %s80, %s81
    %p90 = scmp.eq.s32.totalorder %s14, 0
    %p91 = por %p89, %p90
    %p92 = scmp.ne.s32.totalorder %s80, %s81
    %p93 = scmp.eq.s32.totalorder %s15, 3
    %p94 = por %p92, %p93
    %p96 = scmp.ne.s32.totalorder %s81, %s95
    %p97 = scmp.eq.s32.totalorder %s15, 0
    %p98 = por %p96, %p97
    %s99 = ssub.s32 %s16, %s28
    %s100 = ssub.s32 %s17, %s24
    %s101 = sor.u32 %s99, %s100
    %p102 = scmp.eq.s32.totalorder %s101, 0
    %s104 = sadd.s32 %s103, 1
    %s105 = scalar_select %p102, %s103, %s104
    %p108 = pneg %p102
    %p109 = scmp.eq.s32.totalorder %s9, 3
    %p110 = por %p108, %p109
    %p111 = scmp.ne.s32.totalorder %s103, %s106
    %p112 = scmp.eq.s32.totalorder %s9, 0
    %p113 = por %p111, %p112
    %p114 = scmp.ne.s32.totalorder %s103, %s106
    %p115 = scmp.eq.s32.totalorder %s14, 3
    %p116 = por %p114, %p115
    %p117 = scmp.ne.s32.totalorder %s106, %s107
    %p118 = scmp.eq.s32.totalorder %s14, 0
    %p119 = por %p117, %p118
    %p120 = scmp.ne.s32.totalorder %s106, %s107
    %p121 = scmp.eq.s32.totalorder %s15, 3
    %p122 = por %p120, %p121
    %p124 = scmp.ne.s32.totalorder %s107, %s123
    %p125 = scmp.eq.s32.totalorder %s15, 0
    %p126 = por %p124, %p125
    %p127 = scmp.le.s32.totalorder 1, %s9
    %p128 = scmp.lt.s32.totalorder %s9, 5
    %p129 = pnand %p127, %p128
    %p130 = pneg %p129
    // Predicated region
    $region9: #{generator_forward.10} parent=5 // pred_check
      _
    $region10: #{generator_forward.10} parent=5 // pred_check_branch
      %132 = sbr.rel (%p129) target = $region12
    $region11: #{generator_forward.10} parent=5 // pred_region
      %s133 = ssub.s32 %s9, 1
      // Predicated region
      $region13: #{generator_forward.10} parent=11 // pred_check
        %p134 = pneg %p70
      $region14: #{generator_forward.10} parent=11 // pred_check_branch
        %136 = sbr.rel (%p134) target = $region16
      $region15: #{generator_forward.10} parent=11 // pred_region
        _
      $region16: #{generator_forward.10} parent=11 // pred_fallthru
        _
      // Predicated region
      $region17: #{generator_forward.10} parent=11 // pred_check
        %p137 = pneg %p91
      $region18: #{generator_forward.10} parent=11 // pred_check_branch
        %139 = sbr.rel (%p137) target = $region20
      $region19: #{generator_forward.10} parent=11 // pred_region
        _
      $region20: #{generator_forward.10} parent=11 // pred_fallthru
        _
    $region12: #{generator_forward.10} parent=5 // pred_fallthru
      _
    %p140 = scmp.lt.s32.totalorder %s9, 4
    // Predicated region
    $region21: #{generator_forward.10} parent=5 // pred_check
      %p141 = pneg %p140
    $region22: #{generator_forward.10} parent=5 // pred_check_branch
      %143 = sbr.rel (%p141) target = $region24
    $region23: #{generator_forward.10} parent=5 // pred_region
      // Predicated region
      $region25: #{generator_forward.10} parent=23 // pred_check
        %p144 = pneg %p43
      $region26: #{generator_forward.10} parent=23 // pred_check_branch
        %146 = sbr.rel (%p144) target = $region28
      $region27: #{generator_forward.10} parent=23 // pred_region
        %s147 = smul.u32 16, %s17
        %p148 = scmp.lt.s32.totalorder %s16, 3
        %s149 = scalar_select %p148, %s16, 3
        %p150 = scmp.lt.s32.totalorder %s147, 15
        %s151 = scalar_select %p150, %s147, 15
        %s152 = smul.addr %s149, 16
        %s153 = sadd.s32 %s151, %s152
        %s154 = smul.addr %s153, 4
        %s155 = scalar_lea.vmem %s0, %s154
        %s156 = smul.u32 16, %s17
      $region28: #{generator_forward.10} parent=23 // pred_fallthru
        _
    $region24: #{generator_forward.10} parent=5 // pred_fallthru
      _
    %p157 = scmp.le.s32.totalorder 1, %s9
    %p158 = scmp.lt.s32.totalorder %s9, 5
    %p159 = pnand %p157, %p158
    %p160 = pneg %p159
    // Predicated region
    $region29: #{generator_forward.10} parent=5 // pred_check
      _
    $region30: #{generator_forward.10} parent=5 // pred_check_branch
      %162 = sbr.rel (%p159) target = $region32
    $region31: #{generator_forward.10} parent=5 // pred_region
      %s163 = ssub.s32 %s9, 1
      %s164 = smul.u32 16, %s19
      %p165 = scmp.lt.s32.totalorder %s18, 3
      %s166 = scalar_select %p165, %s18, 3
      %p167 = scmp.lt.s32.totalorder %s164, 15
      %s168 = scalar_select %p167, %s164, 15
      %s169 = smul.addr %s166, 16
      %s170 = sadd.s32 %s168, %s169
      %s171 = smul.addr %s170, 4
      %s172 = scalar_lea.vmem %s0, %s171
      %p173 = pneg %p49
      %p174 = pneg %p46
      %p175 = pneg %p70
      %p176 = pneg %p67
      %p177 = pneg %p91
      %p178 = pneg %p88
      %p179 = pneg %p119
      %p180 = pneg %p116
      %s181 = smul.u32 16, %s19
      %p182 = scmp.lt.s32.totalorder %s18, 3
      %s183 = scalar_select %p182, %s18, 3
      %p184 = scmp.lt.s32.totalorder %s181, 15
      %s185 = scalar_select %p184, %s181, 15
      %s186 = smul.addr %s183, 16
      %s187 = sadd.s32 %s185, %s186
      %s188 = smul.addr %s187, 4
      %s189 = scalar_lea.vmem %s3, %s188
      %s190 = smul.u32 16, %s19
      %p191 = scmp.lt.s32.totalorder %s18, 3
      %s192 = scalar_select %p191, %s18, 3
      %p193 = scmp.lt.s32.totalorder %s190, 15
      %s194 = scalar_select %p193, %s190, 15
      %s195 = smul.addr %s192, 16
      %s196 = sadd.s32 %s194, %s195
      %s197 = smul.addr %s196, 4
      %s198 = scalar_lea.vmem %s0, %s197
      %s199 = smul.u32 16, %s19
      %s200 = smul.u32 16, %s19
      %p201 = scmp.lt.s32.totalorder %s18, 3
      %s202 = scalar_select %p201, %s18, 3
      %p203 = scmp.lt.s32.totalorder %s200, 15
      %s204 = scalar_select %p203, %s200, 15
      %s205 = smul.addr %s202, 16
      %s206 = sadd.s32 %s204, %s205
      %s207 = smul.addr %s206, 4
      %s208 = scalar_lea.vmem %s3, %s207
      %s209 = smul.u32 16, %s19
      %v210 = vld [vmem:[%s198] sm:$0xf]
      %v211 = vld [vmem:[%s198 + $0x4] sm:$0xf]
      %v212 = vld [vmem:[%s198 + $0x8] sm:$0xf]
      %v213 = vld [vmem:[%s198 + $0xc] sm:$0xf]
      %v214 = vld [vmem:[%s198 + $0x10] sm:$0xf]
      %v215 = vld [vmem:[%s198 + $0x14] sm:$0xf]
      %v216 = vld [vmem:[%s198 + $0x18] sm:$0xf]
      %v217 = vld [vmem:[%s198 + $0x1c] sm:$0xf]
      %v218 = vld [vmem:[%s198 + $0x20] sm:$0xf]
      %v219 = vld [vmem:[%s198 + $0x24] sm:$0xf]
      %v220 = vld [vmem:[%s198 + $0x28] sm:$0xf]
      %v221 = vld [vmem:[%s198 + $0x2c] sm:$0xf]
      %v222 = vld [vmem:[%s198 + $0x30] sm:$0xf]
      %v223 = vld [vmem:[%s198 + $0x34] sm:$0xf]
      %v224 = vld [vmem:[%s198 + $0x38] sm:$0xf]
      %v225 = vld [vmem:[%s198 + $0x3c] sm:$0xf]
      %v226 = vunpack.c.l.bf16 %v210
      %v227 = vunpack.c.l.bf16 %v211
      %v228 = vunpack.c.l.bf16 %v212
      %v229 = vunpack.c.l.bf16 %v213
      %v230 = vunpack.c.l.bf16 %v214
      %v231 = vunpack.c.l.bf16 %v215
      %v232 = vunpack.c.l.bf16 %v216
      %v233 = vunpack.c.l.bf16 %v217
      %v234 = vunpack.c.l.bf16 %v218
      %v235 = vunpack.c.l.bf16 %v219
      %v236 = vunpack.c.l.bf16 %v220
      %v237 = vunpack.c.l.bf16 %v221
      %v238 = vunpack.c.l.bf16 %v222
      %v239 = vunpack.c.l.bf16 %v223
      %v240 = vunpack.c.l.bf16 %v224
      %v241 = vunpack.c.l.bf16 %v225
      %v242 = vld [vmem:[%s1] sm:$0x1]
      %v244 = vperm.slane %v242, 0
      %v246 = vmul.f32 %v226, %v244
      %v247 = vmul.f32 %v227, %v244
      %v248 = vmul.f32 %v228, %v244
      %v249 = vmul.f32 %v229, %v244
      %v250 = vmul.f32 %v230, %v244
      %v251 = vmul.f32 %v231, %v244
      %v252 = vmul.f32 %v232, %v244
      %v253 = vmul.f32 %v233, %v244
      %v254 = vmul.f32 %v234, %v244
      %v255 = vmul.f32 %v235, %v244
      %v256 = vmul.f32 %v236, %v244
      %v257 = vmul.f32 %v237, %v244
      %v258 = vmul.f32 %v238, %v244
      %v259 = vmul.f32 %v239, %v244
      %v260 = vmul.f32 %v240, %v244
      %v261 = vmul.f32 %v241, %v244
      %v262 = vld [vmem:[%s2] sm:$0x1]
      %v264 = vperm.slane %v262, 0
      %v266 = vadd.f32 %v246, %v264
      %v267 = vadd.f32 %v247, %v264
      %v268 = vadd.f32 %v248, %v264
      %v269 = vadd.f32 %v249, %v264
      %v270 = vadd.f32 %v250, %v264
      %v271 = vadd.f32 %v251, %v264
      %v272 = vadd.f32 %v252, %v264
      %v273 = vadd.f32 %v253, %v264
      %v274 = vadd.f32 %v254, %v264
      %v275 = vadd.f32 %v255, %v264
      %v276 = vadd.f32 %v256, %v264
      %v277 = vadd.f32 %v257, %v264
      %v278 = vadd.f32 %v258, %v264
      %v279 = vadd.f32 %v259, %v264
      %v280 = vadd.f32 %v260, %v264
      %v281 = vadd.f32 %v261, %v264
      %vm282 = vcmp.ge.f32.partialorder %v266, 0.0
      %vm283 = vcmp.ge.f32.partialorder %v267, 0.0
      %vm284 = vcmp.ge.f32.partialorder %v268, 0.0
      %vm285 = vcmp.ge.f32.partialorder %v269, 0.0
      %vm286 = vcmp.ge.f32.partialorder %v270, 0.0
      %vm287 = vcmp.ge.f32.partialorder %v271, 0.0
      %vm288 = vcmp.ge.f32.partialorder %v272, 0.0
      %vm289 = vcmp.ge.f32.partialorder %v273, 0.0
      %vm290 = vcmp.ge.f32.partialorder %v274, 0.0
      %vm291 = vcmp.ge.f32.partialorder %v275, 0.0
      %vm292 = vcmp.ge.f32.partialorder %v276, 0.0
      %vm293 = vcmp.ge.f32.partialorder %v277, 0.0
      %vm294 = vcmp.ge.f32.partialorder %v278, 0.0
      %vm295 = vcmp.ge.f32.partialorder %v279, 0.0
      %vm296 = vcmp.ge.f32.partialorder %v280, 0.0
      %vm297 = vcmp.ge.f32.partialorder %v281, 0.0
      %v298 = vmul.f32 %v266, 0.2
      %v299 = vmul.f32 %v267, 0.2
      %v300 = vmul.f32 %v268, 0.2
      %v301 = vmul.f32 %v269, 0.2
      %v302 = vmul.f32 %v270, 0.2
      %v303 = vmul.f32 %v271, 0.2
      %v304 = vmul.f32 %v272, 0.2
      %v305 = vmul.f32 %v273, 0.2
      %v306 = vmul.f32 %v274, 0.2
      %v307 = vmul.f32 %v275, 0.2
      %v308 = vmul.f32 %v276, 0.2
      %v309 = vmul.f32 %v277, 0.2
      %v310 = vmul.f32 %v278, 0.2
      %v311 = vmul.f32 %v279, 0.2
      %v312 = vmul.f32 %v280, 0.2
      %v313 = vmul.f32 %v281, 0.2
      %v314 = vsel %vm282, %v266, %v298
      %v315 = vsel %vm283, %v267, %v299
      %v316 = vsel %vm284, %v268, %v300
      %v317 = vsel %vm285, %v269, %v301
      %v318 = vsel %vm286, %v270, %v302
      %v319 = vsel %vm287, %v271, %v303
      %v320 = vsel %vm288, %v272, %v304
      %v321 = vsel %vm289, %v273, %v305
      %v322 = vsel %vm290, %v274, %v306
      %v323 = vsel %vm291, %v275, %v307
      %v324 = vsel %vm292, %v276, %v308
      %v325 = vsel %vm293, %v277, %v309
      %v326 = vsel %vm294, %v278, %v310
      %v327 = vsel %vm295, %v279, %v311
      %v328 = vsel %vm296, %v280, %v312
      %v329 = vsel %vm297, %v281, %v313
      %v330 = vpack.c.bf16 %v314, %v314
      %v331 = vpack.c.bf16 %v315, %v315
      %v332 = vpack.c.bf16 %v316, %v316
      %v333 = vpack.c.bf16 %v317, %v317
      %v334 = vpack.c.bf16 %v318, %v318
      %v335 = vpack.c.bf16 %v319, %v319
      %v336 = vpack.c.bf16 %v320, %v320
      %v337 = vpack.c.bf16 %v321, %v321
      %v338 = vpack.c.bf16 %v322, %v322
      %v339 = vpack.c.bf16 %v323, %v323
      %v340 = vpack.c.bf16 %v324, %v324
      %v341 = vpack.c.bf16 %v325, %v325
      %v342 = vpack.c.bf16 %v326, %v326
      %v343 = vpack.c.bf16 %v327, %v327
      %v344 = vpack.c.bf16 %v328, %v328
      %v345 = vpack.c.bf16 %v329, %v329
      %346 = vst [vmem:[%s208] sm:$0xf] %v330
      %347 = vst [vmem:[%s208 + $0x4] sm:$0xf] %v331
      %348 = vst [vmem:[%s208 + $0x8] sm:$0xf] %v332
      %349 = vst [vmem:[%s208 + $0xc] sm:$0xf] %v333
      %350 = vst [vmem:[%s208 + $0x10] sm:$0xf] %v334
      %351 = vst [vmem:[%s208 + $0x14] sm:$0xf] %v335
      %352 = vst [vmem:[%s208 + $0x18] sm:$0xf] %v336
      %353 = vst [vmem:[%s208 + $0x1c] sm:$0xf] %v337
      %354 = vst [vmem:[%s208 + $0x20] sm:$0xf] %v338
      %355 = vst [vmem:[%s208 + $0x24] sm:$0xf] %v339
      %356 = vst [vmem:[%s208 + $0x28] sm:$0xf] %v340
      %357 = vst [vmem:[%s208 + $0x2c] sm:$0xf] %v341
      %358 = vst [vmem:[%s208 + $0x30] sm:$0xf] %v342
      %359 = vst [vmem:[%s208 + $0x34] sm:$0xf] %v343
      %360 = vst [vmem:[%s208 + $0x38] sm:$0xf] %v344
      %361 = vst [vmem:[%s208 + $0x3c] sm:$0xf] %v345
      %s362 = smul.u32 16, %s19
      %p363 = scmp.lt.s32.totalorder %s18, 3
      %s364 = scalar_select %p363, %s18, 3
      %p365 = scmp.lt.s32.totalorder %s362, 15
      %s366 = scalar_select %p365, %s362, 15
      %s367 = smul.addr %s364, 16
      %s368 = sadd.s32 %s366, %s367
      %s369 = smul.addr %s368, 4
      %s370 = scalar_lea.vmem %s3, %s369
      // Predicated region
      $region33: #{generator_forward.10} parent=31 // pred_check
        %p371 = pneg %p116
      $region34: #{generator_forward.10} parent=31 // pred_check_branch
        %373 = sbr.rel (%p371) target = $region36
      $region35: #{generator_forward.10} parent=31 // pred_region
        %s374 = smul.u32 16, %s19
      $region36: #{generator_forward.10} parent=31 // pred_fallthru
        _
    $region32: #{generator_forward.10} parent=5 // pred_fallthru
      _
    %p375 = scmp.le.s32.totalorder 2, %s9
    // Predicated region
    $region37: #{generator_forward.10} parent=5 // pred_check
      %p376 = pneg %p375
    $region38: #{generator_forward.10} parent=5 // pred_check_branch
      %378 = sbr.rel (%p376) target = $region40
    $region39: #{generator_forward.10} parent=5 // pred_region
      %s379 = ssub.s32 %s9, 2
      // Predicated region
      $region41: #{generator_forward.10} parent=39 // pred_check
        %p380 = pneg %p122
      $region42: #{generator_forward.10} parent=39 // pred_check_branch
        %382 = sbr.rel (%p380) target = $region44
      $region43: #{generator_forward.10} parent=39 // pred_region
        %s383 = smul.u32 16, %s21
        %p384 = scmp.lt.s32.totalorder %s20, 3
        %s385 = scalar_select %p384, %s20, 3
        %p386 = scmp.lt.s32.totalorder %s383, 15
        %s387 = scalar_select %p386, %s383, 15
        %s388 = smul.addr %s385, 16
        %s389 = sadd.s32 %s387, %s388
        %s390 = smul.addr %s389, 4
        %s391 = scalar_lea.vmem %s3, %s390
      $region44: #{generator_forward.10} parent=39 // pred_fallthru
        _
    $region40: #{generator_forward.10} parent=5 // pred_fallthru
      _
  $region6: #{generator_forward.10} parent=0 // loop_footer
    %s13 = sadd.s32 1, %s9
  $region7: #{generator_forward.10} parent=0 // loop_footer_branch
    %8 = sbr.rel target = $region3
  $region8: #{generator_forward.10} parent=0 // loop_exit
    _

// kernel: generator_forward.11
$region0: #{generator_forward.11}
  #allocation0 [shape = 'u32[]', space=smem, size = 0x4, offset = 0x4, fixed_abs, tag = 'smem constant byte address 0x4 - core index']
  #allocation1 [shape = 'u32[72,128]{1,0:T(1,128)}', space=vmem, size = 0x9000, scoped, tag = 'internal scratch']
  %s0 = inlined_call_operand.vmem [shape: bf16[512,1024], index: 0, kind: input, shape index: {}]
  %s1 = inlined_call_operand.vmem [shape: bf16[1024,128], index: 1, kind: input, shape index: {}]
  %s2 = inlined_call_operand.vmem [shape: f32[1,128], index: 2, kind: input, shape index: {}]
  %s3 = inlined_call_operand.vmem [shape: bf16[512,128], index: 3, kind: output, shape index: {}]
  %s4 = sld [smem:[#allocation0]]
  $region22: #{generator_forward.11} parent=0
    _
  %s6 = ssub.s32 1, %s4
  %s7 = scalar_select 0, %s6, %s4
  // Predicated region
  $region2: #{generator_forward.11} parent=0 // pred_check
    _
  $region3: #{generator_forward.11} parent=0 // pred_check_branch
    %9 = sbr.rel (0) target = $region5
  $region4: #{generator_forward.11} parent=0 // pred_region
    _
  $region5: #{generator_forward.11} parent=0 // pred_fallthru
    _
  // Predicated region
  $region6: #{generator_forward.11} parent=0 // pred_check
    _
  $region7: #{generator_forward.11} parent=0 // pred_check_branch
    %11 = sbr.rel (0) target = $region9
  $region8: #{generator_forward.11} parent=0 // pred_region
    _
  $region9: #{generator_forward.11} parent=0 // pred_fallthru
    _
  // Predicated region
  $region10: #{generator_forward.11} parent=0 // pred_check
    _
  $region11: #{generator_forward.11} parent=0 // pred_check_branch
    %13 = sbr.rel (0) target = $region13
  $region12: #{generator_forward.11} parent=0 // pred_region
    _
  $region13: #{generator_forward.11} parent=0 // pred_fallthru
    _
  %v14 = vld [vmem:[%s0] sm:$0xff]
  %v15 = vld [vmem:[%s0 + $0x8] sm:$0xff]
  %v16 = vld [vmem:[%s0 + $0x10] sm:$0xff]
  %v17 = vld [vmem:[%s0 + $0x18] sm:$0xff]
  %v18 = vld [vmem:[%s0 + $0x20] sm:$0xff]
  %v19 = vld [vmem:[%s0 + $0x28] sm:$0xff]
  %v20 = vld [vmem:[%s0 + $0x30] sm:$0xff]
  %v21 = vld [vmem:[%s0 + $0x38] sm:$0xff]
  %v22 = vld [vmem:[%s0 + $0x40] sm:$0xff]
  %v23 = vld [vmem:[%s0 + $0x48] sm:$0xff]
  %v24 = vld [vmem:[%s0 + $0x50] sm:$0xff]
  %v25 = vld [vmem:[%s0 + $0x58] sm:$0xff]
  %v26 = vld [vmem:[%s0 + $0x60] sm:$0xff]
  %v27 = vld [vmem:[%s0 + $0x68] sm:$0xff]
  %v28 = vld [vmem:[%s0 + $0x70] sm:$0xff]
  %v29 = vld [vmem:[%s0 + $0x78] sm:$0xff]
  %v30 = vld [vmem:[%s0 + $0x80] sm:$0xff]
  %v31 = vld [vmem:[%s0 + $0x88] sm:$0xff]
  %v32 = vld [vmem:[%s0 + $0x90] sm:$0xff]
  %v33 = vld [vmem:[%s0 + $0x98] sm:$0xff]
  %v34 = vld [vmem:[%s0 + $0xa0] sm:$0xff]
  %v35 = vld [vmem:[%s0 + $0xa8] sm:$0xff]
  %v36 = vld [vmem:[%s0 + $0xb0] sm:$0xff]
  %v37 = vld [vmem:[%s0 + $0xb8] sm:$0xff]
  %v38 = vld [vmem:[%s0 + $0xc0] sm:$0xff]
  %v39 = vld [vmem:[%s0 + $0xc8] sm:$0xff]
  %v40 = vld [vmem:[%s0 + $0xd0] sm:$0xff]
  %v41 = vld [vmem:[%s0 + $0xd8] sm:$0xff]
  %v42 = vld [vmem:[%s0 + $0xe0] sm:$0xff]
  %v43 = vld [vmem:[%s0 + $0xe8] sm:$0xff]
  %v44 = vld [vmem:[%s0 + $0xf0] sm:$0xff]
  %v45 = vld [vmem:[%s0 + $0xf8] sm:$0xff]
  %v46 = vld [vmem:[%s0 + $0x100] sm:$0xff]
  %v47 = vld [vmem:[%s0 + $0x108] sm:$0xff]
  %v48 = vld [vmem:[%s0 + $0x110] sm:$0xff]
  %v49 = vld [vmem:[%s0 + $0x118] sm:$0xff]
  %v50 = vld [vmem:[%s0 + $0x120] sm:$0xff]
  %v51 = vld [vmem:[%s0 + $0x128] sm:$0xff]
  %v52 = vld [vmem:[%s0 + $0x130] sm:$0xff]
  %v53 = vld [vmem:[%s0 + $0x138] sm:$0xff]
  %v54 = vld [vmem:[%s0 + $0x140] sm:$0xff]
  %v55 = vld [vmem:[%s0 + $0x148] sm:$0xff]
  %v56 = vld [vmem:[%s0 + $0x150] sm:$0xff]
  %v57 = vld [vmem:[%s0 + $0x158] sm:$0xff]
  %v58 = vld [vmem:[%s0 + $0x160] sm:$0xff]
  %v59 = vld [vmem:[%s0 + $0x168] sm:$0xff]
  %v60 = vld [vmem:[%s0 + $0x170] sm:$0xff]
  %v61 = vld [vmem:[%s0 + $0x178] sm:$0xff]
  %v62 = vld [vmem:[%s0 + $0x180] sm:$0xff]
  %v63 = vld [vmem:[%s0 + $0x188] sm:$0xff]
  %v64 = vld [vmem:[%s0 + $0x190] sm:$0xff]
  %v65 = vld [vmem:[%s0 + $0x198] sm:$0xff]
  %v66 = vld [vmem:[%s0 + $0x1a0] sm:$0xff]
  %v67 = vld [vmem:[%s0 + $0x1a8] sm:$0xff]
  %v68 = vld [vmem:[%s0 + $0x1b0] sm:$0xff]
  %v69 = vld [vmem:[%s0 + $0x1b8] sm:$0xff]
  %v70 = vld [vmem:[%s0 + $0x1c0] sm:$0xff]
  %v71 = vld [vmem:[%s0 + $0x1c8] sm:$0xff]
  %v72 = vld [vmem:[%s0 + $0x1d0] sm:$0xff]
  %v73 = vld [vmem:[%s0 + $0x1d8] sm:$0xff]
  %v74 = vld [vmem:[%s0 + $0x1e0] sm:$0xff]
  %v75 = vld [vmem:[%s0 + $0x1e8] sm:$0xff]
  %v76 = vld [vmem:[%s0 + $0x1f0] sm:$0xff]
  %v77 = vld [vmem:[%s0 + $0x1f8] sm:$0xff]
  %v78 = vld [vmem:[%s0 + $0x200] sm:$0xff]
  %v79 = vld [vmem:[%s0 + $0x208] sm:$0xff]
  %v80 = vld [vmem:[%s0 + $0x210] sm:$0xff]
  %v81 = vld [vmem:[%s0 + $0x218] sm:$0xff]
  %v82 = vld [vmem:[%s0 + $0x220] sm:$0xff]
  %v83 = vld [vmem:[%s0 + $0x228] sm:$0xff]
  %v84 = vld [vmem:[%s0 + $0x230] sm:$0xff]
  %v85 = vld [vmem:[%s0 + $0x238] sm:$0xff]
  %v86 = vld [vmem:[%s0 + $0x240] sm:$0xff]
  %v87 = vld [vmem:[%s0 + $0x248] sm:$0xff]
  %v88 = vld [vmem:[%s0 + $0x250] sm:$0xff]
  %v89 = vld [vmem:[%s0 + $0x258] sm:$0xff]
  %v90 = vld [vmem:[%s0 + $0x260] sm:$0xff]
  %v91 = vld [vmem:[%s0 + $0x268] sm:$0xff]
  %v92 = vld [vmem:[%s0 + $0x270] sm:$0xff]
  %v93 = vld [vmem:[%s0 + $0x278] sm:$0xff]
  %v94 = vld [vmem:[%s0 + $0x280] sm:$0xff]
  %v95 = vld [vmem:[%s0 + $0x288] sm:$0xff]
  %v96 = vld [vmem:[%s0 + $0x290] sm:$0xff]
  %v97 = vld [vmem:[%s0 + $0x298] sm:$0xff]
  %v98 = vld [vmem:[%s0 + $0x2a0] sm:$0xff]
  %v99 = vld [vmem:[%s0 + $0x2a8] sm:$0xff]
  %v100 = vld [vmem:[%s0 + $0x2b0] sm:$0xff]
  %v101 = vld [vmem:[%s0 + $0x2b8] sm:$0xff]
  %v102 = vld [vmem:[%s0 + $0x2c0] sm:$0xff]
  %v103 = vld [vmem:[%s0 + $0x2c8] sm:$0xff]
  %v104 = vld [vmem:[%s0 + $0x2d0] sm:$0xff]
  %v105 = vld [vmem:[%s0 + $0x2d8] sm:$0xff]
  %v106 = vld [vmem:[%s0 + $0x2e0] sm:$0xff]
  %v107 = vld [vmem:[%s0 + $0x2e8] sm:$0xff]
  %v108 = vld [vmem:[%s0 + $0x2f0] sm:$0xff]
  %v109 = vld [vmem:[%s0 + $0x2f8] sm:$0xff]
  %v110 = vld [vmem:[%s0 + $0x300] sm:$0xff]
  %v111 = vld [vmem:[%s0 + $0x308] sm:$0xff]
  %v112 = vld [vmem:[%s0 + $0x310] sm:$0xff]
  %v113 = vld [vmem:[%s0 + $0x318] sm:$0xff]
  %v114 = vld [vmem:[%s0 + $0x320] sm:$0xff]
  %v115 = vld [vmem:[%s0 + $0x328] sm:$0xff]
  %v116 = vld [vmem:[%s0 + $0x330] sm:$0xff]
  %v117 = vld [vmem:[%s0 + $0x338] sm:$0xff]
  %v118 = vld [vmem:[%s0 + $0x340] sm:$0xff]
  %v119 = vld [vmem:[%s0 + $0x348] sm:$0xff]
  %v120 = vld [vmem:[%s0 + $0x350] sm:$0xff]
  %v121 = vld [vmem:[%s0 + $0x358] sm:$0xff]
  %v122 = vld [vmem:[%s0 + $0x360] sm:$0xff]
  %v123 = vld [vmem:[%s0 + $0x368] sm:$0xff]
  %v124 = vld [vmem:[%s0 + $0x370] sm:$0xff]
  %v125 = vld [vmem:[%s0 + $0x378] sm:$0xff]
  %v126 = vld [vmem:[%s0 + $0x380] sm:$0xff]
  %v127 = vld [vmem:[%s0 + $0x388] sm:$0xff]
  %v128 = vld [vmem:[%s0 + $0x390] sm:$0xff]
  %v129 = vld [vmem:[%s0 + $0x398] sm:$0xff]
  %v130 = vld [vmem:[%s0 + $0x3a0] sm:$0xff]
  %v131 = vld [vmem:[%s0 + $0x3a8] sm:$0xff]
  %v132 = vld [vmem:[%s0 + $0x3b0] sm:$0xff]
  %v133 = vld [vmem:[%s0 + $0x3b8] sm:$0xff]
  %v134 = vld [vmem:[%s0 + $0x3c0] sm:$0xff]
  %v135 = vld [vmem:[%s0 + $0x3c8] sm:$0xff]
  %v136 = vld [vmem:[%s0 + $0x3d0] sm:$0xff]
  %v137 = vld [vmem:[%s0 + $0x3d8] sm:$0xff]
  %v138 = vld [vmem:[%s0 + $0x3e0] sm:$0xff]
  %v139 = vld [vmem:[%s0 + $0x3e8] sm:$0xff]
  %v140 = vld [vmem:[%s0 + $0x3f0] sm:$0xff]
  %v141 = vld [vmem:[%s0 + $0x3f8] sm:$0xff]
  %v142 = vld [vmem:[%s0 + $0x400] sm:$0xff]
  %v143 = vld [vmem:[%s0 + $0x408] sm:$0xff]
  %v144 = vld [vmem:[%s0 + $0x410] sm:$0xff]
  %v145 = vld [vmem:[%s0 + $0x418] sm:$0xff]
  %v146 = vld [vmem:[%s0 + $0x420] sm:$0xff]
  %v147 = vld [vmem:[%s0 + $0x428] sm:$0xff]
  %v148 = vld [vmem:[%s0 + $0x430] sm:$0xff]
  %v149 = vld [vmem:[%s0 + $0x438] sm:$0xff]
  %v150 = vld [vmem:[%s0 + $0x440] sm:$0xff]
  %v151 = vld [vmem:[%s0 + $0x448] sm:$0xff]
  %v152 = vld [vmem:[%s0 + $0x450] sm:$0xff]
  %v153 = vld [vmem:[%s0 + $0x458] sm:$0xff]
  %v154 = vld [vmem:[%s0 + $0x460] sm:$0xff]
  %v155 = vld [vmem:[%s0 + $0x468] sm:$0xff]
  %v156 = vld [vmem:[%s0 + $0x470] sm:$0xff]
  %v157 = vld [vmem:[%s0 + $0x478] sm:$0xff]
  %v158 = vld [vmem:[%s0 + $0x480] sm:$0xff]
  %v159 = vld [vmem:[%s0 + $0x488] sm:$0xff]
  %v160 = vld [vmem:[%s0 + $0x490] sm:$0xff]
  %v161 = vld [vmem:[%s0 + $0x498] sm:$0xff]
  %v162 = vld [vmem:[%s0 + $0x4a0] sm:$0xff]
  %v163 = vld [vmem:[%s0 + $0x4a8] sm:$0xff]
  %v164 = vld [vmem:[%s0 + $0x4b0] sm:$0xff]
  %v165 = vld [vmem:[%s0 + $0x4b8] sm:$0xff]
  %v166 = vld [vmem:[%s0 + $0x4c0] sm:$0xff]
  %v167 = vld [vmem:[%s0 + $0x4c8] sm:$0xff]
  %v168 = vld [vmem:[%s0 + $0x4d0] sm:$0xff]
  %v169 = vld [vmem:[%s0 + $0x4d8] sm:$0xff]
  %v170 = vld [vmem:[%s0 + $0x4e0] sm:$0xff]
  %v171 = vld [vmem:[%s0 + $0x4e8] sm:$0xff]
  %v172 = vld [vmem:[%s0 + $0x4f0] sm:$0xff]
  %v173 = vld [vmem:[%s0 + $0x4f8] sm:$0xff]
  %v174 = vld [vmem:[%s0 + $0x500] sm:$0xff]
  %v175 = vld [vmem:[%s0 + $0x508] sm:$0xff]
  %v176 = vld [vmem:[%s0 + $0x510] sm:$0xff]
  %v177 = vld [vmem:[%s0 + $0x518] sm:$0xff]
  %v178 = vld [vmem:[%s0 + $0x520] sm:$0xff]
  %v179 = vld [vmem:[%s0 + $0x528] sm:$0xff]
  %v180 = vld [vmem:[%s0 + $0x530] sm:$0xff]
  %v181 = vld [vmem:[%s0 + $0x538] sm:$0xff]
  %v182 = vld [vmem:[%s0 + $0x540] sm:$0xff]
  %v183 = vld [vmem:[%s0 + $0x548] sm:$0xff]
  %v184 = vld [vmem:[%s0 + $0x550] sm:$0xff]
  %v185 = vld [vmem:[%s0 + $0x558] sm:$0xff]
  %v186 = vld [vmem:[%s0 + $0x560] sm:$0xff]
  %v187 = vld [vmem:[%s0 + $0x568] sm:$0xff]
  %v188 = vld [vmem:[%s0 + $0x570] sm:$0xff]
  %v189 = vld [vmem:[%s0 + $0x578] sm:$0xff]
  %v190 = vld [vmem:[%s0 + $0x580] sm:$0xff]
  %v191 = vld [vmem:[%s0 + $0x588] sm:$0xff]
  %v192 = vld [vmem:[%s0 + $0x590] sm:$0xff]
  %v193 = vld [vmem:[%s0 + $0x598] sm:$0xff]
  %v194 = vld [vmem:[%s0 + $0x5a0] sm:$0xff]
  %v195 = vld [vmem:[%s0 + $0x5a8] sm:$0xff]
  %v196 = vld [vmem:[%s0 + $0x5b0] sm:$0xff]
  %v197 = vld [vmem:[%s0 + $0x5b8] sm:$0xff]
  %v198 = vld [vmem:[%s0 + $0x5c0] sm:$0xff]
  %v199 = vld [vmem:[%s0 + $0x5c8] sm:$0xff]
  %v200 = vld [vmem:[%s0 + $0x5d0] sm:$0xff]
  %v201 = vld [vmem:[%s0 + $0x5d8] sm:$0xff]
  %v202 = vld [vmem:[%s0 + $0x5e0] sm:$0xff]
  %v203 = vld [vmem:[%s0 + $0x5e8] sm:$0xff]
  %v204 = vld [vmem:[%s0 + $0x5f0] sm:$0xff]
  %v205 = vld [vmem:[%s0 + $0x5f8] sm:$0xff]
  %v206 = vld [vmem:[%s0 + $0x600] sm:$0xff]
  %v207 = vld [vmem:[%s0 + $0x608] sm:$0xff]
  %v208 = vld [vmem:[%s0 + $0x610] sm:$0xff]
  %v209 = vld [vmem:[%s0 + $0x618] sm:$0xff]
  %v210 = vld [vmem:[%s0 + $0x620] sm:$0xff]
  %v211 = vld [vmem:[%s0 + $0x628] sm:$0xff]
  %v212 = vld [vmem:[%s0 + $0x630] sm:$0xff]
  %v213 = vld [vmem:[%s0 + $0x638] sm:$0xff]
  %v214 = vld [vmem:[%s0 + $0x640] sm:$0xff]
  %v215 = vld [vmem:[%s0 + $0x648] sm:$0xff]
  %v216 = vld [vmem:[%s0 + $0x650] sm:$0xff]
  %v217 = vld [vmem:[%s0 + $0x658] sm:$0xff]
  %v218 = vld [vmem:[%s0 + $0x660] sm:$0xff]
  %v219 = vld [vmem:[%s0 + $0x668] sm:$0xff]
  %v220 = vld [vmem:[%s0 + $0x670] sm:$0xff]
  %v221 = vld [vmem:[%s0 + $0x678] sm:$0xff]
  %v222 = vld [vmem:[%s0 + $0x680] sm:$0xff]
  %v223 = vld [vmem:[%s0 + $0x688] sm:$0xff]
  %v224 = vld [vmem:[%s0 + $0x690] sm:$0xff]
  %v225 = vld [vmem:[%s0 + $0x698] sm:$0xff]
  %v226 = vld [vmem:[%s0 + $0x6a0] sm:$0xff]
  %v227 = vld [vmem:[%s0 + $0x6a8] sm:$0xff]
  %v228 = vld [vmem:[%s0 + $0x6b0] sm:$0xff]
  %v229 = vld [vmem:[%s0 + $0x6b8] sm:$0xff]
  %v230 = vld [vmem:[%s0 + $0x6c0] sm:$0xff]
  %v231 = vld [vmem:[%s0 + $0x6c8] sm:$0xff]
  %v232 = vld [vmem:[%s0 + $0x6d0] sm:$0xff]
  %v233 = vld [vmem:[%s0 + $0x6d8] sm:$0xff]
  %v234 = vld [vmem:[%s0 + $0x6e0] sm:$0xff]
  %v235 = vld [vmem:[%s0 + $0x6e8] sm:$0xff]
  %v236 = vld [vmem:[%s0 + $0x6f0] sm:$0xff]
  %v237 = vld [vmem:[%s0 + $0x6f8] sm:$0xff]
  %v238 = vld [vmem:[%s0 + $0x700] sm:$0xff]
  %v239 = vld [vmem:[%s0 + $0x708] sm:$0xff]
  %v240 = vld [vmem:[%s0 + $0x710] sm:$0xff]
  %v241 = vld [vmem:[%s0 + $0x718] sm:$0xff]
  %v242 = vld [vmem:[%s0 + $0x720] sm:$0xff]
  %v243 = vld [vmem:[%s0 + $0x728] sm:$0xff]
  %v244 = vld [vmem:[%s0 + $0x730] sm:$0xff]
  %v245 = vld [vmem:[%s0 + $0x738] sm:$0xff]
  %v246 = vld [vmem:[%s0 + $0x740] sm:$0xff]
  %v247 = vld [vmem:[%s0 + $0x748] sm:$0xff]
  %v248 = vld [vmem:[%s0 + $0x750] sm:$0xff]
  %v249 = vld [vmem:[%s0 + $0x758] sm:$0xff]
  %v250 = vld [vmem:[%s0 + $0x760] sm:$0xff]
  %v251 = vld [vmem:[%s0 + $0x768] sm:$0xff]
  %v252 = vld [vmem:[%s0 + $0x770] sm:$0xff]
  %v253 = vld [vmem:[%s0 + $0x778] sm:$0xff]
  %v254 = vld [vmem:[%s0 + $0x780] sm:$0xff]
  %v255 = vld [vmem:[%s0 + $0x788] sm:$0xff]
  %v256 = vld [vmem:[%s0 + $0x790] sm:$0xff]
  %v257 = vld [vmem:[%s0 + $0x798] sm:$0xff]
  %v258 = vld [vmem:[%s0 + $0x7a0] sm:$0xff]
  %v259 = vld [vmem:[%s0 + $0x7a8] sm:$0xff]
  %v260 = vld [vmem:[%s0 + $0x7b0] sm:$0xff]
  %v261 = vld [vmem:[%s0 + $0x7b8] sm:$0xff]
  %v262 = vld [vmem:[%s0 + $0x7c0] sm:$0xff]
  %v263 = vld [vmem:[%s0 + $0x7c8] sm:$0xff]
  %v264 = vld [vmem:[%s0 + $0x7d0] sm:$0xff]
  %v265 = vld [vmem:[%s0 + $0x7d8] sm:$0xff]
  %v266 = vld [vmem:[%s0 + $0x7e0] sm:$0xff]
  %v267 = vld [vmem:[%s0 + $0x7e8] sm:$0xff]
  %v268 = vld [vmem:[%s0 + $0x7f0] sm:$0xff]
  %v269 = vld [vmem:[%s0 + $0x7f8] sm:$0xff]
  %v270 = vld [vmem:[%s1] sm:$0xf]
  %v271 = vld [vmem:[%s1 + $0x4] sm:$0xf]
  %v272 = vld [vmem:[%s1 + $0x8] sm:$0xf]
  %v273 = vld [vmem:[%s1 + $0xc] sm:$0xf]
  %v274 = vld [vmem:[%s1 + $0x10] sm:$0xf]
  %v275 = vld [vmem:[%s1 + $0x14] sm:$0xf]
  %v276 = vld [vmem:[%s1 + $0x18] sm:$0xf]
  %v277 = vld [vmem:[%s1 + $0x1c] sm:$0xf]
  %v278 = vld [vmem:[%s1 + $0x20] sm:$0xf]
  %v279 = vld [vmem:[%s1 + $0x24] sm:$0xf]
  %v280 = vld [vmem:[%s1 + $0x28] sm:$0xf]
  %v281 = vld [vmem:[%s1 + $0x2c] sm:$0xf]
  %v282 = vld [vmem:[%s1 + $0x30] sm:$0xf]
  %v283 = vld [vmem:[%s1 + $0x34] sm:$0xf]
  %v284 = vld [vmem:[%s1 + $0x38] sm:$0xf]
  %v285 = vld [vmem:[%s1 + $0x3c] sm:$0xf]
  %v286 = vld [vmem:[%s1 + $0x40] sm:$0xf]
  %v287 = vld [vmem:[%s1 + $0x44] sm:$0xf]
  %v288 = vld [vmem:[%s1 + $0x48] sm:$0xf]
  %v289 = vld [vmem:[%s1 + $0x4c] sm:$0xf]
  %v290 = vld [vmem:[%s1 + $0x50] sm:$0xf]
  %v291 = vld [vmem:[%s1 + $0x54] sm:$0xf]
  %v292 = vld [vmem:[%s1 + $0x58] sm:$0xf]
  %v293 = vld [vmem:[%s1 + $0x5c] sm:$0xf]
  %v294 = vld [vmem:[%s1 + $0x60] sm:$0xf]
  %v295 = vld [vmem:[%s1 + $0x64] sm:$0xf]
  %v296 = vld [vmem:[%s1 + $0x68] sm:$0xf]
  %v297 = vld [vmem:[%s1 + $0x6c] sm:$0xf]
  %v298 = vld [vmem:[%s1 + $0x70] sm:$0xf]
  %v299 = vld [vmem:[%s1 + $0x74] sm:$0xf]
  %v300 = vld [vmem:[%s1 + $0x78] sm:$0xf]
  %v301 = vld [vmem:[%s1 + $0x7c] sm:$0xf]
  %v302 = vld [vmem:[%s1 + $0x80] sm:$0xf]
  %v303 = vld [vmem:[%s1 + $0x84] sm:$0xf]
  %v304 = vld [vmem:[%s1 + $0x88] sm:$0xf]
  %v305 = vld [vmem:[%s1 + $0x8c] sm:$0xf]
  %v306 = vld [vmem:[%s1 + $0x90] sm:$0xf]
  %v307 = vld [vmem:[%s1 + $0x94] sm:$0xf]
  %v308 = vld [vmem:[%s1 + $0x98] sm:$0xf]
  %v309 = vld [vmem:[%s1 + $0x9c] sm:$0xf]
  %v310 = vld [vmem:[%s1 + $0xa0] sm:$0xf]
  %v311 = vld [vmem:[%s1 + $0xa4] sm:$0xf]
  %v312 = vld [vmem:[%s1 + $0xa8] sm:$0xf]
  %v313 = vld [vmem:[%s1 + $0xac] sm:$0xf]
  %v314 = vld [vmem:[%s1 + $0xb0] sm:$0xf]
  %v315 = vld [vmem:[%s1 + $0xb4] sm:$0xf]
  %v316 = vld [vmem:[%s1 + $0xb8] sm:$0xf]
  %v317 = vld [vmem:[%s1 + $0xbc] sm:$0xf]
  %v318 = vld [vmem:[%s1 + $0xc0] sm:$0xf]
  %v319 = vld [vmem:[%s1 + $0xc4] sm:$0xf]
  %v320 = vld [vmem:[%s1 + $0xc8] sm:$0xf]
  %v321 = vld [vmem:[%s1 + $0xcc] sm:$0xf]
  %v322 = vld [vmem:[%s1 + $0xd0] sm:$0xf]
  %v323 = vld [vmem:[%s1 + $0xd4] sm:$0xf]
  %v324 = vld [vmem:[%s1 + $0xd8] sm:$0xf]
  %v325 = vld [vmem:[%s1 + $0xdc] sm:$0xf]
  %v326 = vld [vmem:[%s1 + $0xe0] sm:$0xf]
  %v327 = vld [vmem:[%s1 + $0xe4] sm:$0xf]
  %v328 = vld [vmem:[%s1 + $0xe8] sm:$0xf]
  %v329 = vld [vmem:[%s1 + $0xec] sm:$0xf]
  %v330 = vld [vmem:[%s1 + $0xf0] sm:$0xf]
  %v331 = vld [vmem:[%s1 + $0xf4] sm:$0xf]
  %v332 = vld [vmem:[%s1 + $0xf8] sm:$0xf]
  %v333 = vld [vmem:[%s1 + $0xfc] sm:$0xf]
  %v334 = vld [vmem:[%s1 + $0x100] sm:$0xf]
  %v335 = vld [vmem:[%s1 + $0x104] sm:$0xf]
  %v336 = vld [vmem:[%s1 + $0x108] sm:$0xf]
  %v337 = vld [vmem:[%s1 + $0x10c] sm:$0xf]
  %v338 = vld [vmem:[%s1 + $0x110] sm:$0xf]
  %v339 = vld [vmem:[%s1 + $0x114] sm:$0xf]
  %v340 = vld [vmem:[%s1 + $0x118] sm:$0xf]
  %v341 = vld [vmem:[%s1 + $0x11c] sm:$0xf]
  %v342 = vld [vmem:[%s1 + $0x120] sm:$0xf]
  %v343 = vld [vmem:[%s1 + $0x124] sm:$0xf]
  %v344 = vld [vmem:[%s1 + $0x128] sm:$0xf]
  %v345 = vld [vmem:[%s1 + $0x12c] sm:$0xf]
  %v346 = vld [vmem:[%s1 + $0x130] sm:$0xf]
  %v347 = vld [vmem:[%s1 + $0x134] sm:$0xf]
  %v348 = vld [vmem:[%s1 + $0x138] sm:$0xf]
  %v349 = vld [vmem:[%s1 + $0x13c] sm:$0xf]
  %v350 = vld [vmem:[%s1 + $0x140] sm:$0xf]
  %v351 = vld [vmem:[%s1 + $0x144] sm:$0xf]
  %v352 = vld [vmem:[%s1 + $0x148] sm:$0xf]
  %v353 = vld [vmem:[%s1 + $0x14c] sm:$0xf]
  %v354 = vld [vmem:[%s1 + $0x150] sm:$0xf]
  %v355 = vld [vmem:[%s1 + $0x154] sm:$0xf]
  %v356 = vld [vmem:[%s1 + $0x158] sm:$0xf]
  %v357 = vld [vmem:[%s1 + $0x15c] sm:$0xf]
  %v358 = vld [vmem:[%s1 + $0x160] sm:$0xf]
  %v359 = vld [vmem:[%s1 + $0x164] sm:$0xf]
  %v360 = vld [vmem:[%s1 + $0x168] sm:$0xf]
  %v361 = vld [vmem:[%s1 + $0x16c] sm:$0xf]
  %v362 = vld [vmem:[%s1 + $0x170] sm:$0xf]
  %v363 = vld [vmem:[%s1 + $0x174] sm:$0xf]
  %v364 = vld [vmem:[%s1 + $0x178] sm:$0xf]
  %v365 = vld [vmem:[%s1 + $0x17c] sm:$0xf]
  %v366 = vld [vmem:[%s1 + $0x180] sm:$0xf]
  %v367 = vld [vmem:[%s1 + $0x184] sm:$0xf]
  %v368 = vld [vmem:[%s1 + $0x188] sm:$0xf]
  %v369 = vld [vmem:[%s1 + $0x18c] sm:$0xf]
  %v370 = vld [vmem:[%s1 + $0x190] sm:$0xf]
  %v371 = vld [vmem:[%s1 + $0x194] sm:$0xf]
  %v372 = vld [vmem:[%s1 + $0x198] sm:$0xf]
  %v373 = vld [vmem:[%s1 + $0x19c] sm:$0xf]
  %v374 = vld [vmem:[%s1 + $0x1a0] sm:$0xf]
  %v375 = vld [vmem:[%s1 + $0x1a4] sm:$0xf]
  %v376 = vld [vmem:[%s1 + $0x1a8] sm:$0xf]
  %v377 = vld [vmem:[%s1 + $0x1ac] sm:$0xf]
  %v378 = vld [vmem:[%s1 + $0x1b0] sm:$0xf]
  %v379 = vld [vmem:[%s1 + $0x1b4] sm:$0xf]
  %v380 = vld [vmem:[%s1 + $0x1b8] sm:$0xf]
  %v381 = vld [vmem:[%s1 + $0x1bc] sm:$0xf]
  %v382 = vld [vmem:[%s1 + $0x1c0] sm:$0xf]
  %v383 = vld [vmem:[%s1 + $0x1c4] sm:$0xf]
  %v384 = vld [vmem:[%s1 + $0x1c8] sm:$0xf]
  %v385 = vld [vmem:[%s1 + $0x1cc] sm:$0xf]
  %v386 = vld [vmem:[%s1 + $0x1d0] sm:$0xf]
  %v387 = vld [vmem:[%s1 + $0x1d4] sm:$0xf]
  %v388 = vld [vmem:[%s1 + $0x1d8] sm:$0xf]
  %v389 = vld [vmem:[%s1 + $0x1dc] sm:$0xf]
  %v390 = vld [vmem:[%s1 + $0x1e0] sm:$0xf]
  %v391 = vld [vmem:[%s1 + $0x1e4] sm:$0xf]
  %v392 = vld [vmem:[%s1 + $0x1e8] sm:$0xf]
  %v393 = vld [vmem:[%s1 + $0x1ec] sm:$0xf]
  %v394 = vld [vmem:[%s1 + $0x1f0] sm:$0xf]
  %v395 = vld [vmem:[%s1 + $0x1f4] sm:$0xf]
  %v396 = vld [vmem:[%s1 + $0x1f8] sm:$0xf]
  %v397 = vld [vmem:[%s1 + $0x1fc] sm:$0xf]
  %v398 = vld [vmem:[%s2] sm:$0x1]
  %v400 = vperm.slane %v398, 0
  %v658 = vunpack.c.l.b16 %v14
  %v659 = vunpack.c.h.b16 %v14
  %v660 = vunpack.c.l.b16 %v15
  %v661 = vunpack.c.h.b16 %v15
  %v662 = vunpack.c.l.b16 %v16
  %v663 = vunpack.c.h.b16 %v16
  %v664 = vunpack.c.l.b16 %v17
  %v665 = vunpack.c.h.b16 %v17
  %v666 = vunpack.c.l.b16 %v18
  %v667 = vunpack.c.h.b16 %v18
  %v668 = vunpack.c.l.b16 %v19
  %v669 = vunpack.c.h.b16 %v19
  %v670 = vunpack.c.l.b16 %v20
  %v671 = vunpack.c.h.b16 %v20
  %v672 = vunpack.c.l.b16 %v21
  %v673 = vunpack.c.h.b16 %v21
  %v674 = vunpack.c.l.b16 %v22
  %v675 = vunpack.c.h.b16 %v22
  %v676 = vunpack.c.l.b16 %v23
  %v677 = vunpack.c.h.b16 %v23
  %v678 = vunpack.c.l.b16 %v24
  %v679 = vunpack.c.h.b16 %v24
  %v680 = vunpack.c.l.b16 %v25
  %v681 = vunpack.c.h.b16 %v25
  %v682 = vunpack.c.l.b16 %v26
  %v683 = vunpack.c.h.b16 %v26
  %v684 = vunpack.c.l.b16 %v27
  %v685 = vunpack.c.h.b16 %v27
  %v686 = vunpack.c.l.b16 %v28
  %v687 = vunpack.c.h.b16 %v28
  %v688 = vunpack.c.l.b16 %v29
  %v689 = vunpack.c.h.b16 %v29
  %v690 = vunpack.c.l.b16 %v30
  %v691 = vunpack.c.h.b16 %v30
  %v692 = vunpack.c.l.b16 %v31
  %v693 = vunpack.c.h.b16 %v31
  %v694 = vunpack.c.l.b16 %v32
  %v695 = vunpack.c.h.b16 %v32
  %v696 = vunpack.c.l.b16 %v33
  %v697 = vunpack.c.h.b16 %v33
  %v698 = vunpack.c.l.b16 %v34
  %v699 = vunpack.c.h.b16 %v34
  %v700 = vunpack.c.l.b16 %v35
  %v701 = vunpack.c.h.b16 %v35
  %v702 = vunpack.c.l.b16 %v36
  %v703 = vunpack.c.h.b16 %v36
  %v704 = vunpack.c.l.b16 %v37
  %v705 = vunpack.c.h.b16 %v37
  %v706 = vunpack.c.l.b16 %v38
  %v707 = vunpack.c.h.b16 %v38
  %v708 = vunpack.c.l.b16 %v39
  %v709 = vunpack.c.h.b16 %v39
  %v710 = vunpack.c.l.b16 %v40
  %v711 = vunpack.c.h.b16 %v40
  %v712 = vunpack.c.l.b16 %v41
  %v713 = vunpack.c.h.b16 %v41
  %v714 = vunpack.c.l.b16 %v42
  %v715 = vunpack.c.h.b16 %v42
  %v716 = vunpack.c.l.b16 %v43
  %v717 = vunpack.c.h.b16 %v43
  %v718 = vunpack.c.l.b16 %v44
  %v719 = vunpack.c.h.b16 %v44
  %v720 = vunpack.c.l.b16 %v45
  %v721 = vunpack.c.h.b16 %v45
  %v722 = vunpack.c.l.b16 %v46
  %v723 = vunpack.c.h.b16 %v46
  %v724 = vunpack.c.l.b16 %v47
  %v725 = vunpack.c.h.b16 %v47
  %v726 = vunpack.c.l.b16 %v48
  %v727 = vunpack.c.h.b16 %v48
  %v728 = vunpack.c.l.b16 %v49
  %v729 = vunpack.c.h.b16 %v49
  %v730 = vunpack.c.l.b16 %v50
  %v731 = vunpack.c.h.b16 %v50
  %v732 = vunpack.c.l.b16 %v51
  %v733 = vunpack.c.h.b16 %v51
  %v734 = vunpack.c.l.b16 %v52
  %v735 = vunpack.c.h.b16 %v52
  %v736 = vunpack.c.l.b16 %v53
  %v737 = vunpack.c.h.b16 %v53
  %v738 = vunpack.c.l.b16 %v54
  %v739 = vunpack.c.h.b16 %v54
  %v740 = vunpack.c.l.b16 %v55
  %v741 = vunpack.c.h.b16 %v55
  %v742 = vunpack.c.l.b16 %v56
  %v743 = vunpack.c.h.b16 %v56
  %v744 = vunpack.c.l.b16 %v57
  %v745 = vunpack.c.h.b16 %v57
  %v746 = vunpack.c.l.b16 %v58
  %v747 = vunpack.c.h.b16 %v58
  %v748 = vunpack.c.l.b16 %v59
  %v749 = vunpack.c.h.b16 %v59
  %v750 = vunpack.c.l.b16 %v60
  %v751 = vunpack.c.h.b16 %v60
  %v752 = vunpack.c.l.b16 %v61
  %v753 = vunpack.c.h.b16 %v61
  %v754 = vunpack.c.l.b16 %v62
  %v755 = vunpack.c.h.b16 %v62
  %v756 = vunpack.c.l.b16 %v63
  %v757 = vunpack.c.h.b16 %v63
  %v758 = vunpack.c.l.b16 %v64
  %v759 = vunpack.c.h.b16 %v64
  %v760 = vunpack.c.l.b16 %v65
  %v761 = vunpack.c.h.b16 %v65
  %v762 = vunpack.c.l.b16 %v66
  %v763 = vunpack.c.h.b16 %v66
  %v764 = vunpack.c.l.b16 %v67
  %v765 = vunpack.c.h.b16 %v67
  %v766 = vunpack.c.l.b16 %v68
  %v767 = vunpack.c.h.b16 %v68
  %v768 = vunpack.c.l.b16 %v69
  %v769 = vunpack.c.h.b16 %v69
  %v770 = vunpack.c.l.b16 %v70
  %v771 = vunpack.c.h.b16 %v70
  %v772 = vunpack.c.l.b16 %v71
  %v773 = vunpack.c.h.b16 %v71
  %v774 = vunpack.c.l.b16 %v72
  %v775 = vunpack.c.h.b16 %v72
  %v776 = vunpack.c.l.b16 %v73
  %v777 = vunpack.c.h.b16 %v73
  %v778 = vunpack.c.l.b16 %v74
  %v779 = vunpack.c.h.b16 %v74
  %v780 = vunpack.c.l.b16 %v75
  %v781 = vunpack.c.h.b16 %v75
  %v782 = vunpack.c.l.b16 %v76
  %v783 = vunpack.c.h.b16 %v76
  %v784 = vunpack.c.l.b16 %v77
  %v785 = vunpack.c.h.b16 %v77
  %v786 = vunpack.c.l.b16 %v78
  %v787 = vunpack.c.h.b16 %v78
  %v788 = vunpack.c.l.b16 %v79
  %v789 = vunpack.c.h.b16 %v79
  %v790 = vunpack.c.l.b16 %v80
  %v791 = vunpack.c.h.b16 %v80
  %v792 = vunpack.c.l.b16 %v81
  %v793 = vunpack.c.h.b16 %v81
  %v794 = vunpack.c.l.b16 %v82
  %v795 = vunpack.c.h.b16 %v82
  %v796 = vunpack.c.l.b16 %v83
  %v797 = vunpack.c.h.b16 %v83
  %v798 = vunpack.c.l.b16 %v84
  %v799 = vunpack.c.h.b16 %v84
  %v800 = vunpack.c.l.b16 %v85
  %v801 = vunpack.c.h.b16 %v85
  %v802 = vunpack.c.l.b16 %v86
  %v803 = vunpack.c.h.b16 %v86
  %v804 = vunpack.c.l.b16 %v87
  %v805 = vunpack.c.h.b16 %v87
  %v806 = vunpack.c.l.b16 %v88
  %v807 = vunpack.c.h.b16 %v88
  %v808 = vunpack.c.l.b16 %v89
  %v809 = vunpack.c.h.b16 %v89
  %v810 = vunpack.c.l.b16 %v90
  %v811 = vunpack.c.h.b16 %v90
  %v812 = vunpack.c.l.b16 %v91
  %v813 = vunpack.c.h.b16 %v91
  %v814 = vunpack.c.l.b16 %v92
  %v815 = vunpack.c.h.b16 %v92
  %v816 = vunpack.c.l.b16 %v93
  %v817 = vunpack.c.h.b16 %v93
  %v818 = vunpack.c.l.b16 %v94
  %v819 = vunpack.c.h.b16 %v94
  %v820 = vunpack.c.l.b16 %v95
  %v821 = vunpack.c.h.b16 %v95
  %v822 = vunpack.c.l.b16 %v96
  %v823 = vunpack.c.h.b16 %v96
  %v824 = vunpack.c.l.b16 %v97
  %v825 = vunpack.c.h.b16 %v97
  %v826 = vunpack.c.l.b16 %v98
  %v827 = vunpack.c.h.b16 %v98
  %v828 = vunpack.c.l.b16 %v99
  %v829 = vunpack.c.h.b16 %v99
  %v830 = vunpack.c.l.b16 %v100
  %v831 = vunpack.c.h.b16 %v100
  %v832 = vunpack.c.l.b16 %v101
  %v833 = vunpack.c.h.b16 %v101
  %v834 = vunpack.c.l.b16 %v102
  %v835 = vunpack.c.h.b16 %v102
  %v836 = vunpack.c.l.b16 %v103
  %v837 = vunpack.c.h.b16 %v103
  %v838 = vunpack.c.l.b16 %v104
  %v839 = vunpack.c.h.b16 %v104
  %v840 = vunpack.c.l.b16 %v105
  %v841 = vunpack.c.h.b16 %v105
  %v842 = vunpack.c.l.b16 %v106
  %v843 = vunpack.c.h.b16 %v106
  %v844 = vunpack.c.l.b16 %v107
  %v845 = vunpack.c.h.b16 %v107
  %v846 = vunpack.c.l.b16 %v108
  %v847 = vunpack.c.h.b16 %v108
  %v848 = vunpack.c.l.b16 %v109
  %v849 = vunpack.c.h.b16 %v109
  %v850 = vunpack.c.l.b16 %v110
  %v851 = vunpack.c.h.b16 %v110
  %v852 = vunpack.c.l.b16 %v111
  %v853 = vunpack.c.h.b16 %v111
  %v854 = vunpack.c.l.b16 %v112
  %v855 = vunpack.c.h.b16 %v112
  %v856 = vunpack.c.l.b16 %v113
  %v857 = vunpack.c.h.b16 %v113
  %v858 = vunpack.c.l.b16 %v114
  %v859 = vunpack.c.h.b16 %v114
  %v860 = vunpack.c.l.b16 %v115
  %v861 = vunpack.c.h.b16 %v115
  %v862 = vunpack.c.l.b16 %v116
  %v863 = vunpack.c.h.b16 %v116
  %v864 = vunpack.c.l.b16 %v117
  %v865 = vunpack.c.h.b16 %v117
  %v866 = vunpack.c.l.b16 %v118
  %v867 = vunpack.c.h.b16 %v118
  %v868 = vunpack.c.l.b16 %v119
  %v869 = vunpack.c.h.b16 %v119
  %v870 = vunpack.c.l.b16 %v120
  %v871 = vunpack.c.h.b16 %v120
  %v872 = vunpack.c.l.b16 %v121
  %v873 = vunpack.c.h.b16 %v121
  %v874 = vunpack.c.l.b16 %v122
  %v875 = vunpack.c.h.b16 %v122
  %v876 = vunpack.c.l.b16 %v123
  %v877 = vunpack.c.h.b16 %v123
  %v878 = vunpack.c.l.b16 %v124
  %v879 = vunpack.c.h.b16 %v124
  %v880 = vunpack.c.l.b16 %v125
  %v881 = vunpack.c.h.b16 %v125
  %v882 = vunpack.c.l.b16 %v126
  %v883 = vunpack.c.h.b16 %v126
  %v884 = vunpack.c.l.b16 %v127
  %v885 = vunpack.c.h.b16 %v127
  %v886 = vunpack.c.l.b16 %v128
  %v887 = vunpack.c.h.b16 %v128
  %v888 = vunpack.c.l.b16 %v129
  %v889 = vunpack.c.h.b16 %v129
  %v890 = vunpack.c.l.b16 %v130
  %v891 = vunpack.c.h.b16 %v130
  %v892 = vunpack.c.l.b16 %v131
  %v893 = vunpack.c.h.b16 %v131
  %v894 = vunpack.c.l.b16 %v132
  %v895 = vunpack.c.h.b16 %v132
  %v896 = vunpack.c.l.b16 %v133
  %v897 = vunpack.c.h.b16 %v133
  %v898 = vunpack.c.l.b16 %v134
  %v899 = vunpack.c.h.b16 %v134
  %v900 = vunpack.c.l.b16 %v135
  %v901 = vunpack.c.h.b16 %v135
  %v902 = vunpack.c.l.b16 %v136
  %v903 = vunpack.c.h.b16 %v136
  %v904 = vunpack.c.l.b16 %v137
  %v905 = vunpack.c.h.b16 %v137
  %v906 = vunpack.c.l.b16 %v138
  %v907 = vunpack.c.h.b16 %v138
  %v908 = vunpack.c.l.b16 %v139
  %v909 = vunpack.c.h.b16 %v139
  %v910 = vunpack.c.l.b16 %v140
  %v911 = vunpack.c.h.b16 %v140
  %v912 = vunpack.c.l.b16 %v141
  %v913 = vunpack.c.h.b16 %v141
  %v914 = vunpack.c.l.b16 %v142
  %v915 = vunpack.c.h.b16 %v142
  %v916 = vunpack.c.l.b16 %v143
  %v917 = vunpack.c.h.b16 %v143
  %v918 = vunpack.c.l.b16 %v144
  %v919 = vunpack.c.h.b16 %v144
  %v920 = vunpack.c.l.b16 %v145
  %v921 = vunpack.c.h.b16 %v145
  %v922 = vunpack.c.l.b16 %v146
  %v923 = vunpack.c.h.b16 %v146
  %v924 = vunpack.c.l.b16 %v147
  %v925 = vunpack.c.h.b16 %v147
  %v926 = vunpack.c.l.b16 %v148
  %v927 = vunpack.c.h.b16 %v148
  %v928 = vunpack.c.l.b16 %v149
  %v929 = vunpack.c.h.b16 %v149
  %v930 = vunpack.c.l.b16 %v150
  %v931 = vunpack.c.h.b16 %v150
  %v932 = vunpack.c.l.b16 %v151
  %v933 = vunpack.c.h.b16 %v151
  %v934 = vunpack.c.l.b16 %v152
  %v935 = vunpack.c.h.b16 %v152
  %v936 = vunpack.c.l.b16 %v153
  %v937 = vunpack.c.h.b16 %v153
  %v938 = vunpack.c.l.b16 %v154
  %v939 = vunpack.c.h.b16 %v154
  %v940 = vunpack.c.l.b16 %v155
  %v941 = vunpack.c.h.b16 %v155
  %v942 = vunpack.c.l.b16 %v156
  %v943 = vunpack.c.h.b16 %v156
  %v944 = vunpack.c.l.b16 %v157
  %v945 = vunpack.c.h.b16 %v157
  %v946 = vunpack.c.l.b16 %v158
  %v947 = vunpack.c.h.b16 %v158
  %v948 = vunpack.c.l.b16 %v159
  %v949 = vunpack.c.h.b16 %v159
  %v950 = vunpack.c.l.b16 %v160
  %v951 = vunpack.c.h.b16 %v160
  %v952 = vunpack.c.l.b16 %v161
  %v953 = vunpack.c.h.b16 %v161
  %v954 = vunpack.c.l.b16 %v162
  %v955 = vunpack.c.h.b16 %v162
  %v956 = vunpack.c.l.b16 %v163
  %v957 = vunpack.c.h.b16 %v163
  %v958 = vunpack.c.l.b16 %v164
  %v959 = vunpack.c.h.b16 %v164
  %v960 = vunpack.c.l.b16 %v165
  %v961 = vunpack.c.h.b16 %v165
  %v962 = vunpack.c.l.b16 %v166
  %v963 = vunpack.c.h.b16 %v166
  %v964 = vunpack.c.l.b16 %v167
  %v965 = vunpack.c.h.b16 %v167
  %v966 = vunpack.c.l.b16 %v168
  %v967 = vunpack.c.h.b16 %v168
  %v968 = vunpack.c.l.b16 %v169
  %v969 = vunpack.c.h.b16 %v169
  %v970 = vunpack.c.l.b16 %v170
  %v971 = vunpack.c.h.b16 %v170
  %v972 = vunpack.c.l.b16 %v171
  %v973 = vunpack.c.h.b16 %v171
  %v974 = vunpack.c.l.b16 %v172
  %v975 = vunpack.c.h.b16 %v172
  %v976 = vunpack.c.l.b16 %v173
  %v977 = vunpack.c.h.b16 %v173
  %v978 = vunpack.c.l.b16 %v174
  %v979 = vunpack.c.h.b16 %v174
  %v980 = vunpack.c.l.b16 %v175
  %v981 = vunpack.c.h.b16 %v175
  %v982 = vunpack.c.l.b16 %v176
  %v983 = vunpack.c.h.b16 %v176
  %v984 = vunpack.c.l.b16 %v177
  %v985 = vunpack.c.h.b16 %v177
  %v986 = vunpack.c.l.b16 %v178
  %v987 = vunpack.c.h.b16 %v178
  %v988 = vunpack.c.l.b16 %v179
  %v989 = vunpack.c.h.b16 %v179
  %v990 = vunpack.c.l.b16 %v180
  %v991 = vunpack.c.h.b16 %v180
  %v992 = vunpack.c.l.b16 %v181
  %v993 = vunpack.c.h.b16 %v181
  %v994 = vunpack.c.l.b16 %v182
  %v995 = vunpack.c.h.b16 %v182
  %v996 = vunpack.c.l.b16 %v183
  %v997 = vunpack.c.h.b16 %v183
  %v998 = vunpack.c.l.b16 %v184
  %v999 = vunpack.c.h.b16 %v184
  %v1000 = vunpack.c.l.b16 %v185
  %v1001 = vunpack.c.h.b16 %v185
  %v1002 = vunpack.c.l.b16 %v186
  %v1003 = vunpack.c.h.b16 %v186
  %v1004 = vunpack.c.l.b16 %v187
  %v1005 = vunpack.c.h.b16 %v187
  %v1006 = vunpack.c.l.b16 %v188
  %v1007 = vunpack.c.h.b16 %v188
  %v1008 = vunpack.c.l.b16 %v189
  %v1009 = vunpack.c.h.b16 %v189
  %v1010 = vunpack.c.l.b16 %v190
  %v1011 = vunpack.c.h.b16 %v190
  %v1012 = vunpack.c.l.b16 %v191
  %v1013 = vunpack.c.h.b16 %v191
  %v1014 = vunpack.c.l.b16 %v192
  %v1015 = vunpack.c.h.b16 %v192
  %v1016 = vunpack.c.l.b16 %v193
  %v1017 = vunpack.c.h.b16 %v193
  %v1018 = vunpack.c.l.b16 %v194
  %v1019 = vunpack.c.h.b16 %v194
  %v1020 = vunpack.c.l.b16 %v195
  %v1021 = vunpack.c.h.b16 %v195
  %v1022 = vunpack.c.l.b16 %v196
  %v1023 = vunpack.c.h.b16 %v196
  %v1024 = vunpack.c.l.b16 %v197
  %v1025 = vunpack.c.h.b16 %v197
  %v1026 = vunpack.c.l.b16 %v198
  %v1027 = vunpack.c.h.b16 %v198
  %v1028 = vunpack.c.l.b16 %v199
  %v1029 = vunpack.c.h.b16 %v199
  %v1030 = vunpack.c.l.b16 %v200
  %v1031 = vunpack.c.h.b16 %v200
  %v1032 = vunpack.c.l.b16 %v201
  %v1033 = vunpack.c.h.b16 %v201
  %v1034 = vunpack.c.l.b16 %v202
  %v1035 = vunpack.c.h.b16 %v202
  %v1036 = vunpack.c.l.b16 %v203
  %v1037 = vunpack.c.h.b16 %v203
  %v1038 = vunpack.c.l.b16 %v204
  %v1039 = vunpack.c.h.b16 %v204
  %v1040 = vunpack.c.l.b16 %v205
  %v1041 = vunpack.c.h.b16 %v205
  %v1042 = vunpack.c.l.b16 %v206
  %v1043 = vunpack.c.h.b16 %v206
  %v1044 = vunpack.c.l.b16 %v207
  %v1045 = vunpack.c.h.b16 %v207
  %v1046 = vunpack.c.l.b16 %v208
  %v1047 = vunpack.c.h.b16 %v208
  %v1048 = vunpack.c.l.b16 %v209
  %v1049 = vunpack.c.h.b16 %v209
  %v1050 = vunpack.c.l.b16 %v210
  %v1051 = vunpack.c.h.b16 %v210
  %v1052 = vunpack.c.l.b16 %v211
  %v1053 = vunpack.c.h.b16 %v211
  %v1054 = vunpack.c.l.b16 %v212
  %v1055 = vunpack.c.h.b16 %v212
  %v1056 = vunpack.c.l.b16 %v213
  %v1057 = vunpack.c.h.b16 %v213
  %v1058 = vunpack.c.l.b16 %v214
  %v1059 = vunpack.c.h.b16 %v214
  %v1060 = vunpack.c.l.b16 %v215
  %v1061 = vunpack.c.h.b16 %v215
  %v1062 = vunpack.c.l.b16 %v216
  %v1063 = vunpack.c.h.b16 %v216
  %v1064 = vunpack.c.l.b16 %v217
  %v1065 = vunpack.c.h.b16 %v217
  %v1066 = vunpack.c.l.b16 %v218
  %v1067 = vunpack.c.h.b16 %v218
  %v1068 = vunpack.c.l.b16 %v219
  %v1069 = vunpack.c.h.b16 %v219
  %v1070 = vunpack.c.l.b16 %v220
  %v1071 = vunpack.c.h.b16 %v220
  %v1072 = vunpack.c.l.b16 %v221
  %v1073 = vunpack.c.h.b16 %v221
  %v1074 = vunpack.c.l.b16 %v222
  %v1075 = vunpack.c.h.b16 %v222
  %v1076 = vunpack.c.l.b16 %v223
  %v1077 = vunpack.c.h.b16 %v223
  %v1078 = vunpack.c.l.b16 %v224
  %v1079 = vunpack.c.h.b16 %v224
  %v1080 = vunpack.c.l.b16 %v225
  %v1081 = vunpack.c.h.b16 %v225
  %v1082 = vunpack.c.l.b16 %v226
  %v1083 = vunpack.c.h.b16 %v226
  %v1084 = vunpack.c.l.b16 %v227
  %v1085 = vunpack.c.h.b16 %v227
  %v1086 = vunpack.c.l.b16 %v228
  %v1087 = vunpack.c.h.b16 %v228
  %v1088 = vunpack.c.l.b16 %v229
  %v1089 = vunpack.c.h.b16 %v229
  %v1090 = vunpack.c.l.b16 %v230
  %v1091 = vunpack.c.h.b16 %v230
  %v1092 = vunpack.c.l.b16 %v231
  %v1093 = vunpack.c.h.b16 %v231
  %v1094 = vunpack.c.l.b16 %v232
  %v1095 = vunpack.c.h.b16 %v232
  %v1096 = vunpack.c.l.b16 %v233
  %v1097 = vunpack.c.h.b16 %v233
  %v1098 = vunpack.c.l.b16 %v234
  %v1099 = vunpack.c.h.b16 %v234
  %v1100 = vunpack.c.l.b16 %v235
  %v1101 = vunpack.c.h.b16 %v235
  %v1102 = vunpack.c.l.b16 %v236
  %v1103 = vunpack.c.h.b16 %v236
  %v1104 = vunpack.c.l.b16 %v237
  %v1105 = vunpack.c.h.b16 %v237
  %v1106 = vunpack.c.l.b16 %v238
  %v1107 = vunpack.c.h.b16 %v238
  %v1108 = vunpack.c.l.b16 %v239
  %v1109 = vunpack.c.h.b16 %v239
  %v1110 = vunpack.c.l.b16 %v240
  %v1111 = vunpack.c.h.b16 %v240
  %v1112 = vunpack.c.l.b16 %v241
  %v1113 = vunpack.c.h.b16 %v241
  %v1114 = vunpack.c.l.b16 %v242
  %v1115 = vunpack.c.h.b16 %v242
  %v1116 = vunpack.c.l.b16 %v243
  %v1117 = vunpack.c.h.b16 %v243
  %v1118 = vunpack.c.l.b16 %v244
  %v1119 = vunpack.c.h.b16 %v244
  %v1120 = vunpack.c.l.b16 %v245
  %v1121 = vunpack.c.h.b16 %v245
  %v1122 = vunpack.c.l.b16 %v246
  %v1123 = vunpack.c.h.b16 %v246
  %v1124 = vunpack.c.l.b16 %v247
  %v1125 = vunpack.c.h.b16 %v247
  %v1126 = vunpack.c.l.b16 %v248
  %v1127 = vunpack.c.h.b16 %v248
  %v1128 = vunpack.c.l.b16 %v249
  %v1129 = vunpack.c.h.b16 %v249
  %v1130 = vunpack.c.l.b16 %v250
  %v1131 = vunpack.c.h.b16 %v250
  %v1132 = vunpack.c.l.b16 %v251
  %v1133 = vunpack.c.h.b16 %v251
  %v1134 = vunpack.c.l.b16 %v252
  %v1135 = vunpack.c.h.b16 %v252
  %v1136 = vunpack.c.l.b16 %v253
  %v1137 = vunpack.c.h.b16 %v253
  %v1138 = vunpack.c.l.b16 %v254
  %v1139 = vunpack.c.h.b16 %v254
  %v1140 = vunpack.c.l.b16 %v255
  %v1141 = vunpack.c.h.b16 %v255
  %v1142 = vunpack.c.l.b16 %v256
  %v1143 = vunpack.c.h.b16 %v256
  %v1144 = vunpack.c.l.b16 %v257
  %v1145 = vunpack.c.h.b16 %v257
  %v1146 = vunpack.c.l.b16 %v258
  %v1147 = vunpack.c.h.b16 %v258
  %v1148 = vunpack.c.l.b16 %v259
  %v1149 = vunpack.c.h.b16 %v259
  %v1150 = vunpack.c.l.b16 %v260
  %v1151 = vunpack.c.h.b16 %v260
  %v1152 = vunpack.c.l.b16 %v261
  %v1153 = vunpack.c.h.b16 %v261
  %v1154 = vunpack.c.l.b16 %v262
  %v1155 = vunpack.c.h.b16 %v262
  %v1156 = vunpack.c.l.b16 %v263
  %v1157 = vunpack.c.h.b16 %v263
  %v1158 = vunpack.c.l.b16 %v264
  %v1159 = vunpack.c.h.b16 %v264
  %v1160 = vunpack.c.l.b16 %v265
  %v1161 = vunpack.c.h.b16 %v265
  %v1162 = vunpack.c.l.b16 %v266
  %v1163 = vunpack.c.h.b16 %v266
  %v1164 = vunpack.c.l.b16 %v267
  %v1165 = vunpack.c.h.b16 %v267
  %v1166 = vunpack.c.l.b16 %v268
  %v1167 = vunpack.c.h.b16 %v268
  %v1168 = vunpack.c.l.b16 %v269
  %v1169 = vunpack.c.h.b16 %v269
  %v1170 = vpack.c.b16 %v666, %v658
  %v1171 = vpack.c.b16 %v667, %v659
  %v1172 = vpack.c.b16 %v668, %v660
  %v1173 = vpack.c.b16 %v669, %v661
  %v1174 = vpack.c.b16 %v670, %v662
  %v1175 = vpack.c.b16 %v671, %v663
  %v1176 = vpack.c.b16 %v672, %v664
  %v1177 = vpack.c.b16 %v673, %v665
  %v1178 = vpack.c.b16 %v682, %v674
  %v1179 = vpack.c.b16 %v683, %v675
  %v1180 = vpack.c.b16 %v684, %v676
  %v1181 = vpack.c.b16 %v685, %v677
  %v1182 = vpack.c.b16 %v686, %v678
  %v1183 = vpack.c.b16 %v687, %v679
  %v1184 = vpack.c.b16 %v688, %v680
  %v1185 = vpack.c.b16 %v689, %v681
  %v1186 = vpack.c.b16 %v698, %v690
  %v1187 = vpack.c.b16 %v699, %v691
  %v1188 = vpack.c.b16 %v700, %v692
  %v1189 = vpack.c.b16 %v701, %v693
  %v1190 = vpack.c.b16 %v702, %v694
  %v1191 = vpack.c.b16 %v703, %v695
  %v1192 = vpack.c.b16 %v704, %v696
  %v1193 = vpack.c.b16 %v705, %v697
  %v1194 = vpack.c.b16 %v714, %v706
  %v1195 = vpack.c.b16 %v715, %v707
  %v1196 = vpack.c.b16 %v716, %v708
  %v1197 = vpack.c.b16 %v717, %v709
  %v1198 = vpack.c.b16 %v718, %v710
  %v1199 = vpack.c.b16 %v719, %v711
  %v1200 = vpack.c.b16 %v720, %v712
  %v1201 = vpack.c.b16 %v721, %v713
  %v1202 = vpack.c.b16 %v730, %v722
  %v1203 = vpack.c.b16 %v731, %v723
  %v1204 = vpack.c.b16 %v732, %v724
  %v1205 = vpack.c.b16 %v733, %v725
  %v1206 = vpack.c.b16 %v734, %v726
  %v1207 = vpack.c.b16 %v735, %v727
  %v1208 = vpack.c.b16 %v736, %v728
  %v1209 = vpack.c.b16 %v737, %v729
  %v1210 = vpack.c.b16 %v746, %v738
  %v1211 = vpack.c.b16 %v747, %v739
  %v1212 = vpack.c.b16 %v748, %v740
  %v1213 = vpack.c.b16 %v749, %v741
  %v1214 = vpack.c.b16 %v750, %v742
  %v1215 = vpack.c.b16 %v751, %v743
  %v1216 = vpack.c.b16 %v752, %v744
  %v1217 = vpack.c.b16 %v753, %v745
  %v1218 = vpack.c.b16 %v762, %v754
  %v1219 = vpack.c.b16 %v763, %v755
  %v1220 = vpack.c.b16 %v764, %v756
  %v1221 = vpack.c.b16 %v765, %v757
  %v1222 = vpack.c.b16 %v766, %v758
  %v1223 = vpack.c.b16 %v767, %v759
  %v1224 = vpack.c.b16 %v768, %v760
  %v1225 = vpack.c.b16 %v769, %v761
  %v1226 = vpack.c.b16 %v778, %v770
  %v1227 = vpack.c.b16 %v779, %v771
  %v1228 = vpack.c.b16 %v780, %v772
  %v1229 = vpack.c.b16 %v781, %v773
  %v1230 = vpack.c.b16 %v782, %v774
  %v1231 = vpack.c.b16 %v783, %v775
  %v1232 = vpack.c.b16 %v784, %v776
  %v1233 = vpack.c.b16 %v785, %v777
  %v1234 = vpack.c.b16 %v794, %v786
  %v1235 = vpack.c.b16 %v795, %v787
  %v1236 = vpack.c.b16 %v796, %v788
  %v1237 = vpack.c.b16 %v797, %v789
  %v1238 = vpack.c.b16 %v798, %v790
  %v1239 = vpack.c.b16 %v799, %v791
  %v1240 = vpack.c.b16 %v800, %v792
  %v1241 = vpack.c.b16 %v801, %v793
  %v1242 = vpack.c.b16 %v810, %v802
  %v1243 = vpack.c.b16 %v811, %v803
  %v1244 = vpack.c.b16 %v812, %v804
  %v1245 = vpack.c.b16 %v813, %v805
  %v1246 = vpack.c.b16 %v814, %v806
  %v1247 = vpack.c.b16 %v815, %v807
  %v1248 = vpack.c.b16 %v816, %v808
  %v1249 = vpack.c.b16 %v817, %v809
  %v1250 = vpack.c.b16 %v826, %v818
  %v1251 = vpack.c.b16 %v827, %v819
  %v1252 = vpack.c.b16 %v828, %v820
  %v1253 = vpack.c.b16 %v829, %v821
  %v1254 = vpack.c.b16 %v830, %v822
  %v1255 = vpack.c.b16 %v831, %v823
  %v1256 = vpack.c.b16 %v832, %v824
  %v1257 = vpack.c.b16 %v833, %v825
  %v1258 = vpack.c.b16 %v842, %v834
  %v1259 = vpack.c.b16 %v843, %v835
  %v1260 = vpack.c.b16 %v844, %v836
  %v1261 = vpack.c.b16 %v845, %v837
  %v1262 = vpack.c.b16 %v846, %v838
  %v1263 = vpack.c.b16 %v847, %v839
  %v1264 = vpack.c.b16 %v848, %v840
  %v1265 = vpack.c.b16 %v849, %v841
  %v1266 = vpack.c.b16 %v858, %v850
  %v1267 = vpack.c.b16 %v859, %v851
  %v1268 = vpack.c.b16 %v860, %v852
  %v1269 = vpack.c.b16 %v861, %v853
  %v1270 = vpack.c.b16 %v862, %v854
  %v1271 = vpack.c.b16 %v863, %v855
  %v1272 = vpack.c.b16 %v864, %v856
  %v1273 = vpack.c.b16 %v865, %v857
  %v1274 = vpack.c.b16 %v874, %v866
  %v1275 = vpack.c.b16 %v875, %v867
  %v1276 = vpack.c.b16 %v876, %v868
  %v1277 = vpack.c.b16 %v877, %v869
  %v1278 = vpack.c.b16 %v878, %v870
  %v1279 = vpack.c.b16 %v879, %v871
  %v1280 = vpack.c.b16 %v880, %v872
  %v1281 = vpack.c.b16 %v881, %v873
  %v1282 = vpack.c.b16 %v890, %v882
  %v1283 = vpack.c.b16 %v891, %v883
  %v1284 = vpack.c.b16 %v892, %v884
  %v1285 = vpack.c.b16 %v893, %v885
  %v1286 = vpack.c.b16 %v894, %v886
  %v1287 = vpack.c.b16 %v895, %v887
  %v1288 = vpack.c.b16 %v896, %v888
  %v1289 = vpack.c.b16 %v897, %v889
  %v1290 = vpack.c.b16 %v906, %v898
  %v1291 = vpack.c.b16 %v907, %v899
  %v1292 = vpack.c.b16 %v908, %v900
  %v1293 = vpack.c.b16 %v909, %v901
  %v1294 = vpack.c.b16 %v910, %v902
  %v1295 = vpack.c.b16 %v911, %v903
  %v1296 = vpack.c.b16 %v912, %v904
  %v1297 = vpack.c.b16 %v913, %v905
  %v1298 = vpack.c.b16 %v922, %v914
  %v1299 = vpack.c.b16 %v923, %v915
  %v1300 = vpack.c.b16 %v924, %v916
  %v1301 = vpack.c.b16 %v925, %v917
  %v1302 = vpack.c.b16 %v926, %v918
  %v1303 = vpack.c.b16 %v927, %v919
  %v1304 = vpack.c.b16 %v928, %v920
  %v1305 = vpack.c.b16 %v929, %v921
  %v1306 = vpack.c.b16 %v938, %v930
  %v1307 = vpack.c.b16 %v939, %v931
  %v1308 = vpack.c.b16 %v940, %v932
  %v1309 = vpack.c.b16 %v941, %v933
  %v1310 = vpack.c.b16 %v942, %v934
  %v1311 = vpack.c.b16 %v943, %v935
  %v1312 = vpack.c.b16 %v944, %v936
  %v1313 = vpack.c.b16 %v945, %v937
  %v1314 = vpack.c.b16 %v954, %v946
  %v1315 = vpack.c.b16 %v955, %v947
  %v1316 = vpack.c.b16 %v956, %v948
  %v1317 = vpack.c.b16 %v957, %v949
  %v1318 = vpack.c.b16 %v958, %v950
  %v1319 = vpack.c.b16 %v959, %v951
  %v1320 = vpack.c.b16 %v960, %v952
  %v1321 = vpack.c.b16 %v961, %v953
  %v1322 = vpack.c.b16 %v970, %v962
  %v1323 = vpack.c.b16 %v971, %v963
  %v1324 = vpack.c.b16 %v972, %v964
  %v1325 = vpack.c.b16 %v973, %v965
  %v1326 = vpack.c.b16 %v974, %v966
  %v1327 = vpack.c.b16 %v975, %v967
  %v1328 = vpack.c.b16 %v976, %v968
  %v1329 = vpack.c.b16 %v977, %v969
  %v1330 = vpack.c.b16 %v986, %v978
  %v1331 = vpack.c.b16 %v987, %v979
  %v1332 = vpack.c.b16 %v988, %v980
  %v1333 = vpack.c.b16 %v989, %v981
  %v1334 = vpack.c.b16 %v990, %v982
  %v1335 = vpack.c.b16 %v991, %v983
  %v1336 = vpack.c.b16 %v992, %v984
  %v1337 = vpack.c.b16 %v993, %v985
  %v1338 = vpack.c.b16 %v1002, %v994
  %v1339 = vpack.c.b16 %v1003, %v995
  %v1340 = vpack.c.b16 %v1004, %v996
  %v1341 = vpack.c.b16 %v1005, %v997
  %v1342 = vpack.c.b16 %v1006, %v998
  %v1343 = vpack.c.b16 %v1007, %v999
  %v1344 = vpack.c.b16 %v1008, %v1000
  %v1345 = vpack.c.b16 %v1009, %v1001
  %v1346 = vpack.c.b16 %v1018, %v1010
  %v1347 = vpack.c.b16 %v1019, %v1011
  %v1348 = vpack.c.b16 %v1020, %v1012
  %v1349 = vpack.c.b16 %v1021, %v1013
  %v1350 = vpack.c.b16 %v1022, %v1014
  %v1351 = vpack.c.b16 %v1023, %v1015
  %v1352 = vpack.c.b16 %v1024, %v1016
  %v1353 = vpack.c.b16 %v1025, %v1017
  %v1354 = vpack.c.b16 %v1034, %v1026
  %v1355 = vpack.c.b16 %v1035, %v1027
  %v1356 = vpack.c.b16 %v1036, %v1028
  %v1357 = vpack.c.b16 %v1037, %v1029
  %v1358 = vpack.c.b16 %v1038, %v1030
  %v1359 = vpack.c.b16 %v1039, %v1031
  %v1360 = vpack.c.b16 %v1040, %v1032
  %v1361 = vpack.c.b16 %v1041, %v1033
  %v1362 = vpack.c.b16 %v1050, %v1042
  %v1363 = vpack.c.b16 %v1051, %v1043
  %v1364 = vpack.c.b16 %v1052, %v1044
  %v1365 = vpack.c.b16 %v1053, %v1045
  %v1366 = vpack.c.b16 %v1054, %v1046
  %v1367 = vpack.c.b16 %v1055, %v1047
  %v1368 = vpack.c.b16 %v1056, %v1048
  %v1369 = vpack.c.b16 %v1057, %v1049
  %v1370 = vpack.c.b16 %v1066, %v1058
  %v1371 = vpack.c.b16 %v1067, %v1059
  %v1372 = vpack.c.b16 %v1068, %v1060
  %v1373 = vpack.c.b16 %v1069, %v1061
  %v1374 = vpack.c.b16 %v1070, %v1062
  %v1375 = vpack.c.b16 %v1071, %v1063
  %v1376 = vpack.c.b16 %v1072, %v1064
  %v1377 = vpack.c.b16 %v1073, %v1065
  %v1378 = vpack.c.b16 %v1082, %v1074
  %v1379 = vpack.c.b16 %v1083, %v1075
  %v1380 = vpack.c.b16 %v1084, %v1076
  %v1381 = vpack.c.b16 %v1085, %v1077
  %v1382 = vpack.c.b16 %v1086, %v1078
  %v1383 = vpack.c.b16 %v1087, %v1079
  %v1384 = vpack.c.b16 %v1088, %v1080
  %v1385 = vpack.c.b16 %v1089, %v1081
  %v1386 = vpack.c.b16 %v1098, %v1090
  %v1387 = vpack.c.b16 %v1099, %v1091
  %v1388 = vpack.c.b16 %v1100, %v1092
  %v1389 = vpack.c.b16 %v1101, %v1093
  %v1390 = vpack.c.b16 %v1102, %v1094
  %v1391 = vpack.c.b16 %v1103, %v1095
  %v1392 = vpack.c.b16 %v1104, %v1096
  %v1393 = vpack.c.b16 %v1105, %v1097
  %v1394 = vpack.c.b16 %v1114, %v1106
  %v1395 = vpack.c.b16 %v1115, %v1107
  %v1396 = vpack.c.b16 %v1116, %v1108
  %v1397 = vpack.c.b16 %v1117, %v1109
  %v1398 = vpack.c.b16 %v1118, %v1110
  %v1399 = vpack.c.b16 %v1119, %v1111
  %v1400 = vpack.c.b16 %v1120, %v1112
  %v1401 = vpack.c.b16 %v1121, %v1113
  %v1402 = vpack.c.b16 %v1130, %v1122
  %v1403 = vpack.c.b16 %v1131, %v1123
  %v1404 = vpack.c.b16 %v1132, %v1124
  %v1405 = vpack.c.b16 %v1133, %v1125
  %v1406 = vpack.c.b16 %v1134, %v1126
  %v1407 = vpack.c.b16 %v1135, %v1127
  %v1408 = vpack.c.b16 %v1136, %v1128
  %v1409 = vpack.c.b16 %v1137, %v1129
  %v1410 = vpack.c.b16 %v1146, %v1138
  %v1411 = vpack.c.b16 %v1147, %v1139
  %v1412 = vpack.c.b16 %v1148, %v1140
  %v1413 = vpack.c.b16 %v1149, %v1141
  %v1414 = vpack.c.b16 %v1150, %v1142
  %v1415 = vpack.c.b16 %v1151, %v1143
  %v1416 = vpack.c.b16 %v1152, %v1144
  %v1417 = vpack.c.b16 %v1153, %v1145
  %v1418 = vpack.c.b16 %v1162, %v1154
  %v1419 = vpack.c.b16 %v1163, %v1155
  %v1420 = vpack.c.b16 %v1164, %v1156
  %v1421 = vpack.c.b16 %v1165, %v1157
  %v1422 = vpack.c.b16 %v1166, %v1158
  %v1423 = vpack.c.b16 %v1167, %v1159
  %v1424 = vpack.c.b16 %v1168, %v1160
  %v1425 = vpack.c.b16 %v1169, %v1161
  %v1810 = vunpack.c.l.b16 %v270
  %v1811 = vunpack.c.l.b16 %v271
  %v1812 = vunpack.c.l.b16 %v272
  %v1813 = vunpack.c.l.b16 %v273
  %v1814 = vunpack.c.l.b16 %v274
  %v1815 = vunpack.c.l.b16 %v275
  %v1816 = vunpack.c.l.b16 %v276
  %v1817 = vunpack.c.l.b16 %v277
  %v1818 = vunpack.c.l.b16 %v278
  %v1819 = vunpack.c.l.b16 %v279
  %v1820 = vunpack.c.l.b16 %v280
  %v1821 = vunpack.c.l.b16 %v281
  %v1822 = vunpack.c.l.b16 %v282
  %v1823 = vunpack.c.l.b16 %v283
  %v1824 = vunpack.c.l.b16 %v284
  %v1825 = vunpack.c.l.b16 %v285
  %v1826 = vunpack.c.l.b16 %v286
  %v1827 = vunpack.c.l.b16 %v287
  %v1828 = vunpack.c.l.b16 %v288
  %v1829 = vunpack.c.l.b16 %v289
  %v1830 = vunpack.c.l.b16 %v290
  %v1831 = vunpack.c.l.b16 %v291
  %v1832 = vunpack.c.l.b16 %v292
  %v1833 = vunpack.c.l.b16 %v293
  %v1834 = vunpack.c.l.b16 %v294
  %v1835 = vunpack.c.l.b16 %v295
  %v1836 = vunpack.c.l.b16 %v296
  %v1837 = vunpack.c.l.b16 %v297
  %v1838 = vunpack.c.l.b16 %v298
  %v1839 = vunpack.c.l.b16 %v299
  %v1840 = vunpack.c.l.b16 %v300
  %v1841 = vunpack.c.l.b16 %v301
  %v1842 = vunpack.c.l.b16 %v302
  %v1843 = vunpack.c.l.b16 %v303
  %v1844 = vunpack.c.l.b16 %v304
  %v1845 = vunpack.c.l.b16 %v305
  %v1846 = vunpack.c.l.b16 %v306
  %v1847 = vunpack.c.l.b16 %v307
  %v1848 = vunpack.c.l.b16 %v308
  %v1849 = vunpack.c.l.b16 %v309
  %v1850 = vunpack.c.l.b16 %v310
  %v1851 = vunpack.c.l.b16 %v311
  %v1852 = vunpack.c.l.b16 %v312
  %v1853 = vunpack.c.l.b16 %v313
  %v1854 = vunpack.c.l.b16 %v314
  %v1855 = vunpack.c.l.b16 %v315
  %v1856 = vunpack.c.l.b16 %v316
  %v1857 = vunpack.c.l.b16 %v317
  %v1858 = vunpack.c.l.b16 %v318
  %v1859 = vunpack.c.l.b16 %v319
  %v1860 = vunpack.c.l.b16 %v320
  %v1861 = vunpack.c.l.b16 %v321
  %v1862 = vunpack.c.l.b16 %v322
  %v1863 = vunpack.c.l.b16 %v323
  %v1864 = vunpack.c.l.b16 %v324
  %v1865 = vunpack.c.l.b16 %v325
  %v1866 = vunpack.c.l.b16 %v326
  %v1867 = vunpack.c.l.b16 %v327
  %v1868 = vunpack.c.l.b16 %v328
  %v1869 = vunpack.c.l.b16 %v329
  %v1870 = vunpack.c.l.b16 %v330
  %v1871 = vunpack.c.l.b16 %v331
  %v1872 = vunpack.c.l.b16 %v332
  %v1873 = vunpack.c.l.b16 %v333
  %v1874 = vunpack.c.l.b16 %v334
  %v1875 = vunpack.c.l.b16 %v335
  %v1876 = vunpack.c.l.b16 %v336
  %v1877 = vunpack.c.l.b16 %v337
  %v1878 = vunpack.c.l.b16 %v338
  %v1879 = vunpack.c.l.b16 %v339
  %v1880 = vunpack.c.l.b16 %v340
  %v1881 = vunpack.c.l.b16 %v341
  %v1882 = vunpack.c.l.b16 %v342
  %v1883 = vunpack.c.l.b16 %v343
  %v1884 = vunpack.c.l.b16 %v344
  %v1885 = vunpack.c.l.b16 %v345
  %v1886 = vunpack.c.l.b16 %v346
  %v1887 = vunpack.c.l.b16 %v347
  %v1888 = vunpack.c.l.b16 %v348
  %v1889 = vunpack.c.l.b16 %v349
  %v1890 = vunpack.c.l.b16 %v350
  %v1891 = vunpack.c.l.b16 %v351
  %v1892 = vunpack.c.l.b16 %v352
  %v1893 = vunpack.c.l.b16 %v353
  %v1894 = vunpack.c.l.b16 %v354
  %v1895 = vunpack.c.l.b16 %v355
  %v1896 = vunpack.c.l.b16 %v356
  %v1897 = vunpack.c.l.b16 %v357
  %v1898 = vunpack.c.l.b16 %v358
  %v1899 = vunpack.c.l.b16 %v359
  %v1900 = vunpack.c.l.b16 %v360
  %v1901 = vunpack.c.l.b16 %v361
  %v1902 = vunpack.c.l.b16 %v362
  %v1903 = vunpack.c.l.b16 %v363
  %v1904 = vunpack.c.l.b16 %v364
  %v1905 = vunpack.c.l.b16 %v365
  %v1906 = vunpack.c.l.b16 %v366
  %v1907 = vunpack.c.l.b16 %v367
  %v1908 = vunpack.c.l.b16 %v368
  %v1909 = vunpack.c.l.b16 %v369
  %v1910 = vunpack.c.l.b16 %v370
  %v1911 = vunpack.c.l.b16 %v371
  %v1912 = vunpack.c.l.b16 %v372
  %v1913 = vunpack.c.l.b16 %v373
  %v1914 = vunpack.c.l.b16 %v374
  %v1915 = vunpack.c.l.b16 %v375
  %v1916 = vunpack.c.l.b16 %v376
  %v1917 = vunpack.c.l.b16 %v377
  %v1918 = vunpack.c.l.b16 %v378
  %v1919 = vunpack.c.l.b16 %v379
  %v1920 = vunpack.c.l.b16 %v380
  %v1921 = vunpack.c.l.b16 %v381
  %v1922 = vunpack.c.l.b16 %v382
  %v1923 = vunpack.c.l.b16 %v383
  %v1924 = vunpack.c.l.b16 %v384
  %v1925 = vunpack.c.l.b16 %v385
  %v1926 = vunpack.c.l.b16 %v386
  %v1927 = vunpack.c.l.b16 %v387
  %v1928 = vunpack.c.l.b16 %v388
  %v1929 = vunpack.c.l.b16 %v389
  %v1930 = vunpack.c.l.b16 %v390
  %v1931 = vunpack.c.l.b16 %v391
  %v1932 = vunpack.c.l.b16 %v392
  %v1933 = vunpack.c.l.b16 %v393
  %v1934 = vunpack.c.l.b16 %v394
  %v1935 = vunpack.c.l.b16 %v395
  %v1936 = vunpack.c.l.b16 %v396
  %v1937 = vunpack.c.l.b16 %v397
  %v1938 = vpack.c.b16 %v1811, %v1810
  %v1939 = vpack.c.b16 %v1813, %v1812
  %v1940 = vpack.c.b16 %v1815, %v1814
  %v1941 = vpack.c.b16 %v1817, %v1816
  %v1942 = vpack.c.b16 %v1819, %v1818
  %v1943 = vpack.c.b16 %v1821, %v1820
  %v1944 = vpack.c.b16 %v1823, %v1822
  %v1945 = vpack.c.b16 %v1825, %v1824
  %v1946 = vpack.c.b16 %v1827, %v1826
  %v1947 = vpack.c.b16 %v1829, %v1828
  %v1948 = vpack.c.b16 %v1831, %v1830
  %v1949 = vpack.c.b16 %v1833, %v1832
  %v1950 = vpack.c.b16 %v1835, %v1834
  %v1951 = vpack.c.b16 %v1837, %v1836
  %v1952 = vpack.c.b16 %v1839, %v1838
  %v1953 = vpack.c.b16 %v1841, %v1840
  %v1954 = vpack.c.b16 %v1843, %v1842
  %v1955 = vpack.c.b16 %v1845, %v1844
  %v1956 = vpack.c.b16 %v1847, %v1846
  %v1957 = vpack.c.b16 %v1849, %v1848
  %v1958 = vpack.c.b16 %v1851, %v1850
  %v1959 = vpack.c.b16 %v1853, %v1852
  %v1960 = vpack.c.b16 %v1855, %v1854
  %v1961 = vpack.c.b16 %v1857, %v1856
  %v1962 = vpack.c.b16 %v1859, %v1858
  %v1963 = vpack.c.b16 %v1861, %v1860
  %v1964 = vpack.c.b16 %v1863, %v1862
  %v1965 = vpack.c.b16 %v1865, %v1864
  %v1966 = vpack.c.b16 %v1867, %v1866
  %v1967 = vpack.c.b16 %v1869, %v1868
  %v1968 = vpack.c.b16 %v1871, %v1870
  %v1969 = vpack.c.b16 %v1873, %v1872
  %v1970 = vpack.c.b16 %v1875, %v1874
  %v1971 = vpack.c.b16 %v1877, %v1876
  %v1972 = vpack.c.b16 %v1879, %v1878
  %v1973 = vpack.c.b16 %v1881, %v1880
  %v1974 = vpack.c.b16 %v1883, %v1882
  %v1975 = vpack.c.b16 %v1885, %v1884
  %v1976 = vpack.c.b16 %v1887, %v1886
  %v1977 = vpack.c.b16 %v1889, %v1888
  %v1978 = vpack.c.b16 %v1891, %v1890
  %v1979 = vpack.c.b16 %v1893, %v1892
  %v1980 = vpack.c.b16 %v1895, %v1894
  %v1981 = vpack.c.b16 %v1897, %v1896
  %v1982 = vpack.c.b16 %v1899, %v1898
  %v1983 = vpack.c.b16 %v1901, %v1900
  %v1984 = vpack.c.b16 %v1903, %v1902
  %v1985 = vpack.c.b16 %v1905, %v1904
  %v1986 = vpack.c.b16 %v1907, %v1906
  %v1987 = vpack.c.b16 %v1909, %v1908
  %v1988 = vpack.c.b16 %v1911, %v1910
  %v1989 = vpack.c.b16 %v1913, %v1912
  %v1990 = vpack.c.b16 %v1915, %v1914
  %v1991 = vpack.c.b16 %v1917, %v1916
  %v1992 = vpack.c.b16 %v1919, %v1918
  %v1993 = vpack.c.b16 %v1921, %v1920
  %v1994 = vpack.c.b16 %v1923, %v1922
  %v1995 = vpack.c.b16 %v1925, %v1924
  %v1996 = vpack.c.b16 %v1927, %v1926
  %v1997 = vpack.c.b16 %v1929, %v1928
  %v1998 = vpack.c.b16 %v1931, %v1930
  %v1999 = vpack.c.b16 %v1933, %v1932
  %v2000 = vpack.c.b16 %v1935, %v1934
  %v2001 = vpack.c.b16 %v1937, %v1936
  %2066 = vmatpush.bf16.msra.mxu0 %v1945
  %2067 = vmatpush.bf16.msra.mxu0 %v1944
  %2068 = vmatpush.bf16.msra.mxu0 %v1943
  %2069 = vmatpush.bf16.msra.mxu0 %v1942
  %2070 = vmatpush.bf16.msra.mxu0 %v1941
  %2071 = vmatpush.bf16.msra.mxu0 %v1940
  %2072 = vmatpush.bf16.msra.mxu0 %v1939
  %2073 = vmatpush.bf16.msra.mxu0 %v1938
  %2074 = vmatmul.bf16.gmra.mxu0 %v1170
  %v2075 = vpop.f32.mrf.mxu0
  %v2076 = vadd.f32 %v400, %v2075
  %v2077 = vpop.f32.mrf.mxu0
  %v2078 = vadd.f32 %v400, %v2077
  %2079 = vmatmul.bf16.gmra.mxu0 %v1178
  %v2080 = vpop.f32.mrf.mxu0
  %v2081 = vadd.f32 %v400, %v2080
  %v2082 = vpop.f32.mrf.mxu0
  %v2083 = vadd.f32 %v400, %v2082
  %2084 = vmatmul.bf16.gmra.mxu0 %v1186
  %v2085 = vpop.f32.mrf.mxu0
  %v2086 = vadd.f32 %v400, %v2085
  %v2087 = vpop.f32.mrf.mxu0
  %v2088 = vadd.f32 %v400, %v2087
  %2089 = vmatmul.bf16.gmra.mxu0 %v1194
  %v2090 = vpop.f32.mrf.mxu0
  %v2091 = vadd.f32 %v400, %v2090
  %v2092 = vpop.f32.mrf.mxu0
  %v2093 = vadd.f32 %v400, %v2092
  %2094 = vmatmul.bf16.gmra.mxu0 %v1202
  %v2095 = vpop.f32.mrf.mxu0
  %v2096 = vadd.f32 %v400, %v2095
  %v2097 = vpop.f32.mrf.mxu0
  %v2098 = vadd.f32 %v400, %v2097
  %2099 = vmatmul.bf16.gmra.mxu0 %v1210
  %v2100 = vpop.f32.mrf.mxu0
  %v2101 = vadd.f32 %v400, %v2100
  %v2102 = vpop.f32.mrf.mxu0
  %v2103 = vadd.f32 %v400, %v2102
  %2104 = vmatmul.bf16.gmra.mxu0 %v1218
  %v2105 = vpop.f32.mrf.mxu0
  %v2106 = vadd.f32 %v400, %v2105
  %v2107 = vpop.f32.mrf.mxu0
  %v2108 = vadd.f32 %v400, %v2107
  %2109 = vmatmul.bf16.gmra.mxu0 %v1226
  %v2110 = vpop.f32.mrf.mxu0
  %v2111 = vadd.f32 %v400, %v2110
  %v2112 = vpop.f32.mrf.mxu0
  %v2113 = vadd.f32 %v400, %v2112
  %2114 = vmatmul.bf16.gmra.mxu0 %v1234
  %v2115 = vpop.f32.mrf.mxu0
  %v2116 = vadd.f32 %v400, %v2115
  %v2117 = vpop.f32.mrf.mxu0
  %v2118 = vadd.f32 %v400, %v2117
  %2119 = vmatmul.bf16.gmra.mxu0 %v1242
  %v2120 = vpop.f32.mrf.mxu0
  %v2121 = vadd.f32 %v400, %v2120
  %v2122 = vpop.f32.mrf.mxu0
  %v2123 = vadd.f32 %v400, %v2122
  %2124 = vmatmul.bf16.gmra.mxu0 %v1250
  %v2125 = vpop.f32.mrf.mxu0
  %v2126 = vadd.f32 %v400, %v2125
  %v2127 = vpop.f32.mrf.mxu0
  %v2128 = vadd.f32 %v400, %v2127
  %2129 = vmatmul.bf16.gmra.mxu0 %v1258
  %v2130 = vpop.f32.mrf.mxu0
  %v2131 = vadd.f32 %v400, %v2130
  %v2132 = vpop.f32.mrf.mxu0
  %v2133 = vadd.f32 %v400, %v2132
  %2134 = vmatmul.bf16.gmra.mxu0 %v1266
  %v2135 = vpop.f32.mrf.mxu0
  %v2136 = vadd.f32 %v400, %v2135
  %v2137 = vpop.f32.mrf.mxu0
  %v2138 = vadd.f32 %v400, %v2137
  %2139 = vmatmul.bf16.gmra.mxu0 %v1274
  %v2140 = vpop.f32.mrf.mxu0
  %v2141 = vadd.f32 %v400, %v2140
  %v2142 = vpop.f32.mrf.mxu0
  %v2143 = vadd.f32 %v400, %v2142
  %2144 = vmatmul.bf16.gmra.mxu0 %v1282
  %v2145 = vpop.f32.mrf.mxu0
  %v2146 = vadd.f32 %v400, %v2145
  %v2147 = vpop.f32.mrf.mxu0
  %v2148 = vadd.f32 %v400, %v2147
  %2149 = vmatmul.bf16.gmra.mxu0 %v1290
  %v2150 = vpop.f32.mrf.mxu0
  %v2151 = vadd.f32 %v400, %v2150
  %v2152 = vpop.f32.mrf.mxu0
  %v2153 = vadd.f32 %v400, %v2152
  %2154 = vmatmul.bf16.gmra.mxu0 %v1298
  %v2155 = vpop.f32.mrf.mxu0
  %v2156 = vadd.f32 %v400, %v2155
  %v2157 = vpop.f32.mrf.mxu0
  %v2158 = vadd.f32 %v400, %v2157
  %2159 = vmatmul.bf16.gmra.mxu0 %v1306
  %v2160 = vpop.f32.mrf.mxu0
  %v2161 = vadd.f32 %v400, %v2160
  %v2162 = vpop.f32.mrf.mxu0
  %v2163 = vadd.f32 %v400, %v2162
  %2164 = vmatmul.bf16.gmra.mxu0 %v1314
  %v2165 = vpop.f32.mrf.mxu0
  %v2166 = vadd.f32 %v400, %v2165
  %v2167 = vpop.f32.mrf.mxu0
  %v2168 = vadd.f32 %v400, %v2167
  %2169 = vmatmul.bf16.gmra.mxu0 %v1322
  %v2170 = vpop.f32.mrf.mxu0
  %v2171 = vadd.f32 %v400, %v2170
  %v2172 = vpop.f32.mrf.mxu0
  %v2173 = vadd.f32 %v400, %v2172
  %2174 = vmatmul.bf16.gmra.mxu0 %v1330
  %v2175 = vpop.f32.mrf.mxu0
  %v2176 = vadd.f32 %v400, %v2175
  %v2177 = vpop.f32.mrf.mxu0
  %v2178 = vadd.f32 %v400, %v2177
  %2179 = vmatmul.bf16.gmra.mxu0 %v1338
  %v2180 = vpop.f32.mrf.mxu0
  %v2181 = vadd.f32 %v400, %v2180
  %v2182 = vpop.f32.mrf.mxu0
  %v2183 = vadd.f32 %v400, %v2182
  %2184 = vmatmul.bf16.gmra.mxu0 %v1346
  %v2185 = vpop.f32.mrf.mxu0
  %v2186 = vadd.f32 %v400, %v2185
  %v2187 = vpop.f32.mrf.mxu0
  %v2188 = vadd.f32 %v400, %v2187
  %2189 = vmatmul.bf16.gmra.mxu0 %v1354
  %v2190 = vpop.f32.mrf.mxu0
  %v2191 = vadd.f32 %v400, %v2190
  %v2192 = vpop.f32.mrf.mxu0
  %v2193 = vadd.f32 %v400, %v2192
  %2194 = vmatmul.bf16.gmra.mxu0 %v1362
  %v2195 = vpop.f32.mrf.mxu0
  %v2196 = vadd.f32 %v400, %v2195
  %v2197 = vpop.f32.mrf.mxu0
  %v2198 = vadd.f32 %v400, %v2197
  %2199 = vmatmul.bf16.gmra.mxu0 %v1370
  %v2200 = vpop.f32.mrf.mxu0
  %v2201 = vadd.f32 %v400, %v2200
  %v2202 = vpop.f32.mrf.mxu0
  %v2203 = vadd.f32 %v400, %v2202
  %2204 = vmatmul.bf16.gmra.mxu0 %v1378
  %v2205 = vpop.f32.mrf.mxu0
  %v2206 = vadd.f32 %v400, %v2205
  %v2207 = vpop.f32.mrf.mxu0
  %v2208 = vadd.f32 %v400, %v2207
  %2209 = vmatmul.bf16.gmra.mxu0 %v1386
  %v2210 = vpop.f32.mrf.mxu0
  %v2211 = vadd.f32 %v400, %v2210
  %v2212 = vpop.f32.mrf.mxu0
  %v2213 = vadd.f32 %v400, %v2212
  %2214 = vmatmul.bf16.gmra.mxu0 %v1394
  %v2215 = vpop.f32.mrf.mxu0
  %v2216 = vadd.f32 %v400, %v2215
  %v2217 = vpop.f32.mrf.mxu0
  %v2218 = vadd.f32 %v400, %v2217
  %2219 = vmatmul.bf16.gmra.mxu0 %v1402
  %v2220 = vpop.f32.mrf.mxu0
  %v2221 = vadd.f32 %v400, %v2220
  %v2222 = vpop.f32.mrf.mxu0
  %v2223 = vadd.f32 %v400, %v2222
  %2224 = vmatmul.bf16.gmra.mxu0 %v1410
  %v2225 = vpop.f32.mrf.mxu0
  %v2226 = vadd.f32 %v400, %v2225
  %v2227 = vpop.f32.mrf.mxu0
  %v2228 = vadd.f32 %v400, %v2227
  %2229 = vmatmul.bf16.gmra.mxu0 %v1418
  %v2230 = vpop.f32.mrf.mxu0
  %v2231 = vadd.f32 %v400, %v2230
  %v2232 = vpop.f32.mrf.mxu0
  %v2233 = vadd.f32 %v400, %v2232
  %2234 = vdwg.mxu0
  %2235 = vmatpush.bf16.msra.mxu0 %v1953
  %2236 = vmatpush.bf16.msra.mxu0 %v1952
  %2237 = vmatpush.bf16.msra.mxu0 %v1951
  %2238 = vmatpush.bf16.msra.mxu0 %v1950
  %2239 = vmatpush.bf16.msra.mxu0 %v1949
  %2240 = vmatpush.bf16.msra.mxu0 %v1948
  %2241 = vmatpush.bf16.msra.mxu0 %v1947
  %2242 = vmatpush.bf16.msra.mxu0 %v1946
  %2243 = vmatmul.bf16.gmra.mxu0 %v1171
  %v2244 = vpop.f32.mrf.mxu0
  %v2245 = vadd.f32 %v2076, %v2244
  %v2246 = vpop.f32.mrf.mxu0
  %v2247 = vadd.f32 %v2078, %v2246
  %2248 = vmatmul.bf16.gmra.mxu0 %v1179
  %v2249 = vpop.f32.mrf.mxu0
  %v2250 = vadd.f32 %v2081, %v2249
  %v2251 = vpop.f32.mrf.mxu0
  %v2252 = vadd.f32 %v2083, %v2251
  %2253 = vmatmul.bf16.gmra.mxu0 %v1187
  %v2254 = vpop.f32.mrf.mxu0
  %v2255 = vadd.f32 %v2086, %v2254
  %v2256 = vpop.f32.mrf.mxu0
  %v2257 = vadd.f32 %v2088, %v2256
  %2258 = vmatmul.bf16.gmra.mxu0 %v1195
  %v2259 = vpop.f32.mrf.mxu0
  %v2260 = vadd.f32 %v2091, %v2259
  %v2261 = vpop.f32.mrf.mxu0
  %v2262 = vadd.f32 %v2093, %v2261
  %2263 = vmatmul.bf16.gmra.mxu0 %v1203
  %v2264 = vpop.f32.mrf.mxu0
  %v2265 = vadd.f32 %v2096, %v2264
  %v2266 = vpop.f32.mrf.mxu0
  %v2267 = vadd.f32 %v2098, %v2266
  %2268 = vmatmul.bf16.gmra.mxu0 %v1211
  %v2269 = vpop.f32.mrf.mxu0
  %v2270 = vadd.f32 %v2101, %v2269
  %v2271 = vpop.f32.mrf.mxu0
  %v2272 = vadd.f32 %v2103, %v2271
  %2273 = vmatmul.bf16.gmra.mxu0 %v1219
  %v2274 = vpop.f32.mrf.mxu0
  %v2275 = vadd.f32 %v2106, %v2274
  %v2276 = vpop.f32.mrf.mxu0
  %v2277 = vadd.f32 %v2108, %v2276
  %2278 = vmatmul.bf16.gmra.mxu0 %v1227
  %v2279 = vpop.f32.mrf.mxu0
  %v2280 = vadd.f32 %v2111, %v2279
  %v2281 = vpop.f32.mrf.mxu0
  %v2282 = vadd.f32 %v2113, %v2281
  %2283 = vmatmul.bf16.gmra.mxu0 %v1235
  %v2284 = vpop.f32.mrf.mxu0
  %v2285 = vadd.f32 %v2116, %v2284
  %v2286 = vpop.f32.mrf.mxu0
  %v2287 = vadd.f32 %v2118, %v2286
  %2288 = vmatmul.bf16.gmra.mxu0 %v1243
  %v2289 = vpop.f32.mrf.mxu0
  %v2290 = vadd.f32 %v2121, %v2289
  %v2291 = vpop.f32.mrf.mxu0
  %v2292 = vadd.f32 %v2123, %v2291
  %2293 = vmatmul.bf16.gmra.mxu0 %v1251
  %v2294 = vpop.f32.mrf.mxu0
  %v2295 = vadd.f32 %v2126, %v2294
  %v2296 = vpop.f32.mrf.mxu0
  %v2297 = vadd.f32 %v2128, %v2296
  %2298 = vmatmul.bf16.gmra.mxu0 %v1259
  %v2299 = vpop.f32.mrf.mxu0
  %v2300 = vadd.f32 %v2131, %v2299
  %v2301 = vpop.f32.mrf.mxu0
  %v2302 = vadd.f32 %v2133, %v2301
  %2303 = vmatmul.bf16.gmra.mxu0 %v1267
  %v2304 = vpop.f32.mrf.mxu0
  %v2305 = vadd.f32 %v2136, %v2304
  %v2306 = vpop.f32.mrf.mxu0
  %v2307 = vadd.f32 %v2138, %v2306
  %2308 = vmatmul.bf16.gmra.mxu0 %v1275
  %v2309 = vpop.f32.mrf.mxu0
  %v2310 = vadd.f32 %v2141, %v2309
  %v2311 = vpop.f32.mrf.mxu0
  %v2312 = vadd.f32 %v2143, %v2311
  %2313 = vmatmul.bf16.gmra.mxu0 %v1283
  %v2314 = vpop.f32.mrf.mxu0
  %v2315 = vadd.f32 %v2146, %v2314
  %v2316 = vpop.f32.mrf.mxu0
  %v2317 = vadd.f32 %v2148, %v2316
  %2318 = vmatmul.bf16.gmra.mxu0 %v1291
  %v2319 = vpop.f32.mrf.mxu0
  %v2320 = vadd.f32 %v2151, %v2319
  %v2321 = vpop.f32.mrf.mxu0
  %v2322 = vadd.f32 %v2153, %v2321
  %2323 = vmatmul.bf16.gmra.mxu0 %v1299
  %v2324 = vpop.f32.mrf.mxu0
  %v2325 = vadd.f32 %v2156, %v2324
  %v2326 = vpop.f32.mrf.mxu0
  %v2327 = vadd.f32 %v2158, %v2326
  %2328 = vmatmul.bf16.gmra.mxu0 %v1307
  %v2329 = vpop.f32.mrf.mxu0
  %v2330 = vadd.f32 %v2161, %v2329
  %v2331 = vpop.f32.mrf.mxu0
  %v2332 = vadd.f32 %v2163, %v2331
  %2333 = vmatmul.bf16.gmra.mxu0 %v1315
  %v2334 = vpop.f32.mrf.mxu0
  %v2335 = vadd.f32 %v2166, %v2334
  %v2336 = vpop.f32.mrf.mxu0
  %v2337 = vadd.f32 %v2168, %v2336
  %2338 = vmatmul.bf16.gmra.mxu0 %v1323
  %v2339 = vpop.f32.mrf.mxu0
  %v2340 = vadd.f32 %v2171, %v2339
  %v2341 = vpop.f32.mrf.mxu0
  %v2342 = vadd.f32 %v2173, %v2341
  %2343 = vmatmul.bf16.gmra.mxu0 %v1331
  %v2344 = vpop.f32.mrf.mxu0
  %v2345 = vadd.f32 %v2176, %v2344
  %v2346 = vpop.f32.mrf.mxu0
  %v2347 = vadd.f32 %v2178, %v2346
  %2348 = vmatmul.bf16.gmra.mxu0 %v1339
  %v2349 = vpop.f32.mrf.mxu0
  %v2350 = vadd.f32 %v2181, %v2349
  %v2351 = vpop.f32.mrf.mxu0
  %v2352 = vadd.f32 %v2183, %v2351
  %2353 = vmatmul.bf16.gmra.mxu0 %v1347
  %v2354 = vpop.f32.mrf.mxu0
  %v2355 = vadd.f32 %v2186, %v2354
  %v2356 = vpop.f32.mrf.mxu0
  %v2357 = vadd.f32 %v2188, %v2356
  %2358 = vmatmul.bf16.gmra.mxu0 %v1355
  %v2359 = vpop.f32.mrf.mxu0
  %v2360 = vadd.f32 %v2191, %v2359
  %v2361 = vpop.f32.mrf.mxu0
  %v2362 = vadd.f32 %v2193, %v2361
  %2363 = vmatmul.bf16.gmra.mxu0 %v1363
  %v2364 = vpop.f32.mrf.mxu0
  %v2365 = vadd.f32 %v2196, %v2364
  %v2366 = vpop.f32.mrf.mxu0
  %v2367 = vadd.f32 %v2198, %v2366
  %2368 = vmatmul.bf16.gmra.mxu0 %v1371
  %v2369 = vpop.f32.mrf.mxu0
  %v2370 = vadd.f32 %v2201, %v2369
  %v2371 = vpop.f32.mrf.mxu0
  %v2372 = vadd.f32 %v2203, %v2371
  %2373 = vmatmul.bf16.gmra.mxu0 %v1379
  %v2374 = vpop.f32.mrf.mxu0
  %v2375 = vadd.f32 %v2206, %v2374
  %v2376 = vpop.f32.mrf.mxu0
  %v2377 = vadd.f32 %v2208, %v2376
  %2378 = vmatmul.bf16.gmra.mxu0 %v1387
  %v2379 = vpop.f32.mrf.mxu0
  %v2380 = vadd.f32 %v2211, %v2379
  %v2381 = vpop.f32.mrf.mxu0
  %v2382 = vadd.f32 %v2213, %v2381
  %2383 = vmatmul.bf16.gmra.mxu0 %v1395
  %v2384 = vpop.f32.mrf.mxu0
  %v2385 = vadd.f32 %v2216, %v2384
  %v2386 = vpop.f32.mrf.mxu0
  %v2387 = vadd.f32 %v2218, %v2386
  %2388 = vmatmul.bf16.gmra.mxu0 %v1403
  %v2389 = vpop.f32.mrf.mxu0
  %v2390 = vadd.f32 %v2221, %v2389
  %v2391 = vpop.f32.mrf.mxu0
  %v2392 = vadd.f32 %v2223, %v2391
  %2393 = vmatmul.bf16.gmra.mxu0 %v1411
  %v2394 = vpop.f32.mrf.mxu0
  %v2395 = vadd.f32 %v2226, %v2394
  %v2396 = vpop.f32.mrf.mxu0
  %v2397 = vadd.f32 %v2228, %v2396
  %2398 = vmatmul.bf16.gmra.mxu0 %v1419
  %v2399 = vpop.f32.mrf.mxu0
  %v2400 = vadd.f32 %v2231, %v2399
  %v2401 = vpop.f32.mrf.mxu0
  %v2402 = vadd.f32 %v2233, %v2401
  %2403 = vdwg.mxu0
  %2404 = vmatpush.bf16.msra.mxu0 %v1961
  %2405 = vmatpush.bf16.msra.mxu0 %v1960
  %2406 = vmatpush.bf16.msra.mxu0 %v1959
  %2407 = vmatpush.bf16.msra.mxu0 %v1958
  %2408 = vmatpush.bf16.msra.mxu0 %v1957
  %2409 = vmatpush.bf16.msra.mxu0 %v1956
  %2410 = vmatpush.bf16.msra.mxu0 %v1955
  %2411 = vmatpush.bf16.msra.mxu0 %v1954
  %2412 = vmatmul.bf16.gmra.mxu0 %v1172
  %v2413 = vpop.f32.mrf.mxu0
  %v2414 = vadd.f32 %v2245, %v2413
  %v2415 = vpop.f32.mrf.mxu0
  %v2416 = vadd.f32 %v2247, %v2415
  %2417 = vmatmul.bf16.gmra.mxu0 %v1180
  %v2418 = vpop.f32.mrf.mxu0
  %v2419 = vadd.f32 %v2250, %v2418
  %v2420 = vpop.f32.mrf.mxu0
  %v2421 = vadd.f32 %v2252, %v2420
  %2422 = vmatmul.bf16.gmra.mxu0 %v1188
  %v2423 = vpop.f32.mrf.mxu0
  %v2424 = vadd.f32 %v2255, %v2423
  %v2425 = vpop.f32.mrf.mxu0
  %v2426 = vadd.f32 %v2257, %v2425
  %2427 = vmatmul.bf16.gmra.mxu0 %v1196
  %v2428 = vpop.f32.mrf.mxu0
  %v2429 = vadd.f32 %v2260, %v2428
  %v2430 = vpop.f32.mrf.mxu0
  %v2431 = vadd.f32 %v2262, %v2430
  %2432 = vmatmul.bf16.gmra.mxu0 %v1204
  %v2433 = vpop.f32.mrf.mxu0
  %v2434 = vadd.f32 %v2265, %v2433
  %v2435 = vpop.f32.mrf.mxu0
  %v2436 = vadd.f32 %v2267, %v2435
  %2437 = vmatmul.bf16.gmra.mxu0 %v1212
  %v2438 = vpop.f32.mrf.mxu0
  %v2439 = vadd.f32 %v2270, %v2438
  %v2440 = vpop.f32.mrf.mxu0
  %v2441 = vadd.f32 %v2272, %v2440
  %2442 = vmatmul.bf16.gmra.mxu0 %v1220
  %v2443 = vpop.f32.mrf.mxu0
  %v2444 = vadd.f32 %v2275, %v2443
  %v2445 = vpop.f32.mrf.mxu0
  %v2446 = vadd.f32 %v2277, %v2445
  %2447 = vmatmul.bf16.gmra.mxu0 %v1228
  %v2448 = vpop.f32.mrf.mxu0
  %v2449 = vadd.f32 %v2280, %v2448
  %v2450 = vpop.f32.mrf.mxu0
  %v2451 = vadd.f32 %v2282, %v2450
  %2452 = vmatmul.bf16.gmra.mxu0 %v1236
  %v2453 = vpop.f32.mrf.mxu0
  %v2454 = vadd.f32 %v2285, %v2453
  %v2455 = vpop.f32.mrf.mxu0
  %v2456 = vadd.f32 %v2287, %v2455
  %2457 = vmatmul.bf16.gmra.mxu0 %v1244
  %v2458 = vpop.f32.mrf.mxu0
  %v2459 = vadd.f32 %v2290, %v2458
  %v2460 = vpop.f32.mrf.mxu0
  %v2461 = vadd.f32 %v2292, %v2460
  %2462 = vmatmul.bf16.gmra.mxu0 %v1252
  %v2463 = vpop.f32.mrf.mxu0
  %v2464 = vadd.f32 %v2295, %v2463
  %v2465 = vpop.f32.mrf.mxu0
  %v2466 = vadd.f32 %v2297, %v2465
  %2467 = vmatmul.bf16.gmra.mxu0 %v1260
  %v2468 = vpop.f32.mrf.mxu0
  %v2469 = vadd.f32 %v2300, %v2468
  %v2470 = vpop.f32.mrf.mxu0
  %v2471 = vadd.f32 %v2302, %v2470
  %2472 = vmatmul.bf16.gmra.mxu0 %v1268
  %v2473 = vpop.f32.mrf.mxu0
  %v2474 = vadd.f32 %v2305, %v2473
  %v2475 = vpop.f32.mrf.mxu0
  %v2476 = vadd.f32 %v2307, %v2475
  %2477 = vmatmul.bf16.gmra.mxu0 %v1276
  %v2478 = vpop.f32.mrf.mxu0
  %v2479 = vadd.f32 %v2310, %v2478
  %v2480 = vpop.f32.mrf.mxu0
  %v2481 = vadd.f32 %v2312, %v2480
  %2482 = vmatmul.bf16.gmra.mxu0 %v1284
  %v2483 = vpop.f32.mrf.mxu0
  %v2484 = vadd.f32 %v2315, %v2483
  %v2485 = vpop.f32.mrf.mxu0
  %v2486 = vadd.f32 %v2317, %v2485
  %2487 = vmatmul.bf16.gmra.mxu0 %v1292
  %v2488 = vpop.f32.mrf.mxu0
  %v2489 = vadd.f32 %v2320, %v2488
  %v2490 = vpop.f32.mrf.mxu0
  %v2491 = vadd.f32 %v2322, %v2490
  %2492 = vmatmul.bf16.gmra.mxu0 %v1300
  %v2493 = vpop.f32.mrf.mxu0
  %v2494 = vadd.f32 %v2325, %v2493
  %v2495 = vpop.f32.mrf.mxu0
  %v2496 = vadd.f32 %v2327, %v2495
  %2497 = vmatmul.bf16.gmra.mxu0 %v1308
  %v2498 = vpop.f32.mrf.mxu0
  %v2499 = vadd.f32 %v2330, %v2498
  %v2500 = vpop.f32.mrf.mxu0
  %v2501 = vadd.f32 %v2332, %v2500
  %2502 = vmatmul.bf16.gmra.mxu0 %v1316
  %v2503 = vpop.f32.mrf.mxu0
  %v2504 = vadd.f32 %v2335, %v2503
  %v2505 = vpop.f32.mrf.mxu0
  %v2506 = vadd.f32 %v2337, %v2505
  %2507 = vmatmul.bf16.gmra.mxu0 %v1324
  %v2508 = vpop.f32.mrf.mxu0
  %v2509 = vadd.f32 %v2340, %v2508
  %v2510 = vpop.f32.mrf.mxu0
  %v2511 = vadd.f32 %v2342, %v2510
  %2512 = vmatmul.bf16.gmra.mxu0 %v1332
  %v2513 = vpop.f32.mrf.mxu0
  %v2514 = vadd.f32 %v2345, %v2513
  %v2515 = vpop.f32.mrf.mxu0
  %v2516 = vadd.f32 %v2347, %v2515
  %2517 = vmatmul.bf16.gmra.mxu0 %v1340
  %v2518 = vpop.f32.mrf.mxu0
  %v2519 = vadd.f32 %v2350, %v2518
  %v2520 = vpop.f32.mrf.mxu0
  %v2521 = vadd.f32 %v2352, %v2520
  %2522 = vmatmul.bf16.gmra.mxu0 %v1348
  %v2523 = vpop.f32.mrf.mxu0
  %v2524 = vadd.f32 %v2355, %v2523
  %v2525 = vpop.f32.mrf.mxu0
  %v2526 = vadd.f32 %v2357, %v2525
  %2527 = vmatmul.bf16.gmra.mxu0 %v1356
  %v2528 = vpop.f32.mrf.mxu0
  %v2529 = vadd.f32 %v2360, %v2528
  %v2530 = vpop.f32.mrf.mxu0
  %v2531 = vadd.f32 %v2362, %v2530
  %2532 = vmatmul.bf16.gmra.mxu0 %v1364
  %v2533 = vpop.f32.mrf.mxu0
  %v2534 = vadd.f32 %v2365, %v2533
  %v2535 = vpop.f32.mrf.mxu0
  %v2536 = vadd.f32 %v2367, %v2535
  %2537 = vmatmul.bf16.gmra.mxu0 %v1372
  %v2538 = vpop.f32.mrf.mxu0
  %v2539 = vadd.f32 %v2370, %v2538
  %v2540 = vpop.f32.mrf.mxu0
  %v2541 = vadd.f32 %v2372, %v2540
  %2542 = vmatmul.bf16.gmra.mxu0 %v1380
  %v2543 = vpop.f32.mrf.mxu0
  %v2544 = vadd.f32 %v2375, %v2543
  %v2545 = vpop.f32.mrf.mxu0
  %v2546 = vadd.f32 %v2377, %v2545
  %2547 = vmatmul.bf16.gmra.mxu0 %v1388
  %v2548 = vpop.f32.mrf.mxu0
  %v2549 = vadd.f32 %v2380, %v2548
  %v2550 = vpop.f32.mrf.mxu0
  %v2551 = vadd.f32 %v2382, %v2550
  %2552 = vmatmul.bf16.gmra.mxu0 %v1396
  %v2553 = vpop.f32.mrf.mxu0
  %v2554 = vadd.f32 %v2385, %v2553
  %v2555 = vpop.f32.mrf.mxu0
  %v2556 = vadd.f32 %v2387, %v2555
  %2557 = vmatmul.bf16.gmra.mxu0 %v1404
  %v2558 = vpop.f32.mrf.mxu0
  %v2559 = vadd.f32 %v2390, %v2558
  %v2560 = vpop.f32.mrf.mxu0
  %v2561 = vadd.f32 %v2392, %v2560
  %2562 = vmatmul.bf16.gmra.mxu0 %v1412
  %v2563 = vpop.f32.mrf.mxu0
  %v2564 = vadd.f32 %v2395, %v2563
  %v2565 = vpop.f32.mrf.mxu0
  %v2566 = vadd.f32 %v2397, %v2565
  %2567 = vmatmul.bf16.gmra.mxu0 %v1420
  %v2568 = vpop.f32.mrf.mxu0
  %v2569 = vadd.f32 %v2400, %v2568
  %v2570 = vpop.f32.mrf.mxu0
  %v2571 = vadd.f32 %v2402, %v2570
  %2572 = vdwg.mxu0
  %2573 = vmatpush.bf16.msra.mxu0 %v1969
  %2574 = vmatpush.bf16.msra.mxu0 %v1968
  %2575 = vmatpush.bf16.msra.mxu0 %v1967
  %2576 = vmatpush.bf16.msra.mxu0 %v1966
  %2577 = vmatpush.bf16.msra.mxu0 %v1965
  %2578 = vmatpush.bf16.msra.mxu0 %v1964
  %2579 = vmatpush.bf16.msra.mxu0 %v1963
  %2580 = vmatpush.bf16.msra.mxu0 %v1962
  %2581 = vmatmul.bf16.gmra.mxu0 %v1173
  %v2582 = vpop.f32.mrf.mxu0
  %v2583 = vadd.f32 %v2414, %v2582
  %v2584 = vpop.f32.mrf.mxu0
  %v2585 = vadd.f32 %v2416, %v2584
  %2586 = vmatmul.bf16.gmra.mxu0 %v1181
  %v2587 = vpop.f32.mrf.mxu0
  %v2588 = vadd.f32 %v2419, %v2587
  %v2589 = vpop.f32.mrf.mxu0
  %v2590 = vadd.f32 %v2421, %v2589
  %2591 = vmatmul.bf16.gmra.mxu0 %v1189
  %v2592 = vpop.f32.mrf.mxu0
  %v2593 = vadd.f32 %v2424, %v2592
  %v2594 = vpop.f32.mrf.mxu0
  %v2595 = vadd.f32 %v2426, %v2594
  %2596 = vmatmul.bf16.gmra.mxu0 %v1197
  %v2597 = vpop.f32.mrf.mxu0
  %v2598 = vadd.f32 %v2429, %v2597
  %v2599 = vpop.f32.mrf.mxu0
  %v2600 = vadd.f32 %v2431, %v2599
  %2601 = vmatmul.bf16.gmra.mxu0 %v1205
  %v2602 = vpop.f32.mrf.mxu0
  %v2603 = vadd.f32 %v2434, %v2602
  %v2604 = vpop.f32.mrf.mxu0
  %v2605 = vadd.f32 %v2436, %v2604
  %2606 = vmatmul.bf16.gmra.mxu0 %v1213
  %v2607 = vpop.f32.mrf.mxu0
  %v2608 = vadd.f32 %v2439, %v2607
  %v2609 = vpop.f32.mrf.mxu0
  %v2610 = vadd.f32 %v2441, %v2609
  %2611 = vmatmul.bf16.gmra.mxu0 %v1221
  %v2612 = vpop.f32.mrf.mxu0
  %v2613 = vadd.f32 %v2444, %v2612
  %v2614 = vpop.f32.mrf.mxu0
  %v2615 = vadd.f32 %v2446, %v2614
  %2616 = vmatmul.bf16.gmra.mxu0 %v1229
  %v2617 = vpop.f32.mrf.mxu0
  %v2618 = vadd.f32 %v2449, %v2617
  %v2619 = vpop.f32.mrf.mxu0
  %v2620 = vadd.f32 %v2451, %v2619
  %2621 = vmatmul.bf16.gmra.mxu0 %v1237
  %v2622 = vpop.f32.mrf.mxu0
  %v2623 = vadd.f32 %v2454, %v2622
  %v2624 = vpop.f32.mrf.mxu0
  %v2625 = vadd.f32 %v2456, %v2624
  %2626 = vmatmul.bf16.gmra.mxu0 %v1245
  %v2627 = vpop.f32.mrf.mxu0
  %v2628 = vadd.f32 %v2459, %v2627
  %v2629 = vpop.f32.mrf.mxu0
  %v2630 = vadd.f32 %v2461, %v2629
  %2631 = vmatmul.bf16.gmra.mxu0 %v1253
  %v2632 = vpop.f32.mrf.mxu0
  %v2633 = vadd.f32 %v2464, %v2632
  %v2634 = vpop.f32.mrf.mxu0
  %v2635 = vadd.f32 %v2466, %v2634
  %2636 = vmatmul.bf16.gmra.mxu0 %v1261
  %v2637 = vpop.f32.mrf.mxu0
  %v2638 = vadd.f32 %v2469, %v2637
  %v2639 = vpop.f32.mrf.mxu0
  %v2640 = vadd.f32 %v2471, %v2639
  %2641 = vmatmul.bf16.gmra.mxu0 %v1269
  %v2642 = vpop.f32.mrf.mxu0
  %v2643 = vadd.f32 %v2474, %v2642
  %v2644 = vpop.f32.mrf.mxu0
  %v2645 = vadd.f32 %v2476, %v2644
  %2646 = vmatmul.bf16.gmra.mxu0 %v1277
  %v2647 = vpop.f32.mrf.mxu0
  %v2648 = vadd.f32 %v2479, %v2647
  %v2649 = vpop.f32.mrf.mxu0
  %v2650 = vadd.f32 %v2481, %v2649
  %2651 = vmatmul.bf16.gmra.mxu0 %v1285
  %v2652 = vpop.f32.mrf.mxu0
  %v2653 = vadd.f32 %v2484, %v2652
  %v2654 = vpop.f32.mrf.mxu0
  %v2655 = vadd.f32 %v2486, %v2654
  %2656 = vmatmul.bf16.gmra.mxu0 %v1293
  %v2657 = vpop.f32.mrf.mxu0
  %v2658 = vadd.f32 %v2489, %v2657
  %v2659 = vpop.f32.mrf.mxu0
  %v2660 = vadd.f32 %v2491, %v2659
  %2661 = vmatmul.bf16.gmra.mxu0 %v1301
  %v2662 = vpop.f32.mrf.mxu0
  %v2663 = vadd.f32 %v2494, %v2662
  %v2664 = vpop.f32.mrf.mxu0
  %v2665 = vadd.f32 %v2496, %v2664
  %2666 = vmatmul.bf16.gmra.mxu0 %v1309
  %v2667 = vpop.f32.mrf.mxu0
  %v2668 = vadd.f32 %v2499, %v2667
  %v2669 = vpop.f32.mrf.mxu0
  %v2670 = vadd.f32 %v2501, %v2669
  %2671 = vmatmul.bf16.gmra.mxu0 %v1317
  %v2672 = vpop.f32.mrf.mxu0
  %v2673 = vadd.f32 %v2504, %v2672
  %v2674 = vpop.f32.mrf.mxu0
  %v2675 = vadd.f32 %v2506, %v2674
  %2676 = vmatmul.bf16.gmra.mxu0 %v1325
  %v2677 = vpop.f32.mrf.mxu0
  %v2678 = vadd.f32 %v2509, %v2677
  %v2679 = vpop.f32.mrf.mxu0
  %v2680 = vadd.f32 %v2511, %v2679
  %2681 = vmatmul.bf16.gmra.mxu0 %v1333
  %v2682 = vpop.f32.mrf.mxu0
  %v2683 = vadd.f32 %v2514, %v2682
  %v2684 = vpop.f32.mrf.mxu0
  %v2685 = vadd.f32 %v2516, %v2684
  %2686 = vmatmul.bf16.gmra.mxu0 %v1341
  %v2687 = vpop.f32.mrf.mxu0
  %v2688 = vadd.f32 %v2519, %v2687
  %v2689 = vpop.f32.mrf.mxu0
  %v2690 = vadd.f32 %v2521, %v2689
  %2691 = vmatmul.bf16.gmra.mxu0 %v1349
  %v2692 = vpop.f32.mrf.mxu0
  %v2693 = vadd.f32 %v2524, %v2692
  %v2694 = vpop.f32.mrf.mxu0
  %v2695 = vadd.f32 %v2526, %v2694
  %2696 = vmatmul.bf16.gmra.mxu0 %v1357
  %v2697 = vpop.f32.mrf.mxu0
  %v2698 = vadd.f32 %v2529, %v2697
  %v2699 = vpop.f32.mrf.mxu0
  %v2700 = vadd.f32 %v2531, %v2699
  %2701 = vmatmul.bf16.gmra.mxu0 %v1365
  %v2702 = vpop.f32.mrf.mxu0
  %v2703 = vadd.f32 %v2534, %v2702
  %v2704 = vpop.f32.mrf.mxu0
  %v2705 = vadd.f32 %v2536, %v2704
  %2706 = vmatmul.bf16.gmra.mxu0 %v1373
  %v2707 = vpop.f32.mrf.mxu0
  %v2708 = vadd.f32 %v2539, %v2707
  %v2709 = vpop.f32.mrf.mxu0
  %v2710 = vadd.f32 %v2541, %v2709
  %2711 = vmatmul.bf16.gmra.mxu0 %v1381
  %v2712 = vpop.f32.mrf.mxu0
  %v2713 = vadd.f32 %v2544, %v2712
  %v2714 = vpop.f32.mrf.mxu0
  %v2715 = vadd.f32 %v2546, %v2714
  %2716 = vmatmul.bf16.gmra.mxu0 %v1389
  %v2717 = vpop.f32.mrf.mxu0
  %v2718 = vadd.f32 %v2549, %v2717
  %v2719 = vpop.f32.mrf.mxu0
  %v2720 = vadd.f32 %v2551, %v2719
  %2721 = vmatmul.bf16.gmra.mxu0 %v1397
  %v2722 = vpop.f32.mrf.mxu0
  %v2723 = vadd.f32 %v2554, %v2722
  %v2724 = vpop.f32.mrf.mxu0
  %v2725 = vadd.f32 %v2556, %v2724
  %2726 = vmatmul.bf16.gmra.mxu0 %v1405
  %v2727 = vpop.f32.mrf.mxu0
  %v2728 = vadd.f32 %v2559, %v2727
  %v2729 = vpop.f32.mrf.mxu0
  %v2730 = vadd.f32 %v2561, %v2729
  %2731 = vmatmul.bf16.gmra.mxu0 %v1413
  %v2732 = vpop.f32.mrf.mxu0
  %v2733 = vadd.f32 %v2564, %v2732
  %v2734 = vpop.f32.mrf.mxu0
  %v2735 = vadd.f32 %v2566, %v2734
  %2736 = vmatmul.bf16.gmra.mxu0 %v1421
  %v2737 = vpop.f32.mrf.mxu0
  %v2738 = vadd.f32 %v2569, %v2737
  %v2739 = vpop.f32.mrf.mxu0
  %v2740 = vadd.f32 %v2571, %v2739
  %2741 = vdwg.mxu0
  %2742 = vmatpush.bf16.msra.mxu0 %v1977
  %2743 = vmatpush.bf16.msra.mxu0 %v1976
  %2744 = vmatpush.bf16.msra.mxu0 %v1975
  %2745 = vmatpush.bf16.msra.mxu0 %v1974
  %2746 = vmatpush.bf16.msra.mxu0 %v1973
  %2747 = vmatpush.bf16.msra.mxu0 %v1972
  %2748 = vmatpush.bf16.msra.mxu0 %v1971
  %2749 = vmatpush.bf16.msra.mxu0 %v1970
  %2750 = vmatmul.bf16.gmra.mxu0 %v1174
  %v2751 = vpop.f32.mrf.mxu0
  %v2752 = vadd.f32 %v2583, %v2751
  %v2753 = vpop.f32.mrf.mxu0
  %v2754 = vadd.f32 %v2585, %v2753
  %2755 = vmatmul.bf16.gmra.mxu0 %v1182
  %v2756 = vpop.f32.mrf.mxu0
  %v2757 = vadd.f32 %v2588, %v2756
  %v2758 = vpop.f32.mrf.mxu0
  %v2759 = vadd.f32 %v2590, %v2758
  %2760 = vmatmul.bf16.gmra.mxu0 %v1190
  %v2761 = vpop.f32.mrf.mxu0
  %v2762 = vadd.f32 %v2593, %v2761
  %v2763 = vpop.f32.mrf.mxu0
  %v2764 = vadd.f32 %v2595, %v2763
  %2765 = vmatmul.bf16.gmra.mxu0 %v1198
  %v2766 = vpop.f32.mrf.mxu0
  %v2767 = vadd.f32 %v2598, %v2766
  %v2768 = vpop.f32.mrf.mxu0
  %v2769 = vadd.f32 %v2600, %v2768
  %2770 = vmatmul.bf16.gmra.mxu0 %v1206
  %v2771 = vpop.f32.mrf.mxu0
  %v2772 = vadd.f32 %v2603, %v2771
  %v2773 = vpop.f32.mrf.mxu0
  %v2774 = vadd.f32 %v2605, %v2773
  %2775 = vmatmul.bf16.gmra.mxu0 %v1214
  %v2776 = vpop.f32.mrf.mxu0
  %v2777 = vadd.f32 %v2608, %v2776
  %v2778 = vpop.f32.mrf.mxu0
  %v2779 = vadd.f32 %v2610, %v2778
  %2780 = vmatmul.bf16.gmra.mxu0 %v1222
  %v2781 = vpop.f32.mrf.mxu0
  %v2782 = vadd.f32 %v2613, %v2781
  %v2783 = vpop.f32.mrf.mxu0
  %v2784 = vadd.f32 %v2615, %v2783
  %2785 = vmatmul.bf16.gmra.mxu0 %v1230
  %v2786 = vpop.f32.mrf.mxu0
  %v2787 = vadd.f32 %v2618, %v2786
  %v2788 = vpop.f32.mrf.mxu0
  %v2789 = vadd.f32 %v2620, %v2788
  %2790 = vmatmul.bf16.gmra.mxu0 %v1238
  %v2791 = vpop.f32.mrf.mxu0
  %v2792 = vadd.f32 %v2623, %v2791
  %v2793 = vpop.f32.mrf.mxu0
  %v2794 = vadd.f32 %v2625, %v2793
  %2795 = vmatmul.bf16.gmra.mxu0 %v1246
  %v2796 = vpop.f32.mrf.mxu0
  %v2797 = vadd.f32 %v2628, %v2796
  %v2798 = vpop.f32.mrf.mxu0
  %v2799 = vadd.f32 %v2630, %v2798
  %2800 = vmatmul.bf16.gmra.mxu0 %v1254
  %v2801 = vpop.f32.mrf.mxu0
  %v2802 = vadd.f32 %v2633, %v2801
  %v2803 = vpop.f32.mrf.mxu0
  %v2804 = vadd.f32 %v2635, %v2803
  %2805 = vmatmul.bf16.gmra.mxu0 %v1262
  %v2806 = vpop.f32.mrf.mxu0
  %v2807 = vadd.f32 %v2638, %v2806
  %v2808 = vpop.f32.mrf.mxu0
  %v2809 = vadd.f32 %v2640, %v2808
  %2810 = vmatmul.bf16.gmra.mxu0 %v1270
  %v2811 = vpop.f32.mrf.mxu0
  %v2812 = vadd.f32 %v2643, %v2811
  %v2813 = vpop.f32.mrf.mxu0
  %v2814 = vadd.f32 %v2645, %v2813
  %2815 = vmatmul.bf16.gmra.mxu0 %v1278
  %v2816 = vpop.f32.mrf.mxu0
  %v2817 = vadd.f32 %v2648, %v2816
  %v2818 = vpop.f32.mrf.mxu0
  %v2819 = vadd.f32 %v2650, %v2818
  %2820 = vmatmul.bf16.gmra.mxu0 %v1286
  %v2821 = vpop.f32.mrf.mxu0
  %v2822 = vadd.f32 %v2653, %v2821
  %v2823 = vpop.f32.mrf.mxu0
  %v2824 = vadd.f32 %v2655, %v2823
  %2825 = vmatmul.bf16.gmra.mxu0 %v1294
  %v2826 = vpop.f32.mrf.mxu0
  %v2827 = vadd.f32 %v2658, %v2826
  %v2828 = vpop.f32.mrf.mxu0
  %v2829 = vadd.f32 %v2660, %v2828
  %2830 = vmatmul.bf16.gmra.mxu0 %v1302
  %v2831 = vpop.f32.mrf.mxu0
  %v2832 = vadd.f32 %v2663, %v2831
  %v2833 = vpop.f32.mrf.mxu0
  %v2834 = vadd.f32 %v2665, %v2833
  %2835 = vmatmul.bf16.gmra.mxu0 %v1310
  %v2836 = vpop.f32.mrf.mxu0
  %v2837 = vadd.f32 %v2668, %v2836
  %v2838 = vpop.f32.mrf.mxu0
  %v2839 = vadd.f32 %v2670, %v2838
  %2840 = vmatmul.bf16.gmra.mxu0 %v1318
  %v2841 = vpop.f32.mrf.mxu0
  %v2842 = vadd.f32 %v2673, %v2841
  %v2843 = vpop.f32.mrf.mxu0
  %v2844 = vadd.f32 %v2675, %v2843
  %2845 = vmatmul.bf16.gmra.mxu0 %v1326
  %v2846 = vpop.f32.mrf.mxu0
  %v2847 = vadd.f32 %v2678, %v2846
  %v2848 = vpop.f32.mrf.mxu0
  %v2849 = vadd.f32 %v2680, %v2848
  %2850 = vmatmul.bf16.gmra.mxu0 %v1334
  %v2851 = vpop.f32.mrf.mxu0
  %v2852 = vadd.f32 %v2683, %v2851
  %v2853 = vpop.f32.mrf.mxu0
  %v2854 = vadd.f32 %v2685, %v2853
  %2855 = vmatmul.bf16.gmra.mxu0 %v1342
  %v2856 = vpop.f32.mrf.mxu0
  %v2857 = vadd.f32 %v2688, %v2856
  %v2858 = vpop.f32.mrf.mxu0
  %v2859 = vadd.f32 %v2690, %v2858
  %2860 = vmatmul.bf16.gmra.mxu0 %v1350
  %v2861 = vpop.f32.mrf.mxu0
  %v2862 = vadd.f32 %v2693, %v2861
  %v2863 = vpop.f32.mrf.mxu0
  %v2864 = vadd.f32 %v2695, %v2863
  %2865 = vmatmul.bf16.gmra.mxu0 %v1358
  %v2866 = vpop.f32.mrf.mxu0
  %v2867 = vadd.f32 %v2698, %v2866
  %v2868 = vpop.f32.mrf.mxu0
  %v2869 = vadd.f32 %v2700, %v2868
  %2870 = vmatmul.bf16.gmra.mxu0 %v1366
  %v2871 = vpop.f32.mrf.mxu0
  %v2872 = vadd.f32 %v2703, %v2871
  %v2873 = vpop.f32.mrf.mxu0
  %v2874 = vadd.f32 %v2705, %v2873
  %2875 = vmatmul.bf16.gmra.mxu0 %v1374
  %v2876 = vpop.f32.mrf.mxu0
  %v2877 = vadd.f32 %v2708, %v2876
  %v2878 = vpop.f32.mrf.mxu0
  %v2879 = vadd.f32 %v2710, %v2878
  %2880 = vmatmul.bf16.gmra.mxu0 %v1382
  %v2881 = vpop.f32.mrf.mxu0
  %v2882 = vadd.f32 %v2713, %v2881
  %v2883 = vpop.f32.mrf.mxu0
  %v2884 = vadd.f32 %v2715, %v2883
  %2885 = vmatmul.bf16.gmra.mxu0 %v1390
  %v2886 = vpop.f32.mrf.mxu0
  %v2887 = vadd.f32 %v2718, %v2886
  %v2888 = vpop.f32.mrf.mxu0
  %v2889 = vadd.f32 %v2720, %v2888
  %2890 = vmatmul.bf16.gmra.mxu0 %v1398
  %v2891 = vpop.f32.mrf.mxu0
  %v2892 = vadd.f32 %v2723, %v2891
  %v2893 = vpop.f32.mrf.mxu0
  %v2894 = vadd.f32 %v2725, %v2893
  %2895 = vmatmul.bf16.gmra.mxu0 %v1406
  %v2896 = vpop.f32.mrf.mxu0
  %v2897 = vadd.f32 %v2728, %v2896
  %v2898 = vpop.f32.mrf.mxu0
  %v2899 = vadd.f32 %v2730, %v2898
  %2900 = vmatmul.bf16.gmra.mxu0 %v1414
  %v2901 = vpop.f32.mrf.mxu0
  %v2902 = vadd.f32 %v2733, %v2901
  %v2903 = vpop.f32.mrf.mxu0
  %v2904 = vadd.f32 %v2735, %v2903
  %2905 = vmatmul.bf16.gmra.mxu0 %v1422
  %v2906 = vpop.f32.mrf.mxu0
  %v2907 = vadd.f32 %v2738, %v2906
  %v2908 = vpop.f32.mrf.mxu0
  %v2909 = vadd.f32 %v2740, %v2908
  %2910 = vdwg.mxu0
  %2911 = vmatpush.bf16.msra.mxu0 %v1985
  %2912 = vmatpush.bf16.msra.mxu0 %v1984
  %2913 = vmatpush.bf16.msra.mxu0 %v1983
  %2914 = vmatpush.bf16.msra.mxu0 %v1982
  %2915 = vmatpush.bf16.msra.mxu0 %v1981
  %2916 = vmatpush.bf16.msra.mxu0 %v1980
  %2917 = vmatpush.bf16.msra.mxu0 %v1979
  %2918 = vmatpush.bf16.msra.mxu0 %v1978
  %2919 = vmatmul.bf16.gmra.mxu0 %v1175
  %v2920 = vpop.f32.mrf.mxu0
  %v2921 = vadd.f32 %v2752, %v2920
  %v2922 = vpop.f32.mrf.mxu0
  %v2923 = vadd.f32 %v2754, %v2922
  %2924 = vmatmul.bf16.gmra.mxu0 %v1183
  %v2925 = vpop.f32.mrf.mxu0
  %v2926 = vadd.f32 %v2757, %v2925
  %v2927 = vpop.f32.mrf.mxu0
  %v2928 = vadd.f32 %v2759, %v2927
  %2929 = vmatmul.bf16.gmra.mxu0 %v1191
  %v2930 = vpop.f32.mrf.mxu0
  %v2931 = vadd.f32 %v2762, %v2930
  %v2932 = vpop.f32.mrf.mxu0
  %v2933 = vadd.f32 %v2764, %v2932
  %2934 = vmatmul.bf16.gmra.mxu0 %v1199
  %v2935 = vpop.f32.mrf.mxu0
  %v2936 = vadd.f32 %v2767, %v2935
  %v2937 = vpop.f32.mrf.mxu0
  %v2938 = vadd.f32 %v2769, %v2937
  %2939 = vmatmul.bf16.gmra.mxu0 %v1207
  %v2940 = vpop.f32.mrf.mxu0
  %v2941 = vadd.f32 %v2772, %v2940
  %v2942 = vpop.f32.mrf.mxu0
  %v2943 = vadd.f32 %v2774, %v2942
  %2944 = vmatmul.bf16.gmra.mxu0 %v1215
  %v2945 = vpop.f32.mrf.mxu0
  %v2946 = vadd.f32 %v2777, %v2945
  %v2947 = vpop.f32.mrf.mxu0
  %v2948 = vadd.f32 %v2779, %v2947
  %2949 = vmatmul.bf16.gmra.mxu0 %v1223
  %v2950 = vpop.f32.mrf.mxu0
  %v2951 = vadd.f32 %v2782, %v2950
  %v2952 = vpop.f32.mrf.mxu0
  %v2953 = vadd.f32 %v2784, %v2952
  %2954 = vmatmul.bf16.gmra.mxu0 %v1231
  %v2955 = vpop.f32.mrf.mxu0
  %v2956 = vadd.f32 %v2787, %v2955
  %v2957 = vpop.f32.mrf.mxu0
  %v2958 = vadd.f32 %v2789, %v2957
  %2959 = vmatmul.bf16.gmra.mxu0 %v1239
  %v2960 = vpop.f32.mrf.mxu0
  %v2961 = vadd.f32 %v2792, %v2960
  %v2962 = vpop.f32.mrf.mxu0
  %v2963 = vadd.f32 %v2794, %v2962
  %2964 = vmatmul.bf16.gmra.mxu0 %v1247
  %v2965 = vpop.f32.mrf.mxu0
  %v2966 = vadd.f32 %v2797, %v2965
  %v2967 = vpop.f32.mrf.mxu0
  %v2968 = vadd.f32 %v2799, %v2967
  %2969 = vmatmul.bf16.gmra.mxu0 %v1255
  %v2970 = vpop.f32.mrf.mxu0
  %v2971 = vadd.f32 %v2802, %v2970
  %v2972 = vpop.f32.mrf.mxu0
  %v2973 = vadd.f32 %v2804, %v2972
  %2974 = vmatmul.bf16.gmra.mxu0 %v1263
  %v2975 = vpop.f32.mrf.mxu0
  %v2976 = vadd.f32 %v2807, %v2975
  %v2977 = vpop.f32.mrf.mxu0
  %v2978 = vadd.f32 %v2809, %v2977
  %2979 = vmatmul.bf16.gmra.mxu0 %v1271
  %v2980 = vpop.f32.mrf.mxu0
  %v2981 = vadd.f32 %v2812, %v2980
  %v2982 = vpop.f32.mrf.mxu0
  %v2983 = vadd.f32 %v2814, %v2982
  %2984 = vmatmul.bf16.gmra.mxu0 %v1279
  %v2985 = vpop.f32.mrf.mxu0
  %v2986 = vadd.f32 %v2817, %v2985
  %v2987 = vpop.f32.mrf.mxu0
  %v2988 = vadd.f32 %v2819, %v2987
  %2989 = vmatmul.bf16.gmra.mxu0 %v1287
  %v2990 = vpop.f32.mrf.mxu0
  %v2991 = vadd.f32 %v2822, %v2990
  %v2992 = vpop.f32.mrf.mxu0
  %v2993 = vadd.f32 %v2824, %v2992
  %2994 = vmatmul.bf16.gmra.mxu0 %v1295
  %v2995 = vpop.f32.mrf.mxu0
  %v2996 = vadd.f32 %v2827, %v2995
  %v2997 = vpop.f32.mrf.mxu0
  %v2998 = vadd.f32 %v2829, %v2997
  %2999 = vmatmul.bf16.gmra.mxu0 %v1303
  %v3000 = vpop.f32.mrf.mxu0
  %v3001 = vadd.f32 %v2832, %v3000
  %v3002 = vpop.f32.mrf.mxu0
  %v3003 = vadd.f32 %v2834, %v3002
  %3004 = vmatmul.bf16.gmra.mxu0 %v1311
  %v3005 = vpop.f32.mrf.mxu0
  %v3006 = vadd.f32 %v2837, %v3005
  %v3007 = vpop.f32.mrf.mxu0
  %v3008 = vadd.f32 %v2839, %v3007
  %3009 = vmatmul.bf16.gmra.mxu0 %v1319
  %v3010 = vpop.f32.mrf.mxu0
  %v3011 = vadd.f32 %v2842, %v3010
  %v3012 = vpop.f32.mrf.mxu0
  %v3013 = vadd.f32 %v2844, %v3012
  %3014 = vmatmul.bf16.gmra.mxu0 %v1327
  %v3015 = vpop.f32.mrf.mxu0
  %v3016 = vadd.f32 %v2847, %v3015
  %v3017 = vpop.f32.mrf.mxu0
  %v3018 = vadd.f32 %v2849, %v3017
  %3019 = vmatmul.bf16.gmra.mxu0 %v1335
  %v3020 = vpop.f32.mrf.mxu0
  %v3021 = vadd.f32 %v2852, %v3020
  %v3022 = vpop.f32.mrf.mxu0
  %v3023 = vadd.f32 %v2854, %v3022
  %3024 = vmatmul.bf16.gmra.mxu0 %v1343
  %v3025 = vpop.f32.mrf.mxu0
  %v3026 = vadd.f32 %v2857, %v3025
  %v3027 = vpop.f32.mrf.mxu0
  %v3028 = vadd.f32 %v2859, %v3027
  %3029 = vmatmul.bf16.gmra.mxu0 %v1351
  %v3030 = vpop.f32.mrf.mxu0
  %v3031 = vadd.f32 %v2862, %v3030
  %v3032 = vpop.f32.mrf.mxu0
  %v3033 = vadd.f32 %v2864, %v3032
  %3034 = vmatmul.bf16.gmra.mxu0 %v1359
  %v3035 = vpop.f32.mrf.mxu0
  %v3036 = vadd.f32 %v2867, %v3035
  %v3037 = vpop.f32.mrf.mxu0
  %v3038 = vadd.f32 %v2869, %v3037
  %3039 = vmatmul.bf16.gmra.mxu0 %v1367
  %v3040 = vpop.f32.mrf.mxu0
  %v3041 = vadd.f32 %v2872, %v3040
  %v3042 = vpop.f32.mrf.mxu0
  %v3043 = vadd.f32 %v2874, %v3042
  %3044 = vmatmul.bf16.gmra.mxu0 %v1375
  %v3045 = vpop.f32.mrf.mxu0
  %v3046 = vadd.f32 %v2877, %v3045
  %v3047 = vpop.f32.mrf.mxu0
  %v3048 = vadd.f32 %v2879, %v3047
  %3049 = vmatmul.bf16.gmra.mxu0 %v1383
  %v3050 = vpop.f32.mrf.mxu0
  %v3051 = vadd.f32 %v2882, %v3050
  %v3052 = vpop.f32.mrf.mxu0
  %v3053 = vadd.f32 %v2884, %v3052
  %3054 = vmatmul.bf16.gmra.mxu0 %v1391
  %v3055 = vpop.f32.mrf.mxu0
  %v3056 = vadd.f32 %v2887, %v3055
  %v3057 = vpop.f32.mrf.mxu0
  %v3058 = vadd.f32 %v2889, %v3057
  %3059 = vmatmul.bf16.gmra.mxu0 %v1399
  %v3060 = vpop.f32.mrf.mxu0
  %v3061 = vadd.f32 %v2892, %v3060
  %v3062 = vpop.f32.mrf.mxu0
  %v3063 = vadd.f32 %v2894, %v3062
  %3064 = vmatmul.bf16.gmra.mxu0 %v1407
  %v3065 = vpop.f32.mrf.mxu0
  %v3066 = vadd.f32 %v2897, %v3065
  %v3067 = vpop.f32.mrf.mxu0
  %v3068 = vadd.f32 %v2899, %v3067
  %3069 = vmatmul.bf16.gmra.mxu0 %v1415
  %v3070 = vpop.f32.mrf.mxu0
  %v3071 = vadd.f32 %v2902, %v3070
  %v3072 = vpop.f32.mrf.mxu0
  %v3073 = vadd.f32 %v2904, %v3072
  %3074 = vmatmul.bf16.gmra.mxu0 %v1423
  %v3075 = vpop.f32.mrf.mxu0
  %v3076 = vadd.f32 %v2907, %v3075
  %v3077 = vpop.f32.mrf.mxu0
  %v3078 = vadd.f32 %v2909, %v3077
  %3079 = vdwg.mxu0
  %3080 = vmatpush.bf16.msra.mxu0 %v1993
  %3081 = vmatpush.bf16.msra.mxu0 %v1992
  %3082 = vmatpush.bf16.msra.mxu0 %v1991
  %3083 = vmatpush.bf16.msra.mxu0 %v1990
  %3084 = vmatpush.bf16.msra.mxu0 %v1989
  %3085 = vmatpush.bf16.msra.mxu0 %v1988
  %3086 = vmatpush.bf16.msra.mxu0 %v1987
  %3087 = vmatpush.bf16.msra.mxu0 %v1986
  %3088 = vmatmul.bf16.gmra.mxu0 %v1176
  %v3089 = vpop.f32.mrf.mxu0
  %v3090 = vadd.f32 %v2921, %v3089
  %v3091 = vpop.f32.mrf.mxu0
  %v3092 = vadd.f32 %v2923, %v3091
  %3093 = vmatmul.bf16.gmra.mxu0 %v1184
  %v3094 = vpop.f32.mrf.mxu0
  %v3095 = vadd.f32 %v2926, %v3094
  %v3096 = vpop.f32.mrf.mxu0
  %v3097 = vadd.f32 %v2928, %v3096
  %3098 = vmatmul.bf16.gmra.mxu0 %v1192
  %v3099 = vpop.f32.mrf.mxu0
  %v3100 = vadd.f32 %v2931, %v3099
  %v3101 = vpop.f32.mrf.mxu0
  %v3102 = vadd.f32 %v2933, %v3101
  %3103 = vmatmul.bf16.gmra.mxu0 %v1200
  %v3104 = vpop.f32.mrf.mxu0
  %v3105 = vadd.f32 %v2936, %v3104
  %v3106 = vpop.f32.mrf.mxu0
  %v3107 = vadd.f32 %v2938, %v3106
  %3108 = vmatmul.bf16.gmra.mxu0 %v1208
  %v3109 = vpop.f32.mrf.mxu0
  %v3110 = vadd.f32 %v2941, %v3109
  %v3111 = vpop.f32.mrf.mxu0
  %v3112 = vadd.f32 %v2943, %v3111
  %3113 = vmatmul.bf16.gmra.mxu0 %v1216
  %v3114 = vpop.f32.mrf.mxu0
  %v3115 = vadd.f32 %v2946, %v3114
  %v3116 = vpop.f32.mrf.mxu0
  %v3117 = vadd.f32 %v2948, %v3116
  %3118 = vmatmul.bf16.gmra.mxu0 %v1224
  %v3119 = vpop.f32.mrf.mxu0
  %v3120 = vadd.f32 %v2951, %v3119
  %v3121 = vpop.f32.mrf.mxu0
  %v3122 = vadd.f32 %v2953, %v3121
  %3123 = vmatmul.bf16.gmra.mxu0 %v1232
  %v3124 = vpop.f32.mrf.mxu0
  %v3125 = vadd.f32 %v2956, %v3124
  %v3126 = vpop.f32.mrf.mxu0
  %v3127 = vadd.f32 %v2958, %v3126
  %3128 = vmatmul.bf16.gmra.mxu0 %v1240
  %v3129 = vpop.f32.mrf.mxu0
  %v3130 = vadd.f32 %v2961, %v3129
  %v3131 = vpop.f32.mrf.mxu0
  %v3132 = vadd.f32 %v2963, %v3131
  %3133 = vmatmul.bf16.gmra.mxu0 %v1248
  %v3134 = vpop.f32.mrf.mxu0
  %v3135 = vadd.f32 %v2966, %v3134
  %v3136 = vpop.f32.mrf.mxu0
  %v3137 = vadd.f32 %v2968, %v3136
  %3138 = vmatmul.bf16.gmra.mxu0 %v1256
  %v3139 = vpop.f32.mrf.mxu0
  %v3140 = vadd.f32 %v2971, %v3139
  %v3141 = vpop.f32.mrf.mxu0
  %v3142 = vadd.f32 %v2973, %v3141
  %3143 = vmatmul.bf16.gmra.mxu0 %v1264
  %v3144 = vpop.f32.mrf.mxu0
  %v3145 = vadd.f32 %v2976, %v3144
  %v3146 = vpop.f32.mrf.mxu0
  %v3147 = vadd.f32 %v2978, %v3146
  %3148 = vmatmul.bf16.gmra.mxu0 %v1272
  %v3149 = vpop.f32.mrf.mxu0
  %v3150 = vadd.f32 %v2981, %v3149
  %v3151 = vpop.f32.mrf.mxu0
  %v3152 = vadd.f32 %v2983, %v3151
  %3153 = vmatmul.bf16.gmra.mxu0 %v1280
  %v3154 = vpop.f32.mrf.mxu0
  %v3155 = vadd.f32 %v2986, %v3154
  %v3156 = vpop.f32.mrf.mxu0
  %v3157 = vadd.f32 %v2988, %v3156
  %3158 = vmatmul.bf16.gmra.mxu0 %v1288
  %v3159 = vpop.f32.mrf.mxu0
  %v3160 = vadd.f32 %v2991, %v3159
  %v3161 = vpop.f32.mrf.mxu0
  %v3162 = vadd.f32 %v2993, %v3161
  %3163 = vmatmul.bf16.gmra.mxu0 %v1296
  %v3164 = vpop.f32.mrf.mxu0
  %v3165 = vadd.f32 %v2996, %v3164
  %v3166 = vpop.f32.mrf.mxu0
  %v3167 = vadd.f32 %v2998, %v3166
  %3168 = vmatmul.bf16.gmra.mxu0 %v1304
  %v3169 = vpop.f32.mrf.mxu0
  %v3170 = vadd.f32 %v3001, %v3169
  %v3171 = vpop.f32.mrf.mxu0
  %v3172 = vadd.f32 %v3003, %v3171
  %3173 = vmatmul.bf16.gmra.mxu0 %v1312
  %v3174 = vpop.f32.mrf.mxu0
  %v3175 = vadd.f32 %v3006, %v3174
  %v3176 = vpop.f32.mrf.mxu0
  %v3177 = vadd.f32 %v3008, %v3176
  %3178 = vmatmul.bf16.gmra.mxu0 %v1320
  %v3179 = vpop.f32.mrf.mxu0
  %v3180 = vadd.f32 %v3011, %v3179
  %v3181 = vpop.f32.mrf.mxu0
  %v3182 = vadd.f32 %v3013, %v3181
  %3183 = vmatmul.bf16.gmra.mxu0 %v1328
  %v3184 = vpop.f32.mrf.mxu0
  %v3185 = vadd.f32 %v3016, %v3184
  %v3186 = vpop.f32.mrf.mxu0
  %v3187 = vadd.f32 %v3018, %v3186
  %3188 = vmatmul.bf16.gmra.mxu0 %v1336
  %v3189 = vpop.f32.mrf.mxu0
  %v3190 = vadd.f32 %v3021, %v3189
  %v3191 = vpop.f32.mrf.mxu0
  %v3192 = vadd.f32 %v3023, %v3191
  %3193 = vmatmul.bf16.gmra.mxu0 %v1344
  %v3194 = vpop.f32.mrf.mxu0
  %v3195 = vadd.f32 %v3026, %v3194
  %v3196 = vpop.f32.mrf.mxu0
  %v3197 = vadd.f32 %v3028, %v3196
  %3198 = vmatmul.bf16.gmra.mxu0 %v1352
  %v3199 = vpop.f32.mrf.mxu0
  %v3200 = vadd.f32 %v3031, %v3199
  %v3201 = vpop.f32.mrf.mxu0
  %v3202 = vadd.f32 %v3033, %v3201
  %3203 = vmatmul.bf16.gmra.mxu0 %v1360
  %v3204 = vpop.f32.mrf.mxu0
  %v3205 = vadd.f32 %v3036, %v3204
  %v3206 = vpop.f32.mrf.mxu0
  %v3207 = vadd.f32 %v3038, %v3206
  %3208 = vmatmul.bf16.gmra.mxu0 %v1368
  %v3209 = vpop.f32.mrf.mxu0
  %v3210 = vadd.f32 %v3041, %v3209
  %v3211 = vpop.f32.mrf.mxu0
  %v3212 = vadd.f32 %v3043, %v3211
  %3213 = vmatmul.bf16.gmra.mxu0 %v1376
  %v3214 = vpop.f32.mrf.mxu0
  %v3215 = vadd.f32 %v3046, %v3214
  %v3216 = vpop.f32.mrf.mxu0
  %v3217 = vadd.f32 %v3048, %v3216
  %3218 = vmatmul.bf16.gmra.mxu0 %v1384
  %v3219 = vpop.f32.mrf.mxu0
  %v3220 = vadd.f32 %v3051, %v3219
  %v3221 = vpop.f32.mrf.mxu0
  %v3222 = vadd.f32 %v3053, %v3221
  %3223 = vmatmul.bf16.gmra.mxu0 %v1392
  %v3224 = vpop.f32.mrf.mxu0
  %v3225 = vadd.f32 %v3056, %v3224
  %v3226 = vpop.f32.mrf.mxu0
  %v3227 = vadd.f32 %v3058, %v3226
  %3228 = vmatmul.bf16.gmra.mxu0 %v1400
  %v3229 = vpop.f32.mrf.mxu0
  %v3230 = vadd.f32 %v3061, %v3229
  %v3231 = vpop.f32.mrf.mxu0
  %v3232 = vadd.f32 %v3063, %v3231
  %3233 = vmatmul.bf16.gmra.mxu0 %v1408
  %v3234 = vpop.f32.mrf.mxu0
  %v3235 = vadd.f32 %v3066, %v3234
  %v3236 = vpop.f32.mrf.mxu0
  %v3237 = vadd.f32 %v3068, %v3236
  %3238 = vmatmul.bf16.gmra.mxu0 %v1416
  %v3239 = vpop.f32.mrf.mxu0
  %v3240 = vadd.f32 %v3071, %v3239
  %v3241 = vpop.f32.mrf.mxu0
  %v3242 = vadd.f32 %v3073, %v3241
  %3243 = vmatmul.bf16.gmra.mxu0 %v1424
  %v3244 = vpop.f32.mrf.mxu0
  %v3245 = vadd.f32 %v3076, %v3244
  %v3246 = vpop.f32.mrf.mxu0
  %v3247 = vadd.f32 %v3078, %v3246
  %3248 = vdwg.mxu0
  %3249 = vmatpush.bf16.msra.mxu0 %v2001
  %3250 = vmatpush.bf16.msra.mxu0 %v2000
  %3251 = vmatpush.bf16.msra.mxu0 %v1999
  %3252 = vmatpush.bf16.msra.mxu0 %v1998
  %3253 = vmatpush.bf16.msra.mxu0 %v1997
  %3254 = vmatpush.bf16.msra.mxu0 %v1996
  %3255 = vmatpush.bf16.msra.mxu0 %v1995
  %3256 = vmatpush.bf16.msra.mxu0 %v1994
  %3257 = vmatmul.bf16.gmra.mxu0 %v1177
  %v3258 = vpop.f32.mrf.mxu0
  %v3259 = vadd.f32 %v3090, %v3258
  %v3260 = vpop.f32.mrf.mxu0
  %v3261 = vadd.f32 %v3092, %v3260
  %3262 = vmatmul.bf16.gmra.mxu0 %v1185
  %v3263 = vpop.f32.mrf.mxu0
  %v3264 = vadd.f32 %v3095, %v3263
  %v3265 = vpop.f32.mrf.mxu0
  %v3266 = vadd.f32 %v3097, %v3265
  %3267 = vmatmul.bf16.gmra.mxu0 %v1193
  %v3268 = vpop.f32.mrf.mxu0
  %v3269 = vadd.f32 %v3100, %v3268
  %v3270 = vpop.f32.mrf.mxu0
  %v3271 = vadd.f32 %v3102, %v3270
  %3272 = vmatmul.bf16.gmra.mxu0 %v1201
  %v3273 = vpop.f32.mrf.mxu0
  %v3274 = vadd.f32 %v3105, %v3273
  %v3275 = vpop.f32.mrf.mxu0
  %v3276 = vadd.f32 %v3107, %v3275
  %3277 = vmatmul.bf16.gmra.mxu0 %v1209
  %v3278 = vpop.f32.mrf.mxu0
  %v3279 = vadd.f32 %v3110, %v3278
  %v3280 = vpop.f32.mrf.mxu0
  %v3281 = vadd.f32 %v3112, %v3280
  %3282 = vmatmul.bf16.gmra.mxu0 %v1217
  %v3283 = vpop.f32.mrf.mxu0
  %v3284 = vadd.f32 %v3115, %v3283
  %v3285 = vpop.f32.mrf.mxu0
  %v3286 = vadd.f32 %v3117, %v3285
  %3287 = vmatmul.bf16.gmra.mxu0 %v1225
  %v3288 = vpop.f32.mrf.mxu0
  %v3289 = vadd.f32 %v3120, %v3288
  %v3290 = vpop.f32.mrf.mxu0
  %v3291 = vadd.f32 %v3122, %v3290
  %3292 = vmatmul.bf16.gmra.mxu0 %v1233
  %v3293 = vpop.f32.mrf.mxu0
  %v3294 = vadd.f32 %v3125, %v3293
  %v3295 = vpop.f32.mrf.mxu0
  %v3296 = vadd.f32 %v3127, %v3295
  %3297 = vmatmul.bf16.gmra.mxu0 %v1241
  %v3298 = vpop.f32.mrf.mxu0
  %v3299 = vadd.f32 %v3130, %v3298
  %v3300 = vpop.f32.mrf.mxu0
  %v3301 = vadd.f32 %v3132, %v3300
  %3302 = vmatmul.bf16.gmra.mxu0 %v1249
  %v3303 = vpop.f32.mrf.mxu0
  %v3304 = vadd.f32 %v3135, %v3303
  %v3305 = vpop.f32.mrf.mxu0
  %v3306 = vadd.f32 %v3137, %v3305
  %3307 = vmatmul.bf16.gmra.mxu0 %v1257
  %v3308 = vpop.f32.mrf.mxu0
  %v3309 = vadd.f32 %v3140, %v3308
  %v3310 = vpop.f32.mrf.mxu0
  %v3311 = vadd.f32 %v3142, %v3310
  %3312 = vmatmul.bf16.gmra.mxu0 %v1265
  %v3313 = vpop.f32.mrf.mxu0
  %v3314 = vadd.f32 %v3145, %v3313
  %v3315 = vpop.f32.mrf.mxu0
  %v3316 = vadd.f32 %v3147, %v3315
  %3317 = vmatmul.bf16.gmra.mxu0 %v1273
  %v3318 = vpop.f32.mrf.mxu0
  %v3319 = vadd.f32 %v3150, %v3318
  %v3320 = vpop.f32.mrf.mxu0
  %v3321 = vadd.f32 %v3152, %v3320
  %3322 = vmatmul.bf16.gmra.mxu0 %v1281
  %v3323 = vpop.f32.mrf.mxu0
  %v3324 = vadd.f32 %v3155, %v3323
  %v3325 = vpop.f32.mrf.mxu0
  %v3326 = vadd.f32 %v3157, %v3325
  %3327 = vmatmul.bf16.gmra.mxu0 %v1289
  %v3328 = vpop.f32.mrf.mxu0
  %v3329 = vadd.f32 %v3160, %v3328
  %v3330 = vpop.f32.mrf.mxu0
  %v3331 = vadd.f32 %v3162, %v3330
  %3332 = vmatmul.bf16.gmra.mxu0 %v1297
  %v3333 = vpop.f32.mrf.mxu0
  %v3334 = vadd.f32 %v3165, %v3333
  %v3335 = vpop.f32.mrf.mxu0
  %v3336 = vadd.f32 %v3167, %v3335
  %3337 = vmatmul.bf16.gmra.mxu0 %v1305
  %v3338 = vpop.f32.mrf.mxu0
  %v3339 = vadd.f32 %v3170, %v3338
  %v3340 = vpop.f32.mrf.mxu0
  %v3341 = vadd.f32 %v3172, %v3340
  %3342 = vmatmul.bf16.gmra.mxu0 %v1313
  %v3343 = vpop.f32.mrf.mxu0
  %v3344 = vadd.f32 %v3175, %v3343
  %v3345 = vpop.f32.mrf.mxu0
  %v3346 = vadd.f32 %v3177, %v3345
  %3347 = vmatmul.bf16.gmra.mxu0 %v1321
  %v3348 = vpop.f32.mrf.mxu0
  %v3349 = vadd.f32 %v3180, %v3348
  %v3350 = vpop.f32.mrf.mxu0
  %v3351 = vadd.f32 %v3182, %v3350
  %3352 = vmatmul.bf16.gmra.mxu0 %v1329
  %v3353 = vpop.f32.mrf.mxu0
  %v3354 = vadd.f32 %v3185, %v3353
  %v3355 = vpop.f32.mrf.mxu0
  %v3356 = vadd.f32 %v3187, %v3355
  %3357 = vmatmul.bf16.gmra.mxu0 %v1337
  %v3358 = vpop.f32.mrf.mxu0
  %v3359 = vadd.f32 %v3190, %v3358
  %v3360 = vpop.f32.mrf.mxu0
  %v3361 = vadd.f32 %v3192, %v3360
  %3362 = vmatmul.bf16.gmra.mxu0 %v1345
  %v3363 = vpop.f32.mrf.mxu0
  %v3364 = vadd.f32 %v3195, %v3363
  %v3365 = vpop.f32.mrf.mxu0
  %v3366 = vadd.f32 %v3197, %v3365
  %3367 = vmatmul.bf16.gmra.mxu0 %v1353
  %v3368 = vpop.f32.mrf.mxu0
  %v3369 = vadd.f32 %v3200, %v3368
  %v3370 = vpop.f32.mrf.mxu0
  %v3371 = vadd.f32 %v3202, %v3370
  %3372 = vmatmul.bf16.gmra.mxu0 %v1361
  %v3373 = vpop.f32.mrf.mxu0
  %v3374 = vadd.f32 %v3205, %v3373
  %v3375 = vpop.f32.mrf.mxu0
  %v3376 = vadd.f32 %v3207, %v3375
  %3377 = vmatmul.bf16.gmra.mxu0 %v1369
  %v3378 = vpop.f32.mrf.mxu0
  %v3379 = vadd.f32 %v3210, %v3378
  %v3380 = vpop.f32.mrf.mxu0
  %v3381 = vadd.f32 %v3212, %v3380
  %3382 = vmatmul.bf16.gmra.mxu0 %v1377
  %v3383 = vpop.f32.mrf.mxu0
  %v3384 = vadd.f32 %v3215, %v3383
  %v3385 = vpop.f32.mrf.mxu0
  %v3386 = vadd.f32 %v3217, %v3385
  %3387 = vmatmul.bf16.gmra.mxu0 %v1385
  %v3388 = vpop.f32.mrf.mxu0
  %v3389 = vadd.f32 %v3220, %v3388
  %v3390 = vpop.f32.mrf.mxu0
  %v3391 = vadd.f32 %v3222, %v3390
  %3392 = vmatmul.bf16.gmra.mxu0 %v1393
  %v3393 = vpop.f32.mrf.mxu0
  %v3394 = vadd.f32 %v3225, %v3393
  %v3395 = vpop.f32.mrf.mxu0
  %v3396 = vadd.f32 %v3227, %v3395
  %3397 = vmatmul.bf16.gmra.mxu0 %v1401
  %v3398 = vpop.f32.mrf.mxu0
  %v3399 = vadd.f32 %v3230, %v3398
  %v3400 = vpop.f32.mrf.mxu0
  %v3401 = vadd.f32 %v3232, %v3400
  %3402 = vmatmul.bf16.gmra.mxu0 %v1409
  %v3403 = vpop.f32.mrf.mxu0
  %v3404 = vadd.f32 %v3235, %v3403
  %v3405 = vpop.f32.mrf.mxu0
  %v3406 = vadd.f32 %v3237, %v3405
  %3407 = vmatmul.bf16.gmra.mxu0 %v1417
  %v3408 = vpop.f32.mrf.mxu0
  %v3409 = vadd.f32 %v3240, %v3408
  %v3410 = vpop.f32.mrf.mxu0
  %v3411 = vadd.f32 %v3242, %v3410
  %3412 = vmatmul.bf16.gmra.mxu0 %v1425
  %v3413 = vpop.f32.mrf.mxu0
  %v3414 = vadd.f32 %v3245, %v3413
  %v3415 = vpop.f32.mrf.mxu0
  %v3416 = vadd.f32 %v3247, %v3415
  %3417 = vdwg.mxu0
  %v3418 = vtanh.pop %v3259
  %v3419 = vtanh.pop %v3261
  %v3420 = vtanh.pop %v3264
  %v3421 = vtanh.pop %v3266
  %v3422 = vtanh.pop %v3269
  %v3423 = vtanh.pop %v3271
  %v3424 = vtanh.pop %v3274
  %v3425 = vtanh.pop %v3276
  %v3426 = vtanh.pop %v3279
  %v3427 = vtanh.pop %v3281
  %v3428 = vtanh.pop %v3284
  %v3429 = vtanh.pop %v3286
  %v3430 = vtanh.pop %v3289
  %v3431 = vtanh.pop %v3291
  %v3432 = vtanh.pop %v3294
  %v3433 = vtanh.pop %v3296
  %v3434 = vtanh.pop %v3299
  %v3435 = vtanh.pop %v3301
  %v3436 = vtanh.pop %v3304
  %v3437 = vtanh.pop %v3306
  %v3438 = vtanh.pop %v3309
  %v3439 = vtanh.pop %v3311
  %v3440 = vtanh.pop %v3314
  %v3441 = vtanh.pop %v3316
  %v3442 = vtanh.pop %v3319
  %v3443 = vtanh.pop %v3321
  %v3444 = vtanh.pop %v3324
  %v3445 = vtanh.pop %v3326
  %v3446 = vtanh.pop %v3329
  %v3447 = vtanh.pop %v3331
  %v3448 = vtanh.pop %v3334
  %v3449 = vtanh.pop %v3336
  %v3450 = vtanh.pop %v3339
  %v3451 = vtanh.pop %v3341
  %v3452 = vtanh.pop %v3344
  %v3453 = vtanh.pop %v3346
  %v3454 = vtanh.pop %v3349
  %v3455 = vtanh.pop %v3351
  %v3456 = vtanh.pop %v3354
  %v3457 = vtanh.pop %v3356
  %v3458 = vtanh.pop %v3359
  %v3459 = vtanh.pop %v3361
  %v3460 = vtanh.pop %v3364
  %v3461 = vtanh.pop %v3366
  %v3462 = vtanh.pop %v3369
  %v3463 = vtanh.pop %v3371
  %v3464 = vtanh.pop %v3374
  %v3465 = vtanh.pop %v3376
  %v3466 = vtanh.pop %v3379
  %v3467 = vtanh.pop %v3381
  %v3468 = vtanh.pop %v3384
  %v3469 = vtanh.pop %v3386
  %v3470 = vtanh.pop %v3389
  %v3471 = vtanh.pop %v3391
  %v3472 = vtanh.pop %v3394
  %v3473 = vtanh.pop %v3396
  %v3474 = vtanh.pop %v3399
  %v3475 = vtanh.pop %v3401
  %v3476 = vtanh.pop %v3404
  %v3477 = vtanh.pop %v3406
  %v3478 = vtanh.pop %v3409
  %v3479 = vtanh.pop %v3411
  %v3480 = vtanh.pop %v3414
  %v3481 = vtanh.pop %v3416
  %v3482 = vpack.c.bf16 %v3418, %v3418
  %v3483 = vpack.c.bf16 %v3419, %v3419
  %v3484 = vpack.c.bf16 %v3420, %v3420
  %v3485 = vpack.c.bf16 %v3421, %v3421
  %v3486 = vpack.c.bf16 %v3422, %v3422
  %v3487 = vpack.c.bf16 %v3423, %v3423
  %v3488 = vpack.c.bf16 %v3424, %v3424
  %v3489 = vpack.c.bf16 %v3425, %v3425
  %v3490 = vpack.c.bf16 %v3426, %v3426
  %v3491 = vpack.c.bf16 %v3427, %v3427
  %v3492 = vpack.c.bf16 %v3428, %v3428
  %v3493 = vpack.c.bf16 %v3429, %v3429
  %v3494 = vpack.c.bf16 %v3430, %v3430
  %v3495 = vpack.c.bf16 %v3431, %v3431
  %v3496 = vpack.c.bf16 %v3432, %v3432
  %v3497 = vpack.c.bf16 %v3433, %v3433
  %v3498 = vpack.c.bf16 %v3434, %v3434
  %v3499 = vpack.c.bf16 %v3435, %v3435
  %v3500 = vpack.c.bf16 %v3436, %v3436
  %v3501 = vpack.c.bf16 %v3437, %v3437
  %v3502 = vpack.c.bf16 %v3438, %v3438
  %v3503 = vpack.c.bf16 %v3439, %v3439
  %v3504 = vpack.c.bf16 %v3440, %v3440
  %v3505 = vpack.c.bf16 %v3441, %v3441
  %v3506 = vpack.c.bf16 %v3442, %v3442
  %v3507 = vpack.c.bf16 %v3443, %v3443
  %v3508 = vpack.c.bf16 %v3444, %v3444
  %v3509 = vpack.c.bf16 %v3445, %v3445
  %v3510 = vpack.c.bf16 %v3446, %v3446
  %v3511 = vpack.c.bf16 %v3447, %v3447
  %v3512 = vpack.c.bf16 %v3448, %v3448
  %v3513 = vpack.c.bf16 %v3449, %v3449
  %v3514 = vpack.c.bf16 %v3450, %v3450
  %v3515 = vpack.c.bf16 %v3451, %v3451
  %v3516 = vpack.c.bf16 %v3452, %v3452
  %v3517 = vpack.c.bf16 %v3453, %v3453
  %v3518 = vpack.c.bf16 %v3454, %v3454
  %v3519 = vpack.c.bf16 %v3455, %v3455
  %v3520 = vpack.c.bf16 %v3456, %v3456
  %v3521 = vpack.c.bf16 %v3457, %v3457
  %v3522 = vpack.c.bf16 %v3458, %v3458
  %v3523 = vpack.c.bf16 %v3459, %v3459
  %v3524 = vpack.c.bf16 %v3460, %v3460
  %v3525 = vpack.c.bf16 %v3461, %v3461
  %v3526 = vpack.c.bf16 %v3462, %v3462
  %v3527 = vpack.c.bf16 %v3463, %v3463
  %v3528 = vpack.c.bf16 %v3464, %v3464
  %v3529 = vpack.c.bf16 %v3465, %v3465
  %v3530 = vpack.c.bf16 %v3466, %v3466
  %v3531 = vpack.c.bf16 %v3467, %v3467
  %v3532 = vpack.c.bf16 %v3468, %v3468
  %v3533 = vpack.c.bf16 %v3469, %v3469
  %v3534 = vpack.c.bf16 %v3470, %v3470
  %v3535 = vpack.c.bf16 %v3471, %v3471
  %v3536 = vpack.c.bf16 %v3472, %v3472
  %v3537 = vpack.c.bf16 %v3473, %v3473
  %v3538 = vpack.c.bf16 %v3474, %v3474
  %v3539 = vpack.c.bf16 %v3475, %v3475
  %v3540 = vpack.c.bf16 %v3476, %v3476
  %v3541 = vpack.c.bf16 %v3477, %v3477
  %v3542 = vpack.c.bf16 %v3478, %v3478
  %v3543 = vpack.c.bf16 %v3479, %v3479
  %v3544 = vpack.c.bf16 %v3480, %v3480
  %v3545 = vpack.c.bf16 %v3481, %v3481
  %3546 = vst [vmem:[%s3] sm:$0xf] %v3482
  %3547 = vst [vmem:[%s3 + $0x4] sm:$0xf] %v3483
  %3548 = vst [vmem:[%s3 + $0x8] sm:$0xf] %v3484
  %3549 = vst [vmem:[%s3 + $0xc] sm:$0xf] %v3485
  %3550 = vst [vmem:[%s3 + $0x10] sm:$0xf] %v3486
  %3551 = vst [vmem:[%s3 + $0x14] sm:$0xf] %v3487
  %3552 = vst [vmem:[%s3 + $0x18] sm:$0xf] %v3488
  %3553 = vst [vmem:[%s3 + $0x1c] sm:$0xf] %v3489
  %3554 = vst [vmem:[%s3 + $0x20] sm:$0xf] %v3490
  %3555 = vst [vmem:[%s3 + $0x24] sm:$0xf] %v3491
  %3556 = vst [vmem:[%s3 + $0x28] sm:$0xf] %v3492
  %3557 = vst [vmem:[%s3 + $0x2c] sm:$0xf] %v3493
  %3558 = vst [vmem:[%s3 + $0x30] sm:$0xf] %v3494
  %3559 = vst [vmem:[%s3 + $0x34] sm:$0xf] %v3495
  %3560 = vst [vmem:[%s3 + $0x38] sm:$0xf] %v3496
  %3561 = vst [vmem:[%s3 + $0x3c] sm:$0xf] %v3497
  %3562 = vst [vmem:[%s3 + $0x40] sm:$0xf] %v3498
  %3563 = vst [vmem:[%s3 + $0x44] sm:$0xf] %v3499
  %3564 = vst [vmem:[%s3 + $0x48] sm:$0xf] %v3500
  %3565 = vst [vmem:[%s3 + $0x4c] sm:$0xf] %v3501
  %3566 = vst [vmem:[%s3 + $0x50] sm:$0xf] %v3502
  %3567 = vst [vmem:[%s3 + $0x54] sm:$0xf] %v3503
  %3568 = vst [vmem:[%s3 + $0x58] sm:$0xf] %v3504
  %3569 = vst [vmem:[%s3 + $0x5c] sm:$0xf] %v3505
  %3570 = vst [vmem:[%s3 + $0x60] sm:$0xf] %v3506
  %3571 = vst [vmem:[%s3 + $0x64] sm:$0xf] %v3507
  %3572 = vst [vmem:[%s3 + $0x68] sm:$0xf] %v3508
  %3573 = vst [vmem:[%s3 + $0x6c] sm:$0xf] %v3509
  %3574 = vst [vmem:[%s3 + $0x70] sm:$0xf] %v3510
  %3575 = vst [vmem:[%s3 + $0x74] sm:$0xf] %v3511
  %3576 = vst [vmem:[%s3 + $0x78] sm:$0xf] %v3512
  %3577 = vst [vmem:[%s3 + $0x7c] sm:$0xf] %v3513
  %3578 = vst [vmem:[%s3 + $0x80] sm:$0xf] %v3514
  %3579 = vst [vmem:[%s3 + $0x84] sm:$0xf] %v3515
  %3580 = vst [vmem:[%s3 + $0x88] sm:$0xf] %v3516
  %3581 = vst [vmem:[%s3 + $0x8c] sm:$0xf] %v3517
  %3582 = vst [vmem:[%s3 + $0x90] sm:$0xf] %v3518
  %3583 = vst [vmem:[%s3 + $0x94] sm:$0xf] %v3519
  %3584 = vst [vmem:[%s3 + $0x98] sm:$0xf] %v3520
  %3585 = vst [vmem:[%s3 + $0x9c] sm:$0xf] %v3521
  %3586 = vst [vmem:[%s3 + $0xa0] sm:$0xf] %v3522
  %3587 = vst [vmem:[%s3 + $0xa4] sm:$0xf] %v3523
  %3588 = vst [vmem:[%s3 + $0xa8] sm:$0xf] %v3524
  %3589 = vst [vmem:[%s3 + $0xac] sm:$0xf] %v3525
  %3590 = vst [vmem:[%s3 + $0xb0] sm:$0xf] %v3526
  %3591 = vst [vmem:[%s3 + $0xb4] sm:$0xf] %v3527
  %3592 = vst [vmem:[%s3 + $0xb8] sm:$0xf] %v3528
  %3593 = vst [vmem:[%s3 + $0xbc] sm:$0xf] %v3529
  %3594 = vst [vmem:[%s3 + $0xc0] sm:$0xf] %v3530
  %3595 = vst [vmem:[%s3 + $0xc4] sm:$0xf] %v3531
  %3596 = vst [vmem:[%s3 + $0xc8] sm:$0xf] %v3532
  %3597 = vst [vmem:[%s3 + $0xcc] sm:$0xf] %v3533
  %3598 = vst [vmem:[%s3 + $0xd0] sm:$0xf] %v3534
  %3599 = vst [vmem:[%s3 + $0xd4] sm:$0xf] %v3535
  %3600 = vst [vmem:[%s3 + $0xd8] sm:$0xf] %v3536
  %3601 = vst [vmem:[%s3 + $0xdc] sm:$0xf] %v3537
  %3602 = vst [vmem:[%s3 + $0xe0] sm:$0xf] %v3538
  %3603 = vst [vmem:[%s3 + $0xe4] sm:$0xf] %v3539
  %3604 = vst [vmem:[%s3 + $0xe8] sm:$0xf] %v3540
  %3605 = vst [vmem:[%s3 + $0xec] sm:$0xf] %v3541
  %3606 = vst [vmem:[%s3 + $0xf0] sm:$0xf] %v3542
  %3607 = vst [vmem:[%s3 + $0xf4] sm:$0xf] %v3543
  %3608 = vst [vmem:[%s3 + $0xf8] sm:$0xf] %v3544
  %3609 = vst [vmem:[%s3 + $0xfc] sm:$0xf] %v3545
  // Predicated region
  $region14: #{generator_forward.11} parent=0 // pred_check
    _
  $region15: #{generator_forward.11} parent=0 // pred_check_branch
    %3611 = sbr.rel (0) target = $region17
  $region16: #{generator_forward.11} parent=0 // pred_region
    _
  $region17: #{generator_forward.11} parent=0 // pred_fallthru
    _
  // Predicated region
  $region18: #{generator_forward.11} parent=0 // pred_check
    _
  $region19: #{generator_forward.11} parent=0 // pred_check_branch
    %3613 = sbr.rel (0) target = $region21
  $region20: #{generator_forward.11} parent=0 // pred_region
    _
  $region21: #{generator_forward.11} parent=0 // pred_fallthru
    _

</llo_original>
